<compile_context>
chip_gen: v7x
topology: tpu7x:2x2x1
jax: 0.10.0
libtpu: 0.0.40
codegen_flags: <defaults>
</compile_context>

<pallas_src>
import jax
import jax.numpy as jnp
import numpy as np
from jax.experimental import pallas as pl
from jax.experimental.pallas import tpu as pltpu

NEG_SLOPE = 0.01   # F.leaky_relu default
BN_EPS = 1e-5


def _leaky(x):
    # 2 VALU ops (mul + max) instead of cmp + mul + select.
    return jnp.maximum(x, NEG_SLOPE * x)


# ----------------------------------------------------------------------------
# Fused forward kernel (built for a static config; everything unrolled)
# ----------------------------------------------------------------------------
def _make_kernel(conv_specs, W, S_pad, n_rest):
    n_conv = len(conv_specs)

    def kernel(*refs):
        idx = 0
        conv_w = refs[idx:idx + n_conv]; idx += n_conv     # SMEM (cout, cin*k*k)
        conv_b = refs[idx:idx + n_conv]; idx += n_conv     # SMEM (cout,)
        map_ref = refs[idx]; idx += 1                      # VMEM (B, S_pad)
        state_ref = refs[idx]; idx += 1                    # VMEM (B, state_dim)
        action_ref = refs[idx]; idx += 1                   # VMEM (B, action_dim)
        fc1w_conv_ref = refs[idx]; idx += 1                # VMEM (c_last*S_pad, n1)
        fc1w_state_ref = refs[idx]; idx += 1               # VMEM (state_dim, n1)
        fc1w_action_ref = refs[idx]; idx += 1              # VMEM (action_dim, n1)
        fc1b_ref = refs[idx]; idx += 1                     # VMEM (1, n1)
        fc_rest = [(refs[idx + 2 * i], refs[idx + 2 * i + 1]) for i in range(n_rest)]
        idx += 2 * n_rest
        out_ref = refs[idx]; idx += 1                      # VMEM (B, out_dim)
        flat_ref = refs[idx]                               # VMEM scratch (B, c_last*S_pad)

        B = map_ref.shape[0]

        # ---- conv stack: lane-flat spatial layout, shifted taps via XLU roll,
        #      unrolled VPU scalar-MACs (weights broadcast from SMEM) ----------
        x = [map_ref[...]]                                 # first conv always has cin == 1
        for li, (cin, cout, k, hin, hout) in enumerate(conv_specs):
            accs = [jnp.zeros((B, S_pad), jnp.float32) for _ in range(cout)]
            for ci in range(cin):
                xc = x[ci]
                for di in range(k):
                    for dj in range(k):
                        off = di * W + dj
                        tap = pltpu.roll(xc, (S_pad - off) % S_pad, axis=1) if off else xc
                        t = (ci * k + di) * k + dj
                        for co in range(cout):
                            accs[co] = accs[co] + conv_w[li][co, t] * tap
            last = (li == n_conv - 1)
            nxt = []
            for co in range(cout):
                act = _leaky(accs[co] + conv_b[li][co])
                if last:
                    # 256-aligned lane offsets -> unmasked stores; matches the
                    # zero-padded fc1 weight row layout built on the host.
                    flat_ref[:, co * S_pad:(co + 1) * S_pad] = act
                else:
                    nxt.append(act)
            x = nxt

        # ---- fc1 (BatchNorm pre-folded): one big lane-dense dot + 2 tiny dots
        h = (jnp.dot(flat_ref[...], fc1w_conv_ref[...],
                     preferred_element_type=jnp.float32)
             + jnp.dot(state_ref[...], fc1w_state_ref[...],
                       preferred_element_type=jnp.float32)
             + jnp.dot(action_ref[...], fc1w_action_ref[...],
                       preferred_element_type=jnp.float32)
             + fc1b_ref[...])
        h = _leaky(h)

        # ---- remaining FCs (BN pre-folded); last layer (fcOutput) no activation
        for li, (w_ref, b_ref) in enumerate(fc_rest):
            h = jnp.dot(h, w_ref[...], preferred_element_type=jnp.float32) + b_ref[...]
            if li < n_rest - 1:
                h = _leaky(h)

        out_ref[...] = h

    return kernel


# ----------------------------------------------------------------------------
# One-time host-side parameter preparation (BN fold, layouts, zero-padding)
# ----------------------------------------------------------------------------
def prepare_params(params, *, in_state_dim, in_action_dim, in_map_dim,
                   batch_norms_on=True):
    convs = params["convs"]
    fcs = params["fcs"]
    bns = params["bns"]
    fow, fob = params["fc_out"]

    H0 = in_map_dim
    W = H0
    S = H0 * H0
    S_pad = ((S + 127) // 128) * 128

    conv_specs = []
    conv_w_flat, conv_b = [], []
    hin = H0
    for (w, b) in convs:
        w = np.asarray(w, np.float32)
        b = np.asarray(b, np.float32)
        cout, cin, k, _ = w.shape
        hout = hin - k + 1
        conv_specs.append((cin, cout, k, hin, hout))
        conv_w_flat.append(jnp.asarray(w.reshape(cout, cin * k * k)))
        conv_b.append(jnp.asarray(b))
        hin = hout
    c_last, h_last = conv_specs[-1][1], conv_specs[-1][4]
    conv_out_dim = c_last * h_last * h_last

    # Fold eval-mode BatchNorm1d (fixed affine on the fc input) into the Linear.
    def fold_bn(w, b, bn):
        w = np.asarray(w, np.float64)
        b = np.asarray(b, np.float64)
        if not batch_norms_on:
            return w, b
        gamma, beta, rmean, rvar = [np.asarray(t, np.float64) for t in bn]
        scale = gamma / np.sqrt(rvar + BN_EPS)
        shift = beta - rmean * scale
        return scale[:, None] * w, b + shift @ w

    # fc1: split into conv / state / action blocks.  Conv block is re-laid-out
    # to (c_last*S_pad, n1) matching the kernel's lane-flat conv layout
    # (channel-major, spatial index i*W + j); padded rows are zero so garbage
    # lanes in the conv scratch contribute nothing.
    fc1_w, fc1_b = fold_bn(fcs[0][0], fcs[0][1], bns[0])
    n1 = fc1_w.shape[1]
    w_conv = fc1_w[:conv_out_dim].reshape(c_last, h_last, h_last, n1)
    w_conv_pad = np.zeros((c_last, S_pad, n1), np.float64)
    for i in range(h_last):
        w_conv_pad[:, i * W:i * W + h_last, :] = w_conv[:, i, :, :]
    fc1w_conv = jnp.asarray(w_conv_pad.reshape(c_last * S_pad, n1), jnp.float32)
    fc1w_state = jnp.asarray(fc1_w[conv_out_dim:conv_out_dim + in_state_dim], jnp.float32)
    fc1w_action = jnp.asarray(fc1_w[conv_out_dim + in_state_dim:], jnp.float32)
    fc1b = jnp.asarray(fc1_b.reshape(1, n1), jnp.float32)

    rest = []
    for i in range(1, len(fcs)):
        w, b = fold_bn(fcs[i][0], fcs[i][1], bns[i])
        rest.append((jnp.asarray(w, jnp.float32),
                     jnp.asarray(b.reshape(1, -1), jnp.float32)))
    rest.append((jnp.asarray(np.asarray(fow), jnp.float32),
                 jnp.asarray(np.asarray(fob).reshape(1, -1), jnp.float32)))
    out_dim = int(np.asarray(fow).shape[1])

    cfg = dict(conv_specs=tuple(conv_specs), W=W, S=S, S_pad=S_pad,
               c_last=c_last, n_rest=len(rest), out_dim=out_dim)
    prepped = dict(conv_w=conv_w_flat, conv_b=conv_b,
                   fc1w_conv=fc1w_conv, fc1w_state=fc1w_state,
                   fc1w_action=fc1w_action, fc1b=fc1b, rest=rest)
    return cfg, prepped


# ----------------------------------------------------------------------------
# Per-call path: just a (free) reshape of r_map + a single pallas_call
# ----------------------------------------------------------------------------
def build_forward(cfg):
    conv_specs = cfg["conv_specs"]
    n_conv = len(conv_specs)
    n_rest = cfg["n_rest"]
    W, S, S_pad = cfg["W"], cfg["S"], cfg["S_pad"]
    c_last, out_dim = cfg["c_last"], cfg["out_dim"]

    kernel = _make_kernel(conv_specs, W, S_pad, n_rest)

    smem = pl.BlockSpec(memory_space=pltpu.MemorySpace.SMEM)
    vmem = pl.BlockSpec(memory_space=pltpu.MemorySpace.VMEM)
    in_specs = [smem] * (2 * n_conv) + [vmem] * (7 + 2 * n_rest)

    @jax.jit
    def forward(prepped, r_state, r_map, r_action):
        B = r_map.shape[0]
        m = r_map.astype(jnp.float32).reshape(B, S)        # contiguous view, no copy
        if S_pad != S:
            m = jnp.pad(m, ((0, 0), (0, S_pad - S)))
        inputs = (list(prepped["conv_w"]) + list(prepped["conv_b"])
                  + [m, r_state.astype(jnp.float32), r_action.astype(jnp.float32),
                     prepped["fc1w_conv"], prepped["fc1w_state"],
                     prepped["fc1w_action"], prepped["fc1b"]]
                  + [t for wb in prepped["rest"] for t in wb])
        return pl.pallas_call(
            kernel,
            out_shape=jax.ShapeDtypeStruct((B, out_dim), jnp.float32),
            in_specs=in_specs,
            out_specs=vmem,
            scratch_shapes=[pltpu.VMEM((B, c_last * S_pad), jnp.float32)],
        )(*inputs)

    return forward


# ----------------------------------------------------------------------------
# Parameter init (PyTorch-default-style uniform init, torch layouts)
# ----------------------------------------------------------------------------
def init_params(key, in_state_dim, in_map_dim, in_action_dim, out_state_dim,
                conv_size, fc_size):
    params = {"convs": [], "fcs": [], "bns": []}
    last = [1, in_map_dim]
    for (cout, k) in conv_size:
        key, k1, k2 = jax.random.split(key, 3)
        fan_in = last[0] * k * k
        bound = 1.0 / np.sqrt(fan_in)
        w = jax.random.uniform(k1, (cout, last[0], k, k), jnp.float32, -bound, bound)
        b = jax.random.uniform(k2, (cout,), jnp.float32, -bound, bound)
        params["convs"].append((w, b))
        last = [cout, last[1] - k + 1]
    conv_out_dim = last[0] * last[1] * last[1]

    last_dim = conv_out_dim + in_state_dim + in_action_dim
    for f in fc_size:
        key, k1, k2, k3, k4, k5, k6 = jax.random.split(key, 7)
        bound = 1.0 / np.sqrt(last_dim)
        w = jax.random.uniform(k1, (last_dim, f), jnp.float32, -bound, bound)
        b = jax.random.uniform(k2, (f,), jnp.float32, -bound, bound)
        params["fcs"].append((w, b))
        # BatchNorm1d on the *input* of this fc (eval mode, non-trivial stats
        # so the host-side BN folding is actually exercised).
        params["bns"].append((
            jax.random.uniform(k3, (last_dim,), jnp.float32, 0.5, 1.5),    # gamma
            jax.random.uniform(k4, (last_dim,), jnp.float32, -0.1, 0.1),   # beta
            jax.random.uniform(k5, (last_dim,), jnp.float32, -0.1, 0.1),   # running mean
            jax.random.uniform(k6, (last_dim,), jnp.float32, 0.5, 1.5)))   # running var
        last_dim = f

    key, k1, k2 = jax.random.split(key, 3)
    bound = 1.0 / np.sqrt(last_dim)
    w = jax.random.uniform(k1, (last_dim, out_state_dim), jnp.float32, -bound, bound)
    b = jax.random.uniform(k2, (out_state_dim,), jnp.float32, -bound, bound)
    params["fc_out"] = (w, b)
    return params


# ----------------------------------------------------------------------------
# NumPy float64 reference (ground truth, PyTorch semantics)
# ----------------------------------------------------------------------------
def forward_ref_np(params, r_state, r_map, r_action, batch_norms_on=True):
    x = np.asarray(r_map, np.float64)                      # [B, 1, H, H]
    for (w, b) in params["convs"]:
        w = np.asarray(w, np.float64); b = np.asarray(b, np.float64)
        cout, cin, k, _ = w.shape
        B, _, H, _ = x.shape
        Ho = H - k + 1
        y = np.zeros((B, cout, Ho, Ho), np.float64)
        for oc in range(cout):
            acc = np.zeros((B, Ho, Ho), np.float64)
            for ic in range(cin):
                for di in range(k):
                    for dj in range(k):
                        acc += w[oc, ic, di, dj] * x[:, ic, di:di + Ho, dj:dj + Ho]
            y[:, oc] = acc + b[oc]
        x = np.where(y >= 0, y, NEG_SLOPE * y)

    B = x.shape[0]
    connected = np.concatenate([x.reshape(B, -1),
                                np.asarray(r_state, np.float64),
                                np.asarray(r_action, np.float64)], axis=1)
    for (w, b), (gamma, beta, rmean, rvar) in zip(params["fcs"], params["bns"]):
        w = np.asarray(w, np.float64); b = np.asarray(b, np.float64)
        if batch_norms_on:
            g = np.asarray(gamma, np.float64); be = np.asarray(beta, np.float64)
            rm = np.asarray(rmean, np.float64); rv = np.asarray(rvar, np.float64)
            connected = g * (connected - rm) / np.sqrt(rv + BN_EPS) + be
        # dropout: inference mode (identity)
        z = connected @ w + b
        connected = np.where(z >= 0, z, NEG_SLOPE * z)
    w, b = params["fc_out"]
    return connected @ np.asarray(w, np.float64) + np.asarray(b, np.float64)


# ----------------------------------------------------------------------------
if __name__ == "__main__":
    # Module hyper-parameters (motionModelArgs)
    in_state_dim, in_map_dim, in_action_dim, out_state_dim = 4, 16, 2, 4
    conv_size = [[4, 3], [8, 3]]        # conv out: 8 x 12 x 12 = 1152
    fc_size = [32, 32]
    batch = 2

    key = jax.random.PRNGKey(0)
    kp, ks, km, ka = jax.random.split(key, 4)
    params = init_params(kp, in_state_dim, in_map_dim, in_action_dim,
                         out_state_dim, conv_size, fc_size)

    r_state = jax.random.normal(ks, (batch, in_state_dim), jnp.float32)
    r_map = jax.random.normal(km, (batch, 1, in_map_dim, in_map_dim), jnp.float32)
    r_action = jax.random.normal(ka, (batch, in_action_dim), jnp.float32)

    # One-time model-load preparation, then the steady-state forward.
    cfg, prepped = prepare_params(params, in_state_dim=in_state_dim,
                                  in_action_dim=in_action_dim,
                                  in_map_dim=in_map_dim, batch_norms_on=True)
    fwd = build_forward(cfg)

    out = jax.block_until_ready(fwd(prepped, r_state, r_map, r_action))
    ref = forward_ref_np(params, r_state, r_map, r_action, batch_norms_on=True)

    # Tolerance covers TPU default-precision MXU dots on the fused fc stack;
    # a layout / BN-fold / roll bug would produce errors orders of magnitude larger.
    np.testing.assert_allclose(np.asarray(out), ref, rtol=5e-3, atol=5e-3)
    assert out.shape == (batch, out_state_dim)
    print("KERNEL_OK")
</pallas_src>

<mosaic_0001>
module attributes {stable_mosaic.version = 11 : i64} {
  func.func @kernel(%arg0: memref<4x9xf32, #tpu.memory_space<smem>>, %arg1: memref<8x36xf32, #tpu.memory_space<smem>>, %arg2: memref<4xf32, #tpu.memory_space<smem>>, %arg3: memref<8xf32, #tpu.memory_space<smem>>, %arg4: memref<2x256xf32, #tpu.memory_space<vmem>>, %arg5: memref<2x4xf32, #tpu.memory_space<vmem>>, %arg6: memref<2x2xf32, #tpu.memory_space<vmem>>, %arg7: memref<2048x32xf32, #tpu.memory_space<vmem>>, %arg8: memref<4x32xf32, #tpu.memory_space<vmem>>, %arg9: memref<2x32xf32, #tpu.memory_space<vmem>>, %arg10: memref<1x32xf32, #tpu.memory_space<vmem>>, %arg11: memref<32x32xf32, #tpu.memory_space<vmem>>, %arg12: memref<1x32xf32, #tpu.memory_space<vmem>>, %arg13: memref<32x4xf32, #tpu.memory_space<vmem>>, %arg14: memref<1x4xf32, #tpu.memory_space<vmem>>, %arg15: memref<2x4xf32, #tpu.memory_space<vmem>>, %arg16: memref<2x2048xf32, #tpu.memory_space<vmem>>) attributes {dimension_semantics = [], scalar_prefetch = 0 : i64, scratch_operands = 1 : i64, tpu.core_type = #tpu.core_type<tc>} {
    %c0 = arith.constant 0 : index
    %c0_0 = arith.constant 0 : index
    %0 = vector.load %arg4[%c0, %c0_0] : memref<2x256xf32, #tpu.memory_space<vmem>>, vector<2x256xf32>
    %cst = arith.constant 0.000000e+00 : f32
    %1 = vector.broadcast %cst : f32 to vector<2x256xf32>
    %cst_1 = arith.constant 0.000000e+00 : f32
    %2 = vector.broadcast %cst_1 : f32 to vector<2x256xf32>
    %cst_2 = arith.constant 0.000000e+00 : f32
    %3 = vector.broadcast %cst_2 : f32 to vector<2x256xf32>
    %cst_3 = arith.constant 0.000000e+00 : f32
    %4 = vector.broadcast %cst_3 : f32 to vector<2x256xf32>
    %c0_4 = arith.constant 0 : index
    %c0_5 = arith.constant 0 : index
    %5 = memref.load %arg0[%c0_4, %c0_5] : memref<4x9xf32, #tpu.memory_space<smem>>
    %6 = vector.broadcast %5 : f32 to vector<2x256xf32>
    %7 = arith.mulf %6, %0 : vector<2x256xf32>
    %8 = arith.addf %1, %7 : vector<2x256xf32>
    %c1 = arith.constant 1 : index
    %c0_6 = arith.constant 0 : index
    %9 = memref.load %arg0[%c1, %c0_6] : memref<4x9xf32, #tpu.memory_space<smem>>
    %10 = vector.broadcast %9 : f32 to vector<2x256xf32>
    %11 = arith.mulf %10, %0 : vector<2x256xf32>
    %12 = arith.addf %2, %11 : vector<2x256xf32>
    %c2 = arith.constant 2 : index
    %c0_7 = arith.constant 0 : index
    %13 = memref.load %arg0[%c2, %c0_7] : memref<4x9xf32, #tpu.memory_space<smem>>
    %14 = vector.broadcast %13 : f32 to vector<2x256xf32>
    %15 = arith.mulf %14, %0 : vector<2x256xf32>
    %16 = arith.addf %3, %15 : vector<2x256xf32>
    %c3 = arith.constant 3 : index
    %c0_8 = arith.constant 0 : index
    %17 = memref.load %arg0[%c3, %c0_8] : memref<4x9xf32, #tpu.memory_space<smem>>
    %18 = vector.broadcast %17 : f32 to vector<2x256xf32>
    %19 = arith.mulf %18, %0 : vector<2x256xf32>
    %20 = arith.addf %4, %19 : vector<2x256xf32>
    %c255_i32 = arith.constant 255 : i32
    %21 = tpu.dynamic_rotate %0 by %c255_i32 dim 1 : vector<2x256xf32>, i32 -> vector<2x256xf32>
    %c0_9 = arith.constant 0 : index
    %c1_10 = arith.constant 1 : index
    %22 = memref.load %arg0[%c0_9, %c1_10] : memref<4x9xf32, #tpu.memory_space<smem>>
    %23 = vector.broadcast %22 : f32 to vector<2x256xf32>
    %24 = arith.mulf %23, %21 : vector<2x256xf32>
    %25 = arith.addf %8, %24 : vector<2x256xf32>
    %c1_11 = arith.constant 1 : index
    %c1_12 = arith.constant 1 : index
    %26 = memref.load %arg0[%c1_11, %c1_12] : memref<4x9xf32, #tpu.memory_space<smem>>
    %27 = vector.broadcast %26 : f32 to vector<2x256xf32>
    %28 = arith.mulf %27, %21 : vector<2x256xf32>
    %29 = arith.addf %12, %28 : vector<2x256xf32>
    %c2_13 = arith.constant 2 : index
    %c1_14 = arith.constant 1 : index
    %30 = memref.load %arg0[%c2_13, %c1_14] : memref<4x9xf32, #tpu.memory_space<smem>>
    %31 = vector.broadcast %30 : f32 to vector<2x256xf32>
    %32 = arith.mulf %31, %21 : vector<2x256xf32>
    %33 = arith.addf %16, %32 : vector<2x256xf32>
    %c3_15 = arith.constant 3 : index
    %c1_16 = arith.constant 1 : index
    %34 = memref.load %arg0[%c3_15, %c1_16] : memref<4x9xf32, #tpu.memory_space<smem>>
    %35 = vector.broadcast %34 : f32 to vector<2x256xf32>
    %36 = arith.mulf %35, %21 : vector<2x256xf32>
    %37 = arith.addf %20, %36 : vector<2x256xf32>
    %c254_i32 = arith.constant 254 : i32
    %38 = tpu.dynamic_rotate %0 by %c254_i32 dim 1 : vector<2x256xf32>, i32 -> vector<2x256xf32>
    %c0_17 = arith.constant 0 : index
    %c2_18 = arith.constant 2 : index
    %39 = memref.load %arg0[%c0_17, %c2_18] : memref<4x9xf32, #tpu.memory_space<smem>>
    %40 = vector.broadcast %39 : f32 to vector<2x256xf32>
    %41 = arith.mulf %40, %38 : vector<2x256xf32>
    %42 = arith.addf %25, %41 : vector<2x256xf32>
    %c1_19 = arith.constant 1 : index
    %c2_20 = arith.constant 2 : index
    %43 = memref.load %arg0[%c1_19, %c2_20] : memref<4x9xf32, #tpu.memory_space<smem>>
    %44 = vector.broadcast %43 : f32 to vector<2x256xf32>
    %45 = arith.mulf %44, %38 : vector<2x256xf32>
    %46 = arith.addf %29, %45 : vector<2x256xf32>
    %c2_21 = arith.constant 2 : index
    %c2_22 = arith.constant 2 : index
    %47 = memref.load %arg0[%c2_21, %c2_22] : memref<4x9xf32, #tpu.memory_space<smem>>
    %48 = vector.broadcast %47 : f32 to vector<2x256xf32>
    %49 = arith.mulf %48, %38 : vector<2x256xf32>
    %50 = arith.addf %33, %49 : vector<2x256xf32>
    %c3_23 = arith.constant 3 : index
    %c2_24 = arith.constant 2 : index
    %51 = memref.load %arg0[%c3_23, %c2_24] : memref<4x9xf32, #tpu.memory_space<smem>>
    %52 = vector.broadcast %51 : f32 to vector<2x256xf32>
    %53 = arith.mulf %52, %38 : vector<2x256xf32>
    %54 = arith.addf %37, %53 : vector<2x256xf32>
    %c240_i32 = arith.constant 240 : i32
    %55 = tpu.dynamic_rotate %0 by %c240_i32 dim 1 : vector<2x256xf32>, i32 -> vector<2x256xf32>
    %c0_25 = arith.constant 0 : index
    %c3_26 = arith.constant 3 : index
    %56 = memref.load %arg0[%c0_25, %c3_26] : memref<4x9xf32, #tpu.memory_space<smem>>
    %57 = vector.broadcast %56 : f32 to vector<2x256xf32>
    %58 = arith.mulf %57, %55 : vector<2x256xf32>
    %59 = arith.addf %42, %58 : vector<2x256xf32>
    %c1_27 = arith.constant 1 : index
    %c3_28 = arith.constant 3 : index
    %60 = memref.load %arg0[%c1_27, %c3_28] : memref<4x9xf32, #tpu.memory_space<smem>>
    %61 = vector.broadcast %60 : f32 to vector<2x256xf32>
    %62 = arith.mulf %61, %55 : vector<2x256xf32>
    %63 = arith.addf %46, %62 : vector<2x256xf32>
    %c2_29 = arith.constant 2 : index
    %c3_30 = arith.constant 3 : index
    %64 = memref.load %arg0[%c2_29, %c3_30] : memref<4x9xf32, #tpu.memory_space<smem>>
    %65 = vector.broadcast %64 : f32 to vector<2x256xf32>
    %66 = arith.mulf %65, %55 : vector<2x256xf32>
    %67 = arith.addf %50, %66 : vector<2x256xf32>
    %c3_31 = arith.constant 3 : index
    %c3_32 = arith.constant 3 : index
    %68 = memref.load %arg0[%c3_31, %c3_32] : memref<4x9xf32, #tpu.memory_space<smem>>
    %69 = vector.broadcast %68 : f32 to vector<2x256xf32>
    %70 = arith.mulf %69, %55 : vector<2x256xf32>
    %71 = arith.addf %54, %70 : vector<2x256xf32>
    %c239_i32 = arith.constant 239 : i32
    %72 = tpu.dynamic_rotate %0 by %c239_i32 dim 1 : vector<2x256xf32>, i32 -> vector<2x256xf32>
    %c0_33 = arith.constant 0 : index
    %c4 = arith.constant 4 : index
    %73 = memref.load %arg0[%c0_33, %c4] : memref<4x9xf32, #tpu.memory_space<smem>>
    %74 = vector.broadcast %73 : f32 to vector<2x256xf32>
    %75 = arith.mulf %74, %72 : vector<2x256xf32>
    %76 = arith.addf %59, %75 : vector<2x256xf32>
    %c1_34 = arith.constant 1 : index
    %c4_35 = arith.constant 4 : index
    %77 = memref.load %arg0[%c1_34, %c4_35] : memref<4x9xf32, #tpu.memory_space<smem>>
    %78 = vector.broadcast %77 : f32 to vector<2x256xf32>
    %79 = arith.mulf %78, %72 : vector<2x256xf32>
    %80 = arith.addf %63, %79 : vector<2x256xf32>
    %c2_36 = arith.constant 2 : index
    %c4_37 = arith.constant 4 : index
    %81 = memref.load %arg0[%c2_36, %c4_37] : memref<4x9xf32, #tpu.memory_space<smem>>
    %82 = vector.broadcast %81 : f32 to vector<2x256xf32>
    %83 = arith.mulf %82, %72 : vector<2x256xf32>
    %84 = arith.addf %67, %83 : vector<2x256xf32>
    %c3_38 = arith.constant 3 : index
    %c4_39 = arith.constant 4 : index
    %85 = memref.load %arg0[%c3_38, %c4_39] : memref<4x9xf32, #tpu.memory_space<smem>>
    %86 = vector.broadcast %85 : f32 to vector<2x256xf32>
    %87 = arith.mulf %86, %72 : vector<2x256xf32>
    %88 = arith.addf %71, %87 : vector<2x256xf32>
    %c238_i32 = arith.constant 238 : i32
    %89 = tpu.dynamic_rotate %0 by %c238_i32 dim 1 : vector<2x256xf32>, i32 -> vector<2x256xf32>
    %c0_40 = arith.constant 0 : index
    %c5 = arith.constant 5 : index
    %90 = memref.load %arg0[%c0_40, %c5] : memref<4x9xf32, #tpu.memory_space<smem>>
    %91 = vector.broadcast %90 : f32 to vector<2x256xf32>
    %92 = arith.mulf %91, %89 : vector<2x256xf32>
    %93 = arith.addf %76, %92 : vector<2x256xf32>
    %c1_41 = arith.constant 1 : index
    %c5_42 = arith.constant 5 : index
    %94 = memref.load %arg0[%c1_41, %c5_42] : memref<4x9xf32, #tpu.memory_space<smem>>
    %95 = vector.broadcast %94 : f32 to vector<2x256xf32>
    %96 = arith.mulf %95, %89 : vector<2x256xf32>
    %97 = arith.addf %80, %96 : vector<2x256xf32>
    %c2_43 = arith.constant 2 : index
    %c5_44 = arith.constant 5 : index
    %98 = memref.load %arg0[%c2_43, %c5_44] : memref<4x9xf32, #tpu.memory_space<smem>>
    %99 = vector.broadcast %98 : f32 to vector<2x256xf32>
    %100 = arith.mulf %99, %89 : vector<2x256xf32>
    %101 = arith.addf %84, %100 : vector<2x256xf32>
    %c3_45 = arith.constant 3 : index
    %c5_46 = arith.constant 5 : index
    %102 = memref.load %arg0[%c3_45, %c5_46] : memref<4x9xf32, #tpu.memory_space<smem>>
    %103 = vector.broadcast %102 : f32 to vector<2x256xf32>
    %104 = arith.mulf %103, %89 : vector<2x256xf32>
    %105 = arith.addf %88, %104 : vector<2x256xf32>
    %c224_i32 = arith.constant 224 : i32
    %106 = tpu.dynamic_rotate %0 by %c224_i32 dim 1 : vector<2x256xf32>, i32 -> vector<2x256xf32>
    %c0_47 = arith.constant 0 : index
    %c6 = arith.constant 6 : index
    %107 = memref.load %arg0[%c0_47, %c6] : memref<4x9xf32, #tpu.memory_space<smem>>
    %108 = vector.broadcast %107 : f32 to vector<2x256xf32>
    %109 = arith.mulf %108, %106 : vector<2x256xf32>
    %110 = arith.addf %93, %109 : vector<2x256xf32>
    %c1_48 = arith.constant 1 : index
    %c6_49 = arith.constant 6 : index
    %111 = memref.load %arg0[%c1_48, %c6_49] : memref<4x9xf32, #tpu.memory_space<smem>>
    %112 = vector.broadcast %111 : f32 to vector<2x256xf32>
    %113 = arith.mulf %112, %106 : vector<2x256xf32>
    %114 = arith.addf %97, %113 : vector<2x256xf32>
    %c2_50 = arith.constant 2 : index
    %c6_51 = arith.constant 6 : index
    %115 = memref.load %arg0[%c2_50, %c6_51] : memref<4x9xf32, #tpu.memory_space<smem>>
    %116 = vector.broadcast %115 : f32 to vector<2x256xf32>
    %117 = arith.mulf %116, %106 : vector<2x256xf32>
    %118 = arith.addf %101, %117 : vector<2x256xf32>
    %c3_52 = arith.constant 3 : index
    %c6_53 = arith.constant 6 : index
    %119 = memref.load %arg0[%c3_52, %c6_53] : memref<4x9xf32, #tpu.memory_space<smem>>
    %120 = vector.broadcast %119 : f32 to vector<2x256xf32>
    %121 = arith.mulf %120, %106 : vector<2x256xf32>
    %122 = arith.addf %105, %121 : vector<2x256xf32>
    %c223_i32 = arith.constant 223 : i32
    %123 = tpu.dynamic_rotate %0 by %c223_i32 dim 1 : vector<2x256xf32>, i32 -> vector<2x256xf32>
    %c0_54 = arith.constant 0 : index
    %c7 = arith.constant 7 : index
    %124 = memref.load %arg0[%c0_54, %c7] : memref<4x9xf32, #tpu.memory_space<smem>>
    %125 = vector.broadcast %124 : f32 to vector<2x256xf32>
    %126 = arith.mulf %125, %123 : vector<2x256xf32>
    %127 = arith.addf %110, %126 : vector<2x256xf32>
    %c1_55 = arith.constant 1 : index
    %c7_56 = arith.constant 7 : index
    %128 = memref.load %arg0[%c1_55, %c7_56] : memref<4x9xf32, #tpu.memory_space<smem>>
    %129 = vector.broadcast %128 : f32 to vector<2x256xf32>
    %130 = arith.mulf %129, %123 : vector<2x256xf32>
    %131 = arith.addf %114, %130 : vector<2x256xf32>
    %c2_57 = arith.constant 2 : index
    %c7_58 = arith.constant 7 : index
    %132 = memref.load %arg0[%c2_57, %c7_58] : memref<4x9xf32, #tpu.memory_space<smem>>
    %133 = vector.broadcast %132 : f32 to vector<2x256xf32>
    %134 = arith.mulf %133, %123 : vector<2x256xf32>
    %135 = arith.addf %118, %134 : vector<2x256xf32>
    %c3_59 = arith.constant 3 : index
    %c7_60 = arith.constant 7 : index
    %136 = memref.load %arg0[%c3_59, %c7_60] : memref<4x9xf32, #tpu.memory_space<smem>>
    %137 = vector.broadcast %136 : f32 to vector<2x256xf32>
    %138 = arith.mulf %137, %123 : vector<2x256xf32>
    %139 = arith.addf %122, %138 : vector<2x256xf32>
    %c222_i32 = arith.constant 222 : i32
    %140 = tpu.dynamic_rotate %0 by %c222_i32 dim 1 : vector<2x256xf32>, i32 -> vector<2x256xf32>
    %c0_61 = arith.constant 0 : index
    %c8 = arith.constant 8 : index
    %141 = memref.load %arg0[%c0_61, %c8] : memref<4x9xf32, #tpu.memory_space<smem>>
    %142 = vector.broadcast %141 : f32 to vector<2x256xf32>
    %143 = arith.mulf %142, %140 : vector<2x256xf32>
    %144 = arith.addf %127, %143 : vector<2x256xf32>
    %c1_62 = arith.constant 1 : index
    %c8_63 = arith.constant 8 : index
    %145 = memref.load %arg0[%c1_62, %c8_63] : memref<4x9xf32, #tpu.memory_space<smem>>
    %146 = vector.broadcast %145 : f32 to vector<2x256xf32>
    %147 = arith.mulf %146, %140 : vector<2x256xf32>
    %148 = arith.addf %131, %147 : vector<2x256xf32>
    %c2_64 = arith.constant 2 : index
    %c8_65 = arith.constant 8 : index
    %149 = memref.load %arg0[%c2_64, %c8_65] : memref<4x9xf32, #tpu.memory_space<smem>>
    %150 = vector.broadcast %149 : f32 to vector<2x256xf32>
    %151 = arith.mulf %150, %140 : vector<2x256xf32>
    %152 = arith.addf %135, %151 : vector<2x256xf32>
    %c3_66 = arith.constant 3 : index
    %c8_67 = arith.constant 8 : index
    %153 = memref.load %arg0[%c3_66, %c8_67] : memref<4x9xf32, #tpu.memory_space<smem>>
    %154 = vector.broadcast %153 : f32 to vector<2x256xf32>
    %155 = arith.mulf %154, %140 : vector<2x256xf32>
    %156 = arith.addf %139, %155 : vector<2x256xf32>
    %c0_68 = arith.constant 0 : index
    %157 = memref.load %arg2[%c0_68] : memref<4xf32, #tpu.memory_space<smem>>
    %158 = vector.broadcast %157 : f32 to vector<2x256xf32>
    %159 = arith.addf %144, %158 : vector<2x256xf32>
    %cst_69 = arith.constant 0.00999999977 : f32
    %160 = vector.broadcast %cst_69 : f32 to vector<2x256xf32>
    %161 = arith.mulf %160, %159 : vector<2x256xf32>
    %162 = arith.maximumf %159, %161 : vector<2x256xf32>
    %c1_70 = arith.constant 1 : index
    %163 = memref.load %arg2[%c1_70] : memref<4xf32, #tpu.memory_space<smem>>
    %164 = vector.broadcast %163 : f32 to vector<2x256xf32>
    %165 = arith.addf %148, %164 : vector<2x256xf32>
    %cst_71 = arith.constant 0.00999999977 : f32
    %166 = vector.broadcast %cst_71 : f32 to vector<2x256xf32>
    %167 = arith.mulf %166, %165 : vector<2x256xf32>
    %168 = arith.maximumf %165, %167 : vector<2x256xf32>
    %c2_72 = arith.constant 2 : index
    %169 = memref.load %arg2[%c2_72] : memref<4xf32, #tpu.memory_space<smem>>
    %170 = vector.broadcast %169 : f32 to vector<2x256xf32>
    %171 = arith.addf %152, %170 : vector<2x256xf32>
    %cst_73 = arith.constant 0.00999999977 : f32
    %172 = vector.broadcast %cst_73 : f32 to vector<2x256xf32>
    %173 = arith.mulf %172, %171 : vector<2x256xf32>
    %174 = arith.maximumf %171, %173 : vector<2x256xf32>
    %c3_74 = arith.constant 3 : index
    %175 = memref.load %arg2[%c3_74] : memref<4xf32, #tpu.memory_space<smem>>
    %176 = vector.broadcast %175 : f32 to vector<2x256xf32>
    %177 = arith.addf %156, %176 : vector<2x256xf32>
    %cst_75 = arith.constant 0.00999999977 : f32
    %178 = vector.broadcast %cst_75 : f32 to vector<2x256xf32>
    %179 = arith.mulf %178, %177 : vector<2x256xf32>
    %180 = arith.maximumf %177, %179 : vector<2x256xf32>
    %cst_76 = arith.constant 0.000000e+00 : f32
    %181 = vector.broadcast %cst_76 : f32 to vector<2x256xf32>
    %cst_77 = arith.constant 0.000000e+00 : f32
    %182 = vector.broadcast %cst_77 : f32 to vector<2x256xf32>
    %cst_78 = arith.constant 0.000000e+00 : f32
    %183 = vector.broadcast %cst_78 : f32 to vector<2x256xf32>
    %cst_79 = arith.constant 0.000000e+00 : f32
    %184 = vector.broadcast %cst_79 : f32 to vector<2x256xf32>
    %cst_80 = arith.constant 0.000000e+00 : f32
    %185 = vector.broadcast %cst_80 : f32 to vector<2x256xf32>
    %cst_81 = arith.constant 0.000000e+00 : f32
    %186 = vector.broadcast %cst_81 : f32 to vector<2x256xf32>
    %cst_82 = arith.constant 0.000000e+00 : f32
    %187 = vector.broadcast %cst_82 : f32 to vector<2x256xf32>
    %cst_83 = arith.constant 0.000000e+00 : f32
    %188 = vector.broadcast %cst_83 : f32 to vector<2x256xf32>
    %c0_84 = arith.constant 0 : index
    %c0_85 = arith.constant 0 : index
    %189 = memref.load %arg1[%c0_84, %c0_85] : memref<8x36xf32, #tpu.memory_space<smem>>
    %190 = vector.broadcast %189 : f32 to vector<2x256xf32>
    %191 = arith.mulf %190, %162 : vector<2x256xf32>
    %192 = arith.addf %181, %191 : vector<2x256xf32>
    %c1_86 = arith.constant 1 : index
    %c0_87 = arith.constant 0 : index
    %193 = memref.load %arg1[%c1_86, %c0_87] : memref<8x36xf32, #tpu.memory_space<smem>>
    %194 = vector.broadcast %193 : f32 to vector<2x256xf32>
    %195 = arith.mulf %194, %162 : vector<2x256xf32>
    %196 = arith.addf %182, %195 : vector<2x256xf32>
    %c2_88 = arith.constant 2 : index
    %c0_89 = arith.constant 0 : index
    %197 = memref.load %arg1[%c2_88, %c0_89] : memref<8x36xf32, #tpu.memory_space<smem>>
    %198 = vector.broadcast %197 : f32 to vector<2x256xf32>
    %199 = arith.mulf %198, %162 : vector<2x256xf32>
    %200 = arith.addf %183, %199 : vector<2x256xf32>
    %c3_90 = arith.constant 3 : index
    %c0_91 = arith.constant 0 : index
    %201 = memref.load %arg1[%c3_90, %c0_91] : memref<8x36xf32, #tpu.memory_space<smem>>
    %202 = vector.broadcast %201 : f32 to vector<2x256xf32>
    %203 = arith.mulf %202, %162 : vector<2x256xf32>
    %204 = arith.addf %184, %203 : vector<2x256xf32>
    %c4_92 = arith.constant 4 : index
    %c0_93 = arith.constant 0 : index
    %205 = memref.load %arg1[%c4_92, %c0_93] : memref<8x36xf32, #tpu.memory_space<smem>>
    %206 = vector.broadcast %205 : f32 to vector<2x256xf32>
    %207 = arith.mulf %206, %162 : vector<2x256xf32>
    %208 = arith.addf %185, %207 : vector<2x256xf32>
    %c5_94 = arith.constant 5 : index
    %c0_95 = arith.constant 0 : index
    %209 = memref.load %arg1[%c5_94, %c0_95] : memref<8x36xf32, #tpu.memory_space<smem>>
    %210 = vector.broadcast %209 : f32 to vector<2x256xf32>
    %211 = arith.mulf %210, %162 : vector<2x256xf32>
    %212 = arith.addf %186, %211 : vector<2x256xf32>
    %c6_96 = arith.constant 6 : index
    %c0_97 = arith.constant 0 : index
    %213 = memref.load %arg1[%c6_96, %c0_97] : memref<8x36xf32, #tpu.memory_space<smem>>
    %214 = vector.broadcast %213 : f32 to vector<2x256xf32>
    %215 = arith.mulf %214, %162 : vector<2x256xf32>
    %216 = arith.addf %187, %215 : vector<2x256xf32>
    %c7_98 = arith.constant 7 : index
    %c0_99 = arith.constant 0 : index
    %217 = memref.load %arg1[%c7_98, %c0_99] : memref<8x36xf32, #tpu.memory_space<smem>>
    %218 = vector.broadcast %217 : f32 to vector<2x256xf32>
    %219 = arith.mulf %218, %162 : vector<2x256xf32>
    %220 = arith.addf %188, %219 : vector<2x256xf32>
    %c255_i32_100 = arith.constant 255 : i32
    %221 = tpu.dynamic_rotate %162 by %c255_i32_100 dim 1 : vector<2x256xf32>, i32 -> vector<2x256xf32>
    %c0_101 = arith.constant 0 : index
    %c1_102 = arith.constant 1 : index
    %222 = memref.load %arg1[%c0_101, %c1_102] : memref<8x36xf32, #tpu.memory_space<smem>>
    %223 = vector.broadcast %222 : f32 to vector<2x256xf32>
    %224 = arith.mulf %223, %221 : vector<2x256xf32>
    %225 = arith.addf %192, %224 : vector<2x256xf32>
    %c1_103 = arith.constant 1 : index
    %c1_104 = arith.constant 1 : index
    %226 = memref.load %arg1[%c1_103, %c1_104] : memref<8x36xf32, #tpu.memory_space<smem>>
    %227 = vector.broadcast %226 : f32 to vector<2x256xf32>
    %228 = arith.mulf %227, %221 : vector<2x256xf32>
    %229 = arith.addf %196, %228 : vector<2x256xf32>
    %c2_105 = arith.constant 2 : index
    %c1_106 = arith.constant 1 : index
    %230 = memref.load %arg1[%c2_105, %c1_106] : memref<8x36xf32, #tpu.memory_space<smem>>
    %231 = vector.broadcast %230 : f32 to vector<2x256xf32>
    %232 = arith.mulf %231, %221 : vector<2x256xf32>
    %233 = arith.addf %200, %232 : vector<2x256xf32>
    %c3_107 = arith.constant 3 : index
    %c1_108 = arith.constant 1 : index
    %234 = memref.load %arg1[%c3_107, %c1_108] : memref<8x36xf32, #tpu.memory_space<smem>>
    %235 = vector.broadcast %234 : f32 to vector<2x256xf32>
    %236 = arith.mulf %235, %221 : vector<2x256xf32>
    %237 = arith.addf %204, %236 : vector<2x256xf32>
    %c4_109 = arith.constant 4 : index
    %c1_110 = arith.constant 1 : index
    %238 = memref.load %arg1[%c4_109, %c1_110] : memref<8x36xf32, #tpu.memory_space<smem>>
    %239 = vector.broadcast %238 : f32 to vector<2x256xf32>
    %240 = arith.mulf %239, %221 : vector<2x256xf32>
    %241 = arith.addf %208, %240 : vector<2x256xf32>
    %c5_111 = arith.constant 5 : index
    %c1_112 = arith.constant 1 : index
    %242 = memref.load %arg1[%c5_111, %c1_112] : memref<8x36xf32, #tpu.memory_space<smem>>
    %243 = vector.broadcast %242 : f32 to vector<2x256xf32>
    %244 = arith.mulf %243, %221 : vector<2x256xf32>
    %245 = arith.addf %212, %244 : vector<2x256xf32>
    %c6_113 = arith.constant 6 : index
    %c1_114 = arith.constant 1 : index
    %246 = memref.load %arg1[%c6_113, %c1_114] : memref<8x36xf32, #tpu.memory_space<smem>>
    %247 = vector.broadcast %246 : f32 to vector<2x256xf32>
    %248 = arith.mulf %247, %221 : vector<2x256xf32>
    %249 = arith.addf %216, %248 : vector<2x256xf32>
    %c7_115 = arith.constant 7 : index
    %c1_116 = arith.constant 1 : index
    %250 = memref.load %arg1[%c7_115, %c1_116] : memref<8x36xf32, #tpu.memory_space<smem>>
    %251 = vector.broadcast %250 : f32 to vector<2x256xf32>
    %252 = arith.mulf %251, %221 : vector<2x256xf32>
    %253 = arith.addf %220, %252 : vector<2x256xf32>
    %c254_i32_117 = arith.constant 254 : i32
    %254 = tpu.dynamic_rotate %162 by %c254_i32_117 dim 1 : vector<2x256xf32>, i32 -> vector<2x256xf32>
    %c0_118 = arith.constant 0 : index
    %c2_119 = arith.constant 2 : index
    %255 = memref.load %arg1[%c0_118, %c2_119] : memref<8x36xf32, #tpu.memory_space<smem>>
    %256 = vector.broadcast %255 : f32 to vector<2x256xf32>
    %257 = arith.mulf %256, %254 : vector<2x256xf32>
    %258 = arith.addf %225, %257 : vector<2x256xf32>
    %c1_120 = arith.constant 1 : index
    %c2_121 = arith.constant 2 : index
    %259 = memref.load %arg1[%c1_120, %c2_121] : memref<8x36xf32, #tpu.memory_space<smem>>
    %260 = vector.broadcast %259 : f32 to vector<2x256xf32>
    %261 = arith.mulf %260, %254 : vector<2x256xf32>
    %262 = arith.addf %229, %261 : vector<2x256xf32>
    %c2_122 = arith.constant 2 : index
    %c2_123 = arith.constant 2 : index
    %263 = memref.load %arg1[%c2_122, %c2_123] : memref<8x36xf32, #tpu.memory_space<smem>>
    %264 = vector.broadcast %263 : f32 to vector<2x256xf32>
    %265 = arith.mulf %264, %254 : vector<2x256xf32>
    %266 = arith.addf %233, %265 : vector<2x256xf32>
    %c3_124 = arith.constant 3 : index
    %c2_125 = arith.constant 2 : index
    %267 = memref.load %arg1[%c3_124, %c2_125] : memref<8x36xf32, #tpu.memory_space<smem>>
    %268 = vector.broadcast %267 : f32 to vector<2x256xf32>
    %269 = arith.mulf %268, %254 : vector<2x256xf32>
    %270 = arith.addf %237, %269 : vector<2x256xf32>
    %c4_126 = arith.constant 4 : index
    %c2_127 = arith.constant 2 : index
    %271 = memref.load %arg1[%c4_126, %c2_127] : memref<8x36xf32, #tpu.memory_space<smem>>
    %272 = vector.broadcast %271 : f32 to vector<2x256xf32>
    %273 = arith.mulf %272, %254 : vector<2x256xf32>
    %274 = arith.addf %241, %273 : vector<2x256xf32>
    %c5_128 = arith.constant 5 : index
    %c2_129 = arith.constant 2 : index
    %275 = memref.load %arg1[%c5_128, %c2_129] : memref<8x36xf32, #tpu.memory_space<smem>>
    %276 = vector.broadcast %275 : f32 to vector<2x256xf32>
    %277 = arith.mulf %276, %254 : vector<2x256xf32>
    %278 = arith.addf %245, %277 : vector<2x256xf32>
    %c6_130 = arith.constant 6 : index
    %c2_131 = arith.constant 2 : index
    %279 = memref.load %arg1[%c6_130, %c2_131] : memref<8x36xf32, #tpu.memory_space<smem>>
    %280 = vector.broadcast %279 : f32 to vector<2x256xf32>
    %281 = arith.mulf %280, %254 : vector<2x256xf32>
    %282 = arith.addf %249, %281 : vector<2x256xf32>
    %c7_132 = arith.constant 7 : index
    %c2_133 = arith.constant 2 : index
    %283 = memref.load %arg1[%c7_132, %c2_133] : memref<8x36xf32, #tpu.memory_space<smem>>
    %284 = vector.broadcast %283 : f32 to vector<2x256xf32>
    %285 = arith.mulf %284, %254 : vector<2x256xf32>
    %286 = arith.addf %253, %285 : vector<2x256xf32>
    %c240_i32_134 = arith.constant 240 : i32
    %287 = tpu.dynamic_rotate %162 by %c240_i32_134 dim 1 : vector<2x256xf32>, i32 -> vector<2x256xf32>
    %c0_135 = arith.constant 0 : index
    %c3_136 = arith.constant 3 : index
    %288 = memref.load %arg1[%c0_135, %c3_136] : memref<8x36xf32, #tpu.memory_space<smem>>
    %289 = vector.broadcast %288 : f32 to vector<2x256xf32>
    %290 = arith.mulf %289, %287 : vector<2x256xf32>
    %291 = arith.addf %258, %290 : vector<2x256xf32>
    %c1_137 = arith.constant 1 : index
    %c3_138 = arith.constant 3 : index
    %292 = memref.load %arg1[%c1_137, %c3_138] : memref<8x36xf32, #tpu.memory_space<smem>>
    %293 = vector.broadcast %292 : f32 to vector<2x256xf32>
    %294 = arith.mulf %293, %287 : vector<2x256xf32>
    %295 = arith.addf %262, %294 : vector<2x256xf32>
    %c2_139 = arith.constant 2 : index
    %c3_140 = arith.constant 3 : index
    %296 = memref.load %arg1[%c2_139, %c3_140] : memref<8x36xf32, #tpu.memory_space<smem>>
    %297 = vector.broadcast %296 : f32 to vector<2x256xf32>
    %298 = arith.mulf %297, %287 : vector<2x256xf32>
    %299 = arith.addf %266, %298 : vector<2x256xf32>
    %c3_141 = arith.constant 3 : index
    %c3_142 = arith.constant 3 : index
    %300 = memref.load %arg1[%c3_141, %c3_142] : memref<8x36xf32, #tpu.memory_space<smem>>
    %301 = vector.broadcast %300 : f32 to vector<2x256xf32>
    %302 = arith.mulf %301, %287 : vector<2x256xf32>
    %303 = arith.addf %270, %302 : vector<2x256xf32>
    %c4_143 = arith.constant 4 : index
    %c3_144 = arith.constant 3 : index
    %304 = memref.load %arg1[%c4_143, %c3_144] : memref<8x36xf32, #tpu.memory_space<smem>>
    %305 = vector.broadcast %304 : f32 to vector<2x256xf32>
    %306 = arith.mulf %305, %287 : vector<2x256xf32>
    %307 = arith.addf %274, %306 : vector<2x256xf32>
    %c5_145 = arith.constant 5 : index
    %c3_146 = arith.constant 3 : index
    %308 = memref.load %arg1[%c5_145, %c3_146] : memref<8x36xf32, #tpu.memory_space<smem>>
    %309 = vector.broadcast %308 : f32 to vector<2x256xf32>
    %310 = arith.mulf %309, %287 : vector<2x256xf32>
    %311 = arith.addf %278, %310 : vector<2x256xf32>
    %c6_147 = arith.constant 6 : index
    %c3_148 = arith.constant 3 : index
    %312 = memref.load %arg1[%c6_147, %c3_148] : memref<8x36xf32, #tpu.memory_space<smem>>
    %313 = vector.broadcast %312 : f32 to vector<2x256xf32>
    %314 = arith.mulf %313, %287 : vector<2x256xf32>
    %315 = arith.addf %282, %314 : vector<2x256xf32>
    %c7_149 = arith.constant 7 : index
    %c3_150 = arith.constant 3 : index
    %316 = memref.load %arg1[%c7_149, %c3_150] : memref<8x36xf32, #tpu.memory_space<smem>>
    %317 = vector.broadcast %316 : f32 to vector<2x256xf32>
    %318 = arith.mulf %317, %287 : vector<2x256xf32>
    %319 = arith.addf %286, %318 : vector<2x256xf32>
    %c239_i32_151 = arith.constant 239 : i32
    %320 = tpu.dynamic_rotate %162 by %c239_i32_151 dim 1 : vector<2x256xf32>, i32 -> vector<2x256xf32>
    %c0_152 = arith.constant 0 : index
    %c4_153 = arith.constant 4 : index
    %321 = memref.load %arg1[%c0_152, %c4_153] : memref<8x36xf32, #tpu.memory_space<smem>>
    %322 = vector.broadcast %321 : f32 to vector<2x256xf32>
    %323 = arith.mulf %322, %320 : vector<2x256xf32>
    %324 = arith.addf %291, %323 : vector<2x256xf32>
    %c1_154 = arith.constant 1 : index
    %c4_155 = arith.constant 4 : index
    %325 = memref.load %arg1[%c1_154, %c4_155] : memref<8x36xf32, #tpu.memory_space<smem>>
    %326 = vector.broadcast %325 : f32 to vector<2x256xf32>
    %327 = arith.mulf %326, %320 : vector<2x256xf32>
    %328 = arith.addf %295, %327 : vector<2x256xf32>
    %c2_156 = arith.constant 2 : index
    %c4_157 = arith.constant 4 : index
    %329 = memref.load %arg1[%c2_156, %c4_157] : memref<8x36xf32, #tpu.memory_space<smem>>
    %330 = vector.broadcast %329 : f32 to vector<2x256xf32>
    %331 = arith.mulf %330, %320 : vector<2x256xf32>
    %332 = arith.addf %299, %331 : vector<2x256xf32>
    %c3_158 = arith.constant 3 : index
    %c4_159 = arith.constant 4 : index
    %333 = memref.load %arg1[%c3_158, %c4_159] : memref<8x36xf32, #tpu.memory_space<smem>>
    %334 = vector.broadcast %333 : f32 to vector<2x256xf32>
    %335 = arith.mulf %334, %320 : vector<2x256xf32>
    %336 = arith.addf %303, %335 : vector<2x256xf32>
    %c4_160 = arith.constant 4 : index
    %c4_161 = arith.constant 4 : index
    %337 = memref.load %arg1[%c4_160, %c4_161] : memref<8x36xf32, #tpu.memory_space<smem>>
    %338 = vector.broadcast %337 : f32 to vector<2x256xf32>
    %339 = arith.mulf %338, %320 : vector<2x256xf32>
    %340 = arith.addf %307, %339 : vector<2x256xf32>
    %c5_162 = arith.constant 5 : index
    %c4_163 = arith.constant 4 : index
    %341 = memref.load %arg1[%c5_162, %c4_163] : memref<8x36xf32, #tpu.memory_space<smem>>
    %342 = vector.broadcast %341 : f32 to vector<2x256xf32>
    %343 = arith.mulf %342, %320 : vector<2x256xf32>
    %344 = arith.addf %311, %343 : vector<2x256xf32>
    %c6_164 = arith.constant 6 : index
    %c4_165 = arith.constant 4 : index
    %345 = memref.load %arg1[%c6_164, %c4_165] : memref<8x36xf32, #tpu.memory_space<smem>>
    %346 = vector.broadcast %345 : f32 to vector<2x256xf32>
    %347 = arith.mulf %346, %320 : vector<2x256xf32>
    %348 = arith.addf %315, %347 : vector<2x256xf32>
    %c7_166 = arith.constant 7 : index
    %c4_167 = arith.constant 4 : index
    %349 = memref.load %arg1[%c7_166, %c4_167] : memref<8x36xf32, #tpu.memory_space<smem>>
    %350 = vector.broadcast %349 : f32 to vector<2x256xf32>
    %351 = arith.mulf %350, %320 : vector<2x256xf32>
    %352 = arith.addf %319, %351 : vector<2x256xf32>
    %c238_i32_168 = arith.constant 238 : i32
    %353 = tpu.dynamic_rotate %162 by %c238_i32_168 dim 1 : vector<2x256xf32>, i32 -> vector<2x256xf32>
    %c0_169 = arith.constant 0 : index
    %c5_170 = arith.constant 5 : index
    %354 = memref.load %arg1[%c0_169, %c5_170] : memref<8x36xf32, #tpu.memory_space<smem>>
    %355 = vector.broadcast %354 : f32 to vector<2x256xf32>
    %356 = arith.mulf %355, %353 : vector<2x256xf32>
    %357 = arith.addf %324, %356 : vector<2x256xf32>
    %c1_171 = arith.constant 1 : index
    %c5_172 = arith.constant 5 : index
    %358 = memref.load %arg1[%c1_171, %c5_172] : memref<8x36xf32, #tpu.memory_space<smem>>
    %359 = vector.broadcast %358 : f32 to vector<2x256xf32>
    %360 = arith.mulf %359, %353 : vector<2x256xf32>
    %361 = arith.addf %328, %360 : vector<2x256xf32>
    %c2_173 = arith.constant 2 : index
    %c5_174 = arith.constant 5 : index
    %362 = memref.load %arg1[%c2_173, %c5_174] : memref<8x36xf32, #tpu.memory_space<smem>>
    %363 = vector.broadcast %362 : f32 to vector<2x256xf32>
    %364 = arith.mulf %363, %353 : vector<2x256xf32>
    %365 = arith.addf %332, %364 : vector<2x256xf32>
    %c3_175 = arith.constant 3 : index
    %c5_176 = arith.constant 5 : index
    %366 = memref.load %arg1[%c3_175, %c5_176] : memref<8x36xf32, #tpu.memory_space<smem>>
    %367 = vector.broadcast %366 : f32 to vector<2x256xf32>
    %368 = arith.mulf %367, %353 : vector<2x256xf32>
    %369 = arith.addf %336, %368 : vector<2x256xf32>
    %c4_177 = arith.constant 4 : index
    %c5_178 = arith.constant 5 : index
    %370 = memref.load %arg1[%c4_177, %c5_178] : memref<8x36xf32, #tpu.memory_space<smem>>
    %371 = vector.broadcast %370 : f32 to vector<2x256xf32>
    %372 = arith.mulf %371, %353 : vector<2x256xf32>
    %373 = arith.addf %340, %372 : vector<2x256xf32>
    %c5_179 = arith.constant 5 : index
    %c5_180 = arith.constant 5 : index
    %374 = memref.load %arg1[%c5_179, %c5_180] : memref<8x36xf32, #tpu.memory_space<smem>>
    %375 = vector.broadcast %374 : f32 to vector<2x256xf32>
    %376 = arith.mulf %375, %353 : vector<2x256xf32>
    %377 = arith.addf %344, %376 : vector<2x256xf32>
    %c6_181 = arith.constant 6 : index
    %c5_182 = arith.constant 5 : index
    %378 = memref.load %arg1[%c6_181, %c5_182] : memref<8x36xf32, #tpu.memory_space<smem>>
    %379 = vector.broadcast %378 : f32 to vector<2x256xf32>
    %380 = arith.mulf %379, %353 : vector<2x256xf32>
    %381 = arith.addf %348, %380 : vector<2x256xf32>
    %c7_183 = arith.constant 7 : index
    %c5_184 = arith.constant 5 : index
    %382 = memref.load %arg1[%c7_183, %c5_184] : memref<8x36xf32, #tpu.memory_space<smem>>
    %383 = vector.broadcast %382 : f32 to vector<2x256xf32>
    %384 = arith.mulf %383, %353 : vector<2x256xf32>
    %385 = arith.addf %352, %384 : vector<2x256xf32>
    %c224_i32_185 = arith.constant 224 : i32
    %386 = tpu.dynamic_rotate %162 by %c224_i32_185 dim 1 : vector<2x256xf32>, i32 -> vector<2x256xf32>
    %c0_186 = arith.constant 0 : index
    %c6_187 = arith.constant 6 : index
    %387 = memref.load %arg1[%c0_186, %c6_187] : memref<8x36xf32, #tpu.memory_space<smem>>
    %388 = vector.broadcast %387 : f32 to vector<2x256xf32>
    %389 = arith.mulf %388, %386 : vector<2x256xf32>
    %390 = arith.addf %357, %389 : vector<2x256xf32>
    %c1_188 = arith.constant 1 : index
    %c6_189 = arith.constant 6 : index
    %391 = memref.load %arg1[%c1_188, %c6_189] : memref<8x36xf32, #tpu.memory_space<smem>>
    %392 = vector.broadcast %391 : f32 to vector<2x256xf32>
    %393 = arith.mulf %392, %386 : vector<2x256xf32>
    %394 = arith.addf %361, %393 : vector<2x256xf32>
    %c2_190 = arith.constant 2 : index
    %c6_191 = arith.constant 6 : index
    %395 = memref.load %arg1[%c2_190, %c6_191] : memref<8x36xf32, #tpu.memory_space<smem>>
    %396 = vector.broadcast %395 : f32 to vector<2x256xf32>
    %397 = arith.mulf %396, %386 : vector<2x256xf32>
    %398 = arith.addf %365, %397 : vector<2x256xf32>
    %c3_192 = arith.constant 3 : index
    %c6_193 = arith.constant 6 : index
    %399 = memref.load %arg1[%c3_192, %c6_193] : memref<8x36xf32, #tpu.memory_space<smem>>
    %400 = vector.broadcast %399 : f32 to vector<2x256xf32>
    %401 = arith.mulf %400, %386 : vector<2x256xf32>
    %402 = arith.addf %369, %401 : vector<2x256xf32>
    %c4_194 = arith.constant 4 : index
    %c6_195 = arith.constant 6 : index
    %403 = memref.load %arg1[%c4_194, %c6_195] : memref<8x36xf32, #tpu.memory_space<smem>>
    %404 = vector.broadcast %403 : f32 to vector<2x256xf32>
    %405 = arith.mulf %404, %386 : vector<2x256xf32>
    %406 = arith.addf %373, %405 : vector<2x256xf32>
    %c5_196 = arith.constant 5 : index
    %c6_197 = arith.constant 6 : index
    %407 = memref.load %arg1[%c5_196, %c6_197] : memref<8x36xf32, #tpu.memory_space<smem>>
    %408 = vector.broadcast %407 : f32 to vector<2x256xf32>
    %409 = arith.mulf %408, %386 : vector<2x256xf32>
    %410 = arith.addf %377, %409 : vector<2x256xf32>
    %c6_198 = arith.constant 6 : index
    %c6_199 = arith.constant 6 : index
    %411 = memref.load %arg1[%c6_198, %c6_199] : memref<8x36xf32, #tpu.memory_space<smem>>
    %412 = vector.broadcast %411 : f32 to vector<2x256xf32>
    %413 = arith.mulf %412, %386 : vector<2x256xf32>
    %414 = arith.addf %381, %413 : vector<2x256xf32>
    %c7_200 = arith.constant 7 : index
    %c6_201 = arith.constant 6 : index
    %415 = memref.load %arg1[%c7_200, %c6_201] : memref<8x36xf32, #tpu.memory_space<smem>>
    %416 = vector.broadcast %415 : f32 to vector<2x256xf32>
    %417 = arith.mulf %416, %386 : vector<2x256xf32>
    %418 = arith.addf %385, %417 : vector<2x256xf32>
    %c223_i32_202 = arith.constant 223 : i32
    %419 = tpu.dynamic_rotate %162 by %c223_i32_202 dim 1 : vector<2x256xf32>, i32 -> vector<2x256xf32>
    %c0_203 = arith.constant 0 : index
    %c7_204 = arith.constant 7 : index
    %420 = memref.load %arg1[%c0_203, %c7_204] : memref<8x36xf32, #tpu.memory_space<smem>>
    %421 = vector.broadcast %420 : f32 to vector<2x256xf32>
    %422 = arith.mulf %421, %419 : vector<2x256xf32>
    %423 = arith.addf %390, %422 : vector<2x256xf32>
    %c1_205 = arith.constant 1 : index
    %c7_206 = arith.constant 7 : index
    %424 = memref.load %arg1[%c1_205, %c7_206] : memref<8x36xf32, #tpu.memory_space<smem>>
    %425 = vector.broadcast %424 : f32 to vector<2x256xf32>
    %426 = arith.mulf %425, %419 : vector<2x256xf32>
    %427 = arith.addf %394, %426 : vector<2x256xf32>
    %c2_207 = arith.constant 2 : index
    %c7_208 = arith.constant 7 : index
    %428 = memref.load %arg1[%c2_207, %c7_208] : memref<8x36xf32, #tpu.memory_space<smem>>
    %429 = vector.broadcast %428 : f32 to vector<2x256xf32>
    %430 = arith.mulf %429, %419 : vector<2x256xf32>
    %431 = arith.addf %398, %430 : vector<2x256xf32>
    %c3_209 = arith.constant 3 : index
    %c7_210 = arith.constant 7 : index
    %432 = memref.load %arg1[%c3_209, %c7_210] : memref<8x36xf32, #tpu.memory_space<smem>>
    %433 = vector.broadcast %432 : f32 to vector<2x256xf32>
    %434 = arith.mulf %433, %419 : vector<2x256xf32>
    %435 = arith.addf %402, %434 : vector<2x256xf32>
    %c4_211 = arith.constant 4 : index
    %c7_212 = arith.constant 7 : index
    %436 = memref.load %arg1[%c4_211, %c7_212] : memref<8x36xf32, #tpu.memory_space<smem>>
    %437 = vector.broadcast %436 : f32 to vector<2x256xf32>
    %438 = arith.mulf %437, %419 : vector<2x256xf32>
    %439 = arith.addf %406, %438 : vector<2x256xf32>
    %c5_213 = arith.constant 5 : index
    %c7_214 = arith.constant 7 : index
    %440 = memref.load %arg1[%c5_213, %c7_214] : memref<8x36xf32, #tpu.memory_space<smem>>
    %441 = vector.broadcast %440 : f32 to vector<2x256xf32>
    %442 = arith.mulf %441, %419 : vector<2x256xf32>
    %443 = arith.addf %410, %442 : vector<2x256xf32>
    %c6_215 = arith.constant 6 : index
    %c7_216 = arith.constant 7 : index
    %444 = memref.load %arg1[%c6_215, %c7_216] : memref<8x36xf32, #tpu.memory_space<smem>>
    %445 = vector.broadcast %444 : f32 to vector<2x256xf32>
    %446 = arith.mulf %445, %419 : vector<2x256xf32>
    %447 = arith.addf %414, %446 : vector<2x256xf32>
    %c7_217 = arith.constant 7 : index
    %c7_218 = arith.constant 7 : index
    %448 = memref.load %arg1[%c7_217, %c7_218] : memref<8x36xf32, #tpu.memory_space<smem>>
    %449 = vector.broadcast %448 : f32 to vector<2x256xf32>
    %450 = arith.mulf %449, %419 : vector<2x256xf32>
    %451 = arith.addf %418, %450 : vector<2x256xf32>
    %c222_i32_219 = arith.constant 222 : i32
    %452 = tpu.dynamic_rotate %162 by %c222_i32_219 dim 1 : vector<2x256xf32>, i32 -> vector<2x256xf32>
    %c0_220 = arith.constant 0 : index
    %c8_221 = arith.constant 8 : index
    %453 = memref.load %arg1[%c0_220, %c8_221] : memref<8x36xf32, #tpu.memory_space<smem>>
    %454 = vector.broadcast %453 : f32 to vector<2x256xf32>
    %455 = arith.mulf %454, %452 : vector<2x256xf32>
    %456 = arith.addf %423, %455 : vector<2x256xf32>
    %c1_222 = arith.constant 1 : index
    %c8_223 = arith.constant 8 : index
    %457 = memref.load %arg1[%c1_222, %c8_223] : memref<8x36xf32, #tpu.memory_space<smem>>
    %458 = vector.broadcast %457 : f32 to vector<2x256xf32>
    %459 = arith.mulf %458, %452 : vector<2x256xf32>
    %460 = arith.addf %427, %459 : vector<2x256xf32>
    %c2_224 = arith.constant 2 : index
    %c8_225 = arith.constant 8 : index
    %461 = memref.load %arg1[%c2_224, %c8_225] : memref<8x36xf32, #tpu.memory_space<smem>>
    %462 = vector.broadcast %461 : f32 to vector<2x256xf32>
    %463 = arith.mulf %462, %452 : vector<2x256xf32>
    %464 = arith.addf %431, %463 : vector<2x256xf32>
    %c3_226 = arith.constant 3 : index
    %c8_227 = arith.constant 8 : index
    %465 = memref.load %arg1[%c3_226, %c8_227] : memref<8x36xf32, #tpu.memory_space<smem>>
    %466 = vector.broadcast %465 : f32 to vector<2x256xf32>
    %467 = arith.mulf %466, %452 : vector<2x256xf32>
    %468 = arith.addf %435, %467 : vector<2x256xf32>
    %c4_228 = arith.constant 4 : index
    %c8_229 = arith.constant 8 : index
    %469 = memref.load %arg1[%c4_228, %c8_229] : memref<8x36xf32, #tpu.memory_space<smem>>
    %470 = vector.broadcast %469 : f32 to vector<2x256xf32>
    %471 = arith.mulf %470, %452 : vector<2x256xf32>
    %472 = arith.addf %439, %471 : vector<2x256xf32>
    %c5_230 = arith.constant 5 : index
    %c8_231 = arith.constant 8 : index
    %473 = memref.load %arg1[%c5_230, %c8_231] : memref<8x36xf32, #tpu.memory_space<smem>>
    %474 = vector.broadcast %473 : f32 to vector<2x256xf32>
    %475 = arith.mulf %474, %452 : vector<2x256xf32>
    %476 = arith.addf %443, %475 : vector<2x256xf32>
    %c6_232 = arith.constant 6 : index
    %c8_233 = arith.constant 8 : index
    %477 = memref.load %arg1[%c6_232, %c8_233] : memref<8x36xf32, #tpu.memory_space<smem>>
    %478 = vector.broadcast %477 : f32 to vector<2x256xf32>
    %479 = arith.mulf %478, %452 : vector<2x256xf32>
    %480 = arith.addf %447, %479 : vector<2x256xf32>
    %c7_234 = arith.constant 7 : index
    %c8_235 = arith.constant 8 : index
    %481 = memref.load %arg1[%c7_234, %c8_235] : memref<8x36xf32, #tpu.memory_space<smem>>
    %482 = vector.broadcast %481 : f32 to vector<2x256xf32>
    %483 = arith.mulf %482, %452 : vector<2x256xf32>
    %484 = arith.addf %451, %483 : vector<2x256xf32>
    %c0_236 = arith.constant 0 : index
    %c9 = arith.constant 9 : index
    %485 = memref.load %arg1[%c0_236, %c9] : memref<8x36xf32, #tpu.memory_space<smem>>
    %486 = vector.broadcast %485 : f32 to vector<2x256xf32>
    %487 = arith.mulf %486, %168 : vector<2x256xf32>
    %488 = arith.addf %456, %487 : vector<2x256xf32>
    %c1_237 = arith.constant 1 : index
    %c9_238 = arith.constant 9 : index
    %489 = memref.load %arg1[%c1_237, %c9_238] : memref<8x36xf32, #tpu.memory_space<smem>>
    %490 = vector.broadcast %489 : f32 to vector<2x256xf32>
    %491 = arith.mulf %490, %168 : vector<2x256xf32>
    %492 = arith.addf %460, %491 : vector<2x256xf32>
    %c2_239 = arith.constant 2 : index
    %c9_240 = arith.constant 9 : index
    %493 = memref.load %arg1[%c2_239, %c9_240] : memref<8x36xf32, #tpu.memory_space<smem>>
    %494 = vector.broadcast %493 : f32 to vector<2x256xf32>
    %495 = arith.mulf %494, %168 : vector<2x256xf32>
    %496 = arith.addf %464, %495 : vector<2x256xf32>
    %c3_241 = arith.constant 3 : index
    %c9_242 = arith.constant 9 : index
    %497 = memref.load %arg1[%c3_241, %c9_242] : memref<8x36xf32, #tpu.memory_space<smem>>
    %498 = vector.broadcast %497 : f32 to vector<2x256xf32>
    %499 = arith.mulf %498, %168 : vector<2x256xf32>
    %500 = arith.addf %468, %499 : vector<2x256xf32>
    %c4_243 = arith.constant 4 : index
    %c9_244 = arith.constant 9 : index
    %501 = memref.load %arg1[%c4_243, %c9_244] : memref<8x36xf32, #tpu.memory_space<smem>>
    %502 = vector.broadcast %501 : f32 to vector<2x256xf32>
    %503 = arith.mulf %502, %168 : vector<2x256xf32>
    %504 = arith.addf %472, %503 : vector<2x256xf32>
    %c5_245 = arith.constant 5 : index
    %c9_246 = arith.constant 9 : index
    %505 = memref.load %arg1[%c5_245, %c9_246] : memref<8x36xf32, #tpu.memory_space<smem>>
    %506 = vector.broadcast %505 : f32 to vector<2x256xf32>
    %507 = arith.mulf %506, %168 : vector<2x256xf32>
    %508 = arith.addf %476, %507 : vector<2x256xf32>
    %c6_247 = arith.constant 6 : index
    %c9_248 = arith.constant 9 : index
    %509 = memref.load %arg1[%c6_247, %c9_248] : memref<8x36xf32, #tpu.memory_space<smem>>
    %510 = vector.broadcast %509 : f32 to vector<2x256xf32>
    %511 = arith.mulf %510, %168 : vector<2x256xf32>
    %512 = arith.addf %480, %511 : vector<2x256xf32>
    %c7_249 = arith.constant 7 : index
    %c9_250 = arith.constant 9 : index
    %513 = memref.load %arg1[%c7_249, %c9_250] : memref<8x36xf32, #tpu.memory_space<smem>>
    %514 = vector.broadcast %513 : f32 to vector<2x256xf32>
    %515 = arith.mulf %514, %168 : vector<2x256xf32>
    %516 = arith.addf %484, %515 : vector<2x256xf32>
    %c255_i32_251 = arith.constant 255 : i32
    %517 = tpu.dynamic_rotate %168 by %c255_i32_251 dim 1 : vector<2x256xf32>, i32 -> vector<2x256xf32>
    %c0_252 = arith.constant 0 : index
    %c10 = arith.constant 10 : index
    %518 = memref.load %arg1[%c0_252, %c10] : memref<8x36xf32, #tpu.memory_space<smem>>
    %519 = vector.broadcast %518 : f32 to vector<2x256xf32>
    %520 = arith.mulf %519, %517 : vector<2x256xf32>
    %521 = arith.addf %488, %520 : vector<2x256xf32>
    %c1_253 = arith.constant 1 : index
    %c10_254 = arith.constant 10 : index
    %522 = memref.load %arg1[%c1_253, %c10_254] : memref<8x36xf32, #tpu.memory_space<smem>>
    %523 = vector.broadcast %522 : f32 to vector<2x256xf32>
    %524 = arith.mulf %523, %517 : vector<2x256xf32>
    %525 = arith.addf %492, %524 : vector<2x256xf32>
    %c2_255 = arith.constant 2 : index
    %c10_256 = arith.constant 10 : index
    %526 = memref.load %arg1[%c2_255, %c10_256] : memref<8x36xf32, #tpu.memory_space<smem>>
    %527 = vector.broadcast %526 : f32 to vector<2x256xf32>
    %528 = arith.mulf %527, %517 : vector<2x256xf32>
    %529 = arith.addf %496, %528 : vector<2x256xf32>
    %c3_257 = arith.constant 3 : index
    %c10_258 = arith.constant 10 : index
    %530 = memref.load %arg1[%c3_257, %c10_258] : memref<8x36xf32, #tpu.memory_space<smem>>
    %531 = vector.broadcast %530 : f32 to vector<2x256xf32>
    %532 = arith.mulf %531, %517 : vector<2x256xf32>
    %533 = arith.addf %500, %532 : vector<2x256xf32>
    %c4_259 = arith.constant 4 : index
    %c10_260 = arith.constant 10 : index
    %534 = memref.load %arg1[%c4_259, %c10_260] : memref<8x36xf32, #tpu.memory_space<smem>>
    %535 = vector.broadcast %534 : f32 to vector<2x256xf32>
    %536 = arith.mulf %535, %517 : vector<2x256xf32>
    %537 = arith.addf %504, %536 : vector<2x256xf32>
    %c5_261 = arith.constant 5 : index
    %c10_262 = arith.constant 10 : index
    %538 = memref.load %arg1[%c5_261, %c10_262] : memref<8x36xf32, #tpu.memory_space<smem>>
    %539 = vector.broadcast %538 : f32 to vector<2x256xf32>
    %540 = arith.mulf %539, %517 : vector<2x256xf32>
    %541 = arith.addf %508, %540 : vector<2x256xf32>
    %c6_263 = arith.constant 6 : index
    %c10_264 = arith.constant 10 : index
    %542 = memref.load %arg1[%c6_263, %c10_264] : memref<8x36xf32, #tpu.memory_space<smem>>
    %543 = vector.broadcast %542 : f32 to vector<2x256xf32>
    %544 = arith.mulf %543, %517 : vector<2x256xf32>
    %545 = arith.addf %512, %544 : vector<2x256xf32>
    %c7_265 = arith.constant 7 : index
    %c10_266 = arith.constant 10 : index
    %546 = memref.load %arg1[%c7_265, %c10_266] : memref<8x36xf32, #tpu.memory_space<smem>>
    %547 = vector.broadcast %546 : f32 to vector<2x256xf32>
    %548 = arith.mulf %547, %517 : vector<2x256xf32>
    %549 = arith.addf %516, %548 : vector<2x256xf32>
    %c254_i32_267 = arith.constant 254 : i32
    %550 = tpu.dynamic_rotate %168 by %c254_i32_267 dim 1 : vector<2x256xf32>, i32 -> vector<2x256xf32>
    %c0_268 = arith.constant 0 : index
    %c11 = arith.constant 11 : index
    %551 = memref.load %arg1[%c0_268, %c11] : memref<8x36xf32, #tpu.memory_space<smem>>
    %552 = vector.broadcast %551 : f32 to vector<2x256xf32>
    %553 = arith.mulf %552, %550 : vector<2x256xf32>
    %554 = arith.addf %521, %553 : vector<2x256xf32>
    %c1_269 = arith.constant 1 : index
    %c11_270 = arith.constant 11 : index
    %555 = memref.load %arg1[%c1_269, %c11_270] : memref<8x36xf32, #tpu.memory_space<smem>>
    %556 = vector.broadcast %555 : f32 to vector<2x256xf32>
    %557 = arith.mulf %556, %550 : vector<2x256xf32>
    %558 = arith.addf %525, %557 : vector<2x256xf32>
    %c2_271 = arith.constant 2 : index
    %c11_272 = arith.constant 11 : index
    %559 = memref.load %arg1[%c2_271, %c11_272] : memref<8x36xf32, #tpu.memory_space<smem>>
    %560 = vector.broadcast %559 : f32 to vector<2x256xf32>
    %561 = arith.mulf %560, %550 : vector<2x256xf32>
    %562 = arith.addf %529, %561 : vector<2x256xf32>
    %c3_273 = arith.constant 3 : index
    %c11_274 = arith.constant 11 : index
    %563 = memref.load %arg1[%c3_273, %c11_274] : memref<8x36xf32, #tpu.memory_space<smem>>
    %564 = vector.broadcast %563 : f32 to vector<2x256xf32>
    %565 = arith.mulf %564, %550 : vector<2x256xf32>
    %566 = arith.addf %533, %565 : vector<2x256xf32>
    %c4_275 = arith.constant 4 : index
    %c11_276 = arith.constant 11 : index
    %567 = memref.load %arg1[%c4_275, %c11_276] : memref<8x36xf32, #tpu.memory_space<smem>>
    %568 = vector.broadcast %567 : f32 to vector<2x256xf32>
    %569 = arith.mulf %568, %550 : vector<2x256xf32>
    %570 = arith.addf %537, %569 : vector<2x256xf32>
    %c5_277 = arith.constant 5 : index
    %c11_278 = arith.constant 11 : index
    %571 = memref.load %arg1[%c5_277, %c11_278] : memref<8x36xf32, #tpu.memory_space<smem>>
    %572 = vector.broadcast %571 : f32 to vector<2x256xf32>
    %573 = arith.mulf %572, %550 : vector<2x256xf32>
    %574 = arith.addf %541, %573 : vector<2x256xf32>
    %c6_279 = arith.constant 6 : index
    %c11_280 = arith.constant 11 : index
    %575 = memref.load %arg1[%c6_279, %c11_280] : memref<8x36xf32, #tpu.memory_space<smem>>
    %576 = vector.broadcast %575 : f32 to vector<2x256xf32>
    %577 = arith.mulf %576, %550 : vector<2x256xf32>
    %578 = arith.addf %545, %577 : vector<2x256xf32>
    %c7_281 = arith.constant 7 : index
    %c11_282 = arith.constant 11 : index
    %579 = memref.load %arg1[%c7_281, %c11_282] : memref<8x36xf32, #tpu.memory_space<smem>>
    %580 = vector.broadcast %579 : f32 to vector<2x256xf32>
    %581 = arith.mulf %580, %550 : vector<2x256xf32>
    %582 = arith.addf %549, %581 : vector<2x256xf32>
    %c240_i32_283 = arith.constant 240 : i32
    %583 = tpu.dynamic_rotate %168 by %c240_i32_283 dim 1 : vector<2x256xf32>, i32 -> vector<2x256xf32>
    %c0_284 = arith.constant 0 : index
    %c12 = arith.constant 12 : index
    %584 = memref.load %arg1[%c0_284, %c12] : memref<8x36xf32, #tpu.memory_space<smem>>
    %585 = vector.broadcast %584 : f32 to vector<2x256xf32>
    %586 = arith.mulf %585, %583 : vector<2x256xf32>
    %587 = arith.addf %554, %586 : vector<2x256xf32>
    %c1_285 = arith.constant 1 : index
    %c12_286 = arith.constant 12 : index
    %588 = memref.load %arg1[%c1_285, %c12_286] : memref<8x36xf32, #tpu.memory_space<smem>>
    %589 = vector.broadcast %588 : f32 to vector<2x256xf32>
    %590 = arith.mulf %589, %583 : vector<2x256xf32>
    %591 = arith.addf %558, %590 : vector<2x256xf32>
    %c2_287 = arith.constant 2 : index
    %c12_288 = arith.constant 12 : index
    %592 = memref.load %arg1[%c2_287, %c12_288] : memref<8x36xf32, #tpu.memory_space<smem>>
    %593 = vector.broadcast %592 : f32 to vector<2x256xf32>
    %594 = arith.mulf %593, %583 : vector<2x256xf32>
    %595 = arith.addf %562, %594 : vector<2x256xf32>
    %c3_289 = arith.constant 3 : index
    %c12_290 = arith.constant 12 : index
    %596 = memref.load %arg1[%c3_289, %c12_290] : memref<8x36xf32, #tpu.memory_space<smem>>
    %597 = vector.broadcast %596 : f32 to vector<2x256xf32>
    %598 = arith.mulf %597, %583 : vector<2x256xf32>
    %599 = arith.addf %566, %598 : vector<2x256xf32>
    %c4_291 = arith.constant 4 : index
    %c12_292 = arith.constant 12 : index
    %600 = memref.load %arg1[%c4_291, %c12_292] : memref<8x36xf32, #tpu.memory_space<smem>>
    %601 = vector.broadcast %600 : f32 to vector<2x256xf32>
    %602 = arith.mulf %601, %583 : vector<2x256xf32>
    %603 = arith.addf %570, %602 : vector<2x256xf32>
    %c5_293 = arith.constant 5 : index
    %c12_294 = arith.constant 12 : index
    %604 = memref.load %arg1[%c5_293, %c12_294] : memref<8x36xf32, #tpu.memory_space<smem>>
    %605 = vector.broadcast %604 : f32 to vector<2x256xf32>
    %606 = arith.mulf %605, %583 : vector<2x256xf32>
    %607 = arith.addf %574, %606 : vector<2x256xf32>
    %c6_295 = arith.constant 6 : index
    %c12_296 = arith.constant 12 : index
    %608 = memref.load %arg1[%c6_295, %c12_296] : memref<8x36xf32, #tpu.memory_space<smem>>
    %609 = vector.broadcast %608 : f32 to vector<2x256xf32>
    %610 = arith.mulf %609, %583 : vector<2x256xf32>
    %611 = arith.addf %578, %610 : vector<2x256xf32>
    %c7_297 = arith.constant 7 : index
    %c12_298 = arith.constant 12 : index
    %612 = memref.load %arg1[%c7_297, %c12_298] : memref<8x36xf32, #tpu.memory_space<smem>>
    %613 = vector.broadcast %612 : f32 to vector<2x256xf32>
    %614 = arith.mulf %613, %583 : vector<2x256xf32>
    %615 = arith.addf %582, %614 : vector<2x256xf32>
    %c239_i32_299 = arith.constant 239 : i32
    %616 = tpu.dynamic_rotate %168 by %c239_i32_299 dim 1 : vector<2x256xf32>, i32 -> vector<2x256xf32>
    %c0_300 = arith.constant 0 : index
    %c13 = arith.constant 13 : index
    %617 = memref.load %arg1[%c0_300, %c13] : memref<8x36xf32, #tpu.memory_space<smem>>
    %618 = vector.broadcast %617 : f32 to vector<2x256xf32>
    %619 = arith.mulf %618, %616 : vector<2x256xf32>
    %620 = arith.addf %587, %619 : vector<2x256xf32>
    %c1_301 = arith.constant 1 : index
    %c13_302 = arith.constant 13 : index
    %621 = memref.load %arg1[%c1_301, %c13_302] : memref<8x36xf32, #tpu.memory_space<smem>>
    %622 = vector.broadcast %621 : f32 to vector<2x256xf32>
    %623 = arith.mulf %622, %616 : vector<2x256xf32>
    %624 = arith.addf %591, %623 : vector<2x256xf32>
    %c2_303 = arith.constant 2 : index
    %c13_304 = arith.constant 13 : index
    %625 = memref.load %arg1[%c2_303, %c13_304] : memref<8x36xf32, #tpu.memory_space<smem>>
    %626 = vector.broadcast %625 : f32 to vector<2x256xf32>
    %627 = arith.mulf %626, %616 : vector<2x256xf32>
    %628 = arith.addf %595, %627 : vector<2x256xf32>
    %c3_305 = arith.constant 3 : index
    %c13_306 = arith.constant 13 : index
    %629 = memref.load %arg1[%c3_305, %c13_306] : memref<8x36xf32, #tpu.memory_space<smem>>
    %630 = vector.broadcast %629 : f32 to vector<2x256xf32>
    %631 = arith.mulf %630, %616 : vector<2x256xf32>
    %632 = arith.addf %599, %631 : vector<2x256xf32>
    %c4_307 = arith.constant 4 : index
    %c13_308 = arith.constant 13 : index
    %633 = memref.load %arg1[%c4_307, %c13_308] : memref<8x36xf32, #tpu.memory_space<smem>>
    %634 = vector.broadcast %633 : f32 to vector<2x256xf32>
    %635 = arith.mulf %634, %616 : vector<2x256xf32>
    %636 = arith.addf %603, %635 : vector<2x256xf32>
    %c5_309 = arith.constant 5 : index
    %c13_310 = arith.constant 13 : index
    %637 = memref.load %arg1[%c5_309, %c13_310] : memref<8x36xf32, #tpu.memory_space<smem>>
    %638 = vector.broadcast %637 : f32 to vector<2x256xf32>
    %639 = arith.mulf %638, %616 : vector<2x256xf32>
    %640 = arith.addf %607, %639 : vector<2x256xf32>
    %c6_311 = arith.constant 6 : index
    %c13_312 = arith.constant 13 : index
    %641 = memref.load %arg1[%c6_311, %c13_312] : memref<8x36xf32, #tpu.memory_space<smem>>
    %642 = vector.broadcast %641 : f32 to vector<2x256xf32>
    %643 = arith.mulf %642, %616 : vector<2x256xf32>
    %644 = arith.addf %611, %643 : vector<2x256xf32>
    %c7_313 = arith.constant 7 : index
    %c13_314 = arith.constant 13 : index
    %645 = memref.load %arg1[%c7_313, %c13_314] : memref<8x36xf32, #tpu.memory_space<smem>>
    %646 = vector.broadcast %645 : f32 to vector<2x256xf32>
    %647 = arith.mulf %646, %616 : vector<2x256xf32>
    %648 = arith.addf %615, %647 : vector<2x256xf32>
    %c238_i32_315 = arith.constant 238 : i32
    %649 = tpu.dynamic_rotate %168 by %c238_i32_315 dim 1 : vector<2x256xf32>, i32 -> vector<2x256xf32>
    %c0_316 = arith.constant 0 : index
    %c14 = arith.constant 14 : index
    %650 = memref.load %arg1[%c0_316, %c14] : memref<8x36xf32, #tpu.memory_space<smem>>
    %651 = vector.broadcast %650 : f32 to vector<2x256xf32>
    %652 = arith.mulf %651, %649 : vector<2x256xf32>
    %653 = arith.addf %620, %652 : vector<2x256xf32>
    %c1_317 = arith.constant 1 : index
    %c14_318 = arith.constant 14 : index
    %654 = memref.load %arg1[%c1_317, %c14_318] : memref<8x36xf32, #tpu.memory_space<smem>>
    %655 = vector.broadcast %654 : f32 to vector<2x256xf32>
    %656 = arith.mulf %655, %649 : vector<2x256xf32>
    %657 = arith.addf %624, %656 : vector<2x256xf32>
    %c2_319 = arith.constant 2 : index
    %c14_320 = arith.constant 14 : index
    %658 = memref.load %arg1[%c2_319, %c14_320] : memref<8x36xf32, #tpu.memory_space<smem>>
    %659 = vector.broadcast %658 : f32 to vector<2x256xf32>
    %660 = arith.mulf %659, %649 : vector<2x256xf32>
    %661 = arith.addf %628, %660 : vector<2x256xf32>
    %c3_321 = arith.constant 3 : index
    %c14_322 = arith.constant 14 : index
    %662 = memref.load %arg1[%c3_321, %c14_322] : memref<8x36xf32, #tpu.memory_space<smem>>
    %663 = vector.broadcast %662 : f32 to vector<2x256xf32>
    %664 = arith.mulf %663, %649 : vector<2x256xf32>
    %665 = arith.addf %632, %664 : vector<2x256xf32>
    %c4_323 = arith.constant 4 : index
    %c14_324 = arith.constant 14 : index
    %666 = memref.load %arg1[%c4_323, %c14_324] : memref<8x36xf32, #tpu.memory_space<smem>>
    %667 = vector.broadcast %666 : f32 to vector<2x256xf32>
    %668 = arith.mulf %667, %649 : vector<2x256xf32>
    %669 = arith.addf %636, %668 : vector<2x256xf32>
    %c5_325 = arith.constant 5 : index
    %c14_326 = arith.constant 14 : index
    %670 = memref.load %arg1[%c5_325, %c14_326] : memref<8x36xf32, #tpu.memory_space<smem>>
    %671 = vector.broadcast %670 : f32 to vector<2x256xf32>
    %672 = arith.mulf %671, %649 : vector<2x256xf32>
    %673 = arith.addf %640, %672 : vector<2x256xf32>
    %c6_327 = arith.constant 6 : index
    %c14_328 = arith.constant 14 : index
    %674 = memref.load %arg1[%c6_327, %c14_328] : memref<8x36xf32, #tpu.memory_space<smem>>
    %675 = vector.broadcast %674 : f32 to vector<2x256xf32>
    %676 = arith.mulf %675, %649 : vector<2x256xf32>
    %677 = arith.addf %644, %676 : vector<2x256xf32>
    %c7_329 = arith.constant 7 : index
    %c14_330 = arith.constant 14 : index
    %678 = memref.load %arg1[%c7_329, %c14_330] : memref<8x36xf32, #tpu.memory_space<smem>>
    %679 = vector.broadcast %678 : f32 to vector<2x256xf32>
    %680 = arith.mulf %679, %649 : vector<2x256xf32>
    %681 = arith.addf %648, %680 : vector<2x256xf32>
    %c224_i32_331 = arith.constant 224 : i32
    %682 = tpu.dynamic_rotate %168 by %c224_i32_331 dim 1 : vector<2x256xf32>, i32 -> vector<2x256xf32>
    %c0_332 = arith.constant 0 : index
    %c15 = arith.constant 15 : index
    %683 = memref.load %arg1[%c0_332, %c15] : memref<8x36xf32, #tpu.memory_space<smem>>
    %684 = vector.broadcast %683 : f32 to vector<2x256xf32>
    %685 = arith.mulf %684, %682 : vector<2x256xf32>
    %686 = arith.addf %653, %685 : vector<2x256xf32>
    %c1_333 = arith.constant 1 : index
    %c15_334 = arith.constant 15 : index
    %687 = memref.load %arg1[%c1_333, %c15_334] : memref<8x36xf32, #tpu.memory_space<smem>>
    %688 = vector.broadcast %687 : f32 to vector<2x256xf32>
    %689 = arith.mulf %688, %682 : vector<2x256xf32>
    %690 = arith.addf %657, %689 : vector<2x256xf32>
    %c2_335 = arith.constant 2 : index
    %c15_336 = arith.constant 15 : index
    %691 = memref.load %arg1[%c2_335, %c15_336] : memref<8x36xf32, #tpu.memory_space<smem>>
    %692 = vector.broadcast %691 : f32 to vector<2x256xf32>
    %693 = arith.mulf %692, %682 : vector<2x256xf32>
    %694 = arith.addf %661, %693 : vector<2x256xf32>
    %c3_337 = arith.constant 3 : index
    %c15_338 = arith.constant 15 : index
    %695 = memref.load %arg1[%c3_337, %c15_338] : memref<8x36xf32, #tpu.memory_space<smem>>
    %696 = vector.broadcast %695 : f32 to vector<2x256xf32>
    %697 = arith.mulf %696, %682 : vector<2x256xf32>
    %698 = arith.addf %665, %697 : vector<2x256xf32>
    %c4_339 = arith.constant 4 : index
    %c15_340 = arith.constant 15 : index
    %699 = memref.load %arg1[%c4_339, %c15_340] : memref<8x36xf32, #tpu.memory_space<smem>>
    %700 = vector.broadcast %699 : f32 to vector<2x256xf32>
    %701 = arith.mulf %700, %682 : vector<2x256xf32>
    %702 = arith.addf %669, %701 : vector<2x256xf32>
    %c5_341 = arith.constant 5 : index
    %c15_342 = arith.constant 15 : index
    %703 = memref.load %arg1[%c5_341, %c15_342] : memref<8x36xf32, #tpu.memory_space<smem>>
    %704 = vector.broadcast %703 : f32 to vector<2x256xf32>
    %705 = arith.mulf %704, %682 : vector<2x256xf32>
    %706 = arith.addf %673, %705 : vector<2x256xf32>
    %c6_343 = arith.constant 6 : index
    %c15_344 = arith.constant 15 : index
    %707 = memref.load %arg1[%c6_343, %c15_344] : memref<8x36xf32, #tpu.memory_space<smem>>
    %708 = vector.broadcast %707 : f32 to vector<2x256xf32>
    %709 = arith.mulf %708, %682 : vector<2x256xf32>
    %710 = arith.addf %677, %709 : vector<2x256xf32>
    %c7_345 = arith.constant 7 : index
    %c15_346 = arith.constant 15 : index
    %711 = memref.load %arg1[%c7_345, %c15_346] : memref<8x36xf32, #tpu.memory_space<smem>>
    %712 = vector.broadcast %711 : f32 to vector<2x256xf32>
    %713 = arith.mulf %712, %682 : vector<2x256xf32>
    %714 = arith.addf %681, %713 : vector<2x256xf32>
    %c223_i32_347 = arith.constant 223 : i32
    %715 = tpu.dynamic_rotate %168 by %c223_i32_347 dim 1 : vector<2x256xf32>, i32 -> vector<2x256xf32>
    %c0_348 = arith.constant 0 : index
    %c16 = arith.constant 16 : index
    %716 = memref.load %arg1[%c0_348, %c16] : memref<8x36xf32, #tpu.memory_space<smem>>
    %717 = vector.broadcast %716 : f32 to vector<2x256xf32>
    %718 = arith.mulf %717, %715 : vector<2x256xf32>
    %719 = arith.addf %686, %718 : vector<2x256xf32>
    %c1_349 = arith.constant 1 : index
    %c16_350 = arith.constant 16 : index
    %720 = memref.load %arg1[%c1_349, %c16_350] : memref<8x36xf32, #tpu.memory_space<smem>>
    %721 = vector.broadcast %720 : f32 to vector<2x256xf32>
    %722 = arith.mulf %721, %715 : vector<2x256xf32>
    %723 = arith.addf %690, %722 : vector<2x256xf32>
    %c2_351 = arith.constant 2 : index
    %c16_352 = arith.constant 16 : index
    %724 = memref.load %arg1[%c2_351, %c16_352] : memref<8x36xf32, #tpu.memory_space<smem>>
    %725 = vector.broadcast %724 : f32 to vector<2x256xf32>
    %726 = arith.mulf %725, %715 : vector<2x256xf32>
    %727 = arith.addf %694, %726 : vector<2x256xf32>
    %c3_353 = arith.constant 3 : index
    %c16_354 = arith.constant 16 : index
    %728 = memref.load %arg1[%c3_353, %c16_354] : memref<8x36xf32, #tpu.memory_space<smem>>
    %729 = vector.broadcast %728 : f32 to vector<2x256xf32>
    %730 = arith.mulf %729, %715 : vector<2x256xf32>
    %731 = arith.addf %698, %730 : vector<2x256xf32>
    %c4_355 = arith.constant 4 : index
    %c16_356 = arith.constant 16 : index
    %732 = memref.load %arg1[%c4_355, %c16_356] : memref<8x36xf32, #tpu.memory_space<smem>>
    %733 = vector.broadcast %732 : f32 to vector<2x256xf32>
    %734 = arith.mulf %733, %715 : vector<2x256xf32>
    %735 = arith.addf %702, %734 : vector<2x256xf32>
    %c5_357 = arith.constant 5 : index
    %c16_358 = arith.constant 16 : index
    %736 = memref.load %arg1[%c5_357, %c16_358] : memref<8x36xf32, #tpu.memory_space<smem>>
    %737 = vector.broadcast %736 : f32 to vector<2x256xf32>
    %738 = arith.mulf %737, %715 : vector<2x256xf32>
    %739 = arith.addf %706, %738 : vector<2x256xf32>
    %c6_359 = arith.constant 6 : index
    %c16_360 = arith.constant 16 : index
    %740 = memref.load %arg1[%c6_359, %c16_360] : memref<8x36xf32, #tpu.memory_space<smem>>
    %741 = vector.broadcast %740 : f32 to vector<2x256xf32>
    %742 = arith.mulf %741, %715 : vector<2x256xf32>
    %743 = arith.addf %710, %742 : vector<2x256xf32>
    %c7_361 = arith.constant 7 : index
    %c16_362 = arith.constant 16 : index
    %744 = memref.load %arg1[%c7_361, %c16_362] : memref<8x36xf32, #tpu.memory_space<smem>>
    %745 = vector.broadcast %744 : f32 to vector<2x256xf32>
    %746 = arith.mulf %745, %715 : vector<2x256xf32>
    %747 = arith.addf %714, %746 : vector<2x256xf32>
    %c222_i32_363 = arith.constant 222 : i32
    %748 = tpu.dynamic_rotate %168 by %c222_i32_363 dim 1 : vector<2x256xf32>, i32 -> vector<2x256xf32>
    %c0_364 = arith.constant 0 : index
    %c17 = arith.constant 17 : index
    %749 = memref.load %arg1[%c0_364, %c17] : memref<8x36xf32, #tpu.memory_space<smem>>
    %750 = vector.broadcast %749 : f32 to vector<2x256xf32>
    %751 = arith.mulf %750, %748 : vector<2x256xf32>
    %752 = arith.addf %719, %751 : vector<2x256xf32>
    %c1_365 = arith.constant 1 : index
    %c17_366 = arith.constant 17 : index
    %753 = memref.load %arg1[%c1_365, %c17_366] : memref<8x36xf32, #tpu.memory_space<smem>>
    %754 = vector.broadcast %753 : f32 to vector<2x256xf32>
    %755 = arith.mulf %754, %748 : vector<2x256xf32>
    %756 = arith.addf %723, %755 : vector<2x256xf32>
    %c2_367 = arith.constant 2 : index
    %c17_368 = arith.constant 17 : index
    %757 = memref.load %arg1[%c2_367, %c17_368] : memref<8x36xf32, #tpu.memory_space<smem>>
    %758 = vector.broadcast %757 : f32 to vector<2x256xf32>
    %759 = arith.mulf %758, %748 : vector<2x256xf32>
    %760 = arith.addf %727, %759 : vector<2x256xf32>
    %c3_369 = arith.constant 3 : index
    %c17_370 = arith.constant 17 : index
    %761 = memref.load %arg1[%c3_369, %c17_370] : memref<8x36xf32, #tpu.memory_space<smem>>
    %762 = vector.broadcast %761 : f32 to vector<2x256xf32>
    %763 = arith.mulf %762, %748 : vector<2x256xf32>
    %764 = arith.addf %731, %763 : vector<2x256xf32>
    %c4_371 = arith.constant 4 : index
    %c17_372 = arith.constant 17 : index
    %765 = memref.load %arg1[%c4_371, %c17_372] : memref<8x36xf32, #tpu.memory_space<smem>>
    %766 = vector.broadcast %765 : f32 to vector<2x256xf32>
    %767 = arith.mulf %766, %748 : vector<2x256xf32>
    %768 = arith.addf %735, %767 : vector<2x256xf32>
    %c5_373 = arith.constant 5 : index
    %c17_374 = arith.constant 17 : index
    %769 = memref.load %arg1[%c5_373, %c17_374] : memref<8x36xf32, #tpu.memory_space<smem>>
    %770 = vector.broadcast %769 : f32 to vector<2x256xf32>
    %771 = arith.mulf %770, %748 : vector<2x256xf32>
    %772 = arith.addf %739, %771 : vector<2x256xf32>
    %c6_375 = arith.constant 6 : index
    %c17_376 = arith.constant 17 : index
    %773 = memref.load %arg1[%c6_375, %c17_376] : memref<8x36xf32, #tpu.memory_space<smem>>
    %774 = vector.broadcast %773 : f32 to vector<2x256xf32>
    %775 = arith.mulf %774, %748 : vector<2x256xf32>
    %776 = arith.addf %743, %775 : vector<2x256xf32>
    %c7_377 = arith.constant 7 : index
    %c17_378 = arith.constant 17 : index
    %777 = memref.load %arg1[%c7_377, %c17_378] : memref<8x36xf32, #tpu.memory_space<smem>>
    %778 = vector.broadcast %777 : f32 to vector<2x256xf32>
    %779 = arith.mulf %778, %748 : vector<2x256xf32>
    %780 = arith.addf %747, %779 : vector<2x256xf32>
    %c0_379 = arith.constant 0 : index
    %c18 = arith.constant 18 : index
    %781 = memref.load %arg1[%c0_379, %c18] : memref<8x36xf32, #tpu.memory_space<smem>>
    %782 = vector.broadcast %781 : f32 to vector<2x256xf32>
    %783 = arith.mulf %782, %174 : vector<2x256xf32>
    %784 = arith.addf %752, %783 : vector<2x256xf32>
    %c1_380 = arith.constant 1 : index
    %c18_381 = arith.constant 18 : index
    %785 = memref.load %arg1[%c1_380, %c18_381] : memref<8x36xf32, #tpu.memory_space<smem>>
    %786 = vector.broadcast %785 : f32 to vector<2x256xf32>
    %787 = arith.mulf %786, %174 : vector<2x256xf32>
    %788 = arith.addf %756, %787 : vector<2x256xf32>
    %c2_382 = arith.constant 2 : index
    %c18_383 = arith.constant 18 : index
    %789 = memref.load %arg1[%c2_382, %c18_383] : memref<8x36xf32, #tpu.memory_space<smem>>
    %790 = vector.broadcast %789 : f32 to vector<2x256xf32>
    %791 = arith.mulf %790, %174 : vector<2x256xf32>
    %792 = arith.addf %760, %791 : vector<2x256xf32>
    %c3_384 = arith.constant 3 : index
    %c18_385 = arith.constant 18 : index
    %793 = memref.load %arg1[%c3_384, %c18_385] : memref<8x36xf32, #tpu.memory_space<smem>>
    %794 = vector.broadcast %793 : f32 to vector<2x256xf32>
    %795 = arith.mulf %794, %174 : vector<2x256xf32>
    %796 = arith.addf %764, %795 : vector<2x256xf32>
    %c4_386 = arith.constant 4 : index
    %c18_387 = arith.constant 18 : index
    %797 = memref.load %arg1[%c4_386, %c18_387] : memref<8x36xf32, #tpu.memory_space<smem>>
    %798 = vector.broadcast %797 : f32 to vector<2x256xf32>
    %799 = arith.mulf %798, %174 : vector<2x256xf32>
    %800 = arith.addf %768, %799 : vector<2x256xf32>
    %c5_388 = arith.constant 5 : index
    %c18_389 = arith.constant 18 : index
    %801 = memref.load %arg1[%c5_388, %c18_389] : memref<8x36xf32, #tpu.memory_space<smem>>
    %802 = vector.broadcast %801 : f32 to vector<2x256xf32>
    %803 = arith.mulf %802, %174 : vector<2x256xf32>
    %804 = arith.addf %772, %803 : vector<2x256xf32>
    %c6_390 = arith.constant 6 : index
    %c18_391 = arith.constant 18 : index
    %805 = memref.load %arg1[%c6_390, %c18_391] : memref<8x36xf32, #tpu.memory_space<smem>>
    %806 = vector.broadcast %805 : f32 to vector<2x256xf32>
    %807 = arith.mulf %806, %174 : vector<2x256xf32>
    %808 = arith.addf %776, %807 : vector<2x256xf32>
    %c7_392 = arith.constant 7 : index
    %c18_393 = arith.constant 18 : index
    %809 = memref.load %arg1[%c7_392, %c18_393] : memref<8x36xf32, #tpu.memory_space<smem>>
    %810 = vector.broadcast %809 : f32 to vector<2x256xf32>
    %811 = arith.mulf %810, %174 : vector<2x256xf32>
    %812 = arith.addf %780, %811 : vector<2x256xf32>
    %c255_i32_394 = arith.constant 255 : i32
    %813 = tpu.dynamic_rotate %174 by %c255_i32_394 dim 1 : vector<2x256xf32>, i32 -> vector<2x256xf32>
    %c0_395 = arith.constant 0 : index
    %c19 = arith.constant 19 : index
    %814 = memref.load %arg1[%c0_395, %c19] : memref<8x36xf32, #tpu.memory_space<smem>>
    %815 = vector.broadcast %814 : f32 to vector<2x256xf32>
    %816 = arith.mulf %815, %813 : vector<2x256xf32>
    %817 = arith.addf %784, %816 : vector<2x256xf32>
    %c1_396 = arith.constant 1 : index
    %c19_397 = arith.constant 19 : index
    %818 = memref.load %arg1[%c1_396, %c19_397] : memref<8x36xf32, #tpu.memory_space<smem>>
    %819 = vector.broadcast %818 : f32 to vector<2x256xf32>
    %820 = arith.mulf %819, %813 : vector<2x256xf32>
    %821 = arith.addf %788, %820 : vector<2x256xf32>
    %c2_398 = arith.constant 2 : index
    %c19_399 = arith.constant 19 : index
    %822 = memref.load %arg1[%c2_398, %c19_399] : memref<8x36xf32, #tpu.memory_space<smem>>
    %823 = vector.broadcast %822 : f32 to vector<2x256xf32>
    %824 = arith.mulf %823, %813 : vector<2x256xf32>
    %825 = arith.addf %792, %824 : vector<2x256xf32>
    %c3_400 = arith.constant 3 : index
    %c19_401 = arith.constant 19 : index
    %826 = memref.load %arg1[%c3_400, %c19_401] : memref<8x36xf32, #tpu.memory_space<smem>>
    %827 = vector.broadcast %826 : f32 to vector<2x256xf32>
    %828 = arith.mulf %827, %813 : vector<2x256xf32>
    %829 = arith.addf %796, %828 : vector<2x256xf32>
    %c4_402 = arith.constant 4 : index
    %c19_403 = arith.constant 19 : index
    %830 = memref.load %arg1[%c4_402, %c19_403] : memref<8x36xf32, #tpu.memory_space<smem>>
    %831 = vector.broadcast %830 : f32 to vector<2x256xf32>
    %832 = arith.mulf %831, %813 : vector<2x256xf32>
    %833 = arith.addf %800, %832 : vector<2x256xf32>
    %c5_404 = arith.constant 5 : index
    %c19_405 = arith.constant 19 : index
    %834 = memref.load %arg1[%c5_404, %c19_405] : memref<8x36xf32, #tpu.memory_space<smem>>
    %835 = vector.broadcast %834 : f32 to vector<2x256xf32>
    %836 = arith.mulf %835, %813 : vector<2x256xf32>
    %837 = arith.addf %804, %836 : vector<2x256xf32>
    %c6_406 = arith.constant 6 : index
    %c19_407 = arith.constant 19 : index
    %838 = memref.load %arg1[%c6_406, %c19_407] : memref<8x36xf32, #tpu.memory_space<smem>>
    %839 = vector.broadcast %838 : f32 to vector<2x256xf32>
    %840 = arith.mulf %839, %813 : vector<2x256xf32>
    %841 = arith.addf %808, %840 : vector<2x256xf32>
    %c7_408 = arith.constant 7 : index
    %c19_409 = arith.constant 19 : index
    %842 = memref.load %arg1[%c7_408, %c19_409] : memref<8x36xf32, #tpu.memory_space<smem>>
    %843 = vector.broadcast %842 : f32 to vector<2x256xf32>
    %844 = arith.mulf %843, %813 : vector<2x256xf32>
    %845 = arith.addf %812, %844 : vector<2x256xf32>
    %c254_i32_410 = arith.constant 254 : i32
    %846 = tpu.dynamic_rotate %174 by %c254_i32_410 dim 1 : vector<2x256xf32>, i32 -> vector<2x256xf32>
    %c0_411 = arith.constant 0 : index
    %c20 = arith.constant 20 : index
    %847 = memref.load %arg1[%c0_411, %c20] : memref<8x36xf32, #tpu.memory_space<smem>>
    %848 = vector.broadcast %847 : f32 to vector<2x256xf32>
    %849 = arith.mulf %848, %846 : vector<2x256xf32>
    %850 = arith.addf %817, %849 : vector<2x256xf32>
    %c1_412 = arith.constant 1 : index
    %c20_413 = arith.constant 20 : index
    %851 = memref.load %arg1[%c1_412, %c20_413] : memref<8x36xf32, #tpu.memory_space<smem>>
    %852 = vector.broadcast %851 : f32 to vector<2x256xf32>
    %853 = arith.mulf %852, %846 : vector<2x256xf32>
    %854 = arith.addf %821, %853 : vector<2x256xf32>
    %c2_414 = arith.constant 2 : index
    %c20_415 = arith.constant 20 : index
    %855 = memref.load %arg1[%c2_414, %c20_415] : memref<8x36xf32, #tpu.memory_space<smem>>
    %856 = vector.broadcast %855 : f32 to vector<2x256xf32>
    %857 = arith.mulf %856, %846 : vector<2x256xf32>
    %858 = arith.addf %825, %857 : vector<2x256xf32>
    %c3_416 = arith.constant 3 : index
    %c20_417 = arith.constant 20 : index
    %859 = memref.load %arg1[%c3_416, %c20_417] : memref<8x36xf32, #tpu.memory_space<smem>>
    %860 = vector.broadcast %859 : f32 to vector<2x256xf32>
    %861 = arith.mulf %860, %846 : vector<2x256xf32>
    %862 = arith.addf %829, %861 : vector<2x256xf32>
    %c4_418 = arith.constant 4 : index
    %c20_419 = arith.constant 20 : index
    %863 = memref.load %arg1[%c4_418, %c20_419] : memref<8x36xf32, #tpu.memory_space<smem>>
    %864 = vector.broadcast %863 : f32 to vector<2x256xf32>
    %865 = arith.mulf %864, %846 : vector<2x256xf32>
    %866 = arith.addf %833, %865 : vector<2x256xf32>
    %c5_420 = arith.constant 5 : index
    %c20_421 = arith.constant 20 : index
    %867 = memref.load %arg1[%c5_420, %c20_421] : memref<8x36xf32, #tpu.memory_space<smem>>
    %868 = vector.broadcast %867 : f32 to vector<2x256xf32>
    %869 = arith.mulf %868, %846 : vector<2x256xf32>
    %870 = arith.addf %837, %869 : vector<2x256xf32>
    %c6_422 = arith.constant 6 : index
    %c20_423 = arith.constant 20 : index
    %871 = memref.load %arg1[%c6_422, %c20_423] : memref<8x36xf32, #tpu.memory_space<smem>>
    %872 = vector.broadcast %871 : f32 to vector<2x256xf32>
    %873 = arith.mulf %872, %846 : vector<2x256xf32>
    %874 = arith.addf %841, %873 : vector<2x256xf32>
    %c7_424 = arith.constant 7 : index
    %c20_425 = arith.constant 20 : index
    %875 = memref.load %arg1[%c7_424, %c20_425] : memref<8x36xf32, #tpu.memory_space<smem>>
    %876 = vector.broadcast %875 : f32 to vector<2x256xf32>
    %877 = arith.mulf %876, %846 : vector<2x256xf32>
    %878 = arith.addf %845, %877 : vector<2x256xf32>
    %c240_i32_426 = arith.constant 240 : i32
    %879 = tpu.dynamic_rotate %174 by %c240_i32_426 dim 1 : vector<2x256xf32>, i32 -> vector<2x256xf32>
    %c0_427 = arith.constant 0 : index
    %c21 = arith.constant 21 : index
    %880 = memref.load %arg1[%c0_427, %c21] : memref<8x36xf32, #tpu.memory_space<smem>>
    %881 = vector.broadcast %880 : f32 to vector<2x256xf32>
    %882 = arith.mulf %881, %879 : vector<2x256xf32>
    %883 = arith.addf %850, %882 : vector<2x256xf32>
    %c1_428 = arith.constant 1 : index
    %c21_429 = arith.constant 21 : index
    %884 = memref.load %arg1[%c1_428, %c21_429] : memref<8x36xf32, #tpu.memory_space<smem>>
    %885 = vector.broadcast %884 : f32 to vector<2x256xf32>
    %886 = arith.mulf %885, %879 : vector<2x256xf32>
    %887 = arith.addf %854, %886 : vector<2x256xf32>
    %c2_430 = arith.constant 2 : index
    %c21_431 = arith.constant 21 : index
    %888 = memref.load %arg1[%c2_430, %c21_431] : memref<8x36xf32, #tpu.memory_space<smem>>
    %889 = vector.broadcast %888 : f32 to vector<2x256xf32>
    %890 = arith.mulf %889, %879 : vector<2x256xf32>
    %891 = arith.addf %858, %890 : vector<2x256xf32>
    %c3_432 = arith.constant 3 : index
    %c21_433 = arith.constant 21 : index
    %892 = memref.load %arg1[%c3_432, %c21_433] : memref<8x36xf32, #tpu.memory_space<smem>>
    %893 = vector.broadcast %892 : f32 to vector<2x256xf32>
    %894 = arith.mulf %893, %879 : vector<2x256xf32>
    %895 = arith.addf %862, %894 : vector<2x256xf32>
    %c4_434 = arith.constant 4 : index
    %c21_435 = arith.constant 21 : index
    %896 = memref.load %arg1[%c4_434, %c21_435] : memref<8x36xf32, #tpu.memory_space<smem>>
    %897 = vector.broadcast %896 : f32 to vector<2x256xf32>
    %898 = arith.mulf %897, %879 : vector<2x256xf32>
    %899 = arith.addf %866, %898 : vector<2x256xf32>
    %c5_436 = arith.constant 5 : index
    %c21_437 = arith.constant 21 : index
    %900 = memref.load %arg1[%c5_436, %c21_437] : memref<8x36xf32, #tpu.memory_space<smem>>
    %901 = vector.broadcast %900 : f32 to vector<2x256xf32>
    %902 = arith.mulf %901, %879 : vector<2x256xf32>
    %903 = arith.addf %870, %902 : vector<2x256xf32>
    %c6_438 = arith.constant 6 : index
    %c21_439 = arith.constant 21 : index
    %904 = memref.load %arg1[%c6_438, %c21_439] : memref<8x36xf32, #tpu.memory_space<smem>>
    %905 = vector.broadcast %904 : f32 to vector<2x256xf32>
    %906 = arith.mulf %905, %879 : vector<2x256xf32>
    %907 = arith.addf %874, %906 : vector<2x256xf32>
    %c7_440 = arith.constant 7 : index
    %c21_441 = arith.constant 21 : index
    %908 = memref.load %arg1[%c7_440, %c21_441] : memref<8x36xf32, #tpu.memory_space<smem>>
    %909 = vector.broadcast %908 : f32 to vector<2x256xf32>
    %910 = arith.mulf %909, %879 : vector<2x256xf32>
    %911 = arith.addf %878, %910 : vector<2x256xf32>
    %c239_i32_442 = arith.constant 239 : i32
    %912 = tpu.dynamic_rotate %174 by %c239_i32_442 dim 1 : vector<2x256xf32>, i32 -> vector<2x256xf32>
    %c0_443 = arith.constant 0 : index
    %c22 = arith.constant 22 : index
    %913 = memref.load %arg1[%c0_443, %c22] : memref<8x36xf32, #tpu.memory_space<smem>>
    %914 = vector.broadcast %913 : f32 to vector<2x256xf32>
    %915 = arith.mulf %914, %912 : vector<2x256xf32>
    %916 = arith.addf %883, %915 : vector<2x256xf32>
    %c1_444 = arith.constant 1 : index
    %c22_445 = arith.constant 22 : index
    %917 = memref.load %arg1[%c1_444, %c22_445] : memref<8x36xf32, #tpu.memory_space<smem>>
    %918 = vector.broadcast %917 : f32 to vector<2x256xf32>
    %919 = arith.mulf %918, %912 : vector<2x256xf32>
    %920 = arith.addf %887, %919 : vector<2x256xf32>
    %c2_446 = arith.constant 2 : index
    %c22_447 = arith.constant 22 : index
    %921 = memref.load %arg1[%c2_446, %c22_447] : memref<8x36xf32, #tpu.memory_space<smem>>
    %922 = vector.broadcast %921 : f32 to vector<2x256xf32>
    %923 = arith.mulf %922, %912 : vector<2x256xf32>
    %924 = arith.addf %891, %923 : vector<2x256xf32>
    %c3_448 = arith.constant 3 : index
    %c22_449 = arith.constant 22 : index
    %925 = memref.load %arg1[%c3_448, %c22_449] : memref<8x36xf32, #tpu.memory_space<smem>>
    %926 = vector.broadcast %925 : f32 to vector<2x256xf32>
    %927 = arith.mulf %926, %912 : vector<2x256xf32>
    %928 = arith.addf %895, %927 : vector<2x256xf32>
    %c4_450 = arith.constant 4 : index
    %c22_451 = arith.constant 22 : index
    %929 = memref.load %arg1[%c4_450, %c22_451] : memref<8x36xf32, #tpu.memory_space<smem>>
    %930 = vector.broadcast %929 : f32 to vector<2x256xf32>
    %931 = arith.mulf %930, %912 : vector<2x256xf32>
    %932 = arith.addf %899, %931 : vector<2x256xf32>
    %c5_452 = arith.constant 5 : index
    %c22_453 = arith.constant 22 : index
    %933 = memref.load %arg1[%c5_452, %c22_453] : memref<8x36xf32, #tpu.memory_space<smem>>
    %934 = vector.broadcast %933 : f32 to vector<2x256xf32>
    %935 = arith.mulf %934, %912 : vector<2x256xf32>
    %936 = arith.addf %903, %935 : vector<2x256xf32>
    %c6_454 = arith.constant 6 : index
    %c22_455 = arith.constant 22 : index
    %937 = memref.load %arg1[%c6_454, %c22_455] : memref<8x36xf32, #tpu.memory_space<smem>>
    %938 = vector.broadcast %937 : f32 to vector<2x256xf32>
    %939 = arith.mulf %938, %912 : vector<2x256xf32>
    %940 = arith.addf %907, %939 : vector<2x256xf32>
    %c7_456 = arith.constant 7 : index
    %c22_457 = arith.constant 22 : index
    %941 = memref.load %arg1[%c7_456, %c22_457] : memref<8x36xf32, #tpu.memory_space<smem>>
    %942 = vector.broadcast %941 : f32 to vector<2x256xf32>
    %943 = arith.mulf %942, %912 : vector<2x256xf32>
    %944 = arith.addf %911, %943 : vector<2x256xf32>
    %c238_i32_458 = arith.constant 238 : i32
    %945 = tpu.dynamic_rotate %174 by %c238_i32_458 dim 1 : vector<2x256xf32>, i32 -> vector<2x256xf32>
    %c0_459 = arith.constant 0 : index
    %c23 = arith.constant 23 : index
    %946 = memref.load %arg1[%c0_459, %c23] : memref<8x36xf32, #tpu.memory_space<smem>>
    %947 = vector.broadcast %946 : f32 to vector<2x256xf32>
    %948 = arith.mulf %947, %945 : vector<2x256xf32>
    %949 = arith.addf %916, %948 : vector<2x256xf32>
    %c1_460 = arith.constant 1 : index
    %c23_461 = arith.constant 23 : index
    %950 = memref.load %arg1[%c1_460, %c23_461] : memref<8x36xf32, #tpu.memory_space<smem>>
    %951 = vector.broadcast %950 : f32 to vector<2x256xf32>
    %952 = arith.mulf %951, %945 : vector<2x256xf32>
    %953 = arith.addf %920, %952 : vector<2x256xf32>
    %c2_462 = arith.constant 2 : index
    %c23_463 = arith.constant 23 : index
    %954 = memref.load %arg1[%c2_462, %c23_463] : memref<8x36xf32, #tpu.memory_space<smem>>
    %955 = vector.broadcast %954 : f32 to vector<2x256xf32>
    %956 = arith.mulf %955, %945 : vector<2x256xf32>
    %957 = arith.addf %924, %956 : vector<2x256xf32>
    %c3_464 = arith.constant 3 : index
    %c23_465 = arith.constant 23 : index
    %958 = memref.load %arg1[%c3_464, %c23_465] : memref<8x36xf32, #tpu.memory_space<smem>>
    %959 = vector.broadcast %958 : f32 to vector<2x256xf32>
    %960 = arith.mulf %959, %945 : vector<2x256xf32>
    %961 = arith.addf %928, %960 : vector<2x256xf32>
    %c4_466 = arith.constant 4 : index
    %c23_467 = arith.constant 23 : index
    %962 = memref.load %arg1[%c4_466, %c23_467] : memref<8x36xf32, #tpu.memory_space<smem>>
    %963 = vector.broadcast %962 : f32 to vector<2x256xf32>
    %964 = arith.mulf %963, %945 : vector<2x256xf32>
    %965 = arith.addf %932, %964 : vector<2x256xf32>
    %c5_468 = arith.constant 5 : index
    %c23_469 = arith.constant 23 : index
    %966 = memref.load %arg1[%c5_468, %c23_469] : memref<8x36xf32, #tpu.memory_space<smem>>
    %967 = vector.broadcast %966 : f32 to vector<2x256xf32>
    %968 = arith.mulf %967, %945 : vector<2x256xf32>
    %969 = arith.addf %936, %968 : vector<2x256xf32>
    %c6_470 = arith.constant 6 : index
    %c23_471 = arith.constant 23 : index
    %970 = memref.load %arg1[%c6_470, %c23_471] : memref<8x36xf32, #tpu.memory_space<smem>>
    %971 = vector.broadcast %970 : f32 to vector<2x256xf32>
    %972 = arith.mulf %971, %945 : vector<2x256xf32>
    %973 = arith.addf %940, %972 : vector<2x256xf32>
    %c7_472 = arith.constant 7 : index
    %c23_473 = arith.constant 23 : index
    %974 = memref.load %arg1[%c7_472, %c23_473] : memref<8x36xf32, #tpu.memory_space<smem>>
    %975 = vector.broadcast %974 : f32 to vector<2x256xf32>
    %976 = arith.mulf %975, %945 : vector<2x256xf32>
    %977 = arith.addf %944, %976 : vector<2x256xf32>
    %c224_i32_474 = arith.constant 224 : i32
    %978 = tpu.dynamic_rotate %174 by %c224_i32_474 dim 1 : vector<2x256xf32>, i32 -> vector<2x256xf32>
    %c0_475 = arith.constant 0 : index
    %c24 = arith.constant 24 : index
    %979 = memref.load %arg1[%c0_475, %c24] : memref<8x36xf32, #tpu.memory_space<smem>>
    %980 = vector.broadcast %979 : f32 to vector<2x256xf32>
    %981 = arith.mulf %980, %978 : vector<2x256xf32>
    %982 = arith.addf %949, %981 : vector<2x256xf32>
    %c1_476 = arith.constant 1 : index
    %c24_477 = arith.constant 24 : index
    %983 = memref.load %arg1[%c1_476, %c24_477] : memref<8x36xf32, #tpu.memory_space<smem>>
    %984 = vector.broadcast %983 : f32 to vector<2x256xf32>
    %985 = arith.mulf %984, %978 : vector<2x256xf32>
    %986 = arith.addf %953, %985 : vector<2x256xf32>
    %c2_478 = arith.constant 2 : index
    %c24_479 = arith.constant 24 : index
    %987 = memref.load %arg1[%c2_478, %c24_479] : memref<8x36xf32, #tpu.memory_space<smem>>
    %988 = vector.broadcast %987 : f32 to vector<2x256xf32>
    %989 = arith.mulf %988, %978 : vector<2x256xf32>
    %990 = arith.addf %957, %989 : vector<2x256xf32>
    %c3_480 = arith.constant 3 : index
    %c24_481 = arith.constant 24 : index
    %991 = memref.load %arg1[%c3_480, %c24_481] : memref<8x36xf32, #tpu.memory_space<smem>>
    %992 = vector.broadcast %991 : f32 to vector<2x256xf32>
    %993 = arith.mulf %992, %978 : vector<2x256xf32>
    %994 = arith.addf %961, %993 : vector<2x256xf32>
    %c4_482 = arith.constant 4 : index
    %c24_483 = arith.constant 24 : index
    %995 = memref.load %arg1[%c4_482, %c24_483] : memref<8x36xf32, #tpu.memory_space<smem>>
    %996 = vector.broadcast %995 : f32 to vector<2x256xf32>
    %997 = arith.mulf %996, %978 : vector<2x256xf32>
    %998 = arith.addf %965, %997 : vector<2x256xf32>
    %c5_484 = arith.constant 5 : index
    %c24_485 = arith.constant 24 : index
    %999 = memref.load %arg1[%c5_484, %c24_485] : memref<8x36xf32, #tpu.memory_space<smem>>
    %1000 = vector.broadcast %999 : f32 to vector<2x256xf32>
    %1001 = arith.mulf %1000, %978 : vector<2x256xf32>
    %1002 = arith.addf %969, %1001 : vector<2x256xf32>
    %c6_486 = arith.constant 6 : index
    %c24_487 = arith.constant 24 : index
    %1003 = memref.load %arg1[%c6_486, %c24_487] : memref<8x36xf32, #tpu.memory_space<smem>>
    %1004 = vector.broadcast %1003 : f32 to vector<2x256xf32>
    %1005 = arith.mulf %1004, %978 : vector<2x256xf32>
    %1006 = arith.addf %973, %1005 : vector<2x256xf32>
    %c7_488 = arith.constant 7 : index
    %c24_489 = arith.constant 24 : index
    %1007 = memref.load %arg1[%c7_488, %c24_489] : memref<8x36xf32, #tpu.memory_space<smem>>
    %1008 = vector.broadcast %1007 : f32 to vector<2x256xf32>
    %1009 = arith.mulf %1008, %978 : vector<2x256xf32>
    %1010 = arith.addf %977, %1009 : vector<2x256xf32>
    %c223_i32_490 = arith.constant 223 : i32
    %1011 = tpu.dynamic_rotate %174 by %c223_i32_490 dim 1 : vector<2x256xf32>, i32 -> vector<2x256xf32>
    %c0_491 = arith.constant 0 : index
    %c25 = arith.constant 25 : index
    %1012 = memref.load %arg1[%c0_491, %c25] : memref<8x36xf32, #tpu.memory_space<smem>>
    %1013 = vector.broadcast %1012 : f32 to vector<2x256xf32>
    %1014 = arith.mulf %1013, %1011 : vector<2x256xf32>
    %1015 = arith.addf %982, %1014 : vector<2x256xf32>
    %c1_492 = arith.constant 1 : index
    %c25_493 = arith.constant 25 : index
    %1016 = memref.load %arg1[%c1_492, %c25_493] : memref<8x36xf32, #tpu.memory_space<smem>>
    %1017 = vector.broadcast %1016 : f32 to vector<2x256xf32>
    %1018 = arith.mulf %1017, %1011 : vector<2x256xf32>
    %1019 = arith.addf %986, %1018 : vector<2x256xf32>
    %c2_494 = arith.constant 2 : index
    %c25_495 = arith.constant 25 : index
    %1020 = memref.load %arg1[%c2_494, %c25_495] : memref<8x36xf32, #tpu.memory_space<smem>>
    %1021 = vector.broadcast %1020 : f32 to vector<2x256xf32>
    %1022 = arith.mulf %1021, %1011 : vector<2x256xf32>
    %1023 = arith.addf %990, %1022 : vector<2x256xf32>
    %c3_496 = arith.constant 3 : index
    %c25_497 = arith.constant 25 : index
    %1024 = memref.load %arg1[%c3_496, %c25_497] : memref<8x36xf32, #tpu.memory_space<smem>>
    %1025 = vector.broadcast %1024 : f32 to vector<2x256xf32>
    %1026 = arith.mulf %1025, %1011 : vector<2x256xf32>
    %1027 = arith.addf %994, %1026 : vector<2x256xf32>
    %c4_498 = arith.constant 4 : index
    %c25_499 = arith.constant 25 : index
    %1028 = memref.load %arg1[%c4_498, %c25_499] : memref<8x36xf32, #tpu.memory_space<smem>>
    %1029 = vector.broadcast %1028 : f32 to vector<2x256xf32>
    %1030 = arith.mulf %1029, %1011 : vector<2x256xf32>
    %1031 = arith.addf %998, %1030 : vector<2x256xf32>
    %c5_500 = arith.constant 5 : index
    %c25_501 = arith.constant 25 : index
    %1032 = memref.load %arg1[%c5_500, %c25_501] : memref<8x36xf32, #tpu.memory_space<smem>>
    %1033 = vector.broadcast %1032 : f32 to vector<2x256xf32>
    %1034 = arith.mulf %1033, %1011 : vector<2x256xf32>
    %1035 = arith.addf %1002, %1034 : vector<2x256xf32>
    %c6_502 = arith.constant 6 : index
    %c25_503 = arith.constant 25 : index
    %1036 = memref.load %arg1[%c6_502, %c25_503] : memref<8x36xf32, #tpu.memory_space<smem>>
    %1037 = vector.broadcast %1036 : f32 to vector<2x256xf32>
    %1038 = arith.mulf %1037, %1011 : vector<2x256xf32>
    %1039 = arith.addf %1006, %1038 : vector<2x256xf32>
    %c7_504 = arith.constant 7 : index
    %c25_505 = arith.constant 25 : index
    %1040 = memref.load %arg1[%c7_504, %c25_505] : memref<8x36xf32, #tpu.memory_space<smem>>
    %1041 = vector.broadcast %1040 : f32 to vector<2x256xf32>
    %1042 = arith.mulf %1041, %1011 : vector<2x256xf32>
    %1043 = arith.addf %1010, %1042 : vector<2x256xf32>
    %c222_i32_506 = arith.constant 222 : i32
    %1044 = tpu.dynamic_rotate %174 by %c222_i32_506 dim 1 : vector<2x256xf32>, i32 -> vector<2x256xf32>
    %c0_507 = arith.constant 0 : index
    %c26 = arith.constant 26 : index
    %1045 = memref.load %arg1[%c0_507, %c26] : memref<8x36xf32, #tpu.memory_space<smem>>
    %1046 = vector.broadcast %1045 : f32 to vector<2x256xf32>
    %1047 = arith.mulf %1046, %1044 : vector<2x256xf32>
    %1048 = arith.addf %1015, %1047 : vector<2x256xf32>
    %c1_508 = arith.constant 1 : index
    %c26_509 = arith.constant 26 : index
    %1049 = memref.load %arg1[%c1_508, %c26_509] : memref<8x36xf32, #tpu.memory_space<smem>>
    %1050 = vector.broadcast %1049 : f32 to vector<2x256xf32>
    %1051 = arith.mulf %1050, %1044 : vector<2x256xf32>
    %1052 = arith.addf %1019, %1051 : vector<2x256xf32>
    %c2_510 = arith.constant 2 : index
    %c26_511 = arith.constant 26 : index
    %1053 = memref.load %arg1[%c2_510, %c26_511] : memref<8x36xf32, #tpu.memory_space<smem>>
    %1054 = vector.broadcast %1053 : f32 to vector<2x256xf32>
    %1055 = arith.mulf %1054, %1044 : vector<2x256xf32>
    %1056 = arith.addf %1023, %1055 : vector<2x256xf32>
    %c3_512 = arith.constant 3 : index
    %c26_513 = arith.constant 26 : index
    %1057 = memref.load %arg1[%c3_512, %c26_513] : memref<8x36xf32, #tpu.memory_space<smem>>
    %1058 = vector.broadcast %1057 : f32 to vector<2x256xf32>
    %1059 = arith.mulf %1058, %1044 : vector<2x256xf32>
    %1060 = arith.addf %1027, %1059 : vector<2x256xf32>
    %c4_514 = arith.constant 4 : index
    %c26_515 = arith.constant 26 : index
    %1061 = memref.load %arg1[%c4_514, %c26_515] : memref<8x36xf32, #tpu.memory_space<smem>>
    %1062 = vector.broadcast %1061 : f32 to vector<2x256xf32>
    %1063 = arith.mulf %1062, %1044 : vector<2x256xf32>
    %1064 = arith.addf %1031, %1063 : vector<2x256xf32>
    %c5_516 = arith.constant 5 : index
    %c26_517 = arith.constant 26 : index
    %1065 = memref.load %arg1[%c5_516, %c26_517] : memref<8x36xf32, #tpu.memory_space<smem>>
    %1066 = vector.broadcast %1065 : f32 to vector<2x256xf32>
    %1067 = arith.mulf %1066, %1044 : vector<2x256xf32>
    %1068 = arith.addf %1035, %1067 : vector<2x256xf32>
    %c6_518 = arith.constant 6 : index
    %c26_519 = arith.constant 26 : index
    %1069 = memref.load %arg1[%c6_518, %c26_519] : memref<8x36xf32, #tpu.memory_space<smem>>
    %1070 = vector.broadcast %1069 : f32 to vector<2x256xf32>
    %1071 = arith.mulf %1070, %1044 : vector<2x256xf32>
    %1072 = arith.addf %1039, %1071 : vector<2x256xf32>
    %c7_520 = arith.constant 7 : index
    %c26_521 = arith.constant 26 : index
    %1073 = memref.load %arg1[%c7_520, %c26_521] : memref<8x36xf32, #tpu.memory_space<smem>>
    %1074 = vector.broadcast %1073 : f32 to vector<2x256xf32>
    %1075 = arith.mulf %1074, %1044 : vector<2x256xf32>
    %1076 = arith.addf %1043, %1075 : vector<2x256xf32>
    %c0_522 = arith.constant 0 : index
    %c27 = arith.constant 27 : index
    %1077 = memref.load %arg1[%c0_522, %c27] : memref<8x36xf32, #tpu.memory_space<smem>>
    %1078 = vector.broadcast %1077 : f32 to vector<2x256xf32>
    %1079 = arith.mulf %1078, %180 : vector<2x256xf32>
    %1080 = arith.addf %1048, %1079 : vector<2x256xf32>
    %c1_523 = arith.constant 1 : index
    %c27_524 = arith.constant 27 : index
    %1081 = memref.load %arg1[%c1_523, %c27_524] : memref<8x36xf32, #tpu.memory_space<smem>>
    %1082 = vector.broadcast %1081 : f32 to vector<2x256xf32>
    %1083 = arith.mulf %1082, %180 : vector<2x256xf32>
    %1084 = arith.addf %1052, %1083 : vector<2x256xf32>
    %c2_525 = arith.constant 2 : index
    %c27_526 = arith.constant 27 : index
    %1085 = memref.load %arg1[%c2_525, %c27_526] : memref<8x36xf32, #tpu.memory_space<smem>>
    %1086 = vector.broadcast %1085 : f32 to vector<2x256xf32>
    %1087 = arith.mulf %1086, %180 : vector<2x256xf32>
    %1088 = arith.addf %1056, %1087 : vector<2x256xf32>
    %c3_527 = arith.constant 3 : index
    %c27_528 = arith.constant 27 : index
    %1089 = memref.load %arg1[%c3_527, %c27_528] : memref<8x36xf32, #tpu.memory_space<smem>>
    %1090 = vector.broadcast %1089 : f32 to vector<2x256xf32>
    %1091 = arith.mulf %1090, %180 : vector<2x256xf32>
    %1092 = arith.addf %1060, %1091 : vector<2x256xf32>
    %c4_529 = arith.constant 4 : index
    %c27_530 = arith.constant 27 : index
    %1093 = memref.load %arg1[%c4_529, %c27_530] : memref<8x36xf32, #tpu.memory_space<smem>>
    %1094 = vector.broadcast %1093 : f32 to vector<2x256xf32>
    %1095 = arith.mulf %1094, %180 : vector<2x256xf32>
    %1096 = arith.addf %1064, %1095 : vector<2x256xf32>
    %c5_531 = arith.constant 5 : index
    %c27_532 = arith.constant 27 : index
    %1097 = memref.load %arg1[%c5_531, %c27_532] : memref<8x36xf32, #tpu.memory_space<smem>>
    %1098 = vector.broadcast %1097 : f32 to vector<2x256xf32>
    %1099 = arith.mulf %1098, %180 : vector<2x256xf32>
    %1100 = arith.addf %1068, %1099 : vector<2x256xf32>
    %c6_533 = arith.constant 6 : index
    %c27_534 = arith.constant 27 : index
    %1101 = memref.load %arg1[%c6_533, %c27_534] : memref<8x36xf32, #tpu.memory_space<smem>>
    %1102 = vector.broadcast %1101 : f32 to vector<2x256xf32>
    %1103 = arith.mulf %1102, %180 : vector<2x256xf32>
    %1104 = arith.addf %1072, %1103 : vector<2x256xf32>
    %c7_535 = arith.constant 7 : index
    %c27_536 = arith.constant 27 : index
    %1105 = memref.load %arg1[%c7_535, %c27_536] : memref<8x36xf32, #tpu.memory_space<smem>>
    %1106 = vector.broadcast %1105 : f32 to vector<2x256xf32>
    %1107 = arith.mulf %1106, %180 : vector<2x256xf32>
    %1108 = arith.addf %1076, %1107 : vector<2x256xf32>
    %c255_i32_537 = arith.constant 255 : i32
    %1109 = tpu.dynamic_rotate %180 by %c255_i32_537 dim 1 : vector<2x256xf32>, i32 -> vector<2x256xf32>
    %c0_538 = arith.constant 0 : index
    %c28 = arith.constant 28 : index
    %1110 = memref.load %arg1[%c0_538, %c28] : memref<8x36xf32, #tpu.memory_space<smem>>
    %1111 = vector.broadcast %1110 : f32 to vector<2x256xf32>
    %1112 = arith.mulf %1111, %1109 : vector<2x256xf32>
    %1113 = arith.addf %1080, %1112 : vector<2x256xf32>
    %c1_539 = arith.constant 1 : index
    %c28_540 = arith.constant 28 : index
    %1114 = memref.load %arg1[%c1_539, %c28_540] : memref<8x36xf32, #tpu.memory_space<smem>>
    %1115 = vector.broadcast %1114 : f32 to vector<2x256xf32>
    %1116 = arith.mulf %1115, %1109 : vector<2x256xf32>
    %1117 = arith.addf %1084, %1116 : vector<2x256xf32>
    %c2_541 = arith.constant 2 : index
    %c28_542 = arith.constant 28 : index
    %1118 = memref.load %arg1[%c2_541, %c28_542] : memref<8x36xf32, #tpu.memory_space<smem>>
    %1119 = vector.broadcast %1118 : f32 to vector<2x256xf32>
    %1120 = arith.mulf %1119, %1109 : vector<2x256xf32>
    %1121 = arith.addf %1088, %1120 : vector<2x256xf32>
    %c3_543 = arith.constant 3 : index
    %c28_544 = arith.constant 28 : index
    %1122 = memref.load %arg1[%c3_543, %c28_544] : memref<8x36xf32, #tpu.memory_space<smem>>
    %1123 = vector.broadcast %1122 : f32 to vector<2x256xf32>
    %1124 = arith.mulf %1123, %1109 : vector<2x256xf32>
    %1125 = arith.addf %1092, %1124 : vector<2x256xf32>
    %c4_545 = arith.constant 4 : index
    %c28_546 = arith.constant 28 : index
    %1126 = memref.load %arg1[%c4_545, %c28_546] : memref<8x36xf32, #tpu.memory_space<smem>>
    %1127 = vector.broadcast %1126 : f32 to vector<2x256xf32>
    %1128 = arith.mulf %1127, %1109 : vector<2x256xf32>
    %1129 = arith.addf %1096, %1128 : vector<2x256xf32>
    %c5_547 = arith.constant 5 : index
    %c28_548 = arith.constant 28 : index
    %1130 = memref.load %arg1[%c5_547, %c28_548] : memref<8x36xf32, #tpu.memory_space<smem>>
    %1131 = vector.broadcast %1130 : f32 to vector<2x256xf32>
    %1132 = arith.mulf %1131, %1109 : vector<2x256xf32>
    %1133 = arith.addf %1100, %1132 : vector<2x256xf32>
    %c6_549 = arith.constant 6 : index
    %c28_550 = arith.constant 28 : index
    %1134 = memref.load %arg1[%c6_549, %c28_550] : memref<8x36xf32, #tpu.memory_space<smem>>
    %1135 = vector.broadcast %1134 : f32 to vector<2x256xf32>
    %1136 = arith.mulf %1135, %1109 : vector<2x256xf32>
    %1137 = arith.addf %1104, %1136 : vector<2x256xf32>
    %c7_551 = arith.constant 7 : index
    %c28_552 = arith.constant 28 : index
    %1138 = memref.load %arg1[%c7_551, %c28_552] : memref<8x36xf32, #tpu.memory_space<smem>>
    %1139 = vector.broadcast %1138 : f32 to vector<2x256xf32>
    %1140 = arith.mulf %1139, %1109 : vector<2x256xf32>
    %1141 = arith.addf %1108, %1140 : vector<2x256xf32>
    %c254_i32_553 = arith.constant 254 : i32
    %1142 = tpu.dynamic_rotate %180 by %c254_i32_553 dim 1 : vector<2x256xf32>, i32 -> vector<2x256xf32>
    %c0_554 = arith.constant 0 : index
    %c29 = arith.constant 29 : index
    %1143 = memref.load %arg1[%c0_554, %c29] : memref<8x36xf32, #tpu.memory_space<smem>>
    %1144 = vector.broadcast %1143 : f32 to vector<2x256xf32>
    %1145 = arith.mulf %1144, %1142 : vector<2x256xf32>
    %1146 = arith.addf %1113, %1145 : vector<2x256xf32>
    %c1_555 = arith.constant 1 : index
    %c29_556 = arith.constant 29 : index
    %1147 = memref.load %arg1[%c1_555, %c29_556] : memref<8x36xf32, #tpu.memory_space<smem>>
    %1148 = vector.broadcast %1147 : f32 to vector<2x256xf32>
    %1149 = arith.mulf %1148, %1142 : vector<2x256xf32>
    %1150 = arith.addf %1117, %1149 : vector<2x256xf32>
    %c2_557 = arith.constant 2 : index
    %c29_558 = arith.constant 29 : index
    %1151 = memref.load %arg1[%c2_557, %c29_558] : memref<8x36xf32, #tpu.memory_space<smem>>
    %1152 = vector.broadcast %1151 : f32 to vector<2x256xf32>
    %1153 = arith.mulf %1152, %1142 : vector<2x256xf32>
    %1154 = arith.addf %1121, %1153 : vector<2x256xf32>
    %c3_559 = arith.constant 3 : index
    %c29_560 = arith.constant 29 : index
    %1155 = memref.load %arg1[%c3_559, %c29_560] : memref<8x36xf32, #tpu.memory_space<smem>>
    %1156 = vector.broadcast %1155 : f32 to vector<2x256xf32>
    %1157 = arith.mulf %1156, %1142 : vector<2x256xf32>
    %1158 = arith.addf %1125, %1157 : vector<2x256xf32>
    %c4_561 = arith.constant 4 : index
    %c29_562 = arith.constant 29 : index
    %1159 = memref.load %arg1[%c4_561, %c29_562] : memref<8x36xf32, #tpu.memory_space<smem>>
    %1160 = vector.broadcast %1159 : f32 to vector<2x256xf32>
    %1161 = arith.mulf %1160, %1142 : vector<2x256xf32>
    %1162 = arith.addf %1129, %1161 : vector<2x256xf32>
    %c5_563 = arith.constant 5 : index
    %c29_564 = arith.constant 29 : index
    %1163 = memref.load %arg1[%c5_563, %c29_564] : memref<8x36xf32, #tpu.memory_space<smem>>
    %1164 = vector.broadcast %1163 : f32 to vector<2x256xf32>
    %1165 = arith.mulf %1164, %1142 : vector<2x256xf32>
    %1166 = arith.addf %1133, %1165 : vector<2x256xf32>
    %c6_565 = arith.constant 6 : index
    %c29_566 = arith.constant 29 : index
    %1167 = memref.load %arg1[%c6_565, %c29_566] : memref<8x36xf32, #tpu.memory_space<smem>>
    %1168 = vector.broadcast %1167 : f32 to vector<2x256xf32>
    %1169 = arith.mulf %1168, %1142 : vector<2x256xf32>
    %1170 = arith.addf %1137, %1169 : vector<2x256xf32>
    %c7_567 = arith.constant 7 : index
    %c29_568 = arith.constant 29 : index
    %1171 = memref.load %arg1[%c7_567, %c29_568] : memref<8x36xf32, #tpu.memory_space<smem>>
    %1172 = vector.broadcast %1171 : f32 to vector<2x256xf32>
    %1173 = arith.mulf %1172, %1142 : vector<2x256xf32>
    %1174 = arith.addf %1141, %1173 : vector<2x256xf32>
    %c240_i32_569 = arith.constant 240 : i32
    %1175 = tpu.dynamic_rotate %180 by %c240_i32_569 dim 1 : vector<2x256xf32>, i32 -> vector<2x256xf32>
    %c0_570 = arith.constant 0 : index
    %c30 = arith.constant 30 : index
    %1176 = memref.load %arg1[%c0_570, %c30] : memref<8x36xf32, #tpu.memory_space<smem>>
    %1177 = vector.broadcast %1176 : f32 to vector<2x256xf32>
    %1178 = arith.mulf %1177, %1175 : vector<2x256xf32>
    %1179 = arith.addf %1146, %1178 : vector<2x256xf32>
    %c1_571 = arith.constant 1 : index
    %c30_572 = arith.constant 30 : index
    %1180 = memref.load %arg1[%c1_571, %c30_572] : memref<8x36xf32, #tpu.memory_space<smem>>
    %1181 = vector.broadcast %1180 : f32 to vector<2x256xf32>
    %1182 = arith.mulf %1181, %1175 : vector<2x256xf32>
    %1183 = arith.addf %1150, %1182 : vector<2x256xf32>
    %c2_573 = arith.constant 2 : index
    %c30_574 = arith.constant 30 : index
    %1184 = memref.load %arg1[%c2_573, %c30_574] : memref<8x36xf32, #tpu.memory_space<smem>>
    %1185 = vector.broadcast %1184 : f32 to vector<2x256xf32>
    %1186 = arith.mulf %1185, %1175 : vector<2x256xf32>
    %1187 = arith.addf %1154, %1186 : vector<2x256xf32>
    %c3_575 = arith.constant 3 : index
    %c30_576 = arith.constant 30 : index
    %1188 = memref.load %arg1[%c3_575, %c30_576] : memref<8x36xf32, #tpu.memory_space<smem>>
    %1189 = vector.broadcast %1188 : f32 to vector<2x256xf32>
    %1190 = arith.mulf %1189, %1175 : vector<2x256xf32>
    %1191 = arith.addf %1158, %1190 : vector<2x256xf32>
    %c4_577 = arith.constant 4 : index
    %c30_578 = arith.constant 30 : index
    %1192 = memref.load %arg1[%c4_577, %c30_578] : memref<8x36xf32, #tpu.memory_space<smem>>
    %1193 = vector.broadcast %1192 : f32 to vector<2x256xf32>
    %1194 = arith.mulf %1193, %1175 : vector<2x256xf32>
    %1195 = arith.addf %1162, %1194 : vector<2x256xf32>
    %c5_579 = arith.constant 5 : index
    %c30_580 = arith.constant 30 : index
    %1196 = memref.load %arg1[%c5_579, %c30_580] : memref<8x36xf32, #tpu.memory_space<smem>>
    %1197 = vector.broadcast %1196 : f32 to vector<2x256xf32>
    %1198 = arith.mulf %1197, %1175 : vector<2x256xf32>
    %1199 = arith.addf %1166, %1198 : vector<2x256xf32>
    %c6_581 = arith.constant 6 : index
    %c30_582 = arith.constant 30 : index
    %1200 = memref.load %arg1[%c6_581, %c30_582] : memref<8x36xf32, #tpu.memory_space<smem>>
    %1201 = vector.broadcast %1200 : f32 to vector<2x256xf32>
    %1202 = arith.mulf %1201, %1175 : vector<2x256xf32>
    %1203 = arith.addf %1170, %1202 : vector<2x256xf32>
    %c7_583 = arith.constant 7 : index
    %c30_584 = arith.constant 30 : index
    %1204 = memref.load %arg1[%c7_583, %c30_584] : memref<8x36xf32, #tpu.memory_space<smem>>
    %1205 = vector.broadcast %1204 : f32 to vector<2x256xf32>
    %1206 = arith.mulf %1205, %1175 : vector<2x256xf32>
    %1207 = arith.addf %1174, %1206 : vector<2x256xf32>
    %c239_i32_585 = arith.constant 239 : i32
    %1208 = tpu.dynamic_rotate %180 by %c239_i32_585 dim 1 : vector<2x256xf32>, i32 -> vector<2x256xf32>
    %c0_586 = arith.constant 0 : index
    %c31 = arith.constant 31 : index
    %1209 = memref.load %arg1[%c0_586, %c31] : memref<8x36xf32, #tpu.memory_space<smem>>
    %1210 = vector.broadcast %1209 : f32 to vector<2x256xf32>
    %1211 = arith.mulf %1210, %1208 : vector<2x256xf32>
    %1212 = arith.addf %1179, %1211 : vector<2x256xf32>
    %c1_587 = arith.constant 1 : index
    %c31_588 = arith.constant 31 : index
    %1213 = memref.load %arg1[%c1_587, %c31_588] : memref<8x36xf32, #tpu.memory_space<smem>>
    %1214 = vector.broadcast %1213 : f32 to vector<2x256xf32>
    %1215 = arith.mulf %1214, %1208 : vector<2x256xf32>
    %1216 = arith.addf %1183, %1215 : vector<2x256xf32>
    %c2_589 = arith.constant 2 : index
    %c31_590 = arith.constant 31 : index
    %1217 = memref.load %arg1[%c2_589, %c31_590] : memref<8x36xf32, #tpu.memory_space<smem>>
    %1218 = vector.broadcast %1217 : f32 to vector<2x256xf32>
    %1219 = arith.mulf %1218, %1208 : vector<2x256xf32>
    %1220 = arith.addf %1187, %1219 : vector<2x256xf32>
    %c3_591 = arith.constant 3 : index
    %c31_592 = arith.constant 31 : index
    %1221 = memref.load %arg1[%c3_591, %c31_592] : memref<8x36xf32, #tpu.memory_space<smem>>
    %1222 = vector.broadcast %1221 : f32 to vector<2x256xf32>
    %1223 = arith.mulf %1222, %1208 : vector<2x256xf32>
    %1224 = arith.addf %1191, %1223 : vector<2x256xf32>
    %c4_593 = arith.constant 4 : index
    %c31_594 = arith.constant 31 : index
    %1225 = memref.load %arg1[%c4_593, %c31_594] : memref<8x36xf32, #tpu.memory_space<smem>>
    %1226 = vector.broadcast %1225 : f32 to vector<2x256xf32>
    %1227 = arith.mulf %1226, %1208 : vector<2x256xf32>
    %1228 = arith.addf %1195, %1227 : vector<2x256xf32>
    %c5_595 = arith.constant 5 : index
    %c31_596 = arith.constant 31 : index
    %1229 = memref.load %arg1[%c5_595, %c31_596] : memref<8x36xf32, #tpu.memory_space<smem>>
    %1230 = vector.broadcast %1229 : f32 to vector<2x256xf32>
    %1231 = arith.mulf %1230, %1208 : vector<2x256xf32>
    %1232 = arith.addf %1199, %1231 : vector<2x256xf32>
    %c6_597 = arith.constant 6 : index
    %c31_598 = arith.constant 31 : index
    %1233 = memref.load %arg1[%c6_597, %c31_598] : memref<8x36xf32, #tpu.memory_space<smem>>
    %1234 = vector.broadcast %1233 : f32 to vector<2x256xf32>
    %1235 = arith.mulf %1234, %1208 : vector<2x256xf32>
    %1236 = arith.addf %1203, %1235 : vector<2x256xf32>
    %c7_599 = arith.constant 7 : index
    %c31_600 = arith.constant 31 : index
    %1237 = memref.load %arg1[%c7_599, %c31_600] : memref<8x36xf32, #tpu.memory_space<smem>>
    %1238 = vector.broadcast %1237 : f32 to vector<2x256xf32>
    %1239 = arith.mulf %1238, %1208 : vector<2x256xf32>
    %1240 = arith.addf %1207, %1239 : vector<2x256xf32>
    %c238_i32_601 = arith.constant 238 : i32
    %1241 = tpu.dynamic_rotate %180 by %c238_i32_601 dim 1 : vector<2x256xf32>, i32 -> vector<2x256xf32>
    %c0_602 = arith.constant 0 : index
    %c32 = arith.constant 32 : index
    %1242 = memref.load %arg1[%c0_602, %c32] : memref<8x36xf32, #tpu.memory_space<smem>>
    %1243 = vector.broadcast %1242 : f32 to vector<2x256xf32>
    %1244 = arith.mulf %1243, %1241 : vector<2x256xf32>
    %1245 = arith.addf %1212, %1244 : vector<2x256xf32>
    %c1_603 = arith.constant 1 : index
    %c32_604 = arith.constant 32 : index
    %1246 = memref.load %arg1[%c1_603, %c32_604] : memref<8x36xf32, #tpu.memory_space<smem>>
    %1247 = vector.broadcast %1246 : f32 to vector<2x256xf32>
    %1248 = arith.mulf %1247, %1241 : vector<2x256xf32>
    %1249 = arith.addf %1216, %1248 : vector<2x256xf32>
    %c2_605 = arith.constant 2 : index
    %c32_606 = arith.constant 32 : index
    %1250 = memref.load %arg1[%c2_605, %c32_606] : memref<8x36xf32, #tpu.memory_space<smem>>
    %1251 = vector.broadcast %1250 : f32 to vector<2x256xf32>
    %1252 = arith.mulf %1251, %1241 : vector<2x256xf32>
    %1253 = arith.addf %1220, %1252 : vector<2x256xf32>
    %c3_607 = arith.constant 3 : index
    %c32_608 = arith.constant 32 : index
    %1254 = memref.load %arg1[%c3_607, %c32_608] : memref<8x36xf32, #tpu.memory_space<smem>>
    %1255 = vector.broadcast %1254 : f32 to vector<2x256xf32>
    %1256 = arith.mulf %1255, %1241 : vector<2x256xf32>
    %1257 = arith.addf %1224, %1256 : vector<2x256xf32>
    %c4_609 = arith.constant 4 : index
    %c32_610 = arith.constant 32 : index
    %1258 = memref.load %arg1[%c4_609, %c32_610] : memref<8x36xf32, #tpu.memory_space<smem>>
    %1259 = vector.broadcast %1258 : f32 to vector<2x256xf32>
    %1260 = arith.mulf %1259, %1241 : vector<2x256xf32>
    %1261 = arith.addf %1228, %1260 : vector<2x256xf32>
    %c5_611 = arith.constant 5 : index
    %c32_612 = arith.constant 32 : index
    %1262 = memref.load %arg1[%c5_611, %c32_612] : memref<8x36xf32, #tpu.memory_space<smem>>
    %1263 = vector.broadcast %1262 : f32 to vector<2x256xf32>
    %1264 = arith.mulf %1263, %1241 : vector<2x256xf32>
    %1265 = arith.addf %1232, %1264 : vector<2x256xf32>
    %c6_613 = arith.constant 6 : index
    %c32_614 = arith.constant 32 : index
    %1266 = memref.load %arg1[%c6_613, %c32_614] : memref<8x36xf32, #tpu.memory_space<smem>>
    %1267 = vector.broadcast %1266 : f32 to vector<2x256xf32>
    %1268 = arith.mulf %1267, %1241 : vector<2x256xf32>
    %1269 = arith.addf %1236, %1268 : vector<2x256xf32>
    %c7_615 = arith.constant 7 : index
    %c32_616 = arith.constant 32 : index
    %1270 = memref.load %arg1[%c7_615, %c32_616] : memref<8x36xf32, #tpu.memory_space<smem>>
    %1271 = vector.broadcast %1270 : f32 to vector<2x256xf32>
    %1272 = arith.mulf %1271, %1241 : vector<2x256xf32>
    %1273 = arith.addf %1240, %1272 : vector<2x256xf32>
    %c224_i32_617 = arith.constant 224 : i32
    %1274 = tpu.dynamic_rotate %180 by %c224_i32_617 dim 1 : vector<2x256xf32>, i32 -> vector<2x256xf32>
    %c0_618 = arith.constant 0 : index
    %c33 = arith.constant 33 : index
    %1275 = memref.load %arg1[%c0_618, %c33] : memref<8x36xf32, #tpu.memory_space<smem>>
    %1276 = vector.broadcast %1275 : f32 to vector<2x256xf32>
    %1277 = arith.mulf %1276, %1274 : vector<2x256xf32>
    %1278 = arith.addf %1245, %1277 : vector<2x256xf32>
    %c1_619 = arith.constant 1 : index
    %c33_620 = arith.constant 33 : index
    %1279 = memref.load %arg1[%c1_619, %c33_620] : memref<8x36xf32, #tpu.memory_space<smem>>
    %1280 = vector.broadcast %1279 : f32 to vector<2x256xf32>
    %1281 = arith.mulf %1280, %1274 : vector<2x256xf32>
    %1282 = arith.addf %1249, %1281 : vector<2x256xf32>
    %c2_621 = arith.constant 2 : index
    %c33_622 = arith.constant 33 : index
    %1283 = memref.load %arg1[%c2_621, %c33_622] : memref<8x36xf32, #tpu.memory_space<smem>>
    %1284 = vector.broadcast %1283 : f32 to vector<2x256xf32>
    %1285 = arith.mulf %1284, %1274 : vector<2x256xf32>
    %1286 = arith.addf %1253, %1285 : vector<2x256xf32>
    %c3_623 = arith.constant 3 : index
    %c33_624 = arith.constant 33 : index
    %1287 = memref.load %arg1[%c3_623, %c33_624] : memref<8x36xf32, #tpu.memory_space<smem>>
    %1288 = vector.broadcast %1287 : f32 to vector<2x256xf32>
    %1289 = arith.mulf %1288, %1274 : vector<2x256xf32>
    %1290 = arith.addf %1257, %1289 : vector<2x256xf32>
    %c4_625 = arith.constant 4 : index
    %c33_626 = arith.constant 33 : index
    %1291 = memref.load %arg1[%c4_625, %c33_626] : memref<8x36xf32, #tpu.memory_space<smem>>
    %1292 = vector.broadcast %1291 : f32 to vector<2x256xf32>
    %1293 = arith.mulf %1292, %1274 : vector<2x256xf32>
    %1294 = arith.addf %1261, %1293 : vector<2x256xf32>
    %c5_627 = arith.constant 5 : index
    %c33_628 = arith.constant 33 : index
    %1295 = memref.load %arg1[%c5_627, %c33_628] : memref<8x36xf32, #tpu.memory_space<smem>>
    %1296 = vector.broadcast %1295 : f32 to vector<2x256xf32>
    %1297 = arith.mulf %1296, %1274 : vector<2x256xf32>
    %1298 = arith.addf %1265, %1297 : vector<2x256xf32>
    %c6_629 = arith.constant 6 : index
    %c33_630 = arith.constant 33 : index
    %1299 = memref.load %arg1[%c6_629, %c33_630] : memref<8x36xf32, #tpu.memory_space<smem>>
    %1300 = vector.broadcast %1299 : f32 to vector<2x256xf32>
    %1301 = arith.mulf %1300, %1274 : vector<2x256xf32>
    %1302 = arith.addf %1269, %1301 : vector<2x256xf32>
    %c7_631 = arith.constant 7 : index
    %c33_632 = arith.constant 33 : index
    %1303 = memref.load %arg1[%c7_631, %c33_632] : memref<8x36xf32, #tpu.memory_space<smem>>
    %1304 = vector.broadcast %1303 : f32 to vector<2x256xf32>
    %1305 = arith.mulf %1304, %1274 : vector<2x256xf32>
    %1306 = arith.addf %1273, %1305 : vector<2x256xf32>
    %c223_i32_633 = arith.constant 223 : i32
    %1307 = tpu.dynamic_rotate %180 by %c223_i32_633 dim 1 : vector<2x256xf32>, i32 -> vector<2x256xf32>
    %c0_634 = arith.constant 0 : index
    %c34 = arith.constant 34 : index
    %1308 = memref.load %arg1[%c0_634, %c34] : memref<8x36xf32, #tpu.memory_space<smem>>
    %1309 = vector.broadcast %1308 : f32 to vector<2x256xf32>
    %1310 = arith.mulf %1309, %1307 : vector<2x256xf32>
    %1311 = arith.addf %1278, %1310 : vector<2x256xf32>
    %c1_635 = arith.constant 1 : index
    %c34_636 = arith.constant 34 : index
    %1312 = memref.load %arg1[%c1_635, %c34_636] : memref<8x36xf32, #tpu.memory_space<smem>>
    %1313 = vector.broadcast %1312 : f32 to vector<2x256xf32>
    %1314 = arith.mulf %1313, %1307 : vector<2x256xf32>
    %1315 = arith.addf %1282, %1314 : vector<2x256xf32>
    %c2_637 = arith.constant 2 : index
    %c34_638 = arith.constant 34 : index
    %1316 = memref.load %arg1[%c2_637, %c34_638] : memref<8x36xf32, #tpu.memory_space<smem>>
    %1317 = vector.broadcast %1316 : f32 to vector<2x256xf32>
    %1318 = arith.mulf %1317, %1307 : vector<2x256xf32>
    %1319 = arith.addf %1286, %1318 : vector<2x256xf32>
    %c3_639 = arith.constant 3 : index
    %c34_640 = arith.constant 34 : index
    %1320 = memref.load %arg1[%c3_639, %c34_640] : memref<8x36xf32, #tpu.memory_space<smem>>
    %1321 = vector.broadcast %1320 : f32 to vector<2x256xf32>
    %1322 = arith.mulf %1321, %1307 : vector<2x256xf32>
    %1323 = arith.addf %1290, %1322 : vector<2x256xf32>
    %c4_641 = arith.constant 4 : index
    %c34_642 = arith.constant 34 : index
    %1324 = memref.load %arg1[%c4_641, %c34_642] : memref<8x36xf32, #tpu.memory_space<smem>>
    %1325 = vector.broadcast %1324 : f32 to vector<2x256xf32>
    %1326 = arith.mulf %1325, %1307 : vector<2x256xf32>
    %1327 = arith.addf %1294, %1326 : vector<2x256xf32>
    %c5_643 = arith.constant 5 : index
    %c34_644 = arith.constant 34 : index
    %1328 = memref.load %arg1[%c5_643, %c34_644] : memref<8x36xf32, #tpu.memory_space<smem>>
    %1329 = vector.broadcast %1328 : f32 to vector<2x256xf32>
    %1330 = arith.mulf %1329, %1307 : vector<2x256xf32>
    %1331 = arith.addf %1298, %1330 : vector<2x256xf32>
    %c6_645 = arith.constant 6 : index
    %c34_646 = arith.constant 34 : index
    %1332 = memref.load %arg1[%c6_645, %c34_646] : memref<8x36xf32, #tpu.memory_space<smem>>
    %1333 = vector.broadcast %1332 : f32 to vector<2x256xf32>
    %1334 = arith.mulf %1333, %1307 : vector<2x256xf32>
    %1335 = arith.addf %1302, %1334 : vector<2x256xf32>
    %c7_647 = arith.constant 7 : index
    %c34_648 = arith.constant 34 : index
    %1336 = memref.load %arg1[%c7_647, %c34_648] : memref<8x36xf32, #tpu.memory_space<smem>>
    %1337 = vector.broadcast %1336 : f32 to vector<2x256xf32>
    %1338 = arith.mulf %1337, %1307 : vector<2x256xf32>
    %1339 = arith.addf %1306, %1338 : vector<2x256xf32>
    %c222_i32_649 = arith.constant 222 : i32
    %1340 = tpu.dynamic_rotate %180 by %c222_i32_649 dim 1 : vector<2x256xf32>, i32 -> vector<2x256xf32>
    %c0_650 = arith.constant 0 : index
    %c35 = arith.constant 35 : index
    %1341 = memref.load %arg1[%c0_650, %c35] : memref<8x36xf32, #tpu.memory_space<smem>>
    %1342 = vector.broadcast %1341 : f32 to vector<2x256xf32>
    %1343 = arith.mulf %1342, %1340 : vector<2x256xf32>
    %1344 = arith.addf %1311, %1343 : vector<2x256xf32>
    %c1_651 = arith.constant 1 : index
    %c35_652 = arith.constant 35 : index
    %1345 = memref.load %arg1[%c1_651, %c35_652] : memref<8x36xf32, #tpu.memory_space<smem>>
    %1346 = vector.broadcast %1345 : f32 to vector<2x256xf32>
    %1347 = arith.mulf %1346, %1340 : vector<2x256xf32>
    %1348 = arith.addf %1315, %1347 : vector<2x256xf32>
    %c2_653 = arith.constant 2 : index
    %c35_654 = arith.constant 35 : index
    %1349 = memref.load %arg1[%c2_653, %c35_654] : memref<8x36xf32, #tpu.memory_space<smem>>
    %1350 = vector.broadcast %1349 : f32 to vector<2x256xf32>
    %1351 = arith.mulf %1350, %1340 : vector<2x256xf32>
    %1352 = arith.addf %1319, %1351 : vector<2x256xf32>
    %c3_655 = arith.constant 3 : index
    %c35_656 = arith.constant 35 : index
    %1353 = memref.load %arg1[%c3_655, %c35_656] : memref<8x36xf32, #tpu.memory_space<smem>>
    %1354 = vector.broadcast %1353 : f32 to vector<2x256xf32>
    %1355 = arith.mulf %1354, %1340 : vector<2x256xf32>
    %1356 = arith.addf %1323, %1355 : vector<2x256xf32>
    %c4_657 = arith.constant 4 : index
    %c35_658 = arith.constant 35 : index
    %1357 = memref.load %arg1[%c4_657, %c35_658] : memref<8x36xf32, #tpu.memory_space<smem>>
    %1358 = vector.broadcast %1357 : f32 to vector<2x256xf32>
    %1359 = arith.mulf %1358, %1340 : vector<2x256xf32>
    %1360 = arith.addf %1327, %1359 : vector<2x256xf32>
    %c5_659 = arith.constant 5 : index
    %c35_660 = arith.constant 35 : index
    %1361 = memref.load %arg1[%c5_659, %c35_660] : memref<8x36xf32, #tpu.memory_space<smem>>
    %1362 = vector.broadcast %1361 : f32 to vector<2x256xf32>
    %1363 = arith.mulf %1362, %1340 : vector<2x256xf32>
    %1364 = arith.addf %1331, %1363 : vector<2x256xf32>
    %c6_661 = arith.constant 6 : index
    %c35_662 = arith.constant 35 : index
    %1365 = memref.load %arg1[%c6_661, %c35_662] : memref<8x36xf32, #tpu.memory_space<smem>>
    %1366 = vector.broadcast %1365 : f32 to vector<2x256xf32>
    %1367 = arith.mulf %1366, %1340 : vector<2x256xf32>
    %1368 = arith.addf %1335, %1367 : vector<2x256xf32>
    %c7_663 = arith.constant 7 : index
    %c35_664 = arith.constant 35 : index
    %1369 = memref.load %arg1[%c7_663, %c35_664] : memref<8x36xf32, #tpu.memory_space<smem>>
    %1370 = vector.broadcast %1369 : f32 to vector<2x256xf32>
    %1371 = arith.mulf %1370, %1340 : vector<2x256xf32>
    %1372 = arith.addf %1339, %1371 : vector<2x256xf32>
    %c0_665 = arith.constant 0 : index
    %1373 = memref.load %arg3[%c0_665] : memref<8xf32, #tpu.memory_space<smem>>
    %1374 = vector.broadcast %1373 : f32 to vector<2x256xf32>
    %1375 = arith.addf %1344, %1374 : vector<2x256xf32>
    %cst_666 = arith.constant 0.00999999977 : f32
    %1376 = vector.broadcast %cst_666 : f32 to vector<2x256xf32>
    %1377 = arith.mulf %1376, %1375 : vector<2x256xf32>
    %1378 = arith.maximumf %1375, %1377 : vector<2x256xf32>
    %c0_667 = arith.constant 0 : index
    %c0_668 = arith.constant 0 : index
    %1379 = vector.load %arg16[%c0_667, %c0_668] : memref<2x2048xf32, #tpu.memory_space<vmem>>, vector<2x256xf32>
    tpu.vector_store %arg16[%c0_667, %c0_668], %1378 {strides = array<i32>} : memref<2x2048xf32, #tpu.memory_space<vmem>>, vector<2x256xf32>,
    %c1_669 = arith.constant 1 : index
    %1380 = memref.load %arg3[%c1_669] : memref<8xf32, #tpu.memory_space<smem>>
    %1381 = vector.broadcast %1380 : f32 to vector<2x256xf32>
    %1382 = arith.addf %1348, %1381 : vector<2x256xf32>
    %cst_670 = arith.constant 0.00999999977 : f32
    %1383 = vector.broadcast %cst_670 : f32 to vector<2x256xf32>
    %1384 = arith.mulf %1383, %1382 : vector<2x256xf32>
    %1385 = arith.maximumf %1382, %1384 : vector<2x256xf32>
    %c0_671 = arith.constant 0 : index
    %c256 = arith.constant 256 : index
    %1386 = vector.load %arg16[%c0_671, %c256] : memref<2x2048xf32, #tpu.memory_space<vmem>>, vector<2x256xf32>
    tpu.vector_store %arg16[%c0_671, %c256], %1385 {strides = array<i32>} : memref<2x2048xf32, #tpu.memory_space<vmem>>, vector<2x256xf32>,
    %c2_672 = arith.constant 2 : index
    %1387 = memref.load %arg3[%c2_672] : memref<8xf32, #tpu.memory_space<smem>>
    %1388 = vector.broadcast %1387 : f32 to vector<2x256xf32>
    %1389 = arith.addf %1352, %1388 : vector<2x256xf32>
    %cst_673 = arith.constant 0.00999999977 : f32
    %1390 = vector.broadcast %cst_673 : f32 to vector<2x256xf32>
    %1391 = arith.mulf %1390, %1389 : vector<2x256xf32>
    %1392 = arith.maximumf %1389, %1391 : vector<2x256xf32>
    %c0_674 = arith.constant 0 : index
    %c512 = arith.constant 512 : index
    %1393 = vector.load %arg16[%c0_674, %c512] : memref<2x2048xf32, #tpu.memory_space<vmem>>, vector<2x256xf32>
    tpu.vector_store %arg16[%c0_674, %c512], %1392 {strides = array<i32>} : memref<2x2048xf32, #tpu.memory_space<vmem>>, vector<2x256xf32>,
    %c3_675 = arith.constant 3 : index
    %1394 = memref.load %arg3[%c3_675] : memref<8xf32, #tpu.memory_space<smem>>
    %1395 = vector.broadcast %1394 : f32 to vector<2x256xf32>
    %1396 = arith.addf %1356, %1395 : vector<2x256xf32>
    %cst_676 = arith.constant 0.00999999977 : f32
    %1397 = vector.broadcast %cst_676 : f32 to vector<2x256xf32>
    %1398 = arith.mulf %1397, %1396 : vector<2x256xf32>
    %1399 = arith.maximumf %1396, %1398 : vector<2x256xf32>
    %c0_677 = arith.constant 0 : index
    %c768 = arith.constant 768 : index
    %1400 = vector.load %arg16[%c0_677, %c768] : memref<2x2048xf32, #tpu.memory_space<vmem>>, vector<2x256xf32>
    tpu.vector_store %arg16[%c0_677, %c768], %1399 {strides = array<i32>} : memref<2x2048xf32, #tpu.memory_space<vmem>>, vector<2x256xf32>,
    %c4_678 = arith.constant 4 : index
    %1401 = memref.load %arg3[%c4_678] : memref<8xf32, #tpu.memory_space<smem>>
    %1402 = vector.broadcast %1401 : f32 to vector<2x256xf32>
    %1403 = arith.addf %1360, %1402 : vector<2x256xf32>
    %cst_679 = arith.constant 0.00999999977 : f32
    %1404 = vector.broadcast %cst_679 : f32 to vector<2x256xf32>
    %1405 = arith.mulf %1404, %1403 : vector<2x256xf32>
    %1406 = arith.maximumf %1403, %1405 : vector<2x256xf32>
    %c0_680 = arith.constant 0 : index
    %c1024 = arith.constant 1024 : index
    %1407 = vector.load %arg16[%c0_680, %c1024] : memref<2x2048xf32, #tpu.memory_space<vmem>>, vector<2x256xf32>
    tpu.vector_store %arg16[%c0_680, %c1024], %1406 {strides = array<i32>} : memref<2x2048xf32, #tpu.memory_space<vmem>>, vector<2x256xf32>,
    %c5_681 = arith.constant 5 : index
    %1408 = memref.load %arg3[%c5_681] : memref<8xf32, #tpu.memory_space<smem>>
    %1409 = vector.broadcast %1408 : f32 to vector<2x256xf32>
    %1410 = arith.addf %1364, %1409 : vector<2x256xf32>
    %cst_682 = arith.constant 0.00999999977 : f32
    %1411 = vector.broadcast %cst_682 : f32 to vector<2x256xf32>
    %1412 = arith.mulf %1411, %1410 : vector<2x256xf32>
    %1413 = arith.maximumf %1410, %1412 : vector<2x256xf32>
    %c0_683 = arith.constant 0 : index
    %c1280 = arith.constant 1280 : index
    %1414 = vector.load %arg16[%c0_683, %c1280] : memref<2x2048xf32, #tpu.memory_space<vmem>>, vector<2x256xf32>
    tpu.vector_store %arg16[%c0_683, %c1280], %1413 {strides = array<i32>} : memref<2x2048xf32, #tpu.memory_space<vmem>>, vector<2x256xf32>,
    %c6_684 = arith.constant 6 : index
    %1415 = memref.load %arg3[%c6_684] : memref<8xf32, #tpu.memory_space<smem>>
    %1416 = vector.broadcast %1415 : f32 to vector<2x256xf32>
    %1417 = arith.addf %1368, %1416 : vector<2x256xf32>
    %cst_685 = arith.constant 0.00999999977 : f32
    %1418 = vector.broadcast %cst_685 : f32 to vector<2x256xf32>
    %1419 = arith.mulf %1418, %1417 : vector<2x256xf32>
    %1420 = arith.maximumf %1417, %1419 : vector<2x256xf32>
    %c0_686 = arith.constant 0 : index
    %c1536 = arith.constant 1536 : index
    %1421 = vector.load %arg16[%c0_686, %c1536] : memref<2x2048xf32, #tpu.memory_space<vmem>>, vector<2x256xf32>
    tpu.vector_store %arg16[%c0_686, %c1536], %1420 {strides = array<i32>} : memref<2x2048xf32, #tpu.memory_space<vmem>>, vector<2x256xf32>,
    %c7_687 = arith.constant 7 : index
    %1422 = memref.load %arg3[%c7_687] : memref<8xf32, #tpu.memory_space<smem>>
    %1423 = vector.broadcast %1422 : f32 to vector<2x256xf32>
    %1424 = arith.addf %1372, %1423 : vector<2x256xf32>
    %cst_688 = arith.constant 0.00999999977 : f32
    %1425 = vector.broadcast %cst_688 : f32 to vector<2x256xf32>
    %1426 = arith.mulf %1425, %1424 : vector<2x256xf32>
    %1427 = arith.maximumf %1424, %1426 : vector<2x256xf32>
    %c0_689 = arith.constant 0 : index
    %c1792 = arith.constant 1792 : index
    %1428 = vector.load %arg16[%c0_689, %c1792] : memref<2x2048xf32, #tpu.memory_space<vmem>>, vector<2x256xf32>
    tpu.vector_store %arg16[%c0_689, %c1792], %1427 {strides = array<i32>} : memref<2x2048xf32, #tpu.memory_space<vmem>>, vector<2x256xf32>,
    %c0_690 = arith.constant 0 : index
    %c0_691 = arith.constant 0 : index
    %1429 = vector.load %arg16[%c0_690, %c0_691] : memref<2x2048xf32, #tpu.memory_space<vmem>>, vector<2x2048xf32>
    %c0_692 = arith.constant 0 : index
    %c0_693 = arith.constant 0 : index
    %1430 = vector.load %arg7[%c0_692, %c0_693] : memref<2048x32xf32, #tpu.memory_space<vmem>>, vector<2048x32xf32>
    %cst_694 = arith.constant dense<0.000000e+00> : vector<2x32xf32>
    %1431 = tpu.matmul %1429, %1430, %cst_694 {dimension_numbers = #tpu.dot_dimension_numbers<[1], [0], [0], [1], [0, 0, 1, 1], [], []>} : vector<2x2048xf32>, vector<2048x32xf32>, vector<2x32xf32> -> vector<2x32xf32>
    %c0_695 = arith.constant 0 : index
    %c0_696 = arith.constant 0 : index
    %1432 = vector.load %arg5[%c0_695, %c0_696] : memref<2x4xf32, #tpu.memory_space<vmem>>, vector<2x4xf32>
    %c0_697 = arith.constant 0 : index
    %c0_698 = arith.constant 0 : index
    %1433 = vector.load %arg8[%c0_697, %c0_698] : memref<4x32xf32, #tpu.memory_space<vmem>>, vector<4x32xf32>
    %cst_699 = arith.constant dense<0.000000e+00> : vector<2x32xf32>
    %1434 = tpu.matmul %1432, %1433, %cst_699 {dimension_numbers = #tpu.dot_dimension_numbers<[1], [0], [0], [1], [0, 0, 1, 1], [], []>} : vector<2x4xf32>, vector<4x32xf32>, vector<2x32xf32> -> vector<2x32xf32>
    %1435 = arith.addf %1431, %1434 : vector<2x32xf32>
    %c0_700 = arith.constant 0 : index
    %c0_701 = arith.constant 0 : index
    %1436 = vector.load %arg6[%c0_700, %c0_701] : memref<2x2xf32, #tpu.memory_space<vmem>>, vector<2x2xf32>
    %c0_702 = arith.constant 0 : index
    %c0_703 = arith.constant 0 : index
    %1437 = vector.load %arg9[%c0_702, %c0_703] : memref<2x32xf32, #tpu.memory_space<vmem>>, vector<2x32xf32>
    %cst_704 = arith.constant dense<0.000000e+00> : vector<2x32xf32>
    %1438 = tpu.matmul %1436, %1437, %cst_704 {dimension_numbers = #tpu.dot_dimension_numbers<[1], [0], [0], [1], [0, 0, 1, 1], [], []>} : vector<2x2xf32>, vector<2x32xf32>, vector<2x32xf32> -> vector<2x32xf32>
    %1439 = arith.addf %1435, %1438 : vector<2x32xf32>
    %c0_705 = arith.constant 0 : index
    %c0_706 = arith.constant 0 : index
    %1440 = vector.load %arg10[%c0_705, %c0_706] : memref<1x32xf32, #tpu.memory_space<vmem>>, vector<1x32xf32>
    %1441 = vector.broadcast %1440 : vector<1x32xf32> to vector<2x32xf32>
    %1442 = arith.addf %1439, %1441 : vector<2x32xf32>
    %cst_707 = arith.constant 0.00999999977 : f32
    %1443 = vector.broadcast %cst_707 : f32 to vector<2x32xf32>
    %1444 = arith.mulf %1443, %1442 : vector<2x32xf32>
    %1445 = arith.maximumf %1442, %1444 : vector<2x32xf32>
    %c0_708 = arith.constant 0 : index
    %c0_709 = arith.constant 0 : index
    %1446 = vector.load %arg11[%c0_708, %c0_709] : memref<32x32xf32, #tpu.memory_space<vmem>>, vector<32x32xf32>
    %cst_710 = arith.constant dense<0.000000e+00> : vector<2x32xf32>
    %1447 = tpu.matmul %1445, %1446, %cst_710 {dimension_numbers = #tpu.dot_dimension_numbers<[1], [0], [0], [1], [0, 0, 1, 1], [], []>} : vector<2x32xf32>, vector<32x32xf32>, vector<2x32xf32> -> vector<2x32xf32>
    %c0_711 = arith.constant 0 : index
    %c0_712 = arith.constant 0 : index
    %1448 = vector.load %arg12[%c0_711, %c0_712] : memref<1x32xf32, #tpu.memory_space<vmem>>, vector<1x32xf32>
    %1449 = vector.broadcast %1448 : vector<1x32xf32> to vector<2x32xf32>
    %1450 = arith.addf %1447, %1449 : vector<2x32xf32>
    %cst_713 = arith.constant 0.00999999977 : f32
    %1451 = vector.broadcast %cst_713 : f32 to vector<2x32xf32>
    %1452 = arith.mulf %1451, %1450 : vector<2x32xf32>
    %1453 = arith.maximumf %1450, %1452 : vector<2x32xf32>
    %c0_714 = arith.constant 0 : index
    %c0_715 = arith.constant 0 : index
    %1454 = vector.load %arg13[%c0_714, %c0_715] : memref<32x4xf32, #tpu.memory_space<vmem>>, vector<32x4xf32>
    %cst_716 = arith.constant dense<0.000000e+00> : vector<2x4xf32>
    %1455 = tpu.matmul %1453, %1454, %cst_716 {dimension_numbers = #tpu.dot_dimension_numbers<[1], [0], [0], [1], [0, 0, 1, 1], [], []>} : vector<2x32xf32>, vector<32x4xf32>, vector<2x4xf32> -> vector<2x4xf32>
    %c0_717 = arith.constant 0 : index
    %c0_718 = arith.constant 0 : index
    %1456 = vector.load %arg14[%c0_717, %c0_718] : memref<1x4xf32, #tpu.memory_space<vmem>>, vector<1x4xf32>
    %1457 = vector.broadcast %1456 : vector<1x4xf32> to vector<2x4xf32>
    %1458 = arith.addf %1455, %1457 : vector<2x4xf32>
    %c0_719 = arith.constant 0 : index
    %c0_720 = arith.constant 0 : index
    %1459 = vector.load %arg15[%c0_719, %c0_720] : memref<2x4xf32, #tpu.memory_space<vmem>>, vector<2x4xf32>
    tpu.vector_store %arg15[%c0_719, %c0_720], %1458 {strides = array<i32>} : memref<2x4xf32, #tpu.memory_space<vmem>>, vector<2x4xf32>,
    return
  }
}

</mosaic_0001>

<llo_original>
// kernel: forward.1
$region0: #{forward.1}
  #allocation0 [shape = 'u32[]', space=smem, size = 0x4, offset = 0x4, fixed_abs, tag = 'smem constant byte address 0x4 - core index']
  #allocation1 [shape = 'u32[144,128]{1,0:T(1,128)}', space=vmem, size = 0x12000, scoped, tag = 'internal scratch']
  #allocation2 [shape = 'f32[2,2048]{1,0:T(2,128)}', space=vmem, size = 0x4000, scoped, tag = 'scratch operand']
  %s0 = inlined_call_operand.vmem [shape: f32[4,9], index: 0, kind: input, shape index: {}]
  %s1 = inlined_call_operand.vmem [shape: f32[8,36], index: 1, kind: input, shape index: {}]
  %s2 = inlined_call_operand.vmem [shape: f32[4], index: 2, kind: input, shape index: {}]
  %s3 = inlined_call_operand.vmem [shape: f32[8], index: 3, kind: input, shape index: {}]
  %s4 = inlined_call_operand.vmem [shape: f32[2,256], index: 4, kind: input, shape index: {}]
  %s5 = inlined_call_operand.vmem [shape: f32[2,4], index: 5, kind: input, shape index: {}]
  %s6 = inlined_call_operand.vmem [shape: f32[2,2], index: 6, kind: input, shape index: {}]
  %s7 = inlined_call_operand.vmem [shape: f32[2048,32], index: 7, kind: input, shape index: {}]
  %s8 = inlined_call_operand.vmem [shape: f32[4,32], index: 8, kind: input, shape index: {}]
  %s9 = inlined_call_operand.vmem [shape: f32[2,32], index: 9, kind: input, shape index: {}]
  %s10 = inlined_call_operand.vmem [shape: f32[1,32], index: 10, kind: input, shape index: {}]
  %s11 = inlined_call_operand.vmem [shape: f32[32,32], index: 11, kind: input, shape index: {}]
  %s12 = inlined_call_operand.vmem [shape: f32[1,32], index: 12, kind: input, shape index: {}]
  %s13 = inlined_call_operand.vmem [shape: f32[32,4], index: 13, kind: input, shape index: {}]
  %s14 = inlined_call_operand.vmem [shape: f32[1,4], index: 14, kind: input, shape index: {}]
  %s15 = inlined_call_operand.hbm [shape: f32[2,4], index: 15, kind: output, shape index: {}]
  %s16 = sld [smem:[#allocation0]]
  $region86: #{forward.1} parent=0
    _
  %s18 = ssub.s32 1, %s16
  %s19 = scalar_select 0, %s18, %s16
  $region1: #{forward.1} parent=0
    #allocation3 [shape = 'u8[2048]{0}', space=smem, size = 0x800, scoped, tag = 'input window, operand 0, single buffered']
    #allocation4 [shape = 's32[1]{0}', space=sflag, size = 0x4, scoped, tag = 'scoped memory for forward.1']
    #allocation5 [shape = 's32[1]{0}', space=sflag, size = 0x4, scoped, tag = 'scoped memory for forward.1']
    #allocation6 [shape = 'u8[4096]{0}', space=smem, size = 0x1000, scoped, tag = 'input window, operand 1, single buffered']
    #allocation7 [shape = 's32[1]{0}', space=sflag, size = 0x4, scoped, tag = 'scoped memory for forward.1']
    #allocation8 [shape = 'u8[512]{0}', space=smem, size = 0x200, scoped, tag = 'input window, operand 2, single buffered']
    #allocation9 [shape = 'u8[512]{0}', space=smem, size = 0x200, scoped, tag = 'input window, operand 3, single buffered']
    #allocation10 [shape = 's32[1]{0}', space=sflag, size = 0x4, scoped, tag = 'scoped memory for forward.1']
    #allocation11 [shape = 'u8[1024]{0}', space=vmem, size = 0x400, scoped, tag = 'output window, operand 0, single buffered']
    %20 = vsyncpa [#allocation5], 0
    %21 = vsyncpa [#allocation7], 0
    %22 = vsyncpa [#allocation10], 0
    %23 = vsyncpa [#allocation4], 0
    // Predicated region
    $region2: #{forward.1} parent=1 // pred_check
      _
    $region3: #{forward.1} parent=1 // pred_check_branch
      %25 = sbr.rel (0) target = $region5
    $region4: #{forward.1} parent=1 // pred_region
      %s27 = ssub.s32 64, 64
      %28 = vsyncadd [#allocation5], %s27
      %s30 = sshll.u32 %s0, 4
      %s31 = int_to_ptr.vmem [resolvable:$true] %s30
      %33 = dma.vmem_to_smem %s31, 64, [#allocation3], [#allocation5]
    $region5: #{forward.1} parent=1 // pred_fallthru
      _
    // Predicated region
    $region6: #{forward.1} parent=1 // pred_check
      _
    $region7: #{forward.1} parent=1 // pred_check_branch
      %35 = sbr.rel (0) target = $region9
    $region8: #{forward.1} parent=1 // pred_region
      %s37 = ssub.s32 128, 128
      %38 = vsyncadd [#allocation7], %s37
      %s40 = sshll.u32 %s1, 4
      %s41 = int_to_ptr.vmem [resolvable:$true] %s40
      %43 = dma.vmem_to_smem %s41, 128, [#allocation6], [#allocation7]
    $region9: #{forward.1} parent=1 // pred_fallthru
      _
    // Predicated region
    $region10: #{forward.1} parent=1 // pred_check
      _
    $region11: #{forward.1} parent=1 // pred_check_branch
      %45 = sbr.rel (0) target = $region13
    $region12: #{forward.1} parent=1 // pred_region
      %s47 = ssub.s32 16, 16
      %48 = vsyncadd [#allocation7], %s47
      %s50 = sshll.u32 %s2, 4
      %s51 = int_to_ptr.vmem [resolvable:$true] %s50
      %53 = dma.vmem_to_smem %s51, 16, [#allocation8], [#allocation7]
    $region13: #{forward.1} parent=1 // pred_fallthru
      _
    // Predicated region
    $region14: #{forward.1} parent=1 // pred_check
      _
    $region15: #{forward.1} parent=1 // pred_check_branch
      %55 = sbr.rel (0) target = $region17
    $region16: #{forward.1} parent=1 // pred_region
      %s57 = ssub.s32 16, 16
      %58 = vsyncadd [#allocation10], %s57
      %s60 = sshll.u32 %s3, 4
      %s61 = int_to_ptr.vmem [resolvable:$true] %s60
      %63 = dma.vmem_to_smem %s61, 16, [#allocation9], [#allocation10]
    $region17: #{forward.1} parent=1 // pred_fallthru
      _
    // Predicated region
    $region18: #{forward.1} parent=1 // pred_check
      _
    $region19: #{forward.1} parent=1 // pred_check_branch
      %65 = sbr.rel (0) target = $region21
    $region20: #{forward.1} parent=1 // pred_region
      _
    $region21: #{forward.1} parent=1 // pred_fallthru
      _
    // Predicated region
    $region22: #{forward.1} parent=1 // pred_check
      _
    $region23: #{forward.1} parent=1 // pred_check_branch
      %67 = sbr.rel (0) target = $region25
    $region24: #{forward.1} parent=1 // pred_region
      _
    $region25: #{forward.1} parent=1 // pred_fallthru
      _
    // Predicated region
    $region26: #{forward.1} parent=1 // pred_check
      _
    $region27: #{forward.1} parent=1 // pred_check_branch
      %69 = sbr.rel (0) target = $region29
    $region28: #{forward.1} parent=1 // pred_region
      _
    $region29: #{forward.1} parent=1 // pred_fallthru
      _
    // Predicated region
    $region30: #{forward.1} parent=1 // pred_check
      _
    $region31: #{forward.1} parent=1 // pred_check_branch
      %71 = sbr.rel (0) target = $region33
    $region32: #{forward.1} parent=1 // pred_region
      _
    $region33: #{forward.1} parent=1 // pred_fallthru
      _
    // Predicated region
    $region34: #{forward.1} parent=1 // pred_check
      _
    $region35: #{forward.1} parent=1 // pred_check_branch
      %73 = sbr.rel (0) target = $region37
    $region36: #{forward.1} parent=1 // pred_region
      _
    $region37: #{forward.1} parent=1 // pred_fallthru
      _
    // Predicated region
    $region38: #{forward.1} parent=1 // pred_check
      _
    $region39: #{forward.1} parent=1 // pred_check_branch
      %75 = sbr.rel (0) target = $region41
    $region40: #{forward.1} parent=1 // pred_region
      _
    $region41: #{forward.1} parent=1 // pred_fallthru
      _
    // Predicated region
    $region42: #{forward.1} parent=1 // pred_check
      _
    $region43: #{forward.1} parent=1 // pred_check_branch
      %77 = sbr.rel (0) target = $region45
    $region44: #{forward.1} parent=1 // pred_region
      _
    $region45: #{forward.1} parent=1 // pred_fallthru
      _
    // Predicated region
    $region46: #{forward.1} parent=1 // pred_check
      _
    $region47: #{forward.1} parent=1 // pred_check_branch
      %79 = sbr.rel (0) target = $region49
    $region48: #{forward.1} parent=1 // pred_region
      _
    $region49: #{forward.1} parent=1 // pred_fallthru
      _
    // Predicated region
    $region50: #{forward.1} parent=1 // pred_check
      _
    $region51: #{forward.1} parent=1 // pred_check_branch
      %81 = sbr.rel (0) target = $region53
    $region52: #{forward.1} parent=1 // pred_region
      _
    $region53: #{forward.1} parent=1 // pred_fallthru
      _
    // Predicated region
    $region54: #{forward.1} parent=1 // pred_check
      _
    $region55: #{forward.1} parent=1 // pred_check_branch
      %83 = sbr.rel (0) target = $region57
    $region56: #{forward.1} parent=1 // pred_region
      _
    $region57: #{forward.1} parent=1 // pred_fallthru
      _
    // Predicated region
    $region58: #{forward.1} parent=1 // pred_check
      _
    $region59: #{forward.1} parent=1 // pred_check_branch
      %85 = sbr.rel (0) target = $region61
    $region60: #{forward.1} parent=1 // pred_region
      _
    $region61: #{forward.1} parent=1 // pred_fallthru
      _
    // Predicated region
    $region62: #{forward.1} parent=1 // pred_check
      _
    $region63: #{forward.1} parent=1 // pred_check_branch
      %87 = sbr.rel (0) target = $region65
    $region64: #{forward.1} parent=1 // pred_region
      %88 = dma.done [#allocation5], 64
    $region65: #{forward.1} parent=1 // pred_fallthru
      _
    // Predicated region
    $region66: #{forward.1} parent=1 // pred_check
      _
    $region67: #{forward.1} parent=1 // pred_check_branch
      %90 = sbr.rel (0) target = $region69
    $region68: #{forward.1} parent=1 // pred_region
      %91 = dma.done [#allocation7], 128
    $region69: #{forward.1} parent=1 // pred_fallthru
      _
    // Predicated region
    $region70: #{forward.1} parent=1 // pred_check
      _
    $region71: #{forward.1} parent=1 // pred_check_branch
      %93 = sbr.rel (0) target = $region73
    $region72: #{forward.1} parent=1 // pred_region
      %94 = dma.done [#allocation7], 16
    $region73: #{forward.1} parent=1 // pred_fallthru
      _
    // Predicated region
    $region74: #{forward.1} parent=1 // pred_check
      _
    $region75: #{forward.1} parent=1 // pred_check_branch
      %96 = sbr.rel (0) target = $region77
    $region76: #{forward.1} parent=1 // pred_region
      %97 = dma.done [#allocation10], 16
    $region77: #{forward.1} parent=1 // pred_fallthru
      _
    %98 = sfence
    %v99 = vld [vmem:[%s4] sm:$0xf]
    %s100 = sld [smem:[#allocation3]]
    %v101 = vstv %s100
    %v102 = vmul.f32 %v101, %v99
    %v103 = vadd.f32 %v102, 0.0
    %s104 = sld [smem:[#allocation3 + $0x80]]
    %v105 = vstv %s104
    %v106 = vmul.f32 %v105, %v99
    %v107 = vadd.f32 %v106, 0.0
    %s108 = sld [smem:[#allocation3 + $0x100]]
    %v109 = vstv %s108
    %v110 = vmul.f32 %v109, %v99
    %v111 = vadd.f32 %v110, 0.0
    %s112 = sld [smem:[#allocation3 + $0x180]]
    %v113 = vstv %s112
    %v114 = vmul.f32 %v113, %v99
    %v115 = vadd.f32 %v114, 0.0
    %v118 = vunpack.c.l.s4 1983009808
    %v119 = vunpack.c.0.s8 %v118
    %v120 = vlaneseq
    %v121 = vshrl.u32 %v120, 7
    %v122 = vsub.s32 %v119, %v121
    %v123 = vrot.slane %v99, %v122
    %v124 = vcombine.high %v123, %v123
    %127 = vrot.lane.b32.xlu0 %v123, 127
    %v128 = vpop.permute.xlu0 %127
    %129 = vrot.lane.b32.xlu0 %v124, 127
    %v130 = vpop.permute.xlu0 %129
    %v131 = vlaneseq
    %v132 = vand.u32 %v131, 127
    %vm133 = vcmp.lt.s32.totalorder %v132, 127
    %v134 = vsel %vm133, %v128, %v130
    %v135 = vsel %vm133, %v130, %v128
    %s136 = sld [smem:[#allocation3 + $0x1]]
    %v137 = vstv %s136
    %v138 = vmul.f32 %v137, %v134
    %v139 = vmul.f32 %v137, %v135
    %v142 = vcombine.low %v138, %v139
    %v144 = vunpack.c.l.s4 1983009808
    %v145 = vunpack.c.0.s8 %v144
    %v146 = vlaneseq
    %v147 = vshrl.u32 %v146, 7
    %v148 = vsub.s32 %v145, %v147
    %v149 = vrot.slane %v142, %v148
    %v151 = vadd.f32 %v103, %v149
    %s152 = sld [smem:[#allocation3 + $0x81]]
    %v153 = vstv %s152
    %v154 = vmul.f32 %v153, %v134
    %v155 = vmul.f32 %v153, %v135
    %v158 = vcombine.low %v154, %v155
    %v160 = vunpack.c.l.s4 1983009808
    %v161 = vunpack.c.0.s8 %v160
    %v162 = vlaneseq
    %v163 = vshrl.u32 %v162, 7
    %v164 = vsub.s32 %v161, %v163
    %v165 = vrot.slane %v158, %v164
    %v167 = vadd.f32 %v107, %v165
    %s168 = sld [smem:[#allocation3 + $0x101]]
    %v169 = vstv %s168
    %v170 = vmul.f32 %v169, %v134
    %v171 = vmul.f32 %v169, %v135
    %v174 = vcombine.low %v170, %v171
    %v176 = vunpack.c.l.s4 1983009808
    %v177 = vunpack.c.0.s8 %v176
    %v178 = vlaneseq
    %v179 = vshrl.u32 %v178, 7
    %v180 = vsub.s32 %v177, %v179
    %v181 = vrot.slane %v174, %v180
    %v183 = vadd.f32 %v111, %v181
    %s184 = sld [smem:[#allocation3 + $0x181]]
    %v185 = vstv %s184
    %v186 = vmul.f32 %v185, %v134
    %v187 = vmul.f32 %v185, %v135
    %v190 = vcombine.low %v186, %v187
    %v192 = vunpack.c.l.s4 1983009808
    %v193 = vunpack.c.0.s8 %v192
    %v194 = vlaneseq
    %v195 = vshrl.u32 %v194, 7
    %v196 = vsub.s32 %v193, %v195
    %v197 = vrot.slane %v190, %v196
    %v199 = vadd.f32 %v115, %v197
    %200 = vrot.lane.b32.xlu0 %v123, 126
    %v201 = vpop.permute.xlu0 %200
    %202 = vrot.lane.b32.xlu0 %v124, 126
    %v203 = vpop.permute.xlu0 %202
    %vm204 = vcmp.lt.s32.totalorder %v132, 126
    %v205 = vsel %vm204, %v201, %v203
    %v206 = vsel %vm204, %v203, %v201
    %s207 = sld [smem:[#allocation3 + $0x2]]
    %v208 = vstv %s207
    %v209 = vmul.f32 %v208, %v205
    %v210 = vmul.f32 %v208, %v206
    %v213 = vcombine.low %v209, %v210
    %v215 = vunpack.c.l.s4 1983009808
    %v216 = vunpack.c.0.s8 %v215
    %v217 = vlaneseq
    %v218 = vshrl.u32 %v217, 7
    %v219 = vsub.s32 %v216, %v218
    %v220 = vrot.slane %v213, %v219
    %v222 = vadd.f32 %v151, %v220
    %s223 = sld [smem:[#allocation3 + $0x82]]
    %v224 = vstv %s223
    %v225 = vmul.f32 %v224, %v205
    %v226 = vmul.f32 %v224, %v206
    %v229 = vcombine.low %v225, %v226
    %v231 = vunpack.c.l.s4 1983009808
    %v232 = vunpack.c.0.s8 %v231
    %v233 = vlaneseq
    %v234 = vshrl.u32 %v233, 7
    %v235 = vsub.s32 %v232, %v234
    %v236 = vrot.slane %v229, %v235
    %v238 = vadd.f32 %v167, %v236
    %s239 = sld [smem:[#allocation3 + $0x102]]
    %v240 = vstv %s239
    %v241 = vmul.f32 %v240, %v205
    %v242 = vmul.f32 %v240, %v206
    %v245 = vcombine.low %v241, %v242
    %v247 = vunpack.c.l.s4 1983009808
    %v248 = vunpack.c.0.s8 %v247
    %v249 = vlaneseq
    %v250 = vshrl.u32 %v249, 7
    %v251 = vsub.s32 %v248, %v250
    %v252 = vrot.slane %v245, %v251
    %v254 = vadd.f32 %v183, %v252
    %s255 = sld [smem:[#allocation3 + $0x182]]
    %v256 = vstv %s255
    %v257 = vmul.f32 %v256, %v205
    %v258 = vmul.f32 %v256, %v206
    %v261 = vcombine.low %v257, %v258
    %v263 = vunpack.c.l.s4 1983009808
    %v264 = vunpack.c.0.s8 %v263
    %v265 = vlaneseq
    %v266 = vshrl.u32 %v265, 7
    %v267 = vsub.s32 %v264, %v266
    %v268 = vrot.slane %v261, %v267
    %v270 = vadd.f32 %v199, %v268
    %271 = vrot.lane.b32.xlu0 %v123, 112
    %v272 = vpop.permute.xlu0 %271
    %273 = vrot.lane.b32.xlu0 %v124, 112
    %v274 = vpop.permute.xlu0 %273
    %vm275 = vcmp.lt.s32.totalorder %v132, 112
    %v276 = vsel %vm275, %v272, %v274
    %v277 = vsel %vm275, %v274, %v272
    %s278 = sld [smem:[#allocation3 + $0x3]]
    %v279 = vstv %s278
    %v280 = vmul.f32 %v279, %v276
    %v281 = vmul.f32 %v279, %v277
    %v284 = vcombine.low %v280, %v281
    %v286 = vunpack.c.l.s4 1983009808
    %v287 = vunpack.c.0.s8 %v286
    %v288 = vlaneseq
    %v289 = vshrl.u32 %v288, 7
    %v290 = vsub.s32 %v287, %v289
    %v291 = vrot.slane %v284, %v290
    %v293 = vadd.f32 %v222, %v291
    %s294 = sld [smem:[#allocation3 + $0x83]]
    %v295 = vstv %s294
    %v296 = vmul.f32 %v295, %v276
    %v297 = vmul.f32 %v295, %v277
    %v300 = vcombine.low %v296, %v297
    %v302 = vunpack.c.l.s4 1983009808
    %v303 = vunpack.c.0.s8 %v302
    %v304 = vlaneseq
    %v305 = vshrl.u32 %v304, 7
    %v306 = vsub.s32 %v303, %v305
    %v307 = vrot.slane %v300, %v306
    %v309 = vadd.f32 %v238, %v307
    %s310 = sld [smem:[#allocation3 + $0x103]]
    %v311 = vstv %s310
    %v312 = vmul.f32 %v311, %v276
    %v313 = vmul.f32 %v311, %v277
    %v316 = vcombine.low %v312, %v313
    %v318 = vunpack.c.l.s4 1983009808
    %v319 = vunpack.c.0.s8 %v318
    %v320 = vlaneseq
    %v321 = vshrl.u32 %v320, 7
    %v322 = vsub.s32 %v319, %v321
    %v323 = vrot.slane %v316, %v322
    %v325 = vadd.f32 %v254, %v323
    %s326 = sld [smem:[#allocation3 + $0x183]]
    %v327 = vstv %s326
    %v328 = vmul.f32 %v327, %v276
    %v329 = vmul.f32 %v327, %v277
    %v332 = vcombine.low %v328, %v329
    %v334 = vunpack.c.l.s4 1983009808
    %v335 = vunpack.c.0.s8 %v334
    %v336 = vlaneseq
    %v337 = vshrl.u32 %v336, 7
    %v338 = vsub.s32 %v335, %v337
    %v339 = vrot.slane %v332, %v338
    %v341 = vadd.f32 %v270, %v339
    %342 = vrot.lane.b32.xlu0 %v123, 111
    %v343 = vpop.permute.xlu0 %342
    %344 = vrot.lane.b32.xlu0 %v124, 111
    %v345 = vpop.permute.xlu0 %344
    %vm346 = vcmp.lt.s32.totalorder %v132, 111
    %v347 = vsel %vm346, %v343, %v345
    %v348 = vsel %vm346, %v345, %v343
    %s349 = sld [smem:[#allocation3 + $0x4]]
    %v350 = vstv %s349
    %v351 = vmul.f32 %v350, %v347
    %v352 = vmul.f32 %v350, %v348
    %v355 = vcombine.low %v351, %v352
    %v357 = vunpack.c.l.s4 1983009808
    %v358 = vunpack.c.0.s8 %v357
    %v359 = vlaneseq
    %v360 = vshrl.u32 %v359, 7
    %v361 = vsub.s32 %v358, %v360
    %v362 = vrot.slane %v355, %v361
    %v364 = vadd.f32 %v293, %v362
    %s365 = sld [smem:[#allocation3 + $0x84]]
    %v366 = vstv %s365
    %v367 = vmul.f32 %v366, %v347
    %v368 = vmul.f32 %v366, %v348
    %v371 = vcombine.low %v367, %v368
    %v373 = vunpack.c.l.s4 1983009808
    %v374 = vunpack.c.0.s8 %v373
    %v375 = vlaneseq
    %v376 = vshrl.u32 %v375, 7
    %v377 = vsub.s32 %v374, %v376
    %v378 = vrot.slane %v371, %v377
    %v380 = vadd.f32 %v309, %v378
    %s381 = sld [smem:[#allocation3 + $0x104]]
    %v382 = vstv %s381
    %v383 = vmul.f32 %v382, %v347
    %v384 = vmul.f32 %v382, %v348
    %v387 = vcombine.low %v383, %v384
    %v389 = vunpack.c.l.s4 1983009808
    %v390 = vunpack.c.0.s8 %v389
    %v391 = vlaneseq
    %v392 = vshrl.u32 %v391, 7
    %v393 = vsub.s32 %v390, %v392
    %v394 = vrot.slane %v387, %v393
    %v396 = vadd.f32 %v325, %v394
    %s397 = sld [smem:[#allocation3 + $0x184]]
    %v398 = vstv %s397
    %v399 = vmul.f32 %v398, %v347
    %v400 = vmul.f32 %v398, %v348
    %v403 = vcombine.low %v399, %v400
    %v405 = vunpack.c.l.s4 1983009808
    %v406 = vunpack.c.0.s8 %v405
    %v407 = vlaneseq
    %v408 = vshrl.u32 %v407, 7
    %v409 = vsub.s32 %v406, %v408
    %v410 = vrot.slane %v403, %v409
    %v412 = vadd.f32 %v341, %v410
    %413 = vrot.lane.b32.xlu0 %v123, 110
    %v414 = vpop.permute.xlu0 %413
    %415 = vrot.lane.b32.xlu0 %v124, 110
    %v416 = vpop.permute.xlu0 %415
    %vm417 = vcmp.lt.s32.totalorder %v132, 110
    %v418 = vsel %vm417, %v414, %v416
    %v419 = vsel %vm417, %v416, %v414
    %s420 = sld [smem:[#allocation3 + $0x5]]
    %v421 = vstv %s420
    %v422 = vmul.f32 %v421, %v418
    %v423 = vmul.f32 %v421, %v419
    %v426 = vcombine.low %v422, %v423
    %v428 = vunpack.c.l.s4 1983009808
    %v429 = vunpack.c.0.s8 %v428
    %v430 = vlaneseq
    %v431 = vshrl.u32 %v430, 7
    %v432 = vsub.s32 %v429, %v431
    %v433 = vrot.slane %v426, %v432
    %v435 = vadd.f32 %v364, %v433
    %s436 = sld [smem:[#allocation3 + $0x85]]
    %v437 = vstv %s436
    %v438 = vmul.f32 %v437, %v418
    %v439 = vmul.f32 %v437, %v419
    %v442 = vcombine.low %v438, %v439
    %v444 = vunpack.c.l.s4 1983009808
    %v445 = vunpack.c.0.s8 %v444
    %v446 = vlaneseq
    %v447 = vshrl.u32 %v446, 7
    %v448 = vsub.s32 %v445, %v447
    %v449 = vrot.slane %v442, %v448
    %v451 = vadd.f32 %v380, %v449
    %s452 = sld [smem:[#allocation3 + $0x105]]
    %v453 = vstv %s452
    %v454 = vmul.f32 %v453, %v418
    %v455 = vmul.f32 %v453, %v419
    %v458 = vcombine.low %v454, %v455
    %v460 = vunpack.c.l.s4 1983009808
    %v461 = vunpack.c.0.s8 %v460
    %v462 = vlaneseq
    %v463 = vshrl.u32 %v462, 7
    %v464 = vsub.s32 %v461, %v463
    %v465 = vrot.slane %v458, %v464
    %v467 = vadd.f32 %v396, %v465
    %s468 = sld [smem:[#allocation3 + $0x185]]
    %v469 = vstv %s468
    %v470 = vmul.f32 %v469, %v418
    %v471 = vmul.f32 %v469, %v419
    %v474 = vcombine.low %v470, %v471
    %v476 = vunpack.c.l.s4 1983009808
    %v477 = vunpack.c.0.s8 %v476
    %v478 = vlaneseq
    %v479 = vshrl.u32 %v478, 7
    %v480 = vsub.s32 %v477, %v479
    %v481 = vrot.slane %v474, %v480
    %v483 = vadd.f32 %v412, %v481
    %484 = vrot.lane.b32.xlu0 %v123, 96
    %v485 = vpop.permute.xlu0 %484
    %486 = vrot.lane.b32.xlu0 %v124, 96
    %v487 = vpop.permute.xlu0 %486
    %vm488 = vcmp.lt.s32.totalorder %v132, 96
    %v489 = vsel %vm488, %v485, %v487
    %v490 = vsel %vm488, %v487, %v485
    %s491 = sld [smem:[#allocation3 + $0x6]]
    %v492 = vstv %s491
    %v493 = vmul.f32 %v492, %v489
    %v494 = vmul.f32 %v492, %v490
    %v497 = vcombine.low %v493, %v494
    %v499 = vunpack.c.l.s4 1983009808
    %v500 = vunpack.c.0.s8 %v499
    %v501 = vlaneseq
    %v502 = vshrl.u32 %v501, 7
    %v503 = vsub.s32 %v500, %v502
    %v504 = vrot.slane %v497, %v503
    %v506 = vadd.f32 %v435, %v504
    %s507 = sld [smem:[#allocation3 + $0x86]]
    %v508 = vstv %s507
    %v509 = vmul.f32 %v508, %v489
    %v510 = vmul.f32 %v508, %v490
    %v513 = vcombine.low %v509, %v510
    %v515 = vunpack.c.l.s4 1983009808
    %v516 = vunpack.c.0.s8 %v515
    %v517 = vlaneseq
    %v518 = vshrl.u32 %v517, 7
    %v519 = vsub.s32 %v516, %v518
    %v520 = vrot.slane %v513, %v519
    %v522 = vadd.f32 %v451, %v520
    %s523 = sld [smem:[#allocation3 + $0x106]]
    %v524 = vstv %s523
    %v525 = vmul.f32 %v524, %v489
    %v526 = vmul.f32 %v524, %v490
    %v529 = vcombine.low %v525, %v526
    %v531 = vunpack.c.l.s4 1983009808
    %v532 = vunpack.c.0.s8 %v531
    %v533 = vlaneseq
    %v534 = vshrl.u32 %v533, 7
    %v535 = vsub.s32 %v532, %v534
    %v536 = vrot.slane %v529, %v535
    %v538 = vadd.f32 %v467, %v536
    %s539 = sld [smem:[#allocation3 + $0x186]]
    %v540 = vstv %s539
    %v541 = vmul.f32 %v540, %v489
    %v542 = vmul.f32 %v540, %v490
    %v545 = vcombine.low %v541, %v542
    %v547 = vunpack.c.l.s4 1983009808
    %v548 = vunpack.c.0.s8 %v547
    %v549 = vlaneseq
    %v550 = vshrl.u32 %v549, 7
    %v551 = vsub.s32 %v548, %v550
    %v552 = vrot.slane %v545, %v551
    %v554 = vadd.f32 %v483, %v552
    %555 = vrot.lane.b32.xlu0 %v123, 95
    %v556 = vpop.permute.xlu0 %555
    %557 = vrot.lane.b32.xlu0 %v124, 95
    %v558 = vpop.permute.xlu0 %557
    %vm559 = vcmp.lt.s32.totalorder %v132, 95
    %v560 = vsel %vm559, %v556, %v558
    %v561 = vsel %vm559, %v558, %v556
    %s562 = sld [smem:[#allocation3 + $0x7]]
    %v563 = vstv %s562
    %v564 = vmul.f32 %v563, %v560
    %v565 = vmul.f32 %v563, %v561
    %v568 = vcombine.low %v564, %v565
    %v570 = vunpack.c.l.s4 1983009808
    %v571 = vunpack.c.0.s8 %v570
    %v572 = vlaneseq
    %v573 = vshrl.u32 %v572, 7
    %v574 = vsub.s32 %v571, %v573
    %v575 = vrot.slane %v568, %v574
    %v577 = vadd.f32 %v506, %v575
    %s578 = sld [smem:[#allocation3 + $0x87]]
    %v579 = vstv %s578
    %v580 = vmul.f32 %v579, %v560
    %v581 = vmul.f32 %v579, %v561
    %v584 = vcombine.low %v580, %v581
    %v586 = vunpack.c.l.s4 1983009808
    %v587 = vunpack.c.0.s8 %v586
    %v588 = vlaneseq
    %v589 = vshrl.u32 %v588, 7
    %v590 = vsub.s32 %v587, %v589
    %v591 = vrot.slane %v584, %v590
    %v593 = vadd.f32 %v522, %v591
    %s594 = sld [smem:[#allocation3 + $0x107]]
    %v595 = vstv %s594
    %v596 = vmul.f32 %v595, %v560
    %v597 = vmul.f32 %v595, %v561
    %v600 = vcombine.low %v596, %v597
    %v602 = vunpack.c.l.s4 1983009808
    %v603 = vunpack.c.0.s8 %v602
    %v604 = vlaneseq
    %v605 = vshrl.u32 %v604, 7
    %v606 = vsub.s32 %v603, %v605
    %v607 = vrot.slane %v600, %v606
    %v609 = vadd.f32 %v538, %v607
    %s610 = sld [smem:[#allocation3 + $0x187]]
    %v611 = vstv %s610
    %v612 = vmul.f32 %v611, %v560
    %v613 = vmul.f32 %v611, %v561
    %v616 = vcombine.low %v612, %v613
    %v618 = vunpack.c.l.s4 1983009808
    %v619 = vunpack.c.0.s8 %v618
    %v620 = vlaneseq
    %v621 = vshrl.u32 %v620, 7
    %v622 = vsub.s32 %v619, %v621
    %v623 = vrot.slane %v616, %v622
    %v625 = vadd.f32 %v554, %v623
    %626 = vrot.lane.b32.xlu0 %v123, 94
    %v627 = vpop.permute.xlu0 %626
    %628 = vrot.lane.b32.xlu0 %v124, 94
    %v629 = vpop.permute.xlu0 %628
    %vm630 = vcmp.lt.s32.totalorder %v132, 94
    %v631 = vsel %vm630, %v627, %v629
    %v632 = vsel %vm630, %v629, %v627
    %s633 = sld [smem:[#allocation3 + $0x8]]
    %v634 = vstv %s633
    %v635 = vmul.f32 %v634, %v631
    %v636 = vmul.f32 %v634, %v632
    %v639 = vcombine.low %v635, %v636
    %v641 = vunpack.c.l.s4 1983009808
    %v642 = vunpack.c.0.s8 %v641
    %v643 = vlaneseq
    %v644 = vshrl.u32 %v643, 7
    %v645 = vsub.s32 %v642, %v644
    %v646 = vrot.slane %v639, %v645
    %v648 = vadd.f32 %v577, %v646
    %s649 = sld [smem:[#allocation3 + $0x88]]
    %v650 = vstv %s649
    %v651 = vmul.f32 %v650, %v631
    %v652 = vmul.f32 %v650, %v632
    %v655 = vcombine.low %v651, %v652
    %v657 = vunpack.c.l.s4 1983009808
    %v658 = vunpack.c.0.s8 %v657
    %v659 = vlaneseq
    %v660 = vshrl.u32 %v659, 7
    %v661 = vsub.s32 %v658, %v660
    %v662 = vrot.slane %v655, %v661
    %v664 = vadd.f32 %v593, %v662
    %s665 = sld [smem:[#allocation3 + $0x108]]
    %v666 = vstv %s665
    %v667 = vmul.f32 %v666, %v631
    %v668 = vmul.f32 %v666, %v632
    %v671 = vcombine.low %v667, %v668
    %v673 = vunpack.c.l.s4 1983009808
    %v674 = vunpack.c.0.s8 %v673
    %v675 = vlaneseq
    %v676 = vshrl.u32 %v675, 7
    %v677 = vsub.s32 %v674, %v676
    %v678 = vrot.slane %v671, %v677
    %v680 = vadd.f32 %v609, %v678
    %s681 = sld [smem:[#allocation3 + $0x188]]
    %v682 = vstv %s681
    %v683 = vmul.f32 %v682, %v631
    %v684 = vmul.f32 %v682, %v632
    %v687 = vcombine.low %v683, %v684
    %v689 = vunpack.c.l.s4 1983009808
    %v690 = vunpack.c.0.s8 %v689
    %v691 = vlaneseq
    %v692 = vshrl.u32 %v691, 7
    %v693 = vsub.s32 %v690, %v692
    %v694 = vrot.slane %v687, %v693
    %v696 = vadd.f32 %v625, %v694
    %s697 = sld [smem:[#allocation8]]
    %v698 = vstv %s697
    %v699 = vadd.f32 %v648, %v698
    %v700 = vmul.f32 %v699, 0.01
    %v701 = vmax.f32 %v699, %v700
    %s702 = sld [smem:[#allocation8 + $0x1]]
    %v703 = vstv %s702
    %v704 = vadd.f32 %v664, %v703
    %v705 = vmul.f32 %v704, 0.01
    %v706 = vmax.f32 %v704, %v705
    %s707 = sld [smem:[#allocation8 + $0x2]]
    %v708 = vstv %s707
    %v709 = vadd.f32 %v680, %v708
    %v710 = vmul.f32 %v709, 0.01
    %v711 = vmax.f32 %v709, %v710
    %s712 = sld [smem:[#allocation8 + $0x3]]
    %v713 = vstv %s712
    %v714 = vadd.f32 %v696, %v713
    %v715 = vmul.f32 %v714, 0.01
    %v716 = vmax.f32 %v714, %v715
    %s717 = sld [smem:[#allocation6]]
    %v718 = vstv %s717
    %v719 = vmul.f32 %v718, %v701
    %v720 = vadd.f32 %v719, 0.0
    %s721 = sld [smem:[#allocation6 + $0x80]]
    %v722 = vstv %s721
    %v723 = vmul.f32 %v722, %v701
    %v724 = vadd.f32 %v723, 0.0
    %s725 = sld [smem:[#allocation6 + $0x100]]
    %v726 = vstv %s725
    %v727 = vmul.f32 %v726, %v701
    %v728 = vadd.f32 %v727, 0.0
    %s729 = sld [smem:[#allocation6 + $0x180]]
    %v730 = vstv %s729
    %v731 = vmul.f32 %v730, %v701
    %v732 = vadd.f32 %v731, 0.0
    %s733 = sld [smem:[#allocation6 + $0x200]]
    %v734 = vstv %s733
    %v735 = vmul.f32 %v734, %v701
    %v736 = vadd.f32 %v735, 0.0
    %s737 = sld [smem:[#allocation6 + $0x280]]
    %v738 = vstv %s737
    %v739 = vmul.f32 %v738, %v701
    %v740 = vadd.f32 %v739, 0.0
    %s741 = sld [smem:[#allocation6 + $0x300]]
    %v742 = vstv %s741
    %v743 = vmul.f32 %v742, %v701
    %v744 = vadd.f32 %v743, 0.0
    %s745 = sld [smem:[#allocation6 + $0x380]]
    %v746 = vstv %s745
    %v747 = vmul.f32 %v746, %v701
    %v748 = vadd.f32 %v747, 0.0
    %v751 = vunpack.c.l.s4 1983009808
    %v752 = vunpack.c.0.s8 %v751
    %v753 = vlaneseq
    %v754 = vshrl.u32 %v753, 7
    %v755 = vsub.s32 %v752, %v754
    %v756 = vrot.slane %v701, %v755
    %v757 = vcombine.high %v756, %v756
    %760 = vrot.lane.b32.xlu0 %v756, 127
    %v761 = vpop.permute.xlu0 %760
    %762 = vrot.lane.b32.xlu0 %v757, 127
    %v763 = vpop.permute.xlu0 %762
    %v764 = vsel %vm133, %v761, %v763
    %v765 = vsel %vm133, %v763, %v761
    %s766 = sld [smem:[#allocation6 + $0x1]]
    %v767 = vstv %s766
    %v768 = vmul.f32 %v767, %v764
    %v769 = vmul.f32 %v767, %v765
    %v772 = vcombine.low %v768, %v769
    %v774 = vunpack.c.l.s4 1983009808
    %v775 = vunpack.c.0.s8 %v774
    %v776 = vlaneseq
    %v777 = vshrl.u32 %v776, 7
    %v778 = vsub.s32 %v775, %v777
    %v779 = vrot.slane %v772, %v778
    %v781 = vadd.f32 %v720, %v779
    %s782 = sld [smem:[#allocation6 + $0x81]]
    %v783 = vstv %s782
    %v784 = vmul.f32 %v783, %v764
    %v785 = vmul.f32 %v783, %v765
    %v788 = vcombine.low %v784, %v785
    %v790 = vunpack.c.l.s4 1983009808
    %v791 = vunpack.c.0.s8 %v790
    %v792 = vlaneseq
    %v793 = vshrl.u32 %v792, 7
    %v794 = vsub.s32 %v791, %v793
    %v795 = vrot.slane %v788, %v794
    %v797 = vadd.f32 %v724, %v795
    %s798 = sld [smem:[#allocation6 + $0x101]]
    %v799 = vstv %s798
    %v800 = vmul.f32 %v799, %v764
    %v801 = vmul.f32 %v799, %v765
    %v804 = vcombine.low %v800, %v801
    %v806 = vunpack.c.l.s4 1983009808
    %v807 = vunpack.c.0.s8 %v806
    %v808 = vlaneseq
    %v809 = vshrl.u32 %v808, 7
    %v810 = vsub.s32 %v807, %v809
    %v811 = vrot.slane %v804, %v810
    %v813 = vadd.f32 %v728, %v811
    %s814 = sld [smem:[#allocation6 + $0x181]]
    %v815 = vstv %s814
    %v816 = vmul.f32 %v815, %v764
    %v817 = vmul.f32 %v815, %v765
    %v820 = vcombine.low %v816, %v817
    %v822 = vunpack.c.l.s4 1983009808
    %v823 = vunpack.c.0.s8 %v822
    %v824 = vlaneseq
    %v825 = vshrl.u32 %v824, 7
    %v826 = vsub.s32 %v823, %v825
    %v827 = vrot.slane %v820, %v826
    %v829 = vadd.f32 %v732, %v827
    %s830 = sld [smem:[#allocation6 + $0x201]]
    %v831 = vstv %s830
    %v832 = vmul.f32 %v831, %v764
    %v833 = vmul.f32 %v831, %v765
    %v836 = vcombine.low %v832, %v833
    %v838 = vunpack.c.l.s4 1983009808
    %v839 = vunpack.c.0.s8 %v838
    %v840 = vlaneseq
    %v841 = vshrl.u32 %v840, 7
    %v842 = vsub.s32 %v839, %v841
    %v843 = vrot.slane %v836, %v842
    %v845 = vadd.f32 %v736, %v843
    %s846 = sld [smem:[#allocation6 + $0x281]]
    %v847 = vstv %s846
    %v848 = vmul.f32 %v847, %v764
    %v849 = vmul.f32 %v847, %v765
    %v852 = vcombine.low %v848, %v849
    %v854 = vunpack.c.l.s4 1983009808
    %v855 = vunpack.c.0.s8 %v854
    %v856 = vlaneseq
    %v857 = vshrl.u32 %v856, 7
    %v858 = vsub.s32 %v855, %v857
    %v859 = vrot.slane %v852, %v858
    %v861 = vadd.f32 %v740, %v859
    %s862 = sld [smem:[#allocation6 + $0x301]]
    %v863 = vstv %s862
    %v864 = vmul.f32 %v863, %v764
    %v865 = vmul.f32 %v863, %v765
    %v868 = vcombine.low %v864, %v865
    %v870 = vunpack.c.l.s4 1983009808
    %v871 = vunpack.c.0.s8 %v870
    %v872 = vlaneseq
    %v873 = vshrl.u32 %v872, 7
    %v874 = vsub.s32 %v871, %v873
    %v875 = vrot.slane %v868, %v874
    %v877 = vadd.f32 %v744, %v875
    %s878 = sld [smem:[#allocation6 + $0x381]]
    %v879 = vstv %s878
    %v880 = vmul.f32 %v879, %v764
    %v881 = vmul.f32 %v879, %v765
    %v884 = vcombine.low %v880, %v881
    %v886 = vunpack.c.l.s4 1983009808
    %v887 = vunpack.c.0.s8 %v886
    %v888 = vlaneseq
    %v889 = vshrl.u32 %v888, 7
    %v890 = vsub.s32 %v887, %v889
    %v891 = vrot.slane %v884, %v890
    %v893 = vadd.f32 %v748, %v891
    %894 = vrot.lane.b32.xlu0 %v756, 126
    %v895 = vpop.permute.xlu0 %894
    %896 = vrot.lane.b32.xlu0 %v757, 126
    %v897 = vpop.permute.xlu0 %896
    %v898 = vsel %vm204, %v895, %v897
    %v899 = vsel %vm204, %v897, %v895
    %s900 = sld [smem:[#allocation6 + $0x2]]
    %v901 = vstv %s900
    %v902 = vmul.f32 %v901, %v898
    %v903 = vmul.f32 %v901, %v899
    %v906 = vcombine.low %v902, %v903
    %v908 = vunpack.c.l.s4 1983009808
    %v909 = vunpack.c.0.s8 %v908
    %v910 = vlaneseq
    %v911 = vshrl.u32 %v910, 7
    %v912 = vsub.s32 %v909, %v911
    %v913 = vrot.slane %v906, %v912
    %v915 = vadd.f32 %v781, %v913
    %s916 = sld [smem:[#allocation6 + $0x82]]
    %v917 = vstv %s916
    %v918 = vmul.f32 %v917, %v898
    %v919 = vmul.f32 %v917, %v899
    %v922 = vcombine.low %v918, %v919
    %v924 = vunpack.c.l.s4 1983009808
    %v925 = vunpack.c.0.s8 %v924
    %v926 = vlaneseq
    %v927 = vshrl.u32 %v926, 7
    %v928 = vsub.s32 %v925, %v927
    %v929 = vrot.slane %v922, %v928
    %v931 = vadd.f32 %v797, %v929
    %s932 = sld [smem:[#allocation6 + $0x102]]
    %v933 = vstv %s932
    %v934 = vmul.f32 %v933, %v898
    %v935 = vmul.f32 %v933, %v899
    %v938 = vcombine.low %v934, %v935
    %v940 = vunpack.c.l.s4 1983009808
    %v941 = vunpack.c.0.s8 %v940
    %v942 = vlaneseq
    %v943 = vshrl.u32 %v942, 7
    %v944 = vsub.s32 %v941, %v943
    %v945 = vrot.slane %v938, %v944
    %v947 = vadd.f32 %v813, %v945
    %s948 = sld [smem:[#allocation6 + $0x182]]
    %v949 = vstv %s948
    %v950 = vmul.f32 %v949, %v898
    %v951 = vmul.f32 %v949, %v899
    %v954 = vcombine.low %v950, %v951
    %v956 = vunpack.c.l.s4 1983009808
    %v957 = vunpack.c.0.s8 %v956
    %v958 = vlaneseq
    %v959 = vshrl.u32 %v958, 7
    %v960 = vsub.s32 %v957, %v959
    %v961 = vrot.slane %v954, %v960
    %v963 = vadd.f32 %v829, %v961
    %s964 = sld [smem:[#allocation6 + $0x202]]
    %v965 = vstv %s964
    %v966 = vmul.f32 %v965, %v898
    %v967 = vmul.f32 %v965, %v899
    %v970 = vcombine.low %v966, %v967
    %v972 = vunpack.c.l.s4 1983009808
    %v973 = vunpack.c.0.s8 %v972
    %v974 = vlaneseq
    %v975 = vshrl.u32 %v974, 7
    %v976 = vsub.s32 %v973, %v975
    %v977 = vrot.slane %v970, %v976
    %v979 = vadd.f32 %v845, %v977
    %s980 = sld [smem:[#allocation6 + $0x282]]
    %v981 = vstv %s980
    %v982 = vmul.f32 %v981, %v898
    %v983 = vmul.f32 %v981, %v899
    %v986 = vcombine.low %v982, %v983
    %v988 = vunpack.c.l.s4 1983009808
    %v989 = vunpack.c.0.s8 %v988
    %v990 = vlaneseq
    %v991 = vshrl.u32 %v990, 7
    %v992 = vsub.s32 %v989, %v991
    %v993 = vrot.slane %v986, %v992
    %v995 = vadd.f32 %v861, %v993
    %s996 = sld [smem:[#allocation6 + $0x302]]
    %v997 = vstv %s996
    %v998 = vmul.f32 %v997, %v898
    %v999 = vmul.f32 %v997, %v899
    %v1002 = vcombine.low %v998, %v999
    %v1004 = vunpack.c.l.s4 1983009808
    %v1005 = vunpack.c.0.s8 %v1004
    %v1006 = vlaneseq
    %v1007 = vshrl.u32 %v1006, 7
    %v1008 = vsub.s32 %v1005, %v1007
    %v1009 = vrot.slane %v1002, %v1008
    %v1011 = vadd.f32 %v877, %v1009
    %s1012 = sld [smem:[#allocation6 + $0x382]]
    %v1013 = vstv %s1012
    %v1014 = vmul.f32 %v1013, %v898
    %v1015 = vmul.f32 %v1013, %v899
    %v1018 = vcombine.low %v1014, %v1015
    %v1020 = vunpack.c.l.s4 1983009808
    %v1021 = vunpack.c.0.s8 %v1020
    %v1022 = vlaneseq
    %v1023 = vshrl.u32 %v1022, 7
    %v1024 = vsub.s32 %v1021, %v1023
    %v1025 = vrot.slane %v1018, %v1024
    %v1027 = vadd.f32 %v893, %v1025
    %1028 = vrot.lane.b32.xlu0 %v756, 112
    %v1029 = vpop.permute.xlu0 %1028
    %1030 = vrot.lane.b32.xlu0 %v757, 112
    %v1031 = vpop.permute.xlu0 %1030
    %v1032 = vsel %vm275, %v1029, %v1031
    %v1033 = vsel %vm275, %v1031, %v1029
    %s1034 = sld [smem:[#allocation6 + $0x3]]
    %v1035 = vstv %s1034
    %v1036 = vmul.f32 %v1035, %v1032
    %v1037 = vmul.f32 %v1035, %v1033
    %v1040 = vcombine.low %v1036, %v1037
    %v1042 = vunpack.c.l.s4 1983009808
    %v1043 = vunpack.c.0.s8 %v1042
    %v1044 = vlaneseq
    %v1045 = vshrl.u32 %v1044, 7
    %v1046 = vsub.s32 %v1043, %v1045
    %v1047 = vrot.slane %v1040, %v1046
    %v1049 = vadd.f32 %v915, %v1047
    %s1050 = sld [smem:[#allocation6 + $0x83]]
    %v1051 = vstv %s1050
    %v1052 = vmul.f32 %v1051, %v1032
    %v1053 = vmul.f32 %v1051, %v1033
    %v1056 = vcombine.low %v1052, %v1053
    %v1058 = vunpack.c.l.s4 1983009808
    %v1059 = vunpack.c.0.s8 %v1058
    %v1060 = vlaneseq
    %v1061 = vshrl.u32 %v1060, 7
    %v1062 = vsub.s32 %v1059, %v1061
    %v1063 = vrot.slane %v1056, %v1062
    %v1065 = vadd.f32 %v931, %v1063
    %s1066 = sld [smem:[#allocation6 + $0x103]]
    %v1067 = vstv %s1066
    %v1068 = vmul.f32 %v1067, %v1032
    %v1069 = vmul.f32 %v1067, %v1033
    %v1072 = vcombine.low %v1068, %v1069
    %v1074 = vunpack.c.l.s4 1983009808
    %v1075 = vunpack.c.0.s8 %v1074
    %v1076 = vlaneseq
    %v1077 = vshrl.u32 %v1076, 7
    %v1078 = vsub.s32 %v1075, %v1077
    %v1079 = vrot.slane %v1072, %v1078
    %v1081 = vadd.f32 %v947, %v1079
    %s1082 = sld [smem:[#allocation6 + $0x183]]
    %v1083 = vstv %s1082
    %v1084 = vmul.f32 %v1083, %v1032
    %v1085 = vmul.f32 %v1083, %v1033
    %v1088 = vcombine.low %v1084, %v1085
    %v1090 = vunpack.c.l.s4 1983009808
    %v1091 = vunpack.c.0.s8 %v1090
    %v1092 = vlaneseq
    %v1093 = vshrl.u32 %v1092, 7
    %v1094 = vsub.s32 %v1091, %v1093
    %v1095 = vrot.slane %v1088, %v1094
    %v1097 = vadd.f32 %v963, %v1095
    %s1098 = sld [smem:[#allocation6 + $0x203]]
    %v1099 = vstv %s1098
    %v1100 = vmul.f32 %v1099, %v1032
    %v1101 = vmul.f32 %v1099, %v1033
    %v1104 = vcombine.low %v1100, %v1101
    %v1106 = vunpack.c.l.s4 1983009808
    %v1107 = vunpack.c.0.s8 %v1106
    %v1108 = vlaneseq
    %v1109 = vshrl.u32 %v1108, 7
    %v1110 = vsub.s32 %v1107, %v1109
    %v1111 = vrot.slane %v1104, %v1110
    %v1113 = vadd.f32 %v979, %v1111
    %s1114 = sld [smem:[#allocation6 + $0x283]]
    %v1115 = vstv %s1114
    %v1116 = vmul.f32 %v1115, %v1032
    %v1117 = vmul.f32 %v1115, %v1033
    %v1120 = vcombine.low %v1116, %v1117
    %v1122 = vunpack.c.l.s4 1983009808
    %v1123 = vunpack.c.0.s8 %v1122
    %v1124 = vlaneseq
    %v1125 = vshrl.u32 %v1124, 7
    %v1126 = vsub.s32 %v1123, %v1125
    %v1127 = vrot.slane %v1120, %v1126
    %v1129 = vadd.f32 %v995, %v1127
    %s1130 = sld [smem:[#allocation6 + $0x303]]
    %v1131 = vstv %s1130
    %v1132 = vmul.f32 %v1131, %v1032
    %v1133 = vmul.f32 %v1131, %v1033
    %v1136 = vcombine.low %v1132, %v1133
    %v1138 = vunpack.c.l.s4 1983009808
    %v1139 = vunpack.c.0.s8 %v1138
    %v1140 = vlaneseq
    %v1141 = vshrl.u32 %v1140, 7
    %v1142 = vsub.s32 %v1139, %v1141
    %v1143 = vrot.slane %v1136, %v1142
    %v1145 = vadd.f32 %v1011, %v1143
    %s1146 = sld [smem:[#allocation6 + $0x383]]
    %v1147 = vstv %s1146
    %v1148 = vmul.f32 %v1147, %v1032
    %v1149 = vmul.f32 %v1147, %v1033
    %v1152 = vcombine.low %v1148, %v1149
    %v1154 = vunpack.c.l.s4 1983009808
    %v1155 = vunpack.c.0.s8 %v1154
    %v1156 = vlaneseq
    %v1157 = vshrl.u32 %v1156, 7
    %v1158 = vsub.s32 %v1155, %v1157
    %v1159 = vrot.slane %v1152, %v1158
    %v1161 = vadd.f32 %v1027, %v1159
    %1162 = vrot.lane.b32.xlu0 %v756, 111
    %v1163 = vpop.permute.xlu0 %1162
    %1164 = vrot.lane.b32.xlu0 %v757, 111
    %v1165 = vpop.permute.xlu0 %1164
    %v1166 = vsel %vm346, %v1163, %v1165
    %v1167 = vsel %vm346, %v1165, %v1163
    %s1168 = sld [smem:[#allocation6 + $0x4]]
    %v1169 = vstv %s1168
    %v1170 = vmul.f32 %v1169, %v1166
    %v1171 = vmul.f32 %v1169, %v1167
    %v1174 = vcombine.low %v1170, %v1171
    %v1176 = vunpack.c.l.s4 1983009808
    %v1177 = vunpack.c.0.s8 %v1176
    %v1178 = vlaneseq
    %v1179 = vshrl.u32 %v1178, 7
    %v1180 = vsub.s32 %v1177, %v1179
    %v1181 = vrot.slane %v1174, %v1180
    %v1183 = vadd.f32 %v1049, %v1181
    %s1184 = sld [smem:[#allocation6 + $0x84]]
    %v1185 = vstv %s1184
    %v1186 = vmul.f32 %v1185, %v1166
    %v1187 = vmul.f32 %v1185, %v1167
    %v1190 = vcombine.low %v1186, %v1187
    %v1192 = vunpack.c.l.s4 1983009808
    %v1193 = vunpack.c.0.s8 %v1192
    %v1194 = vlaneseq
    %v1195 = vshrl.u32 %v1194, 7
    %v1196 = vsub.s32 %v1193, %v1195
    %v1197 = vrot.slane %v1190, %v1196
    %v1199 = vadd.f32 %v1065, %v1197
    %s1200 = sld [smem:[#allocation6 + $0x104]]
    %v1201 = vstv %s1200
    %v1202 = vmul.f32 %v1201, %v1166
    %v1203 = vmul.f32 %v1201, %v1167
    %v1206 = vcombine.low %v1202, %v1203
    %v1208 = vunpack.c.l.s4 1983009808
    %v1209 = vunpack.c.0.s8 %v1208
    %v1210 = vlaneseq
    %v1211 = vshrl.u32 %v1210, 7
    %v1212 = vsub.s32 %v1209, %v1211
    %v1213 = vrot.slane %v1206, %v1212
    %v1215 = vadd.f32 %v1081, %v1213
    %s1216 = sld [smem:[#allocation6 + $0x184]]
    %v1217 = vstv %s1216
    %v1218 = vmul.f32 %v1217, %v1166
    %v1219 = vmul.f32 %v1217, %v1167
    %v1222 = vcombine.low %v1218, %v1219
    %v1224 = vunpack.c.l.s4 1983009808
    %v1225 = vunpack.c.0.s8 %v1224
    %v1226 = vlaneseq
    %v1227 = vshrl.u32 %v1226, 7
    %v1228 = vsub.s32 %v1225, %v1227
    %v1229 = vrot.slane %v1222, %v1228
    %v1231 = vadd.f32 %v1097, %v1229
    %s1232 = sld [smem:[#allocation6 + $0x204]]
    %v1233 = vstv %s1232
    %v1234 = vmul.f32 %v1233, %v1166
    %v1235 = vmul.f32 %v1233, %v1167
    %v1238 = vcombine.low %v1234, %v1235
    %v1240 = vunpack.c.l.s4 1983009808
    %v1241 = vunpack.c.0.s8 %v1240
    %v1242 = vlaneseq
    %v1243 = vshrl.u32 %v1242, 7
    %v1244 = vsub.s32 %v1241, %v1243
    %v1245 = vrot.slane %v1238, %v1244
    %v1247 = vadd.f32 %v1113, %v1245
    %s1248 = sld [smem:[#allocation6 + $0x284]]
    %v1249 = vstv %s1248
    %v1250 = vmul.f32 %v1249, %v1166
    %v1251 = vmul.f32 %v1249, %v1167
    %v1254 = vcombine.low %v1250, %v1251
    %v1256 = vunpack.c.l.s4 1983009808
    %v1257 = vunpack.c.0.s8 %v1256
    %v1258 = vlaneseq
    %v1259 = vshrl.u32 %v1258, 7
    %v1260 = vsub.s32 %v1257, %v1259
    %v1261 = vrot.slane %v1254, %v1260
    %v1263 = vadd.f32 %v1129, %v1261
    %s1264 = sld [smem:[#allocation6 + $0x304]]
    %v1265 = vstv %s1264
    %v1266 = vmul.f32 %v1265, %v1166
    %v1267 = vmul.f32 %v1265, %v1167
    %v1270 = vcombine.low %v1266, %v1267
    %v1272 = vunpack.c.l.s4 1983009808
    %v1273 = vunpack.c.0.s8 %v1272
    %v1274 = vlaneseq
    %v1275 = vshrl.u32 %v1274, 7
    %v1276 = vsub.s32 %v1273, %v1275
    %v1277 = vrot.slane %v1270, %v1276
    %v1279 = vadd.f32 %v1145, %v1277
    %s1280 = sld [smem:[#allocation6 + $0x384]]
    %v1281 = vstv %s1280
    %v1282 = vmul.f32 %v1281, %v1166
    %v1283 = vmul.f32 %v1281, %v1167
    %v1286 = vcombine.low %v1282, %v1283
    %v1288 = vunpack.c.l.s4 1983009808
    %v1289 = vunpack.c.0.s8 %v1288
    %v1290 = vlaneseq
    %v1291 = vshrl.u32 %v1290, 7
    %v1292 = vsub.s32 %v1289, %v1291
    %v1293 = vrot.slane %v1286, %v1292
    %v1295 = vadd.f32 %v1161, %v1293
    %1296 = vrot.lane.b32.xlu0 %v756, 110
    %v1297 = vpop.permute.xlu0 %1296
    %1298 = vrot.lane.b32.xlu0 %v757, 110
    %v1299 = vpop.permute.xlu0 %1298
    %v1300 = vsel %vm417, %v1297, %v1299
    %v1301 = vsel %vm417, %v1299, %v1297
    %s1302 = sld [smem:[#allocation6 + $0x5]]
    %v1303 = vstv %s1302
    %v1304 = vmul.f32 %v1303, %v1300
    %v1305 = vmul.f32 %v1303, %v1301
    %v1308 = vcombine.low %v1304, %v1305
    %v1310 = vunpack.c.l.s4 1983009808
    %v1311 = vunpack.c.0.s8 %v1310
    %v1312 = vlaneseq
    %v1313 = vshrl.u32 %v1312, 7
    %v1314 = vsub.s32 %v1311, %v1313
    %v1315 = vrot.slane %v1308, %v1314
    %v1317 = vadd.f32 %v1183, %v1315
    %s1318 = sld [smem:[#allocation6 + $0x85]]
    %v1319 = vstv %s1318
    %v1320 = vmul.f32 %v1319, %v1300
    %v1321 = vmul.f32 %v1319, %v1301
    %v1324 = vcombine.low %v1320, %v1321
    %v1326 = vunpack.c.l.s4 1983009808
    %v1327 = vunpack.c.0.s8 %v1326
    %v1328 = vlaneseq
    %v1329 = vshrl.u32 %v1328, 7
    %v1330 = vsub.s32 %v1327, %v1329
    %v1331 = vrot.slane %v1324, %v1330
    %v1333 = vadd.f32 %v1199, %v1331
    %s1334 = sld [smem:[#allocation6 + $0x105]]
    %v1335 = vstv %s1334
    %v1336 = vmul.f32 %v1335, %v1300
    %v1337 = vmul.f32 %v1335, %v1301
    %v1340 = vcombine.low %v1336, %v1337
    %v1342 = vunpack.c.l.s4 1983009808
    %v1343 = vunpack.c.0.s8 %v1342
    %v1344 = vlaneseq
    %v1345 = vshrl.u32 %v1344, 7
    %v1346 = vsub.s32 %v1343, %v1345
    %v1347 = vrot.slane %v1340, %v1346
    %v1349 = vadd.f32 %v1215, %v1347
    %s1350 = sld [smem:[#allocation6 + $0x185]]
    %v1351 = vstv %s1350
    %v1352 = vmul.f32 %v1351, %v1300
    %v1353 = vmul.f32 %v1351, %v1301
    %v1356 = vcombine.low %v1352, %v1353
    %v1358 = vunpack.c.l.s4 1983009808
    %v1359 = vunpack.c.0.s8 %v1358
    %v1360 = vlaneseq
    %v1361 = vshrl.u32 %v1360, 7
    %v1362 = vsub.s32 %v1359, %v1361
    %v1363 = vrot.slane %v1356, %v1362
    %v1365 = vadd.f32 %v1231, %v1363
    %s1366 = sld [smem:[#allocation6 + $0x205]]
    %v1367 = vstv %s1366
    %v1368 = vmul.f32 %v1367, %v1300
    %v1369 = vmul.f32 %v1367, %v1301
    %v1372 = vcombine.low %v1368, %v1369
    %v1374 = vunpack.c.l.s4 1983009808
    %v1375 = vunpack.c.0.s8 %v1374
    %v1376 = vlaneseq
    %v1377 = vshrl.u32 %v1376, 7
    %v1378 = vsub.s32 %v1375, %v1377
    %v1379 = vrot.slane %v1372, %v1378
    %v1381 = vadd.f32 %v1247, %v1379
    %s1382 = sld [smem:[#allocation6 + $0x285]]
    %v1383 = vstv %s1382
    %v1384 = vmul.f32 %v1383, %v1300
    %v1385 = vmul.f32 %v1383, %v1301
    %v1388 = vcombine.low %v1384, %v1385
    %v1390 = vunpack.c.l.s4 1983009808
    %v1391 = vunpack.c.0.s8 %v1390
    %v1392 = vlaneseq
    %v1393 = vshrl.u32 %v1392, 7
    %v1394 = vsub.s32 %v1391, %v1393
    %v1395 = vrot.slane %v1388, %v1394
    %v1397 = vadd.f32 %v1263, %v1395
    %s1398 = sld [smem:[#allocation6 + $0x305]]
    %v1399 = vstv %s1398
    %v1400 = vmul.f32 %v1399, %v1300
    %v1401 = vmul.f32 %v1399, %v1301
    %v1404 = vcombine.low %v1400, %v1401
    %v1406 = vunpack.c.l.s4 1983009808
    %v1407 = vunpack.c.0.s8 %v1406
    %v1408 = vlaneseq
    %v1409 = vshrl.u32 %v1408, 7
    %v1410 = vsub.s32 %v1407, %v1409
    %v1411 = vrot.slane %v1404, %v1410
    %v1413 = vadd.f32 %v1279, %v1411
    %s1414 = sld [smem:[#allocation6 + $0x385]]
    %v1415 = vstv %s1414
    %v1416 = vmul.f32 %v1415, %v1300
    %v1417 = vmul.f32 %v1415, %v1301
    %v1420 = vcombine.low %v1416, %v1417
    %v1422 = vunpack.c.l.s4 1983009808
    %v1423 = vunpack.c.0.s8 %v1422
    %v1424 = vlaneseq
    %v1425 = vshrl.u32 %v1424, 7
    %v1426 = vsub.s32 %v1423, %v1425
    %v1427 = vrot.slane %v1420, %v1426
    %v1429 = vadd.f32 %v1295, %v1427
    %1430 = vrot.lane.b32.xlu0 %v756, 96
    %v1431 = vpop.permute.xlu0 %1430
    %1432 = vrot.lane.b32.xlu0 %v757, 96
    %v1433 = vpop.permute.xlu0 %1432
    %v1434 = vsel %vm488, %v1431, %v1433
    %v1435 = vsel %vm488, %v1433, %v1431
    %s1436 = sld [smem:[#allocation6 + $0x6]]
    %v1437 = vstv %s1436
    %v1438 = vmul.f32 %v1437, %v1434
    %v1439 = vmul.f32 %v1437, %v1435
    %v1442 = vcombine.low %v1438, %v1439
    %v1444 = vunpack.c.l.s4 1983009808
    %v1445 = vunpack.c.0.s8 %v1444
    %v1446 = vlaneseq
    %v1447 = vshrl.u32 %v1446, 7
    %v1448 = vsub.s32 %v1445, %v1447
    %v1449 = vrot.slane %v1442, %v1448
    %v1451 = vadd.f32 %v1317, %v1449
    %s1452 = sld [smem:[#allocation6 + $0x86]]
    %v1453 = vstv %s1452
    %v1454 = vmul.f32 %v1453, %v1434
    %v1455 = vmul.f32 %v1453, %v1435
    %v1458 = vcombine.low %v1454, %v1455
    %v1460 = vunpack.c.l.s4 1983009808
    %v1461 = vunpack.c.0.s8 %v1460
    %v1462 = vlaneseq
    %v1463 = vshrl.u32 %v1462, 7
    %v1464 = vsub.s32 %v1461, %v1463
    %v1465 = vrot.slane %v1458, %v1464
    %v1467 = vadd.f32 %v1333, %v1465
    %s1468 = sld [smem:[#allocation6 + $0x106]]
    %v1469 = vstv %s1468
    %v1470 = vmul.f32 %v1469, %v1434
    %v1471 = vmul.f32 %v1469, %v1435
    %v1474 = vcombine.low %v1470, %v1471
    %v1476 = vunpack.c.l.s4 1983009808
    %v1477 = vunpack.c.0.s8 %v1476
    %v1478 = vlaneseq
    %v1479 = vshrl.u32 %v1478, 7
    %v1480 = vsub.s32 %v1477, %v1479
    %v1481 = vrot.slane %v1474, %v1480
    %v1483 = vadd.f32 %v1349, %v1481
    %s1484 = sld [smem:[#allocation6 + $0x186]]
    %v1485 = vstv %s1484
    %v1486 = vmul.f32 %v1485, %v1434
    %v1487 = vmul.f32 %v1485, %v1435
    %v1490 = vcombine.low %v1486, %v1487
    %v1492 = vunpack.c.l.s4 1983009808
    %v1493 = vunpack.c.0.s8 %v1492
    %v1494 = vlaneseq
    %v1495 = vshrl.u32 %v1494, 7
    %v1496 = vsub.s32 %v1493, %v1495
    %v1497 = vrot.slane %v1490, %v1496
    %v1499 = vadd.f32 %v1365, %v1497
    %s1500 = sld [smem:[#allocation6 + $0x206]]
    %v1501 = vstv %s1500
    %v1502 = vmul.f32 %v1501, %v1434
    %v1503 = vmul.f32 %v1501, %v1435
    %v1506 = vcombine.low %v1502, %v1503
    %v1508 = vunpack.c.l.s4 1983009808
    %v1509 = vunpack.c.0.s8 %v1508
    %v1510 = vlaneseq
    %v1511 = vshrl.u32 %v1510, 7
    %v1512 = vsub.s32 %v1509, %v1511
    %v1513 = vrot.slane %v1506, %v1512
    %v1515 = vadd.f32 %v1381, %v1513
    %s1516 = sld [smem:[#allocation6 + $0x286]]
    %v1517 = vstv %s1516
    %v1518 = vmul.f32 %v1517, %v1434
    %v1519 = vmul.f32 %v1517, %v1435
    %v1522 = vcombine.low %v1518, %v1519
    %v1524 = vunpack.c.l.s4 1983009808
    %v1525 = vunpack.c.0.s8 %v1524
    %v1526 = vlaneseq
    %v1527 = vshrl.u32 %v1526, 7
    %v1528 = vsub.s32 %v1525, %v1527
    %v1529 = vrot.slane %v1522, %v1528
    %v1531 = vadd.f32 %v1397, %v1529
    %s1532 = sld [smem:[#allocation6 + $0x306]]
    %v1533 = vstv %s1532
    %v1534 = vmul.f32 %v1533, %v1434
    %v1535 = vmul.f32 %v1533, %v1435
    %v1538 = vcombine.low %v1534, %v1535
    %v1540 = vunpack.c.l.s4 1983009808
    %v1541 = vunpack.c.0.s8 %v1540
    %v1542 = vlaneseq
    %v1543 = vshrl.u32 %v1542, 7
    %v1544 = vsub.s32 %v1541, %v1543
    %v1545 = vrot.slane %v1538, %v1544
    %v1547 = vadd.f32 %v1413, %v1545
    %s1548 = sld [smem:[#allocation6 + $0x386]]
    %v1549 = vstv %s1548
    %v1550 = vmul.f32 %v1549, %v1434
    %v1551 = vmul.f32 %v1549, %v1435
    %v1554 = vcombine.low %v1550, %v1551
    %v1556 = vunpack.c.l.s4 1983009808
    %v1557 = vunpack.c.0.s8 %v1556
    %v1558 = vlaneseq
    %v1559 = vshrl.u32 %v1558, 7
    %v1560 = vsub.s32 %v1557, %v1559
    %v1561 = vrot.slane %v1554, %v1560
    %v1563 = vadd.f32 %v1429, %v1561
    %1564 = vrot.lane.b32.xlu0 %v756, 95
    %v1565 = vpop.permute.xlu0 %1564
    %1566 = vrot.lane.b32.xlu0 %v757, 95
    %v1567 = vpop.permute.xlu0 %1566
    %v1568 = vsel %vm559, %v1565, %v1567
    %v1569 = vsel %vm559, %v1567, %v1565
    %s1570 = sld [smem:[#allocation6 + $0x7]]
    %v1571 = vstv %s1570
    %v1572 = vmul.f32 %v1571, %v1568
    %v1573 = vmul.f32 %v1571, %v1569
    %v1576 = vcombine.low %v1572, %v1573
    %v1578 = vunpack.c.l.s4 1983009808
    %v1579 = vunpack.c.0.s8 %v1578
    %v1580 = vlaneseq
    %v1581 = vshrl.u32 %v1580, 7
    %v1582 = vsub.s32 %v1579, %v1581
    %v1583 = vrot.slane %v1576, %v1582
    %v1585 = vadd.f32 %v1451, %v1583
    %s1586 = sld [smem:[#allocation6 + $0x87]]
    %v1587 = vstv %s1586
    %v1588 = vmul.f32 %v1587, %v1568
    %v1589 = vmul.f32 %v1587, %v1569
    %v1592 = vcombine.low %v1588, %v1589
    %v1594 = vunpack.c.l.s4 1983009808
    %v1595 = vunpack.c.0.s8 %v1594
    %v1596 = vlaneseq
    %v1597 = vshrl.u32 %v1596, 7
    %v1598 = vsub.s32 %v1595, %v1597
    %v1599 = vrot.slane %v1592, %v1598
    %v1601 = vadd.f32 %v1467, %v1599
    %s1602 = sld [smem:[#allocation6 + $0x107]]
    %v1603 = vstv %s1602
    %v1604 = vmul.f32 %v1603, %v1568
    %v1605 = vmul.f32 %v1603, %v1569
    %v1608 = vcombine.low %v1604, %v1605
    %v1610 = vunpack.c.l.s4 1983009808
    %v1611 = vunpack.c.0.s8 %v1610
    %v1612 = vlaneseq
    %v1613 = vshrl.u32 %v1612, 7
    %v1614 = vsub.s32 %v1611, %v1613
    %v1615 = vrot.slane %v1608, %v1614
    %v1617 = vadd.f32 %v1483, %v1615
    %s1618 = sld [smem:[#allocation6 + $0x187]]
    %v1619 = vstv %s1618
    %v1620 = vmul.f32 %v1619, %v1568
    %v1621 = vmul.f32 %v1619, %v1569
    %v1624 = vcombine.low %v1620, %v1621
    %v1626 = vunpack.c.l.s4 1983009808
    %v1627 = vunpack.c.0.s8 %v1626
    %v1628 = vlaneseq
    %v1629 = vshrl.u32 %v1628, 7
    %v1630 = vsub.s32 %v1627, %v1629
    %v1631 = vrot.slane %v1624, %v1630
    %v1633 = vadd.f32 %v1499, %v1631
    %s1634 = sld [smem:[#allocation6 + $0x207]]
    %v1635 = vstv %s1634
    %v1636 = vmul.f32 %v1635, %v1568
    %v1637 = vmul.f32 %v1635, %v1569
    %v1640 = vcombine.low %v1636, %v1637
    %v1642 = vunpack.c.l.s4 1983009808
    %v1643 = vunpack.c.0.s8 %v1642
    %v1644 = vlaneseq
    %v1645 = vshrl.u32 %v1644, 7
    %v1646 = vsub.s32 %v1643, %v1645
    %v1647 = vrot.slane %v1640, %v1646
    %v1649 = vadd.f32 %v1515, %v1647
    %s1650 = sld [smem:[#allocation6 + $0x287]]
    %v1651 = vstv %s1650
    %v1652 = vmul.f32 %v1651, %v1568
    %v1653 = vmul.f32 %v1651, %v1569
    %v1656 = vcombine.low %v1652, %v1653
    %v1658 = vunpack.c.l.s4 1983009808
    %v1659 = vunpack.c.0.s8 %v1658
    %v1660 = vlaneseq
    %v1661 = vshrl.u32 %v1660, 7
    %v1662 = vsub.s32 %v1659, %v1661
    %v1663 = vrot.slane %v1656, %v1662
    %v1665 = vadd.f32 %v1531, %v1663
    %s1666 = sld [smem:[#allocation6 + $0x307]]
    %v1667 = vstv %s1666
    %v1668 = vmul.f32 %v1667, %v1568
    %v1669 = vmul.f32 %v1667, %v1569
    %v1672 = vcombine.low %v1668, %v1669
    %v1674 = vunpack.c.l.s4 1983009808
    %v1675 = vunpack.c.0.s8 %v1674
    %v1676 = vlaneseq
    %v1677 = vshrl.u32 %v1676, 7
    %v1678 = vsub.s32 %v1675, %v1677
    %v1679 = vrot.slane %v1672, %v1678
    %v1681 = vadd.f32 %v1547, %v1679
    %s1682 = sld [smem:[#allocation6 + $0x387]]
    %v1683 = vstv %s1682
    %v1684 = vmul.f32 %v1683, %v1568
    %v1685 = vmul.f32 %v1683, %v1569
    %v1688 = vcombine.low %v1684, %v1685
    %v1690 = vunpack.c.l.s4 1983009808
    %v1691 = vunpack.c.0.s8 %v1690
    %v1692 = vlaneseq
    %v1693 = vshrl.u32 %v1692, 7
    %v1694 = vsub.s32 %v1691, %v1693
    %v1695 = vrot.slane %v1688, %v1694
    %v1697 = vadd.f32 %v1563, %v1695
    %1698 = vrot.lane.b32.xlu0 %v756, 94
    %v1699 = vpop.permute.xlu0 %1698
    %1700 = vrot.lane.b32.xlu0 %v757, 94
    %v1701 = vpop.permute.xlu0 %1700
    %v1702 = vsel %vm630, %v1699, %v1701
    %v1703 = vsel %vm630, %v1701, %v1699
    %s1704 = sld [smem:[#allocation6 + $0x8]]
    %v1705 = vstv %s1704
    %v1706 = vmul.f32 %v1705, %v1702
    %v1707 = vmul.f32 %v1705, %v1703
    %v1710 = vcombine.low %v1706, %v1707
    %v1712 = vunpack.c.l.s4 1983009808
    %v1713 = vunpack.c.0.s8 %v1712
    %v1714 = vlaneseq
    %v1715 = vshrl.u32 %v1714, 7
    %v1716 = vsub.s32 %v1713, %v1715
    %v1717 = vrot.slane %v1710, %v1716
    %v1719 = vadd.f32 %v1585, %v1717
    %s1720 = sld [smem:[#allocation6 + $0x88]]
    %v1721 = vstv %s1720
    %v1722 = vmul.f32 %v1721, %v1702
    %v1723 = vmul.f32 %v1721, %v1703
    %v1726 = vcombine.low %v1722, %v1723
    %v1728 = vunpack.c.l.s4 1983009808
    %v1729 = vunpack.c.0.s8 %v1728
    %v1730 = vlaneseq
    %v1731 = vshrl.u32 %v1730, 7
    %v1732 = vsub.s32 %v1729, %v1731
    %v1733 = vrot.slane %v1726, %v1732
    %v1735 = vadd.f32 %v1601, %v1733
    %s1736 = sld [smem:[#allocation6 + $0x108]]
    %v1737 = vstv %s1736
    %v1738 = vmul.f32 %v1737, %v1702
    %v1739 = vmul.f32 %v1737, %v1703
    %v1742 = vcombine.low %v1738, %v1739
    %v1744 = vunpack.c.l.s4 1983009808
    %v1745 = vunpack.c.0.s8 %v1744
    %v1746 = vlaneseq
    %v1747 = vshrl.u32 %v1746, 7
    %v1748 = vsub.s32 %v1745, %v1747
    %v1749 = vrot.slane %v1742, %v1748
    %v1751 = vadd.f32 %v1617, %v1749
    %s1752 = sld [smem:[#allocation6 + $0x188]]
    %v1753 = vstv %s1752
    %v1754 = vmul.f32 %v1753, %v1702
    %v1755 = vmul.f32 %v1753, %v1703
    %v1758 = vcombine.low %v1754, %v1755
    %v1760 = vunpack.c.l.s4 1983009808
    %v1761 = vunpack.c.0.s8 %v1760
    %v1762 = vlaneseq
    %v1763 = vshrl.u32 %v1762, 7
    %v1764 = vsub.s32 %v1761, %v1763
    %v1765 = vrot.slane %v1758, %v1764
    %v1767 = vadd.f32 %v1633, %v1765
    %s1768 = sld [smem:[#allocation6 + $0x208]]
    %v1769 = vstv %s1768
    %v1770 = vmul.f32 %v1769, %v1702
    %v1771 = vmul.f32 %v1769, %v1703
    %v1774 = vcombine.low %v1770, %v1771
    %v1776 = vunpack.c.l.s4 1983009808
    %v1777 = vunpack.c.0.s8 %v1776
    %v1778 = vlaneseq
    %v1779 = vshrl.u32 %v1778, 7
    %v1780 = vsub.s32 %v1777, %v1779
    %v1781 = vrot.slane %v1774, %v1780
    %v1783 = vadd.f32 %v1649, %v1781
    %s1784 = sld [smem:[#allocation6 + $0x288]]
    %v1785 = vstv %s1784
    %v1786 = vmul.f32 %v1785, %v1702
    %v1787 = vmul.f32 %v1785, %v1703
    %v1790 = vcombine.low %v1786, %v1787
    %v1792 = vunpack.c.l.s4 1983009808
    %v1793 = vunpack.c.0.s8 %v1792
    %v1794 = vlaneseq
    %v1795 = vshrl.u32 %v1794, 7
    %v1796 = vsub.s32 %v1793, %v1795
    %v1797 = vrot.slane %v1790, %v1796
    %v1799 = vadd.f32 %v1665, %v1797
    %s1800 = sld [smem:[#allocation6 + $0x308]]
    %v1801 = vstv %s1800
    %v1802 = vmul.f32 %v1801, %v1702
    %v1803 = vmul.f32 %v1801, %v1703
    %v1806 = vcombine.low %v1802, %v1803
    %v1808 = vunpack.c.l.s4 1983009808
    %v1809 = vunpack.c.0.s8 %v1808
    %v1810 = vlaneseq
    %v1811 = vshrl.u32 %v1810, 7
    %v1812 = vsub.s32 %v1809, %v1811
    %v1813 = vrot.slane %v1806, %v1812
    %v1815 = vadd.f32 %v1681, %v1813
    %s1816 = sld [smem:[#allocation6 + $0x388]]
    %v1817 = vstv %s1816
    %v1818 = vmul.f32 %v1817, %v1702
    %v1819 = vmul.f32 %v1817, %v1703
    %v1822 = vcombine.low %v1818, %v1819
    %v1824 = vunpack.c.l.s4 1983009808
    %v1825 = vunpack.c.0.s8 %v1824
    %v1826 = vlaneseq
    %v1827 = vshrl.u32 %v1826, 7
    %v1828 = vsub.s32 %v1825, %v1827
    %v1829 = vrot.slane %v1822, %v1828
    %v1831 = vadd.f32 %v1697, %v1829
    %s1832 = sld [smem:[#allocation6 + $0x9]]
    %v1833 = vstv %s1832
    %v1834 = vmul.f32 %v1833, %v706
    %v1835 = vadd.f32 %v1719, %v1834
    %s1836 = sld [smem:[#allocation6 + $0x89]]
    %v1837 = vstv %s1836
    %v1838 = vmul.f32 %v1837, %v706
    %v1839 = vadd.f32 %v1735, %v1838
    %s1840 = sld [smem:[#allocation6 + $0x109]]
    %v1841 = vstv %s1840
    %v1842 = vmul.f32 %v1841, %v706
    %v1843 = vadd.f32 %v1751, %v1842
    %s1844 = sld [smem:[#allocation6 + $0x189]]
    %v1845 = vstv %s1844
    %v1846 = vmul.f32 %v1845, %v706
    %v1847 = vadd.f32 %v1767, %v1846
    %s1848 = sld [smem:[#allocation6 + $0x209]]
    %v1849 = vstv %s1848
    %v1850 = vmul.f32 %v1849, %v706
    %v1851 = vadd.f32 %v1783, %v1850
    %s1852 = sld [smem:[#allocation6 + $0x289]]
    %v1853 = vstv %s1852
    %v1854 = vmul.f32 %v1853, %v706
    %v1855 = vadd.f32 %v1799, %v1854
    %s1856 = sld [smem:[#allocation6 + $0x309]]
    %v1857 = vstv %s1856
    %v1858 = vmul.f32 %v1857, %v706
    %v1859 = vadd.f32 %v1815, %v1858
    %s1860 = sld [smem:[#allocation6 + $0x389]]
    %v1861 = vstv %s1860
    %v1862 = vmul.f32 %v1861, %v706
    %v1863 = vadd.f32 %v1831, %v1862
    %v1866 = vunpack.c.l.s4 1983009808
    %v1867 = vunpack.c.0.s8 %v1866
    %v1868 = vlaneseq
    %v1869 = vshrl.u32 %v1868, 7
    %v1870 = vsub.s32 %v1867, %v1869
    %v1871 = vrot.slane %v706, %v1870
    %v1872 = vcombine.high %v1871, %v1871
    %1875 = vrot.lane.b32.xlu0 %v1871, 127
    %v1876 = vpop.permute.xlu0 %1875
    %1877 = vrot.lane.b32.xlu0 %v1872, 127
    %v1878 = vpop.permute.xlu0 %1877
    %v1879 = vsel %vm133, %v1876, %v1878
    %v1880 = vsel %vm133, %v1878, %v1876
    %s1881 = sld [smem:[#allocation6 + $0xa]]
    %v1882 = vstv %s1881
    %v1883 = vmul.f32 %v1882, %v1879
    %v1884 = vmul.f32 %v1882, %v1880
    %v1887 = vcombine.low %v1883, %v1884
    %v1889 = vunpack.c.l.s4 1983009808
    %v1890 = vunpack.c.0.s8 %v1889
    %v1891 = vlaneseq
    %v1892 = vshrl.u32 %v1891, 7
    %v1893 = vsub.s32 %v1890, %v1892
    %v1894 = vrot.slane %v1887, %v1893
    %v1896 = vadd.f32 %v1835, %v1894
    %s1897 = sld [smem:[#allocation6 + $0x8a]]
    %v1898 = vstv %s1897
    %v1899 = vmul.f32 %v1898, %v1879
    %v1900 = vmul.f32 %v1898, %v1880
    %v1903 = vcombine.low %v1899, %v1900
    %v1905 = vunpack.c.l.s4 1983009808
    %v1906 = vunpack.c.0.s8 %v1905
    %v1907 = vlaneseq
    %v1908 = vshrl.u32 %v1907, 7
    %v1909 = vsub.s32 %v1906, %v1908
    %v1910 = vrot.slane %v1903, %v1909
    %v1912 = vadd.f32 %v1839, %v1910
    %s1913 = sld [smem:[#allocation6 + $0x10a]]
    %v1914 = vstv %s1913
    %v1915 = vmul.f32 %v1914, %v1879
    %v1916 = vmul.f32 %v1914, %v1880
    %v1919 = vcombine.low %v1915, %v1916
    %v1921 = vunpack.c.l.s4 1983009808
    %v1922 = vunpack.c.0.s8 %v1921
    %v1923 = vlaneseq
    %v1924 = vshrl.u32 %v1923, 7
    %v1925 = vsub.s32 %v1922, %v1924
    %v1926 = vrot.slane %v1919, %v1925
    %v1928 = vadd.f32 %v1843, %v1926
    %s1929 = sld [smem:[#allocation6 + $0x18a]]
    %v1930 = vstv %s1929
    %v1931 = vmul.f32 %v1930, %v1879
    %v1932 = vmul.f32 %v1930, %v1880
    %v1935 = vcombine.low %v1931, %v1932
    %v1937 = vunpack.c.l.s4 1983009808
    %v1938 = vunpack.c.0.s8 %v1937
    %v1939 = vlaneseq
    %v1940 = vshrl.u32 %v1939, 7
    %v1941 = vsub.s32 %v1938, %v1940
    %v1942 = vrot.slane %v1935, %v1941
    %v1944 = vadd.f32 %v1847, %v1942
    %s1945 = sld [smem:[#allocation6 + $0x20a]]
    %v1946 = vstv %s1945
    %v1947 = vmul.f32 %v1946, %v1879
    %v1948 = vmul.f32 %v1946, %v1880
    %v1951 = vcombine.low %v1947, %v1948
    %v1953 = vunpack.c.l.s4 1983009808
    %v1954 = vunpack.c.0.s8 %v1953
    %v1955 = vlaneseq
    %v1956 = vshrl.u32 %v1955, 7
    %v1957 = vsub.s32 %v1954, %v1956
    %v1958 = vrot.slane %v1951, %v1957
    %v1960 = vadd.f32 %v1851, %v1958
    %s1961 = sld [smem:[#allocation6 + $0x28a]]
    %v1962 = vstv %s1961
    %v1963 = vmul.f32 %v1962, %v1879
    %v1964 = vmul.f32 %v1962, %v1880
    %v1967 = vcombine.low %v1963, %v1964
    %v1969 = vunpack.c.l.s4 1983009808
    %v1970 = vunpack.c.0.s8 %v1969
    %v1971 = vlaneseq
    %v1972 = vshrl.u32 %v1971, 7
    %v1973 = vsub.s32 %v1970, %v1972
    %v1974 = vrot.slane %v1967, %v1973
    %v1976 = vadd.f32 %v1855, %v1974
    %s1977 = sld [smem:[#allocation6 + $0x30a]]
    %v1978 = vstv %s1977
    %v1979 = vmul.f32 %v1978, %v1879
    %v1980 = vmul.f32 %v1978, %v1880
    %v1983 = vcombine.low %v1979, %v1980
    %v1985 = vunpack.c.l.s4 1983009808
    %v1986 = vunpack.c.0.s8 %v1985
    %v1987 = vlaneseq
    %v1988 = vshrl.u32 %v1987, 7
    %v1989 = vsub.s32 %v1986, %v1988
    %v1990 = vrot.slane %v1983, %v1989
    %v1992 = vadd.f32 %v1859, %v1990
    %s1993 = sld [smem:[#allocation6 + $0x38a]]
    %v1994 = vstv %s1993
    %v1995 = vmul.f32 %v1994, %v1879
    %v1996 = vmul.f32 %v1994, %v1880
    %v1999 = vcombine.low %v1995, %v1996
    %v2001 = vunpack.c.l.s4 1983009808
    %v2002 = vunpack.c.0.s8 %v2001
    %v2003 = vlaneseq
    %v2004 = vshrl.u32 %v2003, 7
    %v2005 = vsub.s32 %v2002, %v2004
    %v2006 = vrot.slane %v1999, %v2005
    %v2008 = vadd.f32 %v1863, %v2006
    %2009 = vrot.lane.b32.xlu0 %v1871, 126
    %v2010 = vpop.permute.xlu0 %2009
    %2011 = vrot.lane.b32.xlu0 %v1872, 126
    %v2012 = vpop.permute.xlu0 %2011
    %v2013 = vsel %vm204, %v2010, %v2012
    %v2014 = vsel %vm204, %v2012, %v2010
    %s2015 = sld [smem:[#allocation6 + $0xb]]
    %v2016 = vstv %s2015
    %v2017 = vmul.f32 %v2016, %v2013
    %v2018 = vmul.f32 %v2016, %v2014
    %v2021 = vcombine.low %v2017, %v2018
    %v2023 = vunpack.c.l.s4 1983009808
    %v2024 = vunpack.c.0.s8 %v2023
    %v2025 = vlaneseq
    %v2026 = vshrl.u32 %v2025, 7
    %v2027 = vsub.s32 %v2024, %v2026
    %v2028 = vrot.slane %v2021, %v2027
    %v2030 = vadd.f32 %v1896, %v2028
    %s2031 = sld [smem:[#allocation6 + $0x8b]]
    %v2032 = vstv %s2031
    %v2033 = vmul.f32 %v2032, %v2013
    %v2034 = vmul.f32 %v2032, %v2014
    %v2037 = vcombine.low %v2033, %v2034
    %v2039 = vunpack.c.l.s4 1983009808
    %v2040 = vunpack.c.0.s8 %v2039
    %v2041 = vlaneseq
    %v2042 = vshrl.u32 %v2041, 7
    %v2043 = vsub.s32 %v2040, %v2042
    %v2044 = vrot.slane %v2037, %v2043
    %v2046 = vadd.f32 %v1912, %v2044
    %s2047 = sld [smem:[#allocation6 + $0x10b]]
    %v2048 = vstv %s2047
    %v2049 = vmul.f32 %v2048, %v2013
    %v2050 = vmul.f32 %v2048, %v2014
    %v2053 = vcombine.low %v2049, %v2050
    %v2055 = vunpack.c.l.s4 1983009808
    %v2056 = vunpack.c.0.s8 %v2055
    %v2057 = vlaneseq
    %v2058 = vshrl.u32 %v2057, 7
    %v2059 = vsub.s32 %v2056, %v2058
    %v2060 = vrot.slane %v2053, %v2059
    %v2062 = vadd.f32 %v1928, %v2060
    %s2063 = sld [smem:[#allocation6 + $0x18b]]
    %v2064 = vstv %s2063
    %v2065 = vmul.f32 %v2064, %v2013
    %v2066 = vmul.f32 %v2064, %v2014
    %v2069 = vcombine.low %v2065, %v2066
    %v2071 = vunpack.c.l.s4 1983009808
    %v2072 = vunpack.c.0.s8 %v2071
    %v2073 = vlaneseq
    %v2074 = vshrl.u32 %v2073, 7
    %v2075 = vsub.s32 %v2072, %v2074
    %v2076 = vrot.slane %v2069, %v2075
    %v2078 = vadd.f32 %v1944, %v2076
    %s2079 = sld [smem:[#allocation6 + $0x20b]]
    %v2080 = vstv %s2079
    %v2081 = vmul.f32 %v2080, %v2013
    %v2082 = vmul.f32 %v2080, %v2014
    %v2085 = vcombine.low %v2081, %v2082
    %v2087 = vunpack.c.l.s4 1983009808
    %v2088 = vunpack.c.0.s8 %v2087
    %v2089 = vlaneseq
    %v2090 = vshrl.u32 %v2089, 7
    %v2091 = vsub.s32 %v2088, %v2090
    %v2092 = vrot.slane %v2085, %v2091
    %v2094 = vadd.f32 %v1960, %v2092
    %s2095 = sld [smem:[#allocation6 + $0x28b]]
    %v2096 = vstv %s2095
    %v2097 = vmul.f32 %v2096, %v2013
    %v2098 = vmul.f32 %v2096, %v2014
    %v2101 = vcombine.low %v2097, %v2098
    %v2103 = vunpack.c.l.s4 1983009808
    %v2104 = vunpack.c.0.s8 %v2103
    %v2105 = vlaneseq
    %v2106 = vshrl.u32 %v2105, 7
    %v2107 = vsub.s32 %v2104, %v2106
    %v2108 = vrot.slane %v2101, %v2107
    %v2110 = vadd.f32 %v1976, %v2108
    %s2111 = sld [smem:[#allocation6 + $0x30b]]
    %v2112 = vstv %s2111
    %v2113 = vmul.f32 %v2112, %v2013
    %v2114 = vmul.f32 %v2112, %v2014
    %v2117 = vcombine.low %v2113, %v2114
    %v2119 = vunpack.c.l.s4 1983009808
    %v2120 = vunpack.c.0.s8 %v2119
    %v2121 = vlaneseq
    %v2122 = vshrl.u32 %v2121, 7
    %v2123 = vsub.s32 %v2120, %v2122
    %v2124 = vrot.slane %v2117, %v2123
    %v2126 = vadd.f32 %v1992, %v2124
    %s2127 = sld [smem:[#allocation6 + $0x38b]]
    %v2128 = vstv %s2127
    %v2129 = vmul.f32 %v2128, %v2013
    %v2130 = vmul.f32 %v2128, %v2014
    %v2133 = vcombine.low %v2129, %v2130
    %v2135 = vunpack.c.l.s4 1983009808
    %v2136 = vunpack.c.0.s8 %v2135
    %v2137 = vlaneseq
    %v2138 = vshrl.u32 %v2137, 7
    %v2139 = vsub.s32 %v2136, %v2138
    %v2140 = vrot.slane %v2133, %v2139
    %v2142 = vadd.f32 %v2008, %v2140
    %2143 = vrot.lane.b32.xlu0 %v1871, 112
    %v2144 = vpop.permute.xlu0 %2143
    %2145 = vrot.lane.b32.xlu0 %v1872, 112
    %v2146 = vpop.permute.xlu0 %2145
    %v2147 = vsel %vm275, %v2144, %v2146
    %v2148 = vsel %vm275, %v2146, %v2144
    %s2149 = sld [smem:[#allocation6 + $0xc]]
    %v2150 = vstv %s2149
    %v2151 = vmul.f32 %v2150, %v2147
    %v2152 = vmul.f32 %v2150, %v2148
    %v2155 = vcombine.low %v2151, %v2152
    %v2157 = vunpack.c.l.s4 1983009808
    %v2158 = vunpack.c.0.s8 %v2157
    %v2159 = vlaneseq
    %v2160 = vshrl.u32 %v2159, 7
    %v2161 = vsub.s32 %v2158, %v2160
    %v2162 = vrot.slane %v2155, %v2161
    %v2164 = vadd.f32 %v2030, %v2162
    %s2165 = sld [smem:[#allocation6 + $0x8c]]
    %v2166 = vstv %s2165
    %v2167 = vmul.f32 %v2166, %v2147
    %v2168 = vmul.f32 %v2166, %v2148
    %v2171 = vcombine.low %v2167, %v2168
    %v2173 = vunpack.c.l.s4 1983009808
    %v2174 = vunpack.c.0.s8 %v2173
    %v2175 = vlaneseq
    %v2176 = vshrl.u32 %v2175, 7
    %v2177 = vsub.s32 %v2174, %v2176
    %v2178 = vrot.slane %v2171, %v2177
    %v2180 = vadd.f32 %v2046, %v2178
    %s2181 = sld [smem:[#allocation6 + $0x10c]]
    %v2182 = vstv %s2181
    %v2183 = vmul.f32 %v2182, %v2147
    %v2184 = vmul.f32 %v2182, %v2148
    %v2187 = vcombine.low %v2183, %v2184
    %v2189 = vunpack.c.l.s4 1983009808
    %v2190 = vunpack.c.0.s8 %v2189
    %v2191 = vlaneseq
    %v2192 = vshrl.u32 %v2191, 7
    %v2193 = vsub.s32 %v2190, %v2192
    %v2194 = vrot.slane %v2187, %v2193
    %v2196 = vadd.f32 %v2062, %v2194
    %s2197 = sld [smem:[#allocation6 + $0x18c]]
    %v2198 = vstv %s2197
    %v2199 = vmul.f32 %v2198, %v2147
    %v2200 = vmul.f32 %v2198, %v2148
    %v2203 = vcombine.low %v2199, %v2200
    %v2205 = vunpack.c.l.s4 1983009808
    %v2206 = vunpack.c.0.s8 %v2205
    %v2207 = vlaneseq
    %v2208 = vshrl.u32 %v2207, 7
    %v2209 = vsub.s32 %v2206, %v2208
    %v2210 = vrot.slane %v2203, %v2209
    %v2212 = vadd.f32 %v2078, %v2210
    %s2213 = sld [smem:[#allocation6 + $0x20c]]
    %v2214 = vstv %s2213
    %v2215 = vmul.f32 %v2214, %v2147
    %v2216 = vmul.f32 %v2214, %v2148
    %v2219 = vcombine.low %v2215, %v2216
    %v2221 = vunpack.c.l.s4 1983009808
    %v2222 = vunpack.c.0.s8 %v2221
    %v2223 = vlaneseq
    %v2224 = vshrl.u32 %v2223, 7
    %v2225 = vsub.s32 %v2222, %v2224
    %v2226 = vrot.slane %v2219, %v2225
    %v2228 = vadd.f32 %v2094, %v2226
    %s2229 = sld [smem:[#allocation6 + $0x28c]]
    %v2230 = vstv %s2229
    %v2231 = vmul.f32 %v2230, %v2147
    %v2232 = vmul.f32 %v2230, %v2148
    %v2235 = vcombine.low %v2231, %v2232
    %v2237 = vunpack.c.l.s4 1983009808
    %v2238 = vunpack.c.0.s8 %v2237
    %v2239 = vlaneseq
    %v2240 = vshrl.u32 %v2239, 7
    %v2241 = vsub.s32 %v2238, %v2240
    %v2242 = vrot.slane %v2235, %v2241
    %v2244 = vadd.f32 %v2110, %v2242
    %s2245 = sld [smem:[#allocation6 + $0x30c]]
    %v2246 = vstv %s2245
    %v2247 = vmul.f32 %v2246, %v2147
    %v2248 = vmul.f32 %v2246, %v2148
    %v2251 = vcombine.low %v2247, %v2248
    %v2253 = vunpack.c.l.s4 1983009808
    %v2254 = vunpack.c.0.s8 %v2253
    %v2255 = vlaneseq
    %v2256 = vshrl.u32 %v2255, 7
    %v2257 = vsub.s32 %v2254, %v2256
    %v2258 = vrot.slane %v2251, %v2257
    %v2260 = vadd.f32 %v2126, %v2258
    %s2261 = sld [smem:[#allocation6 + $0x38c]]
    %v2262 = vstv %s2261
    %v2263 = vmul.f32 %v2262, %v2147
    %v2264 = vmul.f32 %v2262, %v2148
    %v2267 = vcombine.low %v2263, %v2264
    %v2269 = vunpack.c.l.s4 1983009808
    %v2270 = vunpack.c.0.s8 %v2269
    %v2271 = vlaneseq
    %v2272 = vshrl.u32 %v2271, 7
    %v2273 = vsub.s32 %v2270, %v2272
    %v2274 = vrot.slane %v2267, %v2273
    %v2276 = vadd.f32 %v2142, %v2274
    %2277 = vrot.lane.b32.xlu0 %v1871, 111
    %v2278 = vpop.permute.xlu0 %2277
    %2279 = vrot.lane.b32.xlu0 %v1872, 111
    %v2280 = vpop.permute.xlu0 %2279
    %v2281 = vsel %vm346, %v2278, %v2280
    %v2282 = vsel %vm346, %v2280, %v2278
    %s2283 = sld [smem:[#allocation6 + $0xd]]
    %v2284 = vstv %s2283
    %v2285 = vmul.f32 %v2284, %v2281
    %v2286 = vmul.f32 %v2284, %v2282
    %v2289 = vcombine.low %v2285, %v2286
    %v2291 = vunpack.c.l.s4 1983009808
    %v2292 = vunpack.c.0.s8 %v2291
    %v2293 = vlaneseq
    %v2294 = vshrl.u32 %v2293, 7
    %v2295 = vsub.s32 %v2292, %v2294
    %v2296 = vrot.slane %v2289, %v2295
    %v2298 = vadd.f32 %v2164, %v2296
    %s2299 = sld [smem:[#allocation6 + $0x8d]]
    %v2300 = vstv %s2299
    %v2301 = vmul.f32 %v2300, %v2281
    %v2302 = vmul.f32 %v2300, %v2282
    %v2305 = vcombine.low %v2301, %v2302
    %v2307 = vunpack.c.l.s4 1983009808
    %v2308 = vunpack.c.0.s8 %v2307
    %v2309 = vlaneseq
    %v2310 = vshrl.u32 %v2309, 7
    %v2311 = vsub.s32 %v2308, %v2310
    %v2312 = vrot.slane %v2305, %v2311
    %v2314 = vadd.f32 %v2180, %v2312
    %s2315 = sld [smem:[#allocation6 + $0x10d]]
    %v2316 = vstv %s2315
    %v2317 = vmul.f32 %v2316, %v2281
    %v2318 = vmul.f32 %v2316, %v2282
    %v2321 = vcombine.low %v2317, %v2318
    %v2323 = vunpack.c.l.s4 1983009808
    %v2324 = vunpack.c.0.s8 %v2323
    %v2325 = vlaneseq
    %v2326 = vshrl.u32 %v2325, 7
    %v2327 = vsub.s32 %v2324, %v2326
    %v2328 = vrot.slane %v2321, %v2327
    %v2330 = vadd.f32 %v2196, %v2328
    %s2331 = sld [smem:[#allocation6 + $0x18d]]
    %v2332 = vstv %s2331
    %v2333 = vmul.f32 %v2332, %v2281
    %v2334 = vmul.f32 %v2332, %v2282
    %v2337 = vcombine.low %v2333, %v2334
    %v2339 = vunpack.c.l.s4 1983009808
    %v2340 = vunpack.c.0.s8 %v2339
    %v2341 = vlaneseq
    %v2342 = vshrl.u32 %v2341, 7
    %v2343 = vsub.s32 %v2340, %v2342
    %v2344 = vrot.slane %v2337, %v2343
    %v2346 = vadd.f32 %v2212, %v2344
    %s2347 = sld [smem:[#allocation6 + $0x20d]]
    %v2348 = vstv %s2347
    %v2349 = vmul.f32 %v2348, %v2281
    %v2350 = vmul.f32 %v2348, %v2282
    %v2353 = vcombine.low %v2349, %v2350
    %v2355 = vunpack.c.l.s4 1983009808
    %v2356 = vunpack.c.0.s8 %v2355
    %v2357 = vlaneseq
    %v2358 = vshrl.u32 %v2357, 7
    %v2359 = vsub.s32 %v2356, %v2358
    %v2360 = vrot.slane %v2353, %v2359
    %v2362 = vadd.f32 %v2228, %v2360
    %s2363 = sld [smem:[#allocation6 + $0x28d]]
    %v2364 = vstv %s2363
    %v2365 = vmul.f32 %v2364, %v2281
    %v2366 = vmul.f32 %v2364, %v2282
    %v2369 = vcombine.low %v2365, %v2366
    %v2371 = vunpack.c.l.s4 1983009808
    %v2372 = vunpack.c.0.s8 %v2371
    %v2373 = vlaneseq
    %v2374 = vshrl.u32 %v2373, 7
    %v2375 = vsub.s32 %v2372, %v2374
    %v2376 = vrot.slane %v2369, %v2375
    %v2378 = vadd.f32 %v2244, %v2376
    %s2379 = sld [smem:[#allocation6 + $0x30d]]
    %v2380 = vstv %s2379
    %v2381 = vmul.f32 %v2380, %v2281
    %v2382 = vmul.f32 %v2380, %v2282
    %v2385 = vcombine.low %v2381, %v2382
    %v2387 = vunpack.c.l.s4 1983009808
    %v2388 = vunpack.c.0.s8 %v2387
    %v2389 = vlaneseq
    %v2390 = vshrl.u32 %v2389, 7
    %v2391 = vsub.s32 %v2388, %v2390
    %v2392 = vrot.slane %v2385, %v2391
    %v2394 = vadd.f32 %v2260, %v2392
    %s2395 = sld [smem:[#allocation6 + $0x38d]]
    %v2396 = vstv %s2395
    %v2397 = vmul.f32 %v2396, %v2281
    %v2398 = vmul.f32 %v2396, %v2282
    %v2401 = vcombine.low %v2397, %v2398
    %v2403 = vunpack.c.l.s4 1983009808
    %v2404 = vunpack.c.0.s8 %v2403
    %v2405 = vlaneseq
    %v2406 = vshrl.u32 %v2405, 7
    %v2407 = vsub.s32 %v2404, %v2406
    %v2408 = vrot.slane %v2401, %v2407
    %v2410 = vadd.f32 %v2276, %v2408
    %2411 = vrot.lane.b32.xlu0 %v1871, 110
    %v2412 = vpop.permute.xlu0 %2411
    %2413 = vrot.lane.b32.xlu0 %v1872, 110
    %v2414 = vpop.permute.xlu0 %2413
    %v2415 = vsel %vm417, %v2412, %v2414
    %v2416 = vsel %vm417, %v2414, %v2412
    %s2417 = sld [smem:[#allocation6 + $0xe]]
    %v2418 = vstv %s2417
    %v2419 = vmul.f32 %v2418, %v2415
    %v2420 = vmul.f32 %v2418, %v2416
    %v2423 = vcombine.low %v2419, %v2420
    %v2425 = vunpack.c.l.s4 1983009808
    %v2426 = vunpack.c.0.s8 %v2425
    %v2427 = vlaneseq
    %v2428 = vshrl.u32 %v2427, 7
    %v2429 = vsub.s32 %v2426, %v2428
    %v2430 = vrot.slane %v2423, %v2429
    %v2432 = vadd.f32 %v2298, %v2430
    %s2433 = sld [smem:[#allocation6 + $0x8e]]
    %v2434 = vstv %s2433
    %v2435 = vmul.f32 %v2434, %v2415
    %v2436 = vmul.f32 %v2434, %v2416
    %v2439 = vcombine.low %v2435, %v2436
    %v2441 = vunpack.c.l.s4 1983009808
    %v2442 = vunpack.c.0.s8 %v2441
    %v2443 = vlaneseq
    %v2444 = vshrl.u32 %v2443, 7
    %v2445 = vsub.s32 %v2442, %v2444
    %v2446 = vrot.slane %v2439, %v2445
    %v2448 = vadd.f32 %v2314, %v2446
    %s2449 = sld [smem:[#allocation6 + $0x10e]]
    %v2450 = vstv %s2449
    %v2451 = vmul.f32 %v2450, %v2415
    %v2452 = vmul.f32 %v2450, %v2416
    %v2455 = vcombine.low %v2451, %v2452
    %v2457 = vunpack.c.l.s4 1983009808
    %v2458 = vunpack.c.0.s8 %v2457
    %v2459 = vlaneseq
    %v2460 = vshrl.u32 %v2459, 7
    %v2461 = vsub.s32 %v2458, %v2460
    %v2462 = vrot.slane %v2455, %v2461
    %v2464 = vadd.f32 %v2330, %v2462
    %s2465 = sld [smem:[#allocation6 + $0x18e]]
    %v2466 = vstv %s2465
    %v2467 = vmul.f32 %v2466, %v2415
    %v2468 = vmul.f32 %v2466, %v2416
    %v2471 = vcombine.low %v2467, %v2468
    %v2473 = vunpack.c.l.s4 1983009808
    %v2474 = vunpack.c.0.s8 %v2473
    %v2475 = vlaneseq
    %v2476 = vshrl.u32 %v2475, 7
    %v2477 = vsub.s32 %v2474, %v2476
    %v2478 = vrot.slane %v2471, %v2477
    %v2480 = vadd.f32 %v2346, %v2478
    %s2481 = sld [smem:[#allocation6 + $0x20e]]
    %v2482 = vstv %s2481
    %v2483 = vmul.f32 %v2482, %v2415
    %v2484 = vmul.f32 %v2482, %v2416
    %v2487 = vcombine.low %v2483, %v2484
    %v2489 = vunpack.c.l.s4 1983009808
    %v2490 = vunpack.c.0.s8 %v2489
    %v2491 = vlaneseq
    %v2492 = vshrl.u32 %v2491, 7
    %v2493 = vsub.s32 %v2490, %v2492
    %v2494 = vrot.slane %v2487, %v2493
    %v2496 = vadd.f32 %v2362, %v2494
    %s2497 = sld [smem:[#allocation6 + $0x28e]]
    %v2498 = vstv %s2497
    %v2499 = vmul.f32 %v2498, %v2415
    %v2500 = vmul.f32 %v2498, %v2416
    %v2503 = vcombine.low %v2499, %v2500
    %v2505 = vunpack.c.l.s4 1983009808
    %v2506 = vunpack.c.0.s8 %v2505
    %v2507 = vlaneseq
    %v2508 = vshrl.u32 %v2507, 7
    %v2509 = vsub.s32 %v2506, %v2508
    %v2510 = vrot.slane %v2503, %v2509
    %v2512 = vadd.f32 %v2378, %v2510
    %s2513 = sld [smem:[#allocation6 + $0x30e]]
    %v2514 = vstv %s2513
    %v2515 = vmul.f32 %v2514, %v2415
    %v2516 = vmul.f32 %v2514, %v2416
    %v2519 = vcombine.low %v2515, %v2516
    %v2521 = vunpack.c.l.s4 1983009808
    %v2522 = vunpack.c.0.s8 %v2521
    %v2523 = vlaneseq
    %v2524 = vshrl.u32 %v2523, 7
    %v2525 = vsub.s32 %v2522, %v2524
    %v2526 = vrot.slane %v2519, %v2525
    %v2528 = vadd.f32 %v2394, %v2526
    %s2529 = sld [smem:[#allocation6 + $0x38e]]
    %v2530 = vstv %s2529
    %v2531 = vmul.f32 %v2530, %v2415
    %v2532 = vmul.f32 %v2530, %v2416
    %v2535 = vcombine.low %v2531, %v2532
    %v2537 = vunpack.c.l.s4 1983009808
    %v2538 = vunpack.c.0.s8 %v2537
    %v2539 = vlaneseq
    %v2540 = vshrl.u32 %v2539, 7
    %v2541 = vsub.s32 %v2538, %v2540
    %v2542 = vrot.slane %v2535, %v2541
    %v2544 = vadd.f32 %v2410, %v2542
    %2545 = vrot.lane.b32.xlu0 %v1871, 96
    %v2546 = vpop.permute.xlu0 %2545
    %2547 = vrot.lane.b32.xlu0 %v1872, 96
    %v2548 = vpop.permute.xlu0 %2547
    %v2549 = vsel %vm488, %v2546, %v2548
    %v2550 = vsel %vm488, %v2548, %v2546
    %s2551 = sld [smem:[#allocation6 + $0xf]]
    %v2552 = vstv %s2551
    %v2553 = vmul.f32 %v2552, %v2549
    %v2554 = vmul.f32 %v2552, %v2550
    %v2557 = vcombine.low %v2553, %v2554
    %v2559 = vunpack.c.l.s4 1983009808
    %v2560 = vunpack.c.0.s8 %v2559
    %v2561 = vlaneseq
    %v2562 = vshrl.u32 %v2561, 7
    %v2563 = vsub.s32 %v2560, %v2562
    %v2564 = vrot.slane %v2557, %v2563
    %v2566 = vadd.f32 %v2432, %v2564
    %s2567 = sld [smem:[#allocation6 + $0x8f]]
    %v2568 = vstv %s2567
    %v2569 = vmul.f32 %v2568, %v2549
    %v2570 = vmul.f32 %v2568, %v2550
    %v2573 = vcombine.low %v2569, %v2570
    %v2575 = vunpack.c.l.s4 1983009808
    %v2576 = vunpack.c.0.s8 %v2575
    %v2577 = vlaneseq
    %v2578 = vshrl.u32 %v2577, 7
    %v2579 = vsub.s32 %v2576, %v2578
    %v2580 = vrot.slane %v2573, %v2579
    %v2582 = vadd.f32 %v2448, %v2580
    %s2583 = sld [smem:[#allocation6 + $0x10f]]
    %v2584 = vstv %s2583
    %v2585 = vmul.f32 %v2584, %v2549
    %v2586 = vmul.f32 %v2584, %v2550
    %v2589 = vcombine.low %v2585, %v2586
    %v2591 = vunpack.c.l.s4 1983009808
    %v2592 = vunpack.c.0.s8 %v2591
    %v2593 = vlaneseq
    %v2594 = vshrl.u32 %v2593, 7
    %v2595 = vsub.s32 %v2592, %v2594
    %v2596 = vrot.slane %v2589, %v2595
    %v2598 = vadd.f32 %v2464, %v2596
    %s2599 = sld [smem:[#allocation6 + $0x18f]]
    %v2600 = vstv %s2599
    %v2601 = vmul.f32 %v2600, %v2549
    %v2602 = vmul.f32 %v2600, %v2550
    %v2605 = vcombine.low %v2601, %v2602
    %v2607 = vunpack.c.l.s4 1983009808
    %v2608 = vunpack.c.0.s8 %v2607
    %v2609 = vlaneseq
    %v2610 = vshrl.u32 %v2609, 7
    %v2611 = vsub.s32 %v2608, %v2610
    %v2612 = vrot.slane %v2605, %v2611
    %v2614 = vadd.f32 %v2480, %v2612
    %s2615 = sld [smem:[#allocation6 + $0x20f]]
    %v2616 = vstv %s2615
    %v2617 = vmul.f32 %v2616, %v2549
    %v2618 = vmul.f32 %v2616, %v2550
    %v2621 = vcombine.low %v2617, %v2618
    %v2623 = vunpack.c.l.s4 1983009808
    %v2624 = vunpack.c.0.s8 %v2623
    %v2625 = vlaneseq
    %v2626 = vshrl.u32 %v2625, 7
    %v2627 = vsub.s32 %v2624, %v2626
    %v2628 = vrot.slane %v2621, %v2627
    %v2630 = vadd.f32 %v2496, %v2628
    %s2631 = sld [smem:[#allocation6 + $0x28f]]
    %v2632 = vstv %s2631
    %v2633 = vmul.f32 %v2632, %v2549
    %v2634 = vmul.f32 %v2632, %v2550
    %v2637 = vcombine.low %v2633, %v2634
    %v2639 = vunpack.c.l.s4 1983009808
    %v2640 = vunpack.c.0.s8 %v2639
    %v2641 = vlaneseq
    %v2642 = vshrl.u32 %v2641, 7
    %v2643 = vsub.s32 %v2640, %v2642
    %v2644 = vrot.slane %v2637, %v2643
    %v2646 = vadd.f32 %v2512, %v2644
    %s2647 = sld [smem:[#allocation6 + $0x30f]]
    %v2648 = vstv %s2647
    %v2649 = vmul.f32 %v2648, %v2549
    %v2650 = vmul.f32 %v2648, %v2550
    %v2653 = vcombine.low %v2649, %v2650
    %v2655 = vunpack.c.l.s4 1983009808
    %v2656 = vunpack.c.0.s8 %v2655
    %v2657 = vlaneseq
    %v2658 = vshrl.u32 %v2657, 7
    %v2659 = vsub.s32 %v2656, %v2658
    %v2660 = vrot.slane %v2653, %v2659
    %v2662 = vadd.f32 %v2528, %v2660
    %s2663 = sld [smem:[#allocation6 + $0x38f]]
    %v2664 = vstv %s2663
    %v2665 = vmul.f32 %v2664, %v2549
    %v2666 = vmul.f32 %v2664, %v2550
    %v2669 = vcombine.low %v2665, %v2666
    %v2671 = vunpack.c.l.s4 1983009808
    %v2672 = vunpack.c.0.s8 %v2671
    %v2673 = vlaneseq
    %v2674 = vshrl.u32 %v2673, 7
    %v2675 = vsub.s32 %v2672, %v2674
    %v2676 = vrot.slane %v2669, %v2675
    %v2678 = vadd.f32 %v2544, %v2676
    %2679 = vrot.lane.b32.xlu0 %v1871, 95
    %v2680 = vpop.permute.xlu0 %2679
    %2681 = vrot.lane.b32.xlu0 %v1872, 95
    %v2682 = vpop.permute.xlu0 %2681
    %v2683 = vsel %vm559, %v2680, %v2682
    %v2684 = vsel %vm559, %v2682, %v2680
    %s2685 = sld [smem:[#allocation6 + $0x10]]
    %v2686 = vstv %s2685
    %v2687 = vmul.f32 %v2686, %v2683
    %v2688 = vmul.f32 %v2686, %v2684
    %v2691 = vcombine.low %v2687, %v2688
    %v2693 = vunpack.c.l.s4 1983009808
    %v2694 = vunpack.c.0.s8 %v2693
    %v2695 = vlaneseq
    %v2696 = vshrl.u32 %v2695, 7
    %v2697 = vsub.s32 %v2694, %v2696
    %v2698 = vrot.slane %v2691, %v2697
    %v2700 = vadd.f32 %v2566, %v2698
    %s2701 = sld [smem:[#allocation6 + $0x90]]
    %v2702 = vstv %s2701
    %v2703 = vmul.f32 %v2702, %v2683
    %v2704 = vmul.f32 %v2702, %v2684
    %v2707 = vcombine.low %v2703, %v2704
    %v2709 = vunpack.c.l.s4 1983009808
    %v2710 = vunpack.c.0.s8 %v2709
    %v2711 = vlaneseq
    %v2712 = vshrl.u32 %v2711, 7
    %v2713 = vsub.s32 %v2710, %v2712
    %v2714 = vrot.slane %v2707, %v2713
    %v2716 = vadd.f32 %v2582, %v2714
    %s2717 = sld [smem:[#allocation6 + $0x110]]
    %v2718 = vstv %s2717
    %v2719 = vmul.f32 %v2718, %v2683
    %v2720 = vmul.f32 %v2718, %v2684
    %v2723 = vcombine.low %v2719, %v2720
    %v2725 = vunpack.c.l.s4 1983009808
    %v2726 = vunpack.c.0.s8 %v2725
    %v2727 = vlaneseq
    %v2728 = vshrl.u32 %v2727, 7
    %v2729 = vsub.s32 %v2726, %v2728
    %v2730 = vrot.slane %v2723, %v2729
    %v2732 = vadd.f32 %v2598, %v2730
    %s2733 = sld [smem:[#allocation6 + $0x190]]
    %v2734 = vstv %s2733
    %v2735 = vmul.f32 %v2734, %v2683
    %v2736 = vmul.f32 %v2734, %v2684
    %v2739 = vcombine.low %v2735, %v2736
    %v2741 = vunpack.c.l.s4 1983009808
    %v2742 = vunpack.c.0.s8 %v2741
    %v2743 = vlaneseq
    %v2744 = vshrl.u32 %v2743, 7
    %v2745 = vsub.s32 %v2742, %v2744
    %v2746 = vrot.slane %v2739, %v2745
    %v2748 = vadd.f32 %v2614, %v2746
    %s2749 = sld [smem:[#allocation6 + $0x210]]
    %v2750 = vstv %s2749
    %v2751 = vmul.f32 %v2750, %v2683
    %v2752 = vmul.f32 %v2750, %v2684
    %v2755 = vcombine.low %v2751, %v2752
    %v2757 = vunpack.c.l.s4 1983009808
    %v2758 = vunpack.c.0.s8 %v2757
    %v2759 = vlaneseq
    %v2760 = vshrl.u32 %v2759, 7
    %v2761 = vsub.s32 %v2758, %v2760
    %v2762 = vrot.slane %v2755, %v2761
    %v2764 = vadd.f32 %v2630, %v2762
    %s2765 = sld [smem:[#allocation6 + $0x290]]
    %v2766 = vstv %s2765
    %v2767 = vmul.f32 %v2766, %v2683
    %v2768 = vmul.f32 %v2766, %v2684
    %v2771 = vcombine.low %v2767, %v2768
    %v2773 = vunpack.c.l.s4 1983009808
    %v2774 = vunpack.c.0.s8 %v2773
    %v2775 = vlaneseq
    %v2776 = vshrl.u32 %v2775, 7
    %v2777 = vsub.s32 %v2774, %v2776
    %v2778 = vrot.slane %v2771, %v2777
    %v2780 = vadd.f32 %v2646, %v2778
    %s2781 = sld [smem:[#allocation6 + $0x310]]
    %v2782 = vstv %s2781
    %v2783 = vmul.f32 %v2782, %v2683
    %v2784 = vmul.f32 %v2782, %v2684
    %v2787 = vcombine.low %v2783, %v2784
    %v2789 = vunpack.c.l.s4 1983009808
    %v2790 = vunpack.c.0.s8 %v2789
    %v2791 = vlaneseq
    %v2792 = vshrl.u32 %v2791, 7
    %v2793 = vsub.s32 %v2790, %v2792
    %v2794 = vrot.slane %v2787, %v2793
    %v2796 = vadd.f32 %v2662, %v2794
    %s2797 = sld [smem:[#allocation6 + $0x390]]
    %v2798 = vstv %s2797
    %v2799 = vmul.f32 %v2798, %v2683
    %v2800 = vmul.f32 %v2798, %v2684
    %v2803 = vcombine.low %v2799, %v2800
    %v2805 = vunpack.c.l.s4 1983009808
    %v2806 = vunpack.c.0.s8 %v2805
    %v2807 = vlaneseq
    %v2808 = vshrl.u32 %v2807, 7
    %v2809 = vsub.s32 %v2806, %v2808
    %v2810 = vrot.slane %v2803, %v2809
    %v2812 = vadd.f32 %v2678, %v2810
    %2813 = vrot.lane.b32.xlu0 %v1871, 94
    %v2814 = vpop.permute.xlu0 %2813
    %2815 = vrot.lane.b32.xlu0 %v1872, 94
    %v2816 = vpop.permute.xlu0 %2815
    %v2817 = vsel %vm630, %v2814, %v2816
    %v2818 = vsel %vm630, %v2816, %v2814
    %s2819 = sld [smem:[#allocation6 + $0x11]]
    %v2820 = vstv %s2819
    %v2821 = vmul.f32 %v2820, %v2817
    %v2822 = vmul.f32 %v2820, %v2818
    %v2825 = vcombine.low %v2821, %v2822
    %v2827 = vunpack.c.l.s4 1983009808
    %v2828 = vunpack.c.0.s8 %v2827
    %v2829 = vlaneseq
    %v2830 = vshrl.u32 %v2829, 7
    %v2831 = vsub.s32 %v2828, %v2830
    %v2832 = vrot.slane %v2825, %v2831
    %v2834 = vadd.f32 %v2700, %v2832
    %s2835 = sld [smem:[#allocation6 + $0x91]]
    %v2836 = vstv %s2835
    %v2837 = vmul.f32 %v2836, %v2817
    %v2838 = vmul.f32 %v2836, %v2818
    %v2841 = vcombine.low %v2837, %v2838
    %v2843 = vunpack.c.l.s4 1983009808
    %v2844 = vunpack.c.0.s8 %v2843
    %v2845 = vlaneseq
    %v2846 = vshrl.u32 %v2845, 7
    %v2847 = vsub.s32 %v2844, %v2846
    %v2848 = vrot.slane %v2841, %v2847
    %v2850 = vadd.f32 %v2716, %v2848
    %s2851 = sld [smem:[#allocation6 + $0x111]]
    %v2852 = vstv %s2851
    %v2853 = vmul.f32 %v2852, %v2817
    %v2854 = vmul.f32 %v2852, %v2818
    %v2857 = vcombine.low %v2853, %v2854
    %v2859 = vunpack.c.l.s4 1983009808
    %v2860 = vunpack.c.0.s8 %v2859
    %v2861 = vlaneseq
    %v2862 = vshrl.u32 %v2861, 7
    %v2863 = vsub.s32 %v2860, %v2862
    %v2864 = vrot.slane %v2857, %v2863
    %v2866 = vadd.f32 %v2732, %v2864
    %s2867 = sld [smem:[#allocation6 + $0x191]]
    %v2868 = vstv %s2867
    %v2869 = vmul.f32 %v2868, %v2817
    %v2870 = vmul.f32 %v2868, %v2818
    %v2873 = vcombine.low %v2869, %v2870
    %v2875 = vunpack.c.l.s4 1983009808
    %v2876 = vunpack.c.0.s8 %v2875
    %v2877 = vlaneseq
    %v2878 = vshrl.u32 %v2877, 7
    %v2879 = vsub.s32 %v2876, %v2878
    %v2880 = vrot.slane %v2873, %v2879
    %v2882 = vadd.f32 %v2748, %v2880
    %s2883 = sld [smem:[#allocation6 + $0x211]]
    %v2884 = vstv %s2883
    %v2885 = vmul.f32 %v2884, %v2817
    %v2886 = vmul.f32 %v2884, %v2818
    %v2889 = vcombine.low %v2885, %v2886
    %v2891 = vunpack.c.l.s4 1983009808
    %v2892 = vunpack.c.0.s8 %v2891
    %v2893 = vlaneseq
    %v2894 = vshrl.u32 %v2893, 7
    %v2895 = vsub.s32 %v2892, %v2894
    %v2896 = vrot.slane %v2889, %v2895
    %v2898 = vadd.f32 %v2764, %v2896
    %s2899 = sld [smem:[#allocation6 + $0x291]]
    %v2900 = vstv %s2899
    %v2901 = vmul.f32 %v2900, %v2817
    %v2902 = vmul.f32 %v2900, %v2818
    %v2905 = vcombine.low %v2901, %v2902
    %v2907 = vunpack.c.l.s4 1983009808
    %v2908 = vunpack.c.0.s8 %v2907
    %v2909 = vlaneseq
    %v2910 = vshrl.u32 %v2909, 7
    %v2911 = vsub.s32 %v2908, %v2910
    %v2912 = vrot.slane %v2905, %v2911
    %v2914 = vadd.f32 %v2780, %v2912
    %s2915 = sld [smem:[#allocation6 + $0x311]]
    %v2916 = vstv %s2915
    %v2917 = vmul.f32 %v2916, %v2817
    %v2918 = vmul.f32 %v2916, %v2818
    %v2921 = vcombine.low %v2917, %v2918
    %v2923 = vunpack.c.l.s4 1983009808
    %v2924 = vunpack.c.0.s8 %v2923
    %v2925 = vlaneseq
    %v2926 = vshrl.u32 %v2925, 7
    %v2927 = vsub.s32 %v2924, %v2926
    %v2928 = vrot.slane %v2921, %v2927
    %v2930 = vadd.f32 %v2796, %v2928
    %s2931 = sld [smem:[#allocation6 + $0x391]]
    %v2932 = vstv %s2931
    %v2933 = vmul.f32 %v2932, %v2817
    %v2934 = vmul.f32 %v2932, %v2818
    %v2937 = vcombine.low %v2933, %v2934
    %v2939 = vunpack.c.l.s4 1983009808
    %v2940 = vunpack.c.0.s8 %v2939
    %v2941 = vlaneseq
    %v2942 = vshrl.u32 %v2941, 7
    %v2943 = vsub.s32 %v2940, %v2942
    %v2944 = vrot.slane %v2937, %v2943
    %v2946 = vadd.f32 %v2812, %v2944
    %s2947 = sld [smem:[#allocation6 + $0x12]]
    %v2948 = vstv %s2947
    %v2949 = vmul.f32 %v2948, %v711
    %v2950 = vadd.f32 %v2834, %v2949
    %s2951 = sld [smem:[#allocation6 + $0x92]]
    %v2952 = vstv %s2951
    %v2953 = vmul.f32 %v2952, %v711
    %v2954 = vadd.f32 %v2850, %v2953
    %s2955 = sld [smem:[#allocation6 + $0x112]]
    %v2956 = vstv %s2955
    %v2957 = vmul.f32 %v2956, %v711
    %v2958 = vadd.f32 %v2866, %v2957
    %s2959 = sld [smem:[#allocation6 + $0x192]]
    %v2960 = vstv %s2959
    %v2961 = vmul.f32 %v2960, %v711
    %v2962 = vadd.f32 %v2882, %v2961
    %s2963 = sld [smem:[#allocation6 + $0x212]]
    %v2964 = vstv %s2963
    %v2965 = vmul.f32 %v2964, %v711
    %v2966 = vadd.f32 %v2898, %v2965
    %s2967 = sld [smem:[#allocation6 + $0x292]]
    %v2968 = vstv %s2967
    %v2969 = vmul.f32 %v2968, %v711
    %v2970 = vadd.f32 %v2914, %v2969
    %s2971 = sld [smem:[#allocation6 + $0x312]]
    %v2972 = vstv %s2971
    %v2973 = vmul.f32 %v2972, %v711
    %v2974 = vadd.f32 %v2930, %v2973
    %s2975 = sld [smem:[#allocation6 + $0x392]]
    %v2976 = vstv %s2975
    %v2977 = vmul.f32 %v2976, %v711
    %v2978 = vadd.f32 %v2946, %v2977
    %v2981 = vunpack.c.l.s4 1983009808
    %v2982 = vunpack.c.0.s8 %v2981
    %v2983 = vlaneseq
    %v2984 = vshrl.u32 %v2983, 7
    %v2985 = vsub.s32 %v2982, %v2984
    %v2986 = vrot.slane %v711, %v2985
    %v2987 = vcombine.high %v2986, %v2986
    %2990 = vrot.lane.b32.xlu0 %v2986, 127
    %v2991 = vpop.permute.xlu0 %2990
    %2992 = vrot.lane.b32.xlu0 %v2987, 127
    %v2993 = vpop.permute.xlu0 %2992
    %v2994 = vsel %vm133, %v2991, %v2993
    %v2995 = vsel %vm133, %v2993, %v2991
    %s2996 = sld [smem:[#allocation6 + $0x13]]
    %v2997 = vstv %s2996
    %v2998 = vmul.f32 %v2997, %v2994
    %v2999 = vmul.f32 %v2997, %v2995
    %v3002 = vcombine.low %v2998, %v2999
    %v3004 = vunpack.c.l.s4 1983009808
    %v3005 = vunpack.c.0.s8 %v3004
    %v3006 = vlaneseq
    %v3007 = vshrl.u32 %v3006, 7
    %v3008 = vsub.s32 %v3005, %v3007
    %v3009 = vrot.slane %v3002, %v3008
    %v3011 = vadd.f32 %v2950, %v3009
    %s3012 = sld [smem:[#allocation6 + $0x93]]
    %v3013 = vstv %s3012
    %v3014 = vmul.f32 %v3013, %v2994
    %v3015 = vmul.f32 %v3013, %v2995
    %v3018 = vcombine.low %v3014, %v3015
    %v3020 = vunpack.c.l.s4 1983009808
    %v3021 = vunpack.c.0.s8 %v3020
    %v3022 = vlaneseq
    %v3023 = vshrl.u32 %v3022, 7
    %v3024 = vsub.s32 %v3021, %v3023
    %v3025 = vrot.slane %v3018, %v3024
    %v3027 = vadd.f32 %v2954, %v3025
    %s3028 = sld [smem:[#allocation6 + $0x113]]
    %v3029 = vstv %s3028
    %v3030 = vmul.f32 %v3029, %v2994
    %v3031 = vmul.f32 %v3029, %v2995
    %v3034 = vcombine.low %v3030, %v3031
    %v3036 = vunpack.c.l.s4 1983009808
    %v3037 = vunpack.c.0.s8 %v3036
    %v3038 = vlaneseq
    %v3039 = vshrl.u32 %v3038, 7
    %v3040 = vsub.s32 %v3037, %v3039
    %v3041 = vrot.slane %v3034, %v3040
    %v3043 = vadd.f32 %v2958, %v3041
    %s3044 = sld [smem:[#allocation6 + $0x193]]
    %v3045 = vstv %s3044
    %v3046 = vmul.f32 %v3045, %v2994
    %v3047 = vmul.f32 %v3045, %v2995
    %v3050 = vcombine.low %v3046, %v3047
    %v3052 = vunpack.c.l.s4 1983009808
    %v3053 = vunpack.c.0.s8 %v3052
    %v3054 = vlaneseq
    %v3055 = vshrl.u32 %v3054, 7
    %v3056 = vsub.s32 %v3053, %v3055
    %v3057 = vrot.slane %v3050, %v3056
    %v3059 = vadd.f32 %v2962, %v3057
    %s3060 = sld [smem:[#allocation6 + $0x213]]
    %v3061 = vstv %s3060
    %v3062 = vmul.f32 %v3061, %v2994
    %v3063 = vmul.f32 %v3061, %v2995
    %v3066 = vcombine.low %v3062, %v3063
    %v3068 = vunpack.c.l.s4 1983009808
    %v3069 = vunpack.c.0.s8 %v3068
    %v3070 = vlaneseq
    %v3071 = vshrl.u32 %v3070, 7
    %v3072 = vsub.s32 %v3069, %v3071
    %v3073 = vrot.slane %v3066, %v3072
    %v3075 = vadd.f32 %v2966, %v3073
    %s3076 = sld [smem:[#allocation6 + $0x293]]
    %v3077 = vstv %s3076
    %v3078 = vmul.f32 %v3077, %v2994
    %v3079 = vmul.f32 %v3077, %v2995
    %v3082 = vcombine.low %v3078, %v3079
    %v3084 = vunpack.c.l.s4 1983009808
    %v3085 = vunpack.c.0.s8 %v3084
    %v3086 = vlaneseq
    %v3087 = vshrl.u32 %v3086, 7
    %v3088 = vsub.s32 %v3085, %v3087
    %v3089 = vrot.slane %v3082, %v3088
    %v3091 = vadd.f32 %v2970, %v3089
    %s3092 = sld [smem:[#allocation6 + $0x313]]
    %v3093 = vstv %s3092
    %v3094 = vmul.f32 %v3093, %v2994
    %v3095 = vmul.f32 %v3093, %v2995
    %v3098 = vcombine.low %v3094, %v3095
    %v3100 = vunpack.c.l.s4 1983009808
    %v3101 = vunpack.c.0.s8 %v3100
    %v3102 = vlaneseq
    %v3103 = vshrl.u32 %v3102, 7
    %v3104 = vsub.s32 %v3101, %v3103
    %v3105 = vrot.slane %v3098, %v3104
    %v3107 = vadd.f32 %v2974, %v3105
    %s3108 = sld [smem:[#allocation6 + $0x393]]
    %v3109 = vstv %s3108
    %v3110 = vmul.f32 %v3109, %v2994
    %v3111 = vmul.f32 %v3109, %v2995
    %v3114 = vcombine.low %v3110, %v3111
    %v3116 = vunpack.c.l.s4 1983009808
    %v3117 = vunpack.c.0.s8 %v3116
    %v3118 = vlaneseq
    %v3119 = vshrl.u32 %v3118, 7
    %v3120 = vsub.s32 %v3117, %v3119
    %v3121 = vrot.slane %v3114, %v3120
    %v3123 = vadd.f32 %v2978, %v3121
    %3124 = vrot.lane.b32.xlu0 %v2986, 126
    %v3125 = vpop.permute.xlu0 %3124
    %3126 = vrot.lane.b32.xlu0 %v2987, 126
    %v3127 = vpop.permute.xlu0 %3126
    %v3128 = vsel %vm204, %v3125, %v3127
    %v3129 = vsel %vm204, %v3127, %v3125
    %s3130 = sld [smem:[#allocation6 + $0x14]]
    %v3131 = vstv %s3130
    %v3132 = vmul.f32 %v3131, %v3128
    %v3133 = vmul.f32 %v3131, %v3129
    %v3136 = vcombine.low %v3132, %v3133
    %v3138 = vunpack.c.l.s4 1983009808
    %v3139 = vunpack.c.0.s8 %v3138
    %v3140 = vlaneseq
    %v3141 = vshrl.u32 %v3140, 7
    %v3142 = vsub.s32 %v3139, %v3141
    %v3143 = vrot.slane %v3136, %v3142
    %v3145 = vadd.f32 %v3011, %v3143
    %s3146 = sld [smem:[#allocation6 + $0x94]]
    %v3147 = vstv %s3146
    %v3148 = vmul.f32 %v3147, %v3128
    %v3149 = vmul.f32 %v3147, %v3129
    %v3152 = vcombine.low %v3148, %v3149
    %v3154 = vunpack.c.l.s4 1983009808
    %v3155 = vunpack.c.0.s8 %v3154
    %v3156 = vlaneseq
    %v3157 = vshrl.u32 %v3156, 7
    %v3158 = vsub.s32 %v3155, %v3157
    %v3159 = vrot.slane %v3152, %v3158
    %v3161 = vadd.f32 %v3027, %v3159
    %s3162 = sld [smem:[#allocation6 + $0x114]]
    %v3163 = vstv %s3162
    %v3164 = vmul.f32 %v3163, %v3128
    %v3165 = vmul.f32 %v3163, %v3129
    %v3168 = vcombine.low %v3164, %v3165
    %v3170 = vunpack.c.l.s4 1983009808
    %v3171 = vunpack.c.0.s8 %v3170
    %v3172 = vlaneseq
    %v3173 = vshrl.u32 %v3172, 7
    %v3174 = vsub.s32 %v3171, %v3173
    %v3175 = vrot.slane %v3168, %v3174
    %v3177 = vadd.f32 %v3043, %v3175
    %s3178 = sld [smem:[#allocation6 + $0x194]]
    %v3179 = vstv %s3178
    %v3180 = vmul.f32 %v3179, %v3128
    %v3181 = vmul.f32 %v3179, %v3129
    %v3184 = vcombine.low %v3180, %v3181
    %v3186 = vunpack.c.l.s4 1983009808
    %v3187 = vunpack.c.0.s8 %v3186
    %v3188 = vlaneseq
    %v3189 = vshrl.u32 %v3188, 7
    %v3190 = vsub.s32 %v3187, %v3189
    %v3191 = vrot.slane %v3184, %v3190
    %v3193 = vadd.f32 %v3059, %v3191
    %s3194 = sld [smem:[#allocation6 + $0x214]]
    %v3195 = vstv %s3194
    %v3196 = vmul.f32 %v3195, %v3128
    %v3197 = vmul.f32 %v3195, %v3129
    %v3200 = vcombine.low %v3196, %v3197
    %v3202 = vunpack.c.l.s4 1983009808
    %v3203 = vunpack.c.0.s8 %v3202
    %v3204 = vlaneseq
    %v3205 = vshrl.u32 %v3204, 7
    %v3206 = vsub.s32 %v3203, %v3205
    %v3207 = vrot.slane %v3200, %v3206
    %v3209 = vadd.f32 %v3075, %v3207
    %s3210 = sld [smem:[#allocation6 + $0x294]]
    %v3211 = vstv %s3210
    %v3212 = vmul.f32 %v3211, %v3128
    %v3213 = vmul.f32 %v3211, %v3129
    %v3216 = vcombine.low %v3212, %v3213
    %v3218 = vunpack.c.l.s4 1983009808
    %v3219 = vunpack.c.0.s8 %v3218
    %v3220 = vlaneseq
    %v3221 = vshrl.u32 %v3220, 7
    %v3222 = vsub.s32 %v3219, %v3221
    %v3223 = vrot.slane %v3216, %v3222
    %v3225 = vadd.f32 %v3091, %v3223
    %s3226 = sld [smem:[#allocation6 + $0x314]]
    %v3227 = vstv %s3226
    %v3228 = vmul.f32 %v3227, %v3128
    %v3229 = vmul.f32 %v3227, %v3129
    %v3232 = vcombine.low %v3228, %v3229
    %v3234 = vunpack.c.l.s4 1983009808
    %v3235 = vunpack.c.0.s8 %v3234
    %v3236 = vlaneseq
    %v3237 = vshrl.u32 %v3236, 7
    %v3238 = vsub.s32 %v3235, %v3237
    %v3239 = vrot.slane %v3232, %v3238
    %v3241 = vadd.f32 %v3107, %v3239
    %s3242 = sld [smem:[#allocation6 + $0x394]]
    %v3243 = vstv %s3242
    %v3244 = vmul.f32 %v3243, %v3128
    %v3245 = vmul.f32 %v3243, %v3129
    %v3248 = vcombine.low %v3244, %v3245
    %v3250 = vunpack.c.l.s4 1983009808
    %v3251 = vunpack.c.0.s8 %v3250
    %v3252 = vlaneseq
    %v3253 = vshrl.u32 %v3252, 7
    %v3254 = vsub.s32 %v3251, %v3253
    %v3255 = vrot.slane %v3248, %v3254
    %v3257 = vadd.f32 %v3123, %v3255
    %3258 = vrot.lane.b32.xlu0 %v2986, 112
    %v3259 = vpop.permute.xlu0 %3258
    %3260 = vrot.lane.b32.xlu0 %v2987, 112
    %v3261 = vpop.permute.xlu0 %3260
    %v3262 = vsel %vm275, %v3259, %v3261
    %v3263 = vsel %vm275, %v3261, %v3259
    %s3264 = sld [smem:[#allocation6 + $0x15]]
    %v3265 = vstv %s3264
    %v3266 = vmul.f32 %v3265, %v3262
    %v3267 = vmul.f32 %v3265, %v3263
    %v3270 = vcombine.low %v3266, %v3267
    %v3272 = vunpack.c.l.s4 1983009808
    %v3273 = vunpack.c.0.s8 %v3272
    %v3274 = vlaneseq
    %v3275 = vshrl.u32 %v3274, 7
    %v3276 = vsub.s32 %v3273, %v3275
    %v3277 = vrot.slane %v3270, %v3276
    %v3279 = vadd.f32 %v3145, %v3277
    %s3280 = sld [smem:[#allocation6 + $0x95]]
    %v3281 = vstv %s3280
    %v3282 = vmul.f32 %v3281, %v3262
    %v3283 = vmul.f32 %v3281, %v3263
    %v3286 = vcombine.low %v3282, %v3283
    %v3288 = vunpack.c.l.s4 1983009808
    %v3289 = vunpack.c.0.s8 %v3288
    %v3290 = vlaneseq
    %v3291 = vshrl.u32 %v3290, 7
    %v3292 = vsub.s32 %v3289, %v3291
    %v3293 = vrot.slane %v3286, %v3292
    %v3295 = vadd.f32 %v3161, %v3293
    %s3296 = sld [smem:[#allocation6 + $0x115]]
    %v3297 = vstv %s3296
    %v3298 = vmul.f32 %v3297, %v3262
    %v3299 = vmul.f32 %v3297, %v3263
    %v3302 = vcombine.low %v3298, %v3299
    %v3304 = vunpack.c.l.s4 1983009808
    %v3305 = vunpack.c.0.s8 %v3304
    %v3306 = vlaneseq
    %v3307 = vshrl.u32 %v3306, 7
    %v3308 = vsub.s32 %v3305, %v3307
    %v3309 = vrot.slane %v3302, %v3308
    %v3311 = vadd.f32 %v3177, %v3309
    %s3312 = sld [smem:[#allocation6 + $0x195]]
    %v3313 = vstv %s3312
    %v3314 = vmul.f32 %v3313, %v3262
    %v3315 = vmul.f32 %v3313, %v3263
    %v3318 = vcombine.low %v3314, %v3315
    %v3320 = vunpack.c.l.s4 1983009808
    %v3321 = vunpack.c.0.s8 %v3320
    %v3322 = vlaneseq
    %v3323 = vshrl.u32 %v3322, 7
    %v3324 = vsub.s32 %v3321, %v3323
    %v3325 = vrot.slane %v3318, %v3324
    %v3327 = vadd.f32 %v3193, %v3325
    %s3328 = sld [smem:[#allocation6 + $0x215]]
    %v3329 = vstv %s3328
    %v3330 = vmul.f32 %v3329, %v3262
    %v3331 = vmul.f32 %v3329, %v3263
    %v3334 = vcombine.low %v3330, %v3331
    %v3336 = vunpack.c.l.s4 1983009808
    %v3337 = vunpack.c.0.s8 %v3336
    %v3338 = vlaneseq
    %v3339 = vshrl.u32 %v3338, 7
    %v3340 = vsub.s32 %v3337, %v3339
    %v3341 = vrot.slane %v3334, %v3340
    %v3343 = vadd.f32 %v3209, %v3341
    %s3344 = sld [smem:[#allocation6 + $0x295]]
    %v3345 = vstv %s3344
    %v3346 = vmul.f32 %v3345, %v3262
    %v3347 = vmul.f32 %v3345, %v3263
    %v3350 = vcombine.low %v3346, %v3347
    %v3352 = vunpack.c.l.s4 1983009808
    %v3353 = vunpack.c.0.s8 %v3352
    %v3354 = vlaneseq
    %v3355 = vshrl.u32 %v3354, 7
    %v3356 = vsub.s32 %v3353, %v3355
    %v3357 = vrot.slane %v3350, %v3356
    %v3359 = vadd.f32 %v3225, %v3357
    %s3360 = sld [smem:[#allocation6 + $0x315]]
    %v3361 = vstv %s3360
    %v3362 = vmul.f32 %v3361, %v3262
    %v3363 = vmul.f32 %v3361, %v3263
    %v3366 = vcombine.low %v3362, %v3363
    %v3368 = vunpack.c.l.s4 1983009808
    %v3369 = vunpack.c.0.s8 %v3368
    %v3370 = vlaneseq
    %v3371 = vshrl.u32 %v3370, 7
    %v3372 = vsub.s32 %v3369, %v3371
    %v3373 = vrot.slane %v3366, %v3372
    %v3375 = vadd.f32 %v3241, %v3373
    %s3376 = sld [smem:[#allocation6 + $0x395]]
    %v3377 = vstv %s3376
    %v3378 = vmul.f32 %v3377, %v3262
    %v3379 = vmul.f32 %v3377, %v3263
    %v3382 = vcombine.low %v3378, %v3379
    %v3384 = vunpack.c.l.s4 1983009808
    %v3385 = vunpack.c.0.s8 %v3384
    %v3386 = vlaneseq
    %v3387 = vshrl.u32 %v3386, 7
    %v3388 = vsub.s32 %v3385, %v3387
    %v3389 = vrot.slane %v3382, %v3388
    %v3391 = vadd.f32 %v3257, %v3389
    %3392 = vrot.lane.b32.xlu0 %v2986, 111
    %v3393 = vpop.permute.xlu0 %3392
    %3394 = vrot.lane.b32.xlu0 %v2987, 111
    %v3395 = vpop.permute.xlu0 %3394
    %v3396 = vsel %vm346, %v3393, %v3395
    %v3397 = vsel %vm346, %v3395, %v3393
    %s3398 = sld [smem:[#allocation6 + $0x16]]
    %v3399 = vstv %s3398
    %v3400 = vmul.f32 %v3399, %v3396
    %v3401 = vmul.f32 %v3399, %v3397
    %v3404 = vcombine.low %v3400, %v3401
    %v3406 = vunpack.c.l.s4 1983009808
    %v3407 = vunpack.c.0.s8 %v3406
    %v3408 = vlaneseq
    %v3409 = vshrl.u32 %v3408, 7
    %v3410 = vsub.s32 %v3407, %v3409
    %v3411 = vrot.slane %v3404, %v3410
    %v3413 = vadd.f32 %v3279, %v3411
    %s3414 = sld [smem:[#allocation6 + $0x96]]
    %v3415 = vstv %s3414
    %v3416 = vmul.f32 %v3415, %v3396
    %v3417 = vmul.f32 %v3415, %v3397
    %v3420 = vcombine.low %v3416, %v3417
    %v3422 = vunpack.c.l.s4 1983009808
    %v3423 = vunpack.c.0.s8 %v3422
    %v3424 = vlaneseq
    %v3425 = vshrl.u32 %v3424, 7
    %v3426 = vsub.s32 %v3423, %v3425
    %v3427 = vrot.slane %v3420, %v3426
    %v3429 = vadd.f32 %v3295, %v3427
    %s3430 = sld [smem:[#allocation6 + $0x116]]
    %v3431 = vstv %s3430
    %v3432 = vmul.f32 %v3431, %v3396
    %v3433 = vmul.f32 %v3431, %v3397
    %v3436 = vcombine.low %v3432, %v3433
    %v3438 = vunpack.c.l.s4 1983009808
    %v3439 = vunpack.c.0.s8 %v3438
    %v3440 = vlaneseq
    %v3441 = vshrl.u32 %v3440, 7
    %v3442 = vsub.s32 %v3439, %v3441
    %v3443 = vrot.slane %v3436, %v3442
    %v3445 = vadd.f32 %v3311, %v3443
    %s3446 = sld [smem:[#allocation6 + $0x196]]
    %v3447 = vstv %s3446
    %v3448 = vmul.f32 %v3447, %v3396
    %v3449 = vmul.f32 %v3447, %v3397
    %v3452 = vcombine.low %v3448, %v3449
    %v3454 = vunpack.c.l.s4 1983009808
    %v3455 = vunpack.c.0.s8 %v3454
    %v3456 = vlaneseq
    %v3457 = vshrl.u32 %v3456, 7
    %v3458 = vsub.s32 %v3455, %v3457
    %v3459 = vrot.slane %v3452, %v3458
    %v3461 = vadd.f32 %v3327, %v3459
    %s3462 = sld [smem:[#allocation6 + $0x216]]
    %v3463 = vstv %s3462
    %v3464 = vmul.f32 %v3463, %v3396
    %v3465 = vmul.f32 %v3463, %v3397
    %v3468 = vcombine.low %v3464, %v3465
    %v3470 = vunpack.c.l.s4 1983009808
    %v3471 = vunpack.c.0.s8 %v3470
    %v3472 = vlaneseq
    %v3473 = vshrl.u32 %v3472, 7
    %v3474 = vsub.s32 %v3471, %v3473
    %v3475 = vrot.slane %v3468, %v3474
    %v3477 = vadd.f32 %v3343, %v3475
    %s3478 = sld [smem:[#allocation6 + $0x296]]
    %v3479 = vstv %s3478
    %v3480 = vmul.f32 %v3479, %v3396
    %v3481 = vmul.f32 %v3479, %v3397
    %v3484 = vcombine.low %v3480, %v3481
    %v3486 = vunpack.c.l.s4 1983009808
    %v3487 = vunpack.c.0.s8 %v3486
    %v3488 = vlaneseq
    %v3489 = vshrl.u32 %v3488, 7
    %v3490 = vsub.s32 %v3487, %v3489
    %v3491 = vrot.slane %v3484, %v3490
    %v3493 = vadd.f32 %v3359, %v3491
    %s3494 = sld [smem:[#allocation6 + $0x316]]
    %v3495 = vstv %s3494
    %v3496 = vmul.f32 %v3495, %v3396
    %v3497 = vmul.f32 %v3495, %v3397
    %v3500 = vcombine.low %v3496, %v3497
    %v3502 = vunpack.c.l.s4 1983009808
    %v3503 = vunpack.c.0.s8 %v3502
    %v3504 = vlaneseq
    %v3505 = vshrl.u32 %v3504, 7
    %v3506 = vsub.s32 %v3503, %v3505
    %v3507 = vrot.slane %v3500, %v3506
    %v3509 = vadd.f32 %v3375, %v3507
    %s3510 = sld [smem:[#allocation6 + $0x396]]
    %v3511 = vstv %s3510
    %v3512 = vmul.f32 %v3511, %v3396
    %v3513 = vmul.f32 %v3511, %v3397
    %v3516 = vcombine.low %v3512, %v3513
    %v3518 = vunpack.c.l.s4 1983009808
    %v3519 = vunpack.c.0.s8 %v3518
    %v3520 = vlaneseq
    %v3521 = vshrl.u32 %v3520, 7
    %v3522 = vsub.s32 %v3519, %v3521
    %v3523 = vrot.slane %v3516, %v3522
    %v3525 = vadd.f32 %v3391, %v3523
    %3526 = vrot.lane.b32.xlu0 %v2986, 110
    %v3527 = vpop.permute.xlu0 %3526
    %3528 = vrot.lane.b32.xlu0 %v2987, 110
    %v3529 = vpop.permute.xlu0 %3528
    %v3530 = vsel %vm417, %v3527, %v3529
    %v3531 = vsel %vm417, %v3529, %v3527
    %s3532 = sld [smem:[#allocation6 + $0x17]]
    %v3533 = vstv %s3532
    %v3534 = vmul.f32 %v3533, %v3530
    %v3535 = vmul.f32 %v3533, %v3531
    %v3538 = vcombine.low %v3534, %v3535
    %v3540 = vunpack.c.l.s4 1983009808
    %v3541 = vunpack.c.0.s8 %v3540
    %v3542 = vlaneseq
    %v3543 = vshrl.u32 %v3542, 7
    %v3544 = vsub.s32 %v3541, %v3543
    %v3545 = vrot.slane %v3538, %v3544
    %v3547 = vadd.f32 %v3413, %v3545
    %s3548 = sld [smem:[#allocation6 + $0x97]]
    %v3549 = vstv %s3548
    %v3550 = vmul.f32 %v3549, %v3530
    %v3551 = vmul.f32 %v3549, %v3531
    %v3554 = vcombine.low %v3550, %v3551
    %v3556 = vunpack.c.l.s4 1983009808
    %v3557 = vunpack.c.0.s8 %v3556
    %v3558 = vlaneseq
    %v3559 = vshrl.u32 %v3558, 7
    %v3560 = vsub.s32 %v3557, %v3559
    %v3561 = vrot.slane %v3554, %v3560
    %v3563 = vadd.f32 %v3429, %v3561
    %s3564 = sld [smem:[#allocation6 + $0x117]]
    %v3565 = vstv %s3564
    %v3566 = vmul.f32 %v3565, %v3530
    %v3567 = vmul.f32 %v3565, %v3531
    %v3570 = vcombine.low %v3566, %v3567
    %v3572 = vunpack.c.l.s4 1983009808
    %v3573 = vunpack.c.0.s8 %v3572
    %v3574 = vlaneseq
    %v3575 = vshrl.u32 %v3574, 7
    %v3576 = vsub.s32 %v3573, %v3575
    %v3577 = vrot.slane %v3570, %v3576
    %v3579 = vadd.f32 %v3445, %v3577
    %s3580 = sld [smem:[#allocation6 + $0x197]]
    %v3581 = vstv %s3580
    %v3582 = vmul.f32 %v3581, %v3530
    %v3583 = vmul.f32 %v3581, %v3531
    %v3586 = vcombine.low %v3582, %v3583
    %v3588 = vunpack.c.l.s4 1983009808
    %v3589 = vunpack.c.0.s8 %v3588
    %v3590 = vlaneseq
    %v3591 = vshrl.u32 %v3590, 7
    %v3592 = vsub.s32 %v3589, %v3591
    %v3593 = vrot.slane %v3586, %v3592
    %v3595 = vadd.f32 %v3461, %v3593
    %s3596 = sld [smem:[#allocation6 + $0x217]]
    %v3597 = vstv %s3596
    %v3598 = vmul.f32 %v3597, %v3530
    %v3599 = vmul.f32 %v3597, %v3531
    %v3602 = vcombine.low %v3598, %v3599
    %v3604 = vunpack.c.l.s4 1983009808
    %v3605 = vunpack.c.0.s8 %v3604
    %v3606 = vlaneseq
    %v3607 = vshrl.u32 %v3606, 7
    %v3608 = vsub.s32 %v3605, %v3607
    %v3609 = vrot.slane %v3602, %v3608
    %v3611 = vadd.f32 %v3477, %v3609
    %s3612 = sld [smem:[#allocation6 + $0x297]]
    %v3613 = vstv %s3612
    %v3614 = vmul.f32 %v3613, %v3530
    %v3615 = vmul.f32 %v3613, %v3531
    %v3618 = vcombine.low %v3614, %v3615
    %v3620 = vunpack.c.l.s4 1983009808
    %v3621 = vunpack.c.0.s8 %v3620
    %v3622 = vlaneseq
    %v3623 = vshrl.u32 %v3622, 7
    %v3624 = vsub.s32 %v3621, %v3623
    %v3625 = vrot.slane %v3618, %v3624
    %v3627 = vadd.f32 %v3493, %v3625
    %s3628 = sld [smem:[#allocation6 + $0x317]]
    %v3629 = vstv %s3628
    %v3630 = vmul.f32 %v3629, %v3530
    %v3631 = vmul.f32 %v3629, %v3531
    %v3634 = vcombine.low %v3630, %v3631
    %v3636 = vunpack.c.l.s4 1983009808
    %v3637 = vunpack.c.0.s8 %v3636
    %v3638 = vlaneseq
    %v3639 = vshrl.u32 %v3638, 7
    %v3640 = vsub.s32 %v3637, %v3639
    %v3641 = vrot.slane %v3634, %v3640
    %v3643 = vadd.f32 %v3509, %v3641
    %s3644 = sld [smem:[#allocation6 + $0x397]]
    %v3645 = vstv %s3644
    %v3646 = vmul.f32 %v3645, %v3530
    %v3647 = vmul.f32 %v3645, %v3531
    %v3650 = vcombine.low %v3646, %v3647
    %v3652 = vunpack.c.l.s4 1983009808
    %v3653 = vunpack.c.0.s8 %v3652
    %v3654 = vlaneseq
    %v3655 = vshrl.u32 %v3654, 7
    %v3656 = vsub.s32 %v3653, %v3655
    %v3657 = vrot.slane %v3650, %v3656
    %v3659 = vadd.f32 %v3525, %v3657
    %3660 = vrot.lane.b32.xlu0 %v2986, 96
    %v3661 = vpop.permute.xlu0 %3660
    %3662 = vrot.lane.b32.xlu0 %v2987, 96
    %v3663 = vpop.permute.xlu0 %3662
    %v3664 = vsel %vm488, %v3661, %v3663
    %v3665 = vsel %vm488, %v3663, %v3661
    %s3666 = sld [smem:[#allocation6 + $0x18]]
    %v3667 = vstv %s3666
    %v3668 = vmul.f32 %v3667, %v3664
    %v3669 = vmul.f32 %v3667, %v3665
    %v3672 = vcombine.low %v3668, %v3669
    %v3674 = vunpack.c.l.s4 1983009808
    %v3675 = vunpack.c.0.s8 %v3674
    %v3676 = vlaneseq
    %v3677 = vshrl.u32 %v3676, 7
    %v3678 = vsub.s32 %v3675, %v3677
    %v3679 = vrot.slane %v3672, %v3678
    %v3681 = vadd.f32 %v3547, %v3679
    %s3682 = sld [smem:[#allocation6 + $0x98]]
    %v3683 = vstv %s3682
    %v3684 = vmul.f32 %v3683, %v3664
    %v3685 = vmul.f32 %v3683, %v3665
    %v3688 = vcombine.low %v3684, %v3685
    %v3690 = vunpack.c.l.s4 1983009808
    %v3691 = vunpack.c.0.s8 %v3690
    %v3692 = vlaneseq
    %v3693 = vshrl.u32 %v3692, 7
    %v3694 = vsub.s32 %v3691, %v3693
    %v3695 = vrot.slane %v3688, %v3694
    %v3697 = vadd.f32 %v3563, %v3695
    %s3698 = sld [smem:[#allocation6 + $0x118]]
    %v3699 = vstv %s3698
    %v3700 = vmul.f32 %v3699, %v3664
    %v3701 = vmul.f32 %v3699, %v3665
    %v3704 = vcombine.low %v3700, %v3701
    %v3706 = vunpack.c.l.s4 1983009808
    %v3707 = vunpack.c.0.s8 %v3706
    %v3708 = vlaneseq
    %v3709 = vshrl.u32 %v3708, 7
    %v3710 = vsub.s32 %v3707, %v3709
    %v3711 = vrot.slane %v3704, %v3710
    %v3713 = vadd.f32 %v3579, %v3711
    %s3714 = sld [smem:[#allocation6 + $0x198]]
    %v3715 = vstv %s3714
    %v3716 = vmul.f32 %v3715, %v3664
    %v3717 = vmul.f32 %v3715, %v3665
    %v3720 = vcombine.low %v3716, %v3717
    %v3722 = vunpack.c.l.s4 1983009808
    %v3723 = vunpack.c.0.s8 %v3722
    %v3724 = vlaneseq
    %v3725 = vshrl.u32 %v3724, 7
    %v3726 = vsub.s32 %v3723, %v3725
    %v3727 = vrot.slane %v3720, %v3726
    %v3729 = vadd.f32 %v3595, %v3727
    %s3730 = sld [smem:[#allocation6 + $0x218]]
    %v3731 = vstv %s3730
    %v3732 = vmul.f32 %v3731, %v3664
    %v3733 = vmul.f32 %v3731, %v3665
    %v3736 = vcombine.low %v3732, %v3733
    %v3738 = vunpack.c.l.s4 1983009808
    %v3739 = vunpack.c.0.s8 %v3738
    %v3740 = vlaneseq
    %v3741 = vshrl.u32 %v3740, 7
    %v3742 = vsub.s32 %v3739, %v3741
    %v3743 = vrot.slane %v3736, %v3742
    %v3745 = vadd.f32 %v3611, %v3743
    %s3746 = sld [smem:[#allocation6 + $0x298]]
    %v3747 = vstv %s3746
    %v3748 = vmul.f32 %v3747, %v3664
    %v3749 = vmul.f32 %v3747, %v3665
    %v3752 = vcombine.low %v3748, %v3749
    %v3754 = vunpack.c.l.s4 1983009808
    %v3755 = vunpack.c.0.s8 %v3754
    %v3756 = vlaneseq
    %v3757 = vshrl.u32 %v3756, 7
    %v3758 = vsub.s32 %v3755, %v3757
    %v3759 = vrot.slane %v3752, %v3758
    %v3761 = vadd.f32 %v3627, %v3759
    %s3762 = sld [smem:[#allocation6 + $0x318]]
    %v3763 = vstv %s3762
    %v3764 = vmul.f32 %v3763, %v3664
    %v3765 = vmul.f32 %v3763, %v3665
    %v3768 = vcombine.low %v3764, %v3765
    %v3770 = vunpack.c.l.s4 1983009808
    %v3771 = vunpack.c.0.s8 %v3770
    %v3772 = vlaneseq
    %v3773 = vshrl.u32 %v3772, 7
    %v3774 = vsub.s32 %v3771, %v3773
    %v3775 = vrot.slane %v3768, %v3774
    %v3777 = vadd.f32 %v3643, %v3775
    %s3778 = sld [smem:[#allocation6 + $0x398]]
    %v3779 = vstv %s3778
    %v3780 = vmul.f32 %v3779, %v3664
    %v3781 = vmul.f32 %v3779, %v3665
    %v3784 = vcombine.low %v3780, %v3781
    %v3786 = vunpack.c.l.s4 1983009808
    %v3787 = vunpack.c.0.s8 %v3786
    %v3788 = vlaneseq
    %v3789 = vshrl.u32 %v3788, 7
    %v3790 = vsub.s32 %v3787, %v3789
    %v3791 = vrot.slane %v3784, %v3790
    %v3793 = vadd.f32 %v3659, %v3791
    %3794 = vrot.lane.b32.xlu0 %v2986, 95
    %v3795 = vpop.permute.xlu0 %3794
    %3796 = vrot.lane.b32.xlu0 %v2987, 95
    %v3797 = vpop.permute.xlu0 %3796
    %v3798 = vsel %vm559, %v3795, %v3797
    %v3799 = vsel %vm559, %v3797, %v3795
    %s3800 = sld [smem:[#allocation6 + $0x19]]
    %v3801 = vstv %s3800
    %v3802 = vmul.f32 %v3801, %v3798
    %v3803 = vmul.f32 %v3801, %v3799
    %v3806 = vcombine.low %v3802, %v3803
    %v3808 = vunpack.c.l.s4 1983009808
    %v3809 = vunpack.c.0.s8 %v3808
    %v3810 = vlaneseq
    %v3811 = vshrl.u32 %v3810, 7
    %v3812 = vsub.s32 %v3809, %v3811
    %v3813 = vrot.slane %v3806, %v3812
    %v3815 = vadd.f32 %v3681, %v3813
    %s3816 = sld [smem:[#allocation6 + $0x99]]
    %v3817 = vstv %s3816
    %v3818 = vmul.f32 %v3817, %v3798
    %v3819 = vmul.f32 %v3817, %v3799
    %v3822 = vcombine.low %v3818, %v3819
    %v3824 = vunpack.c.l.s4 1983009808
    %v3825 = vunpack.c.0.s8 %v3824
    %v3826 = vlaneseq
    %v3827 = vshrl.u32 %v3826, 7
    %v3828 = vsub.s32 %v3825, %v3827
    %v3829 = vrot.slane %v3822, %v3828
    %v3831 = vadd.f32 %v3697, %v3829
    %s3832 = sld [smem:[#allocation6 + $0x119]]
    %v3833 = vstv %s3832
    %v3834 = vmul.f32 %v3833, %v3798
    %v3835 = vmul.f32 %v3833, %v3799
    %v3838 = vcombine.low %v3834, %v3835
    %v3840 = vunpack.c.l.s4 1983009808
    %v3841 = vunpack.c.0.s8 %v3840
    %v3842 = vlaneseq
    %v3843 = vshrl.u32 %v3842, 7
    %v3844 = vsub.s32 %v3841, %v3843
    %v3845 = vrot.slane %v3838, %v3844
    %v3847 = vadd.f32 %v3713, %v3845
    %s3848 = sld [smem:[#allocation6 + $0x199]]
    %v3849 = vstv %s3848
    %v3850 = vmul.f32 %v3849, %v3798
    %v3851 = vmul.f32 %v3849, %v3799
    %v3854 = vcombine.low %v3850, %v3851
    %v3856 = vunpack.c.l.s4 1983009808
    %v3857 = vunpack.c.0.s8 %v3856
    %v3858 = vlaneseq
    %v3859 = vshrl.u32 %v3858, 7
    %v3860 = vsub.s32 %v3857, %v3859
    %v3861 = vrot.slane %v3854, %v3860
    %v3863 = vadd.f32 %v3729, %v3861
    %s3864 = sld [smem:[#allocation6 + $0x219]]
    %v3865 = vstv %s3864
    %v3866 = vmul.f32 %v3865, %v3798
    %v3867 = vmul.f32 %v3865, %v3799
    %v3870 = vcombine.low %v3866, %v3867
    %v3872 = vunpack.c.l.s4 1983009808
    %v3873 = vunpack.c.0.s8 %v3872
    %v3874 = vlaneseq
    %v3875 = vshrl.u32 %v3874, 7
    %v3876 = vsub.s32 %v3873, %v3875
    %v3877 = vrot.slane %v3870, %v3876
    %v3879 = vadd.f32 %v3745, %v3877
    %s3880 = sld [smem:[#allocation6 + $0x299]]
    %v3881 = vstv %s3880
    %v3882 = vmul.f32 %v3881, %v3798
    %v3883 = vmul.f32 %v3881, %v3799
    %v3886 = vcombine.low %v3882, %v3883
    %v3888 = vunpack.c.l.s4 1983009808
    %v3889 = vunpack.c.0.s8 %v3888
    %v3890 = vlaneseq
    %v3891 = vshrl.u32 %v3890, 7
    %v3892 = vsub.s32 %v3889, %v3891
    %v3893 = vrot.slane %v3886, %v3892
    %v3895 = vadd.f32 %v3761, %v3893
    %s3896 = sld [smem:[#allocation6 + $0x319]]
    %v3897 = vstv %s3896
    %v3898 = vmul.f32 %v3897, %v3798
    %v3899 = vmul.f32 %v3897, %v3799
    %v3902 = vcombine.low %v3898, %v3899
    %v3904 = vunpack.c.l.s4 1983009808
    %v3905 = vunpack.c.0.s8 %v3904
    %v3906 = vlaneseq
    %v3907 = vshrl.u32 %v3906, 7
    %v3908 = vsub.s32 %v3905, %v3907
    %v3909 = vrot.slane %v3902, %v3908
    %v3911 = vadd.f32 %v3777, %v3909
    %s3912 = sld [smem:[#allocation6 + $0x399]]
    %v3913 = vstv %s3912
    %v3914 = vmul.f32 %v3913, %v3798
    %v3915 = vmul.f32 %v3913, %v3799
    %v3918 = vcombine.low %v3914, %v3915
    %v3920 = vunpack.c.l.s4 1983009808
    %v3921 = vunpack.c.0.s8 %v3920
    %v3922 = vlaneseq
    %v3923 = vshrl.u32 %v3922, 7
    %v3924 = vsub.s32 %v3921, %v3923
    %v3925 = vrot.slane %v3918, %v3924
    %v3927 = vadd.f32 %v3793, %v3925
    %3928 = vrot.lane.b32.xlu0 %v2986, 94
    %v3929 = vpop.permute.xlu0 %3928
    %3930 = vrot.lane.b32.xlu0 %v2987, 94
    %v3931 = vpop.permute.xlu0 %3930
    %v3932 = vsel %vm630, %v3929, %v3931
    %v3933 = vsel %vm630, %v3931, %v3929
    %s3934 = sld [smem:[#allocation6 + $0x1a]]
    %v3935 = vstv %s3934
    %v3936 = vmul.f32 %v3935, %v3932
    %v3937 = vmul.f32 %v3935, %v3933
    %v3940 = vcombine.low %v3936, %v3937
    %v3942 = vunpack.c.l.s4 1983009808
    %v3943 = vunpack.c.0.s8 %v3942
    %v3944 = vlaneseq
    %v3945 = vshrl.u32 %v3944, 7
    %v3946 = vsub.s32 %v3943, %v3945
    %v3947 = vrot.slane %v3940, %v3946
    %v3949 = vadd.f32 %v3815, %v3947
    %s3950 = sld [smem:[#allocation6 + $0x9a]]
    %v3951 = vstv %s3950
    %v3952 = vmul.f32 %v3951, %v3932
    %v3953 = vmul.f32 %v3951, %v3933
    %v3956 = vcombine.low %v3952, %v3953
    %v3958 = vunpack.c.l.s4 1983009808
    %v3959 = vunpack.c.0.s8 %v3958
    %v3960 = vlaneseq
    %v3961 = vshrl.u32 %v3960, 7
    %v3962 = vsub.s32 %v3959, %v3961
    %v3963 = vrot.slane %v3956, %v3962
    %v3965 = vadd.f32 %v3831, %v3963
    %s3966 = sld [smem:[#allocation6 + $0x11a]]
    %v3967 = vstv %s3966
    %v3968 = vmul.f32 %v3967, %v3932
    %v3969 = vmul.f32 %v3967, %v3933
    %v3972 = vcombine.low %v3968, %v3969
    %v3974 = vunpack.c.l.s4 1983009808
    %v3975 = vunpack.c.0.s8 %v3974
    %v3976 = vlaneseq
    %v3977 = vshrl.u32 %v3976, 7
    %v3978 = vsub.s32 %v3975, %v3977
    %v3979 = vrot.slane %v3972, %v3978
    %v3981 = vadd.f32 %v3847, %v3979
    %s3982 = sld [smem:[#allocation6 + $0x19a]]
    %v3983 = vstv %s3982
    %v3984 = vmul.f32 %v3983, %v3932
    %v3985 = vmul.f32 %v3983, %v3933
    %v3988 = vcombine.low %v3984, %v3985
    %v3990 = vunpack.c.l.s4 1983009808
    %v3991 = vunpack.c.0.s8 %v3990
    %v3992 = vlaneseq
    %v3993 = vshrl.u32 %v3992, 7
    %v3994 = vsub.s32 %v3991, %v3993
    %v3995 = vrot.slane %v3988, %v3994
    %v3997 = vadd.f32 %v3863, %v3995
    %s3998 = sld [smem:[#allocation6 + $0x21a]]
    %v3999 = vstv %s3998
    %v4000 = vmul.f32 %v3999, %v3932
    %v4001 = vmul.f32 %v3999, %v3933
    %v4004 = vcombine.low %v4000, %v4001
    %v4006 = vunpack.c.l.s4 1983009808
    %v4007 = vunpack.c.0.s8 %v4006
    %v4008 = vlaneseq
    %v4009 = vshrl.u32 %v4008, 7
    %v4010 = vsub.s32 %v4007, %v4009
    %v4011 = vrot.slane %v4004, %v4010
    %v4013 = vadd.f32 %v3879, %v4011
    %s4014 = sld [smem:[#allocation6 + $0x29a]]
    %v4015 = vstv %s4014
    %v4016 = vmul.f32 %v4015, %v3932
    %v4017 = vmul.f32 %v4015, %v3933
    %v4020 = vcombine.low %v4016, %v4017
    %v4022 = vunpack.c.l.s4 1983009808
    %v4023 = vunpack.c.0.s8 %v4022
    %v4024 = vlaneseq
    %v4025 = vshrl.u32 %v4024, 7
    %v4026 = vsub.s32 %v4023, %v4025
    %v4027 = vrot.slane %v4020, %v4026
    %v4029 = vadd.f32 %v3895, %v4027
    %s4030 = sld [smem:[#allocation6 + $0x31a]]
    %v4031 = vstv %s4030
    %v4032 = vmul.f32 %v4031, %v3932
    %v4033 = vmul.f32 %v4031, %v3933
    %v4036 = vcombine.low %v4032, %v4033
    %v4038 = vunpack.c.l.s4 1983009808
    %v4039 = vunpack.c.0.s8 %v4038
    %v4040 = vlaneseq
    %v4041 = vshrl.u32 %v4040, 7
    %v4042 = vsub.s32 %v4039, %v4041
    %v4043 = vrot.slane %v4036, %v4042
    %v4045 = vadd.f32 %v3911, %v4043
    %s4046 = sld [smem:[#allocation6 + $0x39a]]
    %v4047 = vstv %s4046
    %v4048 = vmul.f32 %v4047, %v3932
    %v4049 = vmul.f32 %v4047, %v3933
    %v4052 = vcombine.low %v4048, %v4049
    %v4054 = vunpack.c.l.s4 1983009808
    %v4055 = vunpack.c.0.s8 %v4054
    %v4056 = vlaneseq
    %v4057 = vshrl.u32 %v4056, 7
    %v4058 = vsub.s32 %v4055, %v4057
    %v4059 = vrot.slane %v4052, %v4058
    %v4061 = vadd.f32 %v3927, %v4059
    %s4062 = sld [smem:[#allocation6 + $0x1b]]
    %v4063 = vstv %s4062
    %v4064 = vmul.f32 %v4063, %v716
    %v4065 = vadd.f32 %v3949, %v4064
    %s4066 = sld [smem:[#allocation6 + $0x9b]]
    %v4067 = vstv %s4066
    %v4068 = vmul.f32 %v4067, %v716
    %v4069 = vadd.f32 %v3965, %v4068
    %s4070 = sld [smem:[#allocation6 + $0x11b]]
    %v4071 = vstv %s4070
    %v4072 = vmul.f32 %v4071, %v716
    %v4073 = vadd.f32 %v3981, %v4072
    %s4074 = sld [smem:[#allocation6 + $0x19b]]
    %v4075 = vstv %s4074
    %v4076 = vmul.f32 %v4075, %v716
    %v4077 = vadd.f32 %v3997, %v4076
    %s4078 = sld [smem:[#allocation6 + $0x21b]]
    %v4079 = vstv %s4078
    %v4080 = vmul.f32 %v4079, %v716
    %v4081 = vadd.f32 %v4013, %v4080
    %s4082 = sld [smem:[#allocation6 + $0x29b]]
    %v4083 = vstv %s4082
    %v4084 = vmul.f32 %v4083, %v716
    %v4085 = vadd.f32 %v4029, %v4084
    %s4086 = sld [smem:[#allocation6 + $0x31b]]
    %v4087 = vstv %s4086
    %v4088 = vmul.f32 %v4087, %v716
    %v4089 = vadd.f32 %v4045, %v4088
    %s4090 = sld [smem:[#allocation6 + $0x39b]]
    %v4091 = vstv %s4090
    %v4092 = vmul.f32 %v4091, %v716
    %v4093 = vadd.f32 %v4061, %v4092
    %v4096 = vunpack.c.l.s4 1983009808
    %v4097 = vunpack.c.0.s8 %v4096
    %v4098 = vlaneseq
    %v4099 = vshrl.u32 %v4098, 7
    %v4100 = vsub.s32 %v4097, %v4099
    %v4101 = vrot.slane %v716, %v4100
    %v4102 = vcombine.high %v4101, %v4101
    %4105 = vrot.lane.b32.xlu0 %v4101, 127
    %v4106 = vpop.permute.xlu0 %4105
    %4107 = vrot.lane.b32.xlu0 %v4102, 127
    %v4108 = vpop.permute.xlu0 %4107
    %v4109 = vsel %vm133, %v4106, %v4108
    %v4110 = vsel %vm133, %v4108, %v4106
    %s4111 = sld [smem:[#allocation6 + $0x1c]]
    %v4112 = vstv %s4111
    %v4113 = vmul.f32 %v4112, %v4109
    %v4114 = vmul.f32 %v4112, %v4110
    %v4117 = vcombine.low %v4113, %v4114
    %v4119 = vunpack.c.l.s4 1983009808
    %v4120 = vunpack.c.0.s8 %v4119
    %v4121 = vlaneseq
    %v4122 = vshrl.u32 %v4121, 7
    %v4123 = vsub.s32 %v4120, %v4122
    %v4124 = vrot.slane %v4117, %v4123
    %v4126 = vadd.f32 %v4065, %v4124
    %s4127 = sld [smem:[#allocation6 + $0x9c]]
    %v4128 = vstv %s4127
    %v4129 = vmul.f32 %v4128, %v4109
    %v4130 = vmul.f32 %v4128, %v4110
    %v4133 = vcombine.low %v4129, %v4130
    %v4135 = vunpack.c.l.s4 1983009808
    %v4136 = vunpack.c.0.s8 %v4135
    %v4137 = vlaneseq
    %v4138 = vshrl.u32 %v4137, 7
    %v4139 = vsub.s32 %v4136, %v4138
    %v4140 = vrot.slane %v4133, %v4139
    %v4142 = vadd.f32 %v4069, %v4140
    %s4143 = sld [smem:[#allocation6 + $0x11c]]
    %v4144 = vstv %s4143
    %v4145 = vmul.f32 %v4144, %v4109
    %v4146 = vmul.f32 %v4144, %v4110
    %v4149 = vcombine.low %v4145, %v4146
    %v4151 = vunpack.c.l.s4 1983009808
    %v4152 = vunpack.c.0.s8 %v4151
    %v4153 = vlaneseq
    %v4154 = vshrl.u32 %v4153, 7
    %v4155 = vsub.s32 %v4152, %v4154
    %v4156 = vrot.slane %v4149, %v4155
    %v4158 = vadd.f32 %v4073, %v4156
    %s4159 = sld [smem:[#allocation6 + $0x19c]]
    %v4160 = vstv %s4159
    %v4161 = vmul.f32 %v4160, %v4109
    %v4162 = vmul.f32 %v4160, %v4110
    %v4165 = vcombine.low %v4161, %v4162
    %v4167 = vunpack.c.l.s4 1983009808
    %v4168 = vunpack.c.0.s8 %v4167
    %v4169 = vlaneseq
    %v4170 = vshrl.u32 %v4169, 7
    %v4171 = vsub.s32 %v4168, %v4170
    %v4172 = vrot.slane %v4165, %v4171
    %v4174 = vadd.f32 %v4077, %v4172
    %s4175 = sld [smem:[#allocation6 + $0x21c]]
    %v4176 = vstv %s4175
    %v4177 = vmul.f32 %v4176, %v4109
    %v4178 = vmul.f32 %v4176, %v4110
    %v4181 = vcombine.low %v4177, %v4178
    %v4183 = vunpack.c.l.s4 1983009808
    %v4184 = vunpack.c.0.s8 %v4183
    %v4185 = vlaneseq
    %v4186 = vshrl.u32 %v4185, 7
    %v4187 = vsub.s32 %v4184, %v4186
    %v4188 = vrot.slane %v4181, %v4187
    %v4190 = vadd.f32 %v4081, %v4188
    %s4191 = sld [smem:[#allocation6 + $0x29c]]
    %v4192 = vstv %s4191
    %v4193 = vmul.f32 %v4192, %v4109
    %v4194 = vmul.f32 %v4192, %v4110
    %v4197 = vcombine.low %v4193, %v4194
    %v4199 = vunpack.c.l.s4 1983009808
    %v4200 = vunpack.c.0.s8 %v4199
    %v4201 = vlaneseq
    %v4202 = vshrl.u32 %v4201, 7
    %v4203 = vsub.s32 %v4200, %v4202
    %v4204 = vrot.slane %v4197, %v4203
    %v4206 = vadd.f32 %v4085, %v4204
    %s4207 = sld [smem:[#allocation6 + $0x31c]]
    %v4208 = vstv %s4207
    %v4209 = vmul.f32 %v4208, %v4109
    %v4210 = vmul.f32 %v4208, %v4110
    %v4213 = vcombine.low %v4209, %v4210
    %v4215 = vunpack.c.l.s4 1983009808
    %v4216 = vunpack.c.0.s8 %v4215
    %v4217 = vlaneseq
    %v4218 = vshrl.u32 %v4217, 7
    %v4219 = vsub.s32 %v4216, %v4218
    %v4220 = vrot.slane %v4213, %v4219
    %v4222 = vadd.f32 %v4089, %v4220
    %s4223 = sld [smem:[#allocation6 + $0x39c]]
    %v4224 = vstv %s4223
    %v4225 = vmul.f32 %v4224, %v4109
    %v4226 = vmul.f32 %v4224, %v4110
    %v4229 = vcombine.low %v4225, %v4226
    %v4231 = vunpack.c.l.s4 1983009808
    %v4232 = vunpack.c.0.s8 %v4231
    %v4233 = vlaneseq
    %v4234 = vshrl.u32 %v4233, 7
    %v4235 = vsub.s32 %v4232, %v4234
    %v4236 = vrot.slane %v4229, %v4235
    %v4238 = vadd.f32 %v4093, %v4236
    %4239 = vrot.lane.b32.xlu0 %v4101, 126
    %v4240 = vpop.permute.xlu0 %4239
    %4241 = vrot.lane.b32.xlu0 %v4102, 126
    %v4242 = vpop.permute.xlu0 %4241
    %v4243 = vsel %vm204, %v4240, %v4242
    %v4244 = vsel %vm204, %v4242, %v4240
    %s4245 = sld [smem:[#allocation6 + $0x1d]]
    %v4246 = vstv %s4245
    %v4247 = vmul.f32 %v4246, %v4243
    %v4248 = vmul.f32 %v4246, %v4244
    %v4251 = vcombine.low %v4247, %v4248
    %v4253 = vunpack.c.l.s4 1983009808
    %v4254 = vunpack.c.0.s8 %v4253
    %v4255 = vlaneseq
    %v4256 = vshrl.u32 %v4255, 7
    %v4257 = vsub.s32 %v4254, %v4256
    %v4258 = vrot.slane %v4251, %v4257
    %v4260 = vadd.f32 %v4126, %v4258
    %s4261 = sld [smem:[#allocation6 + $0x9d]]
    %v4262 = vstv %s4261
    %v4263 = vmul.f32 %v4262, %v4243
    %v4264 = vmul.f32 %v4262, %v4244
    %v4267 = vcombine.low %v4263, %v4264
    %v4269 = vunpack.c.l.s4 1983009808
    %v4270 = vunpack.c.0.s8 %v4269
    %v4271 = vlaneseq
    %v4272 = vshrl.u32 %v4271, 7
    %v4273 = vsub.s32 %v4270, %v4272
    %v4274 = vrot.slane %v4267, %v4273
    %v4276 = vadd.f32 %v4142, %v4274
    %s4277 = sld [smem:[#allocation6 + $0x11d]]
    %v4278 = vstv %s4277
    %v4279 = vmul.f32 %v4278, %v4243
    %v4280 = vmul.f32 %v4278, %v4244
    %v4283 = vcombine.low %v4279, %v4280
    %v4285 = vunpack.c.l.s4 1983009808
    %v4286 = vunpack.c.0.s8 %v4285
    %v4287 = vlaneseq
    %v4288 = vshrl.u32 %v4287, 7
    %v4289 = vsub.s32 %v4286, %v4288
    %v4290 = vrot.slane %v4283, %v4289
    %v4292 = vadd.f32 %v4158, %v4290
    %s4293 = sld [smem:[#allocation6 + $0x19d]]
    %v4294 = vstv %s4293
    %v4295 = vmul.f32 %v4294, %v4243
    %v4296 = vmul.f32 %v4294, %v4244
    %v4299 = vcombine.low %v4295, %v4296
    %v4301 = vunpack.c.l.s4 1983009808
    %v4302 = vunpack.c.0.s8 %v4301
    %v4303 = vlaneseq
    %v4304 = vshrl.u32 %v4303, 7
    %v4305 = vsub.s32 %v4302, %v4304
    %v4306 = vrot.slane %v4299, %v4305
    %v4308 = vadd.f32 %v4174, %v4306
    %s4309 = sld [smem:[#allocation6 + $0x21d]]
    %v4310 = vstv %s4309
    %v4311 = vmul.f32 %v4310, %v4243
    %v4312 = vmul.f32 %v4310, %v4244
    %v4315 = vcombine.low %v4311, %v4312
    %v4317 = vunpack.c.l.s4 1983009808
    %v4318 = vunpack.c.0.s8 %v4317
    %v4319 = vlaneseq
    %v4320 = vshrl.u32 %v4319, 7
    %v4321 = vsub.s32 %v4318, %v4320
    %v4322 = vrot.slane %v4315, %v4321
    %v4324 = vadd.f32 %v4190, %v4322
    %s4325 = sld [smem:[#allocation6 + $0x29d]]
    %v4326 = vstv %s4325
    %v4327 = vmul.f32 %v4326, %v4243
    %v4328 = vmul.f32 %v4326, %v4244
    %v4331 = vcombine.low %v4327, %v4328
    %v4333 = vunpack.c.l.s4 1983009808
    %v4334 = vunpack.c.0.s8 %v4333
    %v4335 = vlaneseq
    %v4336 = vshrl.u32 %v4335, 7
    %v4337 = vsub.s32 %v4334, %v4336
    %v4338 = vrot.slane %v4331, %v4337
    %v4340 = vadd.f32 %v4206, %v4338
    %s4341 = sld [smem:[#allocation6 + $0x31d]]
    %v4342 = vstv %s4341
    %v4343 = vmul.f32 %v4342, %v4243
    %v4344 = vmul.f32 %v4342, %v4244
    %v4347 = vcombine.low %v4343, %v4344
    %v4349 = vunpack.c.l.s4 1983009808
    %v4350 = vunpack.c.0.s8 %v4349
    %v4351 = vlaneseq
    %v4352 = vshrl.u32 %v4351, 7
    %v4353 = vsub.s32 %v4350, %v4352
    %v4354 = vrot.slane %v4347, %v4353
    %v4356 = vadd.f32 %v4222, %v4354
    %s4357 = sld [smem:[#allocation6 + $0x39d]]
    %v4358 = vstv %s4357
    %v4359 = vmul.f32 %v4358, %v4243
    %v4360 = vmul.f32 %v4358, %v4244
    %v4363 = vcombine.low %v4359, %v4360
    %v4365 = vunpack.c.l.s4 1983009808
    %v4366 = vunpack.c.0.s8 %v4365
    %v4367 = vlaneseq
    %v4368 = vshrl.u32 %v4367, 7
    %v4369 = vsub.s32 %v4366, %v4368
    %v4370 = vrot.slane %v4363, %v4369
    %v4372 = vadd.f32 %v4238, %v4370
    %4373 = vrot.lane.b32.xlu0 %v4101, 112
    %v4374 = vpop.permute.xlu0 %4373
    %4375 = vrot.lane.b32.xlu0 %v4102, 112
    %v4376 = vpop.permute.xlu0 %4375
    %v4377 = vsel %vm275, %v4374, %v4376
    %v4378 = vsel %vm275, %v4376, %v4374
    %s4379 = sld [smem:[#allocation6 + $0x1e]]
    %v4380 = vstv %s4379
    %v4381 = vmul.f32 %v4380, %v4377
    %v4382 = vmul.f32 %v4380, %v4378
    %v4385 = vcombine.low %v4381, %v4382
    %v4387 = vunpack.c.l.s4 1983009808
    %v4388 = vunpack.c.0.s8 %v4387
    %v4389 = vlaneseq
    %v4390 = vshrl.u32 %v4389, 7
    %v4391 = vsub.s32 %v4388, %v4390
    %v4392 = vrot.slane %v4385, %v4391
    %v4394 = vadd.f32 %v4260, %v4392
    %s4395 = sld [smem:[#allocation6 + $0x9e]]
    %v4396 = vstv %s4395
    %v4397 = vmul.f32 %v4396, %v4377
    %v4398 = vmul.f32 %v4396, %v4378
    %v4401 = vcombine.low %v4397, %v4398
    %v4403 = vunpack.c.l.s4 1983009808
    %v4404 = vunpack.c.0.s8 %v4403
    %v4405 = vlaneseq
    %v4406 = vshrl.u32 %v4405, 7
    %v4407 = vsub.s32 %v4404, %v4406
    %v4408 = vrot.slane %v4401, %v4407
    %v4410 = vadd.f32 %v4276, %v4408
    %s4411 = sld [smem:[#allocation6 + $0x11e]]
    %v4412 = vstv %s4411
    %v4413 = vmul.f32 %v4412, %v4377
    %v4414 = vmul.f32 %v4412, %v4378
    %v4417 = vcombine.low %v4413, %v4414
    %v4419 = vunpack.c.l.s4 1983009808
    %v4420 = vunpack.c.0.s8 %v4419
    %v4421 = vlaneseq
    %v4422 = vshrl.u32 %v4421, 7
    %v4423 = vsub.s32 %v4420, %v4422
    %v4424 = vrot.slane %v4417, %v4423
    %v4426 = vadd.f32 %v4292, %v4424
    %s4427 = sld [smem:[#allocation6 + $0x19e]]
    %v4428 = vstv %s4427
    %v4429 = vmul.f32 %v4428, %v4377
    %v4430 = vmul.f32 %v4428, %v4378
    %v4433 = vcombine.low %v4429, %v4430
    %v4435 = vunpack.c.l.s4 1983009808
    %v4436 = vunpack.c.0.s8 %v4435
    %v4437 = vlaneseq
    %v4438 = vshrl.u32 %v4437, 7
    %v4439 = vsub.s32 %v4436, %v4438
    %v4440 = vrot.slane %v4433, %v4439
    %v4442 = vadd.f32 %v4308, %v4440
    %s4443 = sld [smem:[#allocation6 + $0x21e]]
    %v4444 = vstv %s4443
    %v4445 = vmul.f32 %v4444, %v4377
    %v4446 = vmul.f32 %v4444, %v4378
    %v4449 = vcombine.low %v4445, %v4446
    %v4451 = vunpack.c.l.s4 1983009808
    %v4452 = vunpack.c.0.s8 %v4451
    %v4453 = vlaneseq
    %v4454 = vshrl.u32 %v4453, 7
    %v4455 = vsub.s32 %v4452, %v4454
    %v4456 = vrot.slane %v4449, %v4455
    %v4458 = vadd.f32 %v4324, %v4456
    %s4459 = sld [smem:[#allocation6 + $0x29e]]
    %v4460 = vstv %s4459
    %v4461 = vmul.f32 %v4460, %v4377
    %v4462 = vmul.f32 %v4460, %v4378
    %v4465 = vcombine.low %v4461, %v4462
    %v4467 = vunpack.c.l.s4 1983009808
    %v4468 = vunpack.c.0.s8 %v4467
    %v4469 = vlaneseq
    %v4470 = vshrl.u32 %v4469, 7
    %v4471 = vsub.s32 %v4468, %v4470
    %v4472 = vrot.slane %v4465, %v4471
    %v4474 = vadd.f32 %v4340, %v4472
    %s4475 = sld [smem:[#allocation6 + $0x31e]]
    %v4476 = vstv %s4475
    %v4477 = vmul.f32 %v4476, %v4377
    %v4478 = vmul.f32 %v4476, %v4378
    %v4481 = vcombine.low %v4477, %v4478
    %v4483 = vunpack.c.l.s4 1983009808
    %v4484 = vunpack.c.0.s8 %v4483
    %v4485 = vlaneseq
    %v4486 = vshrl.u32 %v4485, 7
    %v4487 = vsub.s32 %v4484, %v4486
    %v4488 = vrot.slane %v4481, %v4487
    %v4490 = vadd.f32 %v4356, %v4488
    %s4491 = sld [smem:[#allocation6 + $0x39e]]
    %v4492 = vstv %s4491
    %v4493 = vmul.f32 %v4492, %v4377
    %v4494 = vmul.f32 %v4492, %v4378
    %v4497 = vcombine.low %v4493, %v4494
    %v4499 = vunpack.c.l.s4 1983009808
    %v4500 = vunpack.c.0.s8 %v4499
    %v4501 = vlaneseq
    %v4502 = vshrl.u32 %v4501, 7
    %v4503 = vsub.s32 %v4500, %v4502
    %v4504 = vrot.slane %v4497, %v4503
    %v4506 = vadd.f32 %v4372, %v4504
    %4507 = vrot.lane.b32.xlu0 %v4101, 111
    %v4508 = vpop.permute.xlu0 %4507
    %4509 = vrot.lane.b32.xlu0 %v4102, 111
    %v4510 = vpop.permute.xlu0 %4509
    %v4511 = vsel %vm346, %v4508, %v4510
    %v4512 = vsel %vm346, %v4510, %v4508
    %s4513 = sld [smem:[#allocation6 + $0x1f]]
    %v4514 = vstv %s4513
    %v4515 = vmul.f32 %v4514, %v4511
    %v4516 = vmul.f32 %v4514, %v4512
    %v4519 = vcombine.low %v4515, %v4516
    %v4521 = vunpack.c.l.s4 1983009808
    %v4522 = vunpack.c.0.s8 %v4521
    %v4523 = vlaneseq
    %v4524 = vshrl.u32 %v4523, 7
    %v4525 = vsub.s32 %v4522, %v4524
    %v4526 = vrot.slane %v4519, %v4525
    %v4528 = vadd.f32 %v4394, %v4526
    %s4529 = sld [smem:[#allocation6 + $0x9f]]
    %v4530 = vstv %s4529
    %v4531 = vmul.f32 %v4530, %v4511
    %v4532 = vmul.f32 %v4530, %v4512
    %v4535 = vcombine.low %v4531, %v4532
    %v4537 = vunpack.c.l.s4 1983009808
    %v4538 = vunpack.c.0.s8 %v4537
    %v4539 = vlaneseq
    %v4540 = vshrl.u32 %v4539, 7
    %v4541 = vsub.s32 %v4538, %v4540
    %v4542 = vrot.slane %v4535, %v4541
    %v4544 = vadd.f32 %v4410, %v4542
    %s4545 = sld [smem:[#allocation6 + $0x11f]]
    %v4546 = vstv %s4545
    %v4547 = vmul.f32 %v4546, %v4511
    %v4548 = vmul.f32 %v4546, %v4512
    %v4551 = vcombine.low %v4547, %v4548
    %v4553 = vunpack.c.l.s4 1983009808
    %v4554 = vunpack.c.0.s8 %v4553
    %v4555 = vlaneseq
    %v4556 = vshrl.u32 %v4555, 7
    %v4557 = vsub.s32 %v4554, %v4556
    %v4558 = vrot.slane %v4551, %v4557
    %v4560 = vadd.f32 %v4426, %v4558
    %s4561 = sld [smem:[#allocation6 + $0x19f]]
    %v4562 = vstv %s4561
    %v4563 = vmul.f32 %v4562, %v4511
    %v4564 = vmul.f32 %v4562, %v4512
    %v4567 = vcombine.low %v4563, %v4564
    %v4569 = vunpack.c.l.s4 1983009808
    %v4570 = vunpack.c.0.s8 %v4569
    %v4571 = vlaneseq
    %v4572 = vshrl.u32 %v4571, 7
    %v4573 = vsub.s32 %v4570, %v4572
    %v4574 = vrot.slane %v4567, %v4573
    %v4576 = vadd.f32 %v4442, %v4574
    %s4577 = sld [smem:[#allocation6 + $0x21f]]
    %v4578 = vstv %s4577
    %v4579 = vmul.f32 %v4578, %v4511
    %v4580 = vmul.f32 %v4578, %v4512
    %v4583 = vcombine.low %v4579, %v4580
    %v4585 = vunpack.c.l.s4 1983009808
    %v4586 = vunpack.c.0.s8 %v4585
    %v4587 = vlaneseq
    %v4588 = vshrl.u32 %v4587, 7
    %v4589 = vsub.s32 %v4586, %v4588
    %v4590 = vrot.slane %v4583, %v4589
    %v4592 = vadd.f32 %v4458, %v4590
    %s4593 = sld [smem:[#allocation6 + $0x29f]]
    %v4594 = vstv %s4593
    %v4595 = vmul.f32 %v4594, %v4511
    %v4596 = vmul.f32 %v4594, %v4512
    %v4599 = vcombine.low %v4595, %v4596
    %v4601 = vunpack.c.l.s4 1983009808
    %v4602 = vunpack.c.0.s8 %v4601
    %v4603 = vlaneseq
    %v4604 = vshrl.u32 %v4603, 7
    %v4605 = vsub.s32 %v4602, %v4604
    %v4606 = vrot.slane %v4599, %v4605
    %v4608 = vadd.f32 %v4474, %v4606
    %s4609 = sld [smem:[#allocation6 + $0x31f]]
    %v4610 = vstv %s4609
    %v4611 = vmul.f32 %v4610, %v4511
    %v4612 = vmul.f32 %v4610, %v4512
    %v4615 = vcombine.low %v4611, %v4612
    %v4617 = vunpack.c.l.s4 1983009808
    %v4618 = vunpack.c.0.s8 %v4617
    %v4619 = vlaneseq
    %v4620 = vshrl.u32 %v4619, 7
    %v4621 = vsub.s32 %v4618, %v4620
    %v4622 = vrot.slane %v4615, %v4621
    %v4624 = vadd.f32 %v4490, %v4622
    %s4625 = sld [smem:[#allocation6 + $0x39f]]
    %v4626 = vstv %s4625
    %v4627 = vmul.f32 %v4626, %v4511
    %v4628 = vmul.f32 %v4626, %v4512
    %v4631 = vcombine.low %v4627, %v4628
    %v4633 = vunpack.c.l.s4 1983009808
    %v4634 = vunpack.c.0.s8 %v4633
    %v4635 = vlaneseq
    %v4636 = vshrl.u32 %v4635, 7
    %v4637 = vsub.s32 %v4634, %v4636
    %v4638 = vrot.slane %v4631, %v4637
    %v4640 = vadd.f32 %v4506, %v4638
    %4641 = vrot.lane.b32.xlu0 %v4101, 110
    %v4642 = vpop.permute.xlu0 %4641
    %4643 = vrot.lane.b32.xlu0 %v4102, 110
    %v4644 = vpop.permute.xlu0 %4643
    %v4645 = vsel %vm417, %v4642, %v4644
    %v4646 = vsel %vm417, %v4644, %v4642
    %s4647 = sld [smem:[#allocation6 + $0x20]]
    %v4648 = vstv %s4647
    %v4649 = vmul.f32 %v4648, %v4645
    %v4650 = vmul.f32 %v4648, %v4646
    %v4653 = vcombine.low %v4649, %v4650
    %v4655 = vunpack.c.l.s4 1983009808
    %v4656 = vunpack.c.0.s8 %v4655
    %v4657 = vlaneseq
    %v4658 = vshrl.u32 %v4657, 7
    %v4659 = vsub.s32 %v4656, %v4658
    %v4660 = vrot.slane %v4653, %v4659
    %v4662 = vadd.f32 %v4528, %v4660
    %s4663 = sld [smem:[#allocation6 + $0xa0]]
    %v4664 = vstv %s4663
    %v4665 = vmul.f32 %v4664, %v4645
    %v4666 = vmul.f32 %v4664, %v4646
    %v4669 = vcombine.low %v4665, %v4666
    %v4671 = vunpack.c.l.s4 1983009808
    %v4672 = vunpack.c.0.s8 %v4671
    %v4673 = vlaneseq
    %v4674 = vshrl.u32 %v4673, 7
    %v4675 = vsub.s32 %v4672, %v4674
    %v4676 = vrot.slane %v4669, %v4675
    %v4678 = vadd.f32 %v4544, %v4676
    %s4679 = sld [smem:[#allocation6 + $0x120]]
    %v4680 = vstv %s4679
    %v4681 = vmul.f32 %v4680, %v4645
    %v4682 = vmul.f32 %v4680, %v4646
    %v4685 = vcombine.low %v4681, %v4682
    %v4687 = vunpack.c.l.s4 1983009808
    %v4688 = vunpack.c.0.s8 %v4687
    %v4689 = vlaneseq
    %v4690 = vshrl.u32 %v4689, 7
    %v4691 = vsub.s32 %v4688, %v4690
    %v4692 = vrot.slane %v4685, %v4691
    %v4694 = vadd.f32 %v4560, %v4692
    %s4695 = sld [smem:[#allocation6 + $0x1a0]]
    %v4696 = vstv %s4695
    %v4697 = vmul.f32 %v4696, %v4645
    %v4698 = vmul.f32 %v4696, %v4646
    %v4701 = vcombine.low %v4697, %v4698
    %v4703 = vunpack.c.l.s4 1983009808
    %v4704 = vunpack.c.0.s8 %v4703
    %v4705 = vlaneseq
    %v4706 = vshrl.u32 %v4705, 7
    %v4707 = vsub.s32 %v4704, %v4706
    %v4708 = vrot.slane %v4701, %v4707
    %v4710 = vadd.f32 %v4576, %v4708
    %s4711 = sld [smem:[#allocation6 + $0x220]]
    %v4712 = vstv %s4711
    %v4713 = vmul.f32 %v4712, %v4645
    %v4714 = vmul.f32 %v4712, %v4646
    %v4717 = vcombine.low %v4713, %v4714
    %v4719 = vunpack.c.l.s4 1983009808
    %v4720 = vunpack.c.0.s8 %v4719
    %v4721 = vlaneseq
    %v4722 = vshrl.u32 %v4721, 7
    %v4723 = vsub.s32 %v4720, %v4722
    %v4724 = vrot.slane %v4717, %v4723
    %v4726 = vadd.f32 %v4592, %v4724
    %s4727 = sld [smem:[#allocation6 + $0x2a0]]
    %v4728 = vstv %s4727
    %v4729 = vmul.f32 %v4728, %v4645
    %v4730 = vmul.f32 %v4728, %v4646
    %v4733 = vcombine.low %v4729, %v4730
    %v4735 = vunpack.c.l.s4 1983009808
    %v4736 = vunpack.c.0.s8 %v4735
    %v4737 = vlaneseq
    %v4738 = vshrl.u32 %v4737, 7
    %v4739 = vsub.s32 %v4736, %v4738
    %v4740 = vrot.slane %v4733, %v4739
    %v4742 = vadd.f32 %v4608, %v4740
    %s4743 = sld [smem:[#allocation6 + $0x320]]
    %v4744 = vstv %s4743
    %v4745 = vmul.f32 %v4744, %v4645
    %v4746 = vmul.f32 %v4744, %v4646
    %v4749 = vcombine.low %v4745, %v4746
    %v4751 = vunpack.c.l.s4 1983009808
    %v4752 = vunpack.c.0.s8 %v4751
    %v4753 = vlaneseq
    %v4754 = vshrl.u32 %v4753, 7
    %v4755 = vsub.s32 %v4752, %v4754
    %v4756 = vrot.slane %v4749, %v4755
    %v4758 = vadd.f32 %v4624, %v4756
    %s4759 = sld [smem:[#allocation6 + $0x3a0]]
    %v4760 = vstv %s4759
    %v4761 = vmul.f32 %v4760, %v4645
    %v4762 = vmul.f32 %v4760, %v4646
    %v4765 = vcombine.low %v4761, %v4762
    %v4767 = vunpack.c.l.s4 1983009808
    %v4768 = vunpack.c.0.s8 %v4767
    %v4769 = vlaneseq
    %v4770 = vshrl.u32 %v4769, 7
    %v4771 = vsub.s32 %v4768, %v4770
    %v4772 = vrot.slane %v4765, %v4771
    %v4774 = vadd.f32 %v4640, %v4772
    %4775 = vrot.lane.b32.xlu0 %v4101, 96
    %v4776 = vpop.permute.xlu0 %4775
    %4777 = vrot.lane.b32.xlu0 %v4102, 96
    %v4778 = vpop.permute.xlu0 %4777
    %v4779 = vsel %vm488, %v4776, %v4778
    %v4780 = vsel %vm488, %v4778, %v4776
    %s4781 = sld [smem:[#allocation6 + $0x21]]
    %v4782 = vstv %s4781
    %v4783 = vmul.f32 %v4782, %v4779
    %v4784 = vmul.f32 %v4782, %v4780
    %v4787 = vcombine.low %v4783, %v4784
    %v4789 = vunpack.c.l.s4 1983009808
    %v4790 = vunpack.c.0.s8 %v4789
    %v4791 = vlaneseq
    %v4792 = vshrl.u32 %v4791, 7
    %v4793 = vsub.s32 %v4790, %v4792
    %v4794 = vrot.slane %v4787, %v4793
    %v4796 = vadd.f32 %v4662, %v4794
    %s4797 = sld [smem:[#allocation6 + $0xa1]]
    %v4798 = vstv %s4797
    %v4799 = vmul.f32 %v4798, %v4779
    %v4800 = vmul.f32 %v4798, %v4780
    %v4803 = vcombine.low %v4799, %v4800
    %v4805 = vunpack.c.l.s4 1983009808
    %v4806 = vunpack.c.0.s8 %v4805
    %v4807 = vlaneseq
    %v4808 = vshrl.u32 %v4807, 7
    %v4809 = vsub.s32 %v4806, %v4808
    %v4810 = vrot.slane %v4803, %v4809
    %v4812 = vadd.f32 %v4678, %v4810
    %s4813 = sld [smem:[#allocation6 + $0x121]]
    %v4814 = vstv %s4813
    %v4815 = vmul.f32 %v4814, %v4779
    %v4816 = vmul.f32 %v4814, %v4780
    %v4819 = vcombine.low %v4815, %v4816
    %v4821 = vunpack.c.l.s4 1983009808
    %v4822 = vunpack.c.0.s8 %v4821
    %v4823 = vlaneseq
    %v4824 = vshrl.u32 %v4823, 7
    %v4825 = vsub.s32 %v4822, %v4824
    %v4826 = vrot.slane %v4819, %v4825
    %v4828 = vadd.f32 %v4694, %v4826
    %s4829 = sld [smem:[#allocation6 + $0x1a1]]
    %v4830 = vstv %s4829
    %v4831 = vmul.f32 %v4830, %v4779
    %v4832 = vmul.f32 %v4830, %v4780
    %v4835 = vcombine.low %v4831, %v4832
    %v4837 = vunpack.c.l.s4 1983009808
    %v4838 = vunpack.c.0.s8 %v4837
    %v4839 = vlaneseq
    %v4840 = vshrl.u32 %v4839, 7
    %v4841 = vsub.s32 %v4838, %v4840
    %v4842 = vrot.slane %v4835, %v4841
    %v4844 = vadd.f32 %v4710, %v4842
    %s4845 = sld [smem:[#allocation6 + $0x221]]
    %v4846 = vstv %s4845
    %v4847 = vmul.f32 %v4846, %v4779
    %v4848 = vmul.f32 %v4846, %v4780
    %v4851 = vcombine.low %v4847, %v4848
    %v4853 = vunpack.c.l.s4 1983009808
    %v4854 = vunpack.c.0.s8 %v4853
    %v4855 = vlaneseq
    %v4856 = vshrl.u32 %v4855, 7
    %v4857 = vsub.s32 %v4854, %v4856
    %v4858 = vrot.slane %v4851, %v4857
    %v4860 = vadd.f32 %v4726, %v4858
    %s4861 = sld [smem:[#allocation6 + $0x2a1]]
    %v4862 = vstv %s4861
    %v4863 = vmul.f32 %v4862, %v4779
    %v4864 = vmul.f32 %v4862, %v4780
    %v4867 = vcombine.low %v4863, %v4864
    %v4869 = vunpack.c.l.s4 1983009808
    %v4870 = vunpack.c.0.s8 %v4869
    %v4871 = vlaneseq
    %v4872 = vshrl.u32 %v4871, 7
    %v4873 = vsub.s32 %v4870, %v4872
    %v4874 = vrot.slane %v4867, %v4873
    %v4876 = vadd.f32 %v4742, %v4874
    %s4877 = sld [smem:[#allocation6 + $0x321]]
    %v4878 = vstv %s4877
    %v4879 = vmul.f32 %v4878, %v4779
    %v4880 = vmul.f32 %v4878, %v4780
    %v4883 = vcombine.low %v4879, %v4880
    %v4885 = vunpack.c.l.s4 1983009808
    %v4886 = vunpack.c.0.s8 %v4885
    %v4887 = vlaneseq
    %v4888 = vshrl.u32 %v4887, 7
    %v4889 = vsub.s32 %v4886, %v4888
    %v4890 = vrot.slane %v4883, %v4889
    %v4892 = vadd.f32 %v4758, %v4890
    %s4893 = sld [smem:[#allocation6 + $0x3a1]]
    %v4894 = vstv %s4893
    %v4895 = vmul.f32 %v4894, %v4779
    %v4896 = vmul.f32 %v4894, %v4780
    %v4899 = vcombine.low %v4895, %v4896
    %v4901 = vunpack.c.l.s4 1983009808
    %v4902 = vunpack.c.0.s8 %v4901
    %v4903 = vlaneseq
    %v4904 = vshrl.u32 %v4903, 7
    %v4905 = vsub.s32 %v4902, %v4904
    %v4906 = vrot.slane %v4899, %v4905
    %v4908 = vadd.f32 %v4774, %v4906
    %4909 = vrot.lane.b32.xlu0 %v4101, 95
    %v4910 = vpop.permute.xlu0 %4909
    %4911 = vrot.lane.b32.xlu0 %v4102, 95
    %v4912 = vpop.permute.xlu0 %4911
    %v4913 = vsel %vm559, %v4910, %v4912
    %v4914 = vsel %vm559, %v4912, %v4910
    %s4915 = sld [smem:[#allocation6 + $0x22]]
    %v4916 = vstv %s4915
    %v4917 = vmul.f32 %v4916, %v4913
    %v4918 = vmul.f32 %v4916, %v4914
    %v4921 = vcombine.low %v4917, %v4918
    %v4923 = vunpack.c.l.s4 1983009808
    %v4924 = vunpack.c.0.s8 %v4923
    %v4925 = vlaneseq
    %v4926 = vshrl.u32 %v4925, 7
    %v4927 = vsub.s32 %v4924, %v4926
    %v4928 = vrot.slane %v4921, %v4927
    %v4930 = vadd.f32 %v4796, %v4928
    %s4931 = sld [smem:[#allocation6 + $0xa2]]
    %v4932 = vstv %s4931
    %v4933 = vmul.f32 %v4932, %v4913
    %v4934 = vmul.f32 %v4932, %v4914
    %v4937 = vcombine.low %v4933, %v4934
    %v4939 = vunpack.c.l.s4 1983009808
    %v4940 = vunpack.c.0.s8 %v4939
    %v4941 = vlaneseq
    %v4942 = vshrl.u32 %v4941, 7
    %v4943 = vsub.s32 %v4940, %v4942
    %v4944 = vrot.slane %v4937, %v4943
    %v4946 = vadd.f32 %v4812, %v4944
    %s4947 = sld [smem:[#allocation6 + $0x122]]
    %v4948 = vstv %s4947
    %v4949 = vmul.f32 %v4948, %v4913
    %v4950 = vmul.f32 %v4948, %v4914
    %v4953 = vcombine.low %v4949, %v4950
    %v4955 = vunpack.c.l.s4 1983009808
    %v4956 = vunpack.c.0.s8 %v4955
    %v4957 = vlaneseq
    %v4958 = vshrl.u32 %v4957, 7
    %v4959 = vsub.s32 %v4956, %v4958
    %v4960 = vrot.slane %v4953, %v4959
    %v4962 = vadd.f32 %v4828, %v4960
    %s4963 = sld [smem:[#allocation6 + $0x1a2]]
    %v4964 = vstv %s4963
    %v4965 = vmul.f32 %v4964, %v4913
    %v4966 = vmul.f32 %v4964, %v4914
    %v4969 = vcombine.low %v4965, %v4966
    %v4971 = vunpack.c.l.s4 1983009808
    %v4972 = vunpack.c.0.s8 %v4971
    %v4973 = vlaneseq
    %v4974 = vshrl.u32 %v4973, 7
    %v4975 = vsub.s32 %v4972, %v4974
    %v4976 = vrot.slane %v4969, %v4975
    %v4978 = vadd.f32 %v4844, %v4976
    %s4979 = sld [smem:[#allocation6 + $0x222]]
    %v4980 = vstv %s4979
    %v4981 = vmul.f32 %v4980, %v4913
    %v4982 = vmul.f32 %v4980, %v4914
    %v4985 = vcombine.low %v4981, %v4982
    %v4987 = vunpack.c.l.s4 1983009808
    %v4988 = vunpack.c.0.s8 %v4987
    %v4989 = vlaneseq
    %v4990 = vshrl.u32 %v4989, 7
    %v4991 = vsub.s32 %v4988, %v4990
    %v4992 = vrot.slane %v4985, %v4991
    %v4994 = vadd.f32 %v4860, %v4992
    %s4995 = sld [smem:[#allocation6 + $0x2a2]]
    %v4996 = vstv %s4995
    %v4997 = vmul.f32 %v4996, %v4913
    %v4998 = vmul.f32 %v4996, %v4914
    %v5001 = vcombine.low %v4997, %v4998
    %v5003 = vunpack.c.l.s4 1983009808
    %v5004 = vunpack.c.0.s8 %v5003
    %v5005 = vlaneseq
    %v5006 = vshrl.u32 %v5005, 7
    %v5007 = vsub.s32 %v5004, %v5006
    %v5008 = vrot.slane %v5001, %v5007
    %v5010 = vadd.f32 %v4876, %v5008
    %s5011 = sld [smem:[#allocation6 + $0x322]]
    %v5012 = vstv %s5011
    %v5013 = vmul.f32 %v5012, %v4913
    %v5014 = vmul.f32 %v5012, %v4914
    %v5017 = vcombine.low %v5013, %v5014
    %v5019 = vunpack.c.l.s4 1983009808
    %v5020 = vunpack.c.0.s8 %v5019
    %v5021 = vlaneseq
    %v5022 = vshrl.u32 %v5021, 7
    %v5023 = vsub.s32 %v5020, %v5022
    %v5024 = vrot.slane %v5017, %v5023
    %v5026 = vadd.f32 %v4892, %v5024
    %s5027 = sld [smem:[#allocation6 + $0x3a2]]
    %v5028 = vstv %s5027
    %v5029 = vmul.f32 %v5028, %v4913
    %v5030 = vmul.f32 %v5028, %v4914
    %v5033 = vcombine.low %v5029, %v5030
    %v5035 = vunpack.c.l.s4 1983009808
    %v5036 = vunpack.c.0.s8 %v5035
    %v5037 = vlaneseq
    %v5038 = vshrl.u32 %v5037, 7
    %v5039 = vsub.s32 %v5036, %v5038
    %v5040 = vrot.slane %v5033, %v5039
    %v5042 = vadd.f32 %v4908, %v5040
    %5043 = vrot.lane.b32.xlu0 %v4101, 94
    %v5044 = vpop.permute.xlu0 %5043
    %5045 = vrot.lane.b32.xlu0 %v4102, 94
    %v5046 = vpop.permute.xlu0 %5045
    %v5047 = vsel %vm630, %v5044, %v5046
    %v5048 = vsel %vm630, %v5046, %v5044
    %s5049 = sld [smem:[#allocation6 + $0x23]]
    %v5050 = vstv %s5049
    %v5051 = vmul.f32 %v5050, %v5047
    %v5052 = vmul.f32 %v5050, %v5048
    %v5055 = vcombine.low %v5051, %v5052
    %v5057 = vunpack.c.l.s4 1983009808
    %v5058 = vunpack.c.0.s8 %v5057
    %v5059 = vlaneseq
    %v5060 = vshrl.u32 %v5059, 7
    %v5061 = vsub.s32 %v5058, %v5060
    %v5062 = vrot.slane %v5055, %v5061
    %v5064 = vadd.f32 %v4930, %v5062
    %s5065 = sld [smem:[#allocation6 + $0xa3]]
    %v5066 = vstv %s5065
    %v5067 = vmul.f32 %v5066, %v5047
    %v5068 = vmul.f32 %v5066, %v5048
    %v5071 = vcombine.low %v5067, %v5068
    %v5073 = vunpack.c.l.s4 1983009808
    %v5074 = vunpack.c.0.s8 %v5073
    %v5075 = vlaneseq
    %v5076 = vshrl.u32 %v5075, 7
    %v5077 = vsub.s32 %v5074, %v5076
    %v5078 = vrot.slane %v5071, %v5077
    %v5080 = vadd.f32 %v4946, %v5078
    %s5081 = sld [smem:[#allocation6 + $0x123]]
    %v5082 = vstv %s5081
    %v5083 = vmul.f32 %v5082, %v5047
    %v5084 = vmul.f32 %v5082, %v5048
    %v5087 = vcombine.low %v5083, %v5084
    %v5089 = vunpack.c.l.s4 1983009808
    %v5090 = vunpack.c.0.s8 %v5089
    %v5091 = vlaneseq
    %v5092 = vshrl.u32 %v5091, 7
    %v5093 = vsub.s32 %v5090, %v5092
    %v5094 = vrot.slane %v5087, %v5093
    %v5096 = vadd.f32 %v4962, %v5094
    %s5097 = sld [smem:[#allocation6 + $0x1a3]]
    %v5098 = vstv %s5097
    %v5099 = vmul.f32 %v5098, %v5047
    %v5100 = vmul.f32 %v5098, %v5048
    %v5103 = vcombine.low %v5099, %v5100
    %v5105 = vunpack.c.l.s4 1983009808
    %v5106 = vunpack.c.0.s8 %v5105
    %v5107 = vlaneseq
    %v5108 = vshrl.u32 %v5107, 7
    %v5109 = vsub.s32 %v5106, %v5108
    %v5110 = vrot.slane %v5103, %v5109
    %v5112 = vadd.f32 %v4978, %v5110
    %s5113 = sld [smem:[#allocation6 + $0x223]]
    %v5114 = vstv %s5113
    %v5115 = vmul.f32 %v5114, %v5047
    %v5116 = vmul.f32 %v5114, %v5048
    %v5119 = vcombine.low %v5115, %v5116
    %v5121 = vunpack.c.l.s4 1983009808
    %v5122 = vunpack.c.0.s8 %v5121
    %v5123 = vlaneseq
    %v5124 = vshrl.u32 %v5123, 7
    %v5125 = vsub.s32 %v5122, %v5124
    %v5126 = vrot.slane %v5119, %v5125
    %v5128 = vadd.f32 %v4994, %v5126
    %s5129 = sld [smem:[#allocation6 + $0x2a3]]
    %v5130 = vstv %s5129
    %v5131 = vmul.f32 %v5130, %v5047
    %v5132 = vmul.f32 %v5130, %v5048
    %v5135 = vcombine.low %v5131, %v5132
    %v5137 = vunpack.c.l.s4 1983009808
    %v5138 = vunpack.c.0.s8 %v5137
    %v5139 = vlaneseq
    %v5140 = vshrl.u32 %v5139, 7
    %v5141 = vsub.s32 %v5138, %v5140
    %v5142 = vrot.slane %v5135, %v5141
    %v5144 = vadd.f32 %v5010, %v5142
    %s5145 = sld [smem:[#allocation6 + $0x323]]
    %v5146 = vstv %s5145
    %v5147 = vmul.f32 %v5146, %v5047
    %v5148 = vmul.f32 %v5146, %v5048
    %v5151 = vcombine.low %v5147, %v5148
    %v5153 = vunpack.c.l.s4 1983009808
    %v5154 = vunpack.c.0.s8 %v5153
    %v5155 = vlaneseq
    %v5156 = vshrl.u32 %v5155, 7
    %v5157 = vsub.s32 %v5154, %v5156
    %v5158 = vrot.slane %v5151, %v5157
    %v5160 = vadd.f32 %v5026, %v5158
    %s5161 = sld [smem:[#allocation6 + $0x3a3]]
    %v5162 = vstv %s5161
    %v5163 = vmul.f32 %v5162, %v5047
    %v5164 = vmul.f32 %v5162, %v5048
    %v5167 = vcombine.low %v5163, %v5164
    %v5169 = vunpack.c.l.s4 1983009808
    %v5170 = vunpack.c.0.s8 %v5169
    %v5171 = vlaneseq
    %v5172 = vshrl.u32 %v5171, 7
    %v5173 = vsub.s32 %v5170, %v5172
    %v5174 = vrot.slane %v5167, %v5173
    %v5176 = vadd.f32 %v5042, %v5174
    %s5177 = sld [smem:[#allocation9]]
    %v5178 = vstv %s5177
    %v5179 = vadd.f32 %v5064, %v5178
    %v5180 = vmul.f32 %v5179, 0.01
    %v5181 = vmax.f32 %v5179, %v5180
    %5182 = vst [vmem:[#allocation2] sm:$0xf] %v5181
    %s5183 = sld [smem:[#allocation9 + $0x1]]
    %v5184 = vstv %s5183
    %v5185 = vadd.f32 %v5080, %v5184
    %v5186 = vmul.f32 %v5185, 0.01
    %v5187 = vmax.f32 %v5185, %v5186
    %5188 = vst [vmem:[#allocation2 + $0x4] sm:$0xf] %v5187
    %s5189 = sld [smem:[#allocation9 + $0x2]]
    %v5190 = vstv %s5189
    %v5191 = vadd.f32 %v5096, %v5190
    %v5192 = vmul.f32 %v5191, 0.01
    %v5193 = vmax.f32 %v5191, %v5192
    %5194 = vst [vmem:[#allocation2 + $0x8] sm:$0xf] %v5193
    %s5195 = sld [smem:[#allocation9 + $0x3]]
    %v5196 = vstv %s5195
    %v5197 = vadd.f32 %v5112, %v5196
    %v5198 = vmul.f32 %v5197, 0.01
    %v5199 = vmax.f32 %v5197, %v5198
    %5200 = vst [vmem:[#allocation2 + $0xc] sm:$0xf] %v5199
    %s5201 = sld [smem:[#allocation9 + $0x4]]
    %v5202 = vstv %s5201
    %v5203 = vadd.f32 %v5128, %v5202
    %v5204 = vmul.f32 %v5203, 0.01
    %v5205 = vmax.f32 %v5203, %v5204
    %5206 = vst [vmem:[#allocation2 + $0x10] sm:$0xf] %v5205
    %s5207 = sld [smem:[#allocation9 + $0x5]]
    %v5208 = vstv %s5207
    %v5209 = vadd.f32 %v5144, %v5208
    %v5210 = vmul.f32 %v5209, 0.01
    %v5211 = vmax.f32 %v5209, %v5210
    %5212 = vst [vmem:[#allocation2 + $0x14] sm:$0xf] %v5211
    %s5213 = sld [smem:[#allocation9 + $0x6]]
    %v5214 = vstv %s5213
    %v5215 = vadd.f32 %v5160, %v5214
    %v5216 = vmul.f32 %v5215, 0.01
    %v5217 = vmax.f32 %v5215, %v5216
    %5218 = vst [vmem:[#allocation2 + $0x18] sm:$0xf] %v5217
    %s5219 = sld [smem:[#allocation9 + $0x7]]
    %v5220 = vstv %s5219
    %v5221 = vadd.f32 %v5176, %v5220
    %v5222 = vmul.f32 %v5221, 0.01
    %v5223 = vmax.f32 %v5221, %v5222
    %5224 = vst [vmem:[#allocation2 + $0x1c] sm:$0xf] %v5223
    %v5225 = vld [vmem:[#allocation2] sm:$0xff]
    %v5226 = vld [vmem:[#allocation2 + $0x8] sm:$0xff]
    %v5227 = vld [vmem:[#allocation2 + $0x10] sm:$0xff]
    %v5228 = vld [vmem:[#allocation2 + $0x18] sm:$0xff]
    %v5229 = vld [vmem:[%s7] sm:$0xff]
    %v5230 = vld [vmem:[%s7 + $0x8] sm:$0xff]
    %v5231 = vld [vmem:[%s7 + $0x10] sm:$0xff]
    %v5232 = vld [vmem:[%s7 + $0x18] sm:$0xff]
    %v5233 = vld [vmem:[%s7 + $0x20] sm:$0xff]
    %v5234 = vld [vmem:[%s7 + $0x28] sm:$0xff]
    %v5235 = vld [vmem:[%s7 + $0x30] sm:$0xff]
    %v5236 = vld [vmem:[%s7 + $0x38] sm:$0xff]
    %v5237 = vld [vmem:[%s7 + $0x40] sm:$0xff]
    %v5238 = vld [vmem:[%s7 + $0x48] sm:$0xff]
    %v5239 = vld [vmem:[%s7 + $0x50] sm:$0xff]
    %v5240 = vld [vmem:[%s7 + $0x58] sm:$0xff]
    %v5241 = vld [vmem:[%s7 + $0x60] sm:$0xff]
    %v5242 = vld [vmem:[%s7 + $0x68] sm:$0xff]
    %v5243 = vld [vmem:[%s7 + $0x70] sm:$0xff]
    %v5244 = vld [vmem:[%s7 + $0x78] sm:$0xff]
    %v5245 = vld [vmem:[%s7 + $0x80] sm:$0xff]
    %v5246 = vld [vmem:[%s7 + $0x88] sm:$0xff]
    %v5247 = vld [vmem:[%s7 + $0x90] sm:$0xff]
    %v5248 = vld [vmem:[%s7 + $0x98] sm:$0xff]
    %v5249 = vld [vmem:[%s7 + $0xa0] sm:$0xff]
    %v5250 = vld [vmem:[%s7 + $0xa8] sm:$0xff]
    %v5251 = vld [vmem:[%s7 + $0xb0] sm:$0xff]
    %v5252 = vld [vmem:[%s7 + $0xb8] sm:$0xff]
    %v5253 = vld [vmem:[%s7 + $0xc0] sm:$0xff]
    %v5254 = vld [vmem:[%s7 + $0xc8] sm:$0xff]
    %v5255 = vld [vmem:[%s7 + $0xd0] sm:$0xff]
    %v5256 = vld [vmem:[%s7 + $0xd8] sm:$0xff]
    %v5257 = vld [vmem:[%s7 + $0xe0] sm:$0xff]
    %v5258 = vld [vmem:[%s7 + $0xe8] sm:$0xff]
    %v5259 = vld [vmem:[%s7 + $0xf0] sm:$0xff]
    %v5260 = vld [vmem:[%s7 + $0xf8] sm:$0xff]
    %v5261 = vld [vmem:[%s7 + $0x100] sm:$0xff]
    %v5262 = vld [vmem:[%s7 + $0x108] sm:$0xff]
    %v5263 = vld [vmem:[%s7 + $0x110] sm:$0xff]
    %v5264 = vld [vmem:[%s7 + $0x118] sm:$0xff]
    %v5265 = vld [vmem:[%s7 + $0x120] sm:$0xff]
    %v5266 = vld [vmem:[%s7 + $0x128] sm:$0xff]
    %v5267 = vld [vmem:[%s7 + $0x130] sm:$0xff]
    %v5268 = vld [vmem:[%s7 + $0x138] sm:$0xff]
    %v5269 = vld [vmem:[%s7 + $0x140] sm:$0xff]
    %v5270 = vld [vmem:[%s7 + $0x148] sm:$0xff]
    %v5271 = vld [vmem:[%s7 + $0x150] sm:$0xff]
    %v5272 = vld [vmem:[%s7 + $0x158] sm:$0xff]
    %v5273 = vld [vmem:[%s7 + $0x160] sm:$0xff]
    %v5274 = vld [vmem:[%s7 + $0x168] sm:$0xff]
    %v5275 = vld [vmem:[%s7 + $0x170] sm:$0xff]
    %v5276 = vld [vmem:[%s7 + $0x178] sm:$0xff]
    %v5277 = vld [vmem:[%s7 + $0x180] sm:$0xff]
    %v5278 = vld [vmem:[%s7 + $0x188] sm:$0xff]
    %v5279 = vld [vmem:[%s7 + $0x190] sm:$0xff]
    %v5280 = vld [vmem:[%s7 + $0x198] sm:$0xff]
    %v5281 = vld [vmem:[%s7 + $0x1a0] sm:$0xff]
    %v5282 = vld [vmem:[%s7 + $0x1a8] sm:$0xff]
    %v5283 = vld [vmem:[%s7 + $0x1b0] sm:$0xff]
    %v5284 = vld [vmem:[%s7 + $0x1b8] sm:$0xff]
    %v5285 = vld [vmem:[%s7 + $0x1c0] sm:$0xff]
    %v5286 = vld [vmem:[%s7 + $0x1c8] sm:$0xff]
    %v5287 = vld [vmem:[%s7 + $0x1d0] sm:$0xff]
    %v5288 = vld [vmem:[%s7 + $0x1d8] sm:$0xff]
    %v5289 = vld [vmem:[%s7 + $0x1e0] sm:$0xff]
    %v5290 = vld [vmem:[%s7 + $0x1e8] sm:$0xff]
    %v5291 = vld [vmem:[%s7 + $0x1f0] sm:$0xff]
    %v5292 = vld [vmem:[%s7 + $0x1f8] sm:$0xff]
    %v5293 = vld [vmem:[%s7 + $0x200] sm:$0xff]
    %v5294 = vld [vmem:[%s7 + $0x208] sm:$0xff]
    %v5295 = vld [vmem:[%s7 + $0x210] sm:$0xff]
    %v5296 = vld [vmem:[%s7 + $0x218] sm:$0xff]
    %v5297 = vld [vmem:[%s7 + $0x220] sm:$0xff]
    %v5298 = vld [vmem:[%s7 + $0x228] sm:$0xff]
    %v5299 = vld [vmem:[%s7 + $0x230] sm:$0xff]
    %v5300 = vld [vmem:[%s7 + $0x238] sm:$0xff]
    %v5301 = vld [vmem:[%s7 + $0x240] sm:$0xff]
    %v5302 = vld [vmem:[%s7 + $0x248] sm:$0xff]
    %v5303 = vld [vmem:[%s7 + $0x250] sm:$0xff]
    %v5304 = vld [vmem:[%s7 + $0x258] sm:$0xff]
    %v5305 = vld [vmem:[%s7 + $0x260] sm:$0xff]
    %v5306 = vld [vmem:[%s7 + $0x268] sm:$0xff]
    %v5307 = vld [vmem:[%s7 + $0x270] sm:$0xff]
    %v5308 = vld [vmem:[%s7 + $0x278] sm:$0xff]
    %v5309 = vld [vmem:[%s7 + $0x280] sm:$0xff]
    %v5310 = vld [vmem:[%s7 + $0x288] sm:$0xff]
    %v5311 = vld [vmem:[%s7 + $0x290] sm:$0xff]
    %v5312 = vld [vmem:[%s7 + $0x298] sm:$0xff]
    %v5313 = vld [vmem:[%s7 + $0x2a0] sm:$0xff]
    %v5314 = vld [vmem:[%s7 + $0x2a8] sm:$0xff]
    %v5315 = vld [vmem:[%s7 + $0x2b0] sm:$0xff]
    %v5316 = vld [vmem:[%s7 + $0x2b8] sm:$0xff]
    %v5317 = vld [vmem:[%s7 + $0x2c0] sm:$0xff]
    %v5318 = vld [vmem:[%s7 + $0x2c8] sm:$0xff]
    %v5319 = vld [vmem:[%s7 + $0x2d0] sm:$0xff]
    %v5320 = vld [vmem:[%s7 + $0x2d8] sm:$0xff]
    %v5321 = vld [vmem:[%s7 + $0x2e0] sm:$0xff]
    %v5322 = vld [vmem:[%s7 + $0x2e8] sm:$0xff]
    %v5323 = vld [vmem:[%s7 + $0x2f0] sm:$0xff]
    %v5324 = vld [vmem:[%s7 + $0x2f8] sm:$0xff]
    %v5325 = vld [vmem:[%s7 + $0x300] sm:$0xff]
    %v5326 = vld [vmem:[%s7 + $0x308] sm:$0xff]
    %v5327 = vld [vmem:[%s7 + $0x310] sm:$0xff]
    %v5328 = vld [vmem:[%s7 + $0x318] sm:$0xff]
    %v5329 = vld [vmem:[%s7 + $0x320] sm:$0xff]
    %v5330 = vld [vmem:[%s7 + $0x328] sm:$0xff]
    %v5331 = vld [vmem:[%s7 + $0x330] sm:$0xff]
    %v5332 = vld [vmem:[%s7 + $0x338] sm:$0xff]
    %v5333 = vld [vmem:[%s7 + $0x340] sm:$0xff]
    %v5334 = vld [vmem:[%s7 + $0x348] sm:$0xff]
    %v5335 = vld [vmem:[%s7 + $0x350] sm:$0xff]
    %v5336 = vld [vmem:[%s7 + $0x358] sm:$0xff]
    %v5337 = vld [vmem:[%s7 + $0x360] sm:$0xff]
    %v5338 = vld [vmem:[%s7 + $0x368] sm:$0xff]
    %v5339 = vld [vmem:[%s7 + $0x370] sm:$0xff]
    %v5340 = vld [vmem:[%s7 + $0x378] sm:$0xff]
    %v5341 = vld [vmem:[%s7 + $0x380] sm:$0xff]
    %v5342 = vld [vmem:[%s7 + $0x388] sm:$0xff]
    %v5343 = vld [vmem:[%s7 + $0x390] sm:$0xff]
    %v5344 = vld [vmem:[%s7 + $0x398] sm:$0xff]
    %v5345 = vld [vmem:[%s7 + $0x3a0] sm:$0xff]
    %v5346 = vld [vmem:[%s7 + $0x3a8] sm:$0xff]
    %v5347 = vld [vmem:[%s7 + $0x3b0] sm:$0xff]
    %v5348 = vld [vmem:[%s7 + $0x3b8] sm:$0xff]
    %v5349 = vld [vmem:[%s7 + $0x3c0] sm:$0xff]
    %v5350 = vld [vmem:[%s7 + $0x3c8] sm:$0xff]
    %v5351 = vld [vmem:[%s7 + $0x3d0] sm:$0xff]
    %v5352 = vld [vmem:[%s7 + $0x3d8] sm:$0xff]
    %v5353 = vld [vmem:[%s7 + $0x3e0] sm:$0xff]
    %v5354 = vld [vmem:[%s7 + $0x3e8] sm:$0xff]
    %v5355 = vld [vmem:[%s7 + $0x3f0] sm:$0xff]
    %v5356 = vld [vmem:[%s7 + $0x3f8] sm:$0xff]
    %v5357 = vld [vmem:[%s7 + $0x400] sm:$0xff]
    %v5358 = vld [vmem:[%s7 + $0x408] sm:$0xff]
    %v5359 = vld [vmem:[%s7 + $0x410] sm:$0xff]
    %v5360 = vld [vmem:[%s7 + $0x418] sm:$0xff]
    %v5361 = vld [vmem:[%s7 + $0x420] sm:$0xff]
    %v5362 = vld [vmem:[%s7 + $0x428] sm:$0xff]
    %v5363 = vld [vmem:[%s7 + $0x430] sm:$0xff]
    %v5364 = vld [vmem:[%s7 + $0x438] sm:$0xff]
    %v5365 = vld [vmem:[%s7 + $0x440] sm:$0xff]
    %v5366 = vld [vmem:[%s7 + $0x448] sm:$0xff]
    %v5367 = vld [vmem:[%s7 + $0x450] sm:$0xff]
    %v5368 = vld [vmem:[%s7 + $0x458] sm:$0xff]
    %v5369 = vld [vmem:[%s7 + $0x460] sm:$0xff]
    %v5370 = vld [vmem:[%s7 + $0x468] sm:$0xff]
    %v5371 = vld [vmem:[%s7 + $0x470] sm:$0xff]
    %v5372 = vld [vmem:[%s7 + $0x478] sm:$0xff]
    %v5373 = vld [vmem:[%s7 + $0x480] sm:$0xff]
    %v5374 = vld [vmem:[%s7 + $0x488] sm:$0xff]
    %v5375 = vld [vmem:[%s7 + $0x490] sm:$0xff]
    %v5376 = vld [vmem:[%s7 + $0x498] sm:$0xff]
    %v5377 = vld [vmem:[%s7 + $0x4a0] sm:$0xff]
    %v5378 = vld [vmem:[%s7 + $0x4a8] sm:$0xff]
    %v5379 = vld [vmem:[%s7 + $0x4b0] sm:$0xff]
    %v5380 = vld [vmem:[%s7 + $0x4b8] sm:$0xff]
    %v5381 = vld [vmem:[%s7 + $0x4c0] sm:$0xff]
    %v5382 = vld [vmem:[%s7 + $0x4c8] sm:$0xff]
    %v5383 = vld [vmem:[%s7 + $0x4d0] sm:$0xff]
    %v5384 = vld [vmem:[%s7 + $0x4d8] sm:$0xff]
    %v5385 = vld [vmem:[%s7 + $0x4e0] sm:$0xff]
    %v5386 = vld [vmem:[%s7 + $0x4e8] sm:$0xff]
    %v5387 = vld [vmem:[%s7 + $0x4f0] sm:$0xff]
    %v5388 = vld [vmem:[%s7 + $0x4f8] sm:$0xff]
    %v5389 = vld [vmem:[%s7 + $0x500] sm:$0xff]
    %v5390 = vld [vmem:[%s7 + $0x508] sm:$0xff]
    %v5391 = vld [vmem:[%s7 + $0x510] sm:$0xff]
    %v5392 = vld [vmem:[%s7 + $0x518] sm:$0xff]
    %v5393 = vld [vmem:[%s7 + $0x520] sm:$0xff]
    %v5394 = vld [vmem:[%s7 + $0x528] sm:$0xff]
    %v5395 = vld [vmem:[%s7 + $0x530] sm:$0xff]
    %v5396 = vld [vmem:[%s7 + $0x538] sm:$0xff]
    %v5397 = vld [vmem:[%s7 + $0x540] sm:$0xff]
    %v5398 = vld [vmem:[%s7 + $0x548] sm:$0xff]
    %v5399 = vld [vmem:[%s7 + $0x550] sm:$0xff]
    %v5400 = vld [vmem:[%s7 + $0x558] sm:$0xff]
    %v5401 = vld [vmem:[%s7 + $0x560] sm:$0xff]
    %v5402 = vld [vmem:[%s7 + $0x568] sm:$0xff]
    %v5403 = vld [vmem:[%s7 + $0x570] sm:$0xff]
    %v5404 = vld [vmem:[%s7 + $0x578] sm:$0xff]
    %v5405 = vld [vmem:[%s7 + $0x580] sm:$0xff]
    %v5406 = vld [vmem:[%s7 + $0x588] sm:$0xff]
    %v5407 = vld [vmem:[%s7 + $0x590] sm:$0xff]
    %v5408 = vld [vmem:[%s7 + $0x598] sm:$0xff]
    %v5409 = vld [vmem:[%s7 + $0x5a0] sm:$0xff]
    %v5410 = vld [vmem:[%s7 + $0x5a8] sm:$0xff]
    %v5411 = vld [vmem:[%s7 + $0x5b0] sm:$0xff]
    %v5412 = vld [vmem:[%s7 + $0x5b8] sm:$0xff]
    %v5413 = vld [vmem:[%s7 + $0x5c0] sm:$0xff]
    %v5414 = vld [vmem:[%s7 + $0x5c8] sm:$0xff]
    %v5415 = vld [vmem:[%s7 + $0x5d0] sm:$0xff]
    %v5416 = vld [vmem:[%s7 + $0x5d8] sm:$0xff]
    %v5417 = vld [vmem:[%s7 + $0x5e0] sm:$0xff]
    %v5418 = vld [vmem:[%s7 + $0x5e8] sm:$0xff]
    %v5419 = vld [vmem:[%s7 + $0x5f0] sm:$0xff]
    %v5420 = vld [vmem:[%s7 + $0x5f8] sm:$0xff]
    %v5421 = vld [vmem:[%s7 + $0x600] sm:$0xff]
    %v5422 = vld [vmem:[%s7 + $0x608] sm:$0xff]
    %v5423 = vld [vmem:[%s7 + $0x610] sm:$0xff]
    %v5424 = vld [vmem:[%s7 + $0x618] sm:$0xff]
    %v5425 = vld [vmem:[%s7 + $0x620] sm:$0xff]
    %v5426 = vld [vmem:[%s7 + $0x628] sm:$0xff]
    %v5427 = vld [vmem:[%s7 + $0x630] sm:$0xff]
    %v5428 = vld [vmem:[%s7 + $0x638] sm:$0xff]
    %v5429 = vld [vmem:[%s7 + $0x640] sm:$0xff]
    %v5430 = vld [vmem:[%s7 + $0x648] sm:$0xff]
    %v5431 = vld [vmem:[%s7 + $0x650] sm:$0xff]
    %v5432 = vld [vmem:[%s7 + $0x658] sm:$0xff]
    %v5433 = vld [vmem:[%s7 + $0x660] sm:$0xff]
    %v5434 = vld [vmem:[%s7 + $0x668] sm:$0xff]
    %v5435 = vld [vmem:[%s7 + $0x670] sm:$0xff]
    %v5436 = vld [vmem:[%s7 + $0x678] sm:$0xff]
    %v5437 = vld [vmem:[%s7 + $0x680] sm:$0xff]
    %v5438 = vld [vmem:[%s7 + $0x688] sm:$0xff]
    %v5439 = vld [vmem:[%s7 + $0x690] sm:$0xff]
    %v5440 = vld [vmem:[%s7 + $0x698] sm:$0xff]
    %v5441 = vld [vmem:[%s7 + $0x6a0] sm:$0xff]
    %v5442 = vld [vmem:[%s7 + $0x6a8] sm:$0xff]
    %v5443 = vld [vmem:[%s7 + $0x6b0] sm:$0xff]
    %v5444 = vld [vmem:[%s7 + $0x6b8] sm:$0xff]
    %v5445 = vld [vmem:[%s7 + $0x6c0] sm:$0xff]
    %v5446 = vld [vmem:[%s7 + $0x6c8] sm:$0xff]
    %v5447 = vld [vmem:[%s7 + $0x6d0] sm:$0xff]
    %v5448 = vld [vmem:[%s7 + $0x6d8] sm:$0xff]
    %v5449 = vld [vmem:[%s7 + $0x6e0] sm:$0xff]
    %v5450 = vld [vmem:[%s7 + $0x6e8] sm:$0xff]
    %v5451 = vld [vmem:[%s7 + $0x6f0] sm:$0xff]
    %v5452 = vld [vmem:[%s7 + $0x6f8] sm:$0xff]
    %v5453 = vld [vmem:[%s7 + $0x700] sm:$0xff]
    %v5454 = vld [vmem:[%s7 + $0x708] sm:$0xff]
    %v5455 = vld [vmem:[%s7 + $0x710] sm:$0xff]
    %v5456 = vld [vmem:[%s7 + $0x718] sm:$0xff]
    %v5457 = vld [vmem:[%s7 + $0x720] sm:$0xff]
    %v5458 = vld [vmem:[%s7 + $0x728] sm:$0xff]
    %v5459 = vld [vmem:[%s7 + $0x730] sm:$0xff]
    %v5460 = vld [vmem:[%s7 + $0x738] sm:$0xff]
    %v5461 = vld [vmem:[%s7 + $0x740] sm:$0xff]
    %v5462 = vld [vmem:[%s7 + $0x748] sm:$0xff]
    %v5463 = vld [vmem:[%s7 + $0x750] sm:$0xff]
    %v5464 = vld [vmem:[%s7 + $0x758] sm:$0xff]
    %v5465 = vld [vmem:[%s7 + $0x760] sm:$0xff]
    %v5466 = vld [vmem:[%s7 + $0x768] sm:$0xff]
    %v5467 = vld [vmem:[%s7 + $0x770] sm:$0xff]
    %v5468 = vld [vmem:[%s7 + $0x778] sm:$0xff]
    %v5469 = vld [vmem:[%s7 + $0x780] sm:$0xff]
    %v5470 = vld [vmem:[%s7 + $0x788] sm:$0xff]
    %v5471 = vld [vmem:[%s7 + $0x790] sm:$0xff]
    %v5472 = vld [vmem:[%s7 + $0x798] sm:$0xff]
    %v5473 = vld [vmem:[%s7 + $0x7a0] sm:$0xff]
    %v5474 = vld [vmem:[%s7 + $0x7a8] sm:$0xff]
    %v5475 = vld [vmem:[%s7 + $0x7b0] sm:$0xff]
    %v5476 = vld [vmem:[%s7 + $0x7b8] sm:$0xff]
    %v5477 = vld [vmem:[%s7 + $0x7c0] sm:$0xff]
    %v5478 = vld [vmem:[%s7 + $0x7c8] sm:$0xff]
    %v5479 = vld [vmem:[%s7 + $0x7d0] sm:$0xff]
    %v5480 = vld [vmem:[%s7 + $0x7d8] sm:$0xff]
    %v5481 = vld [vmem:[%s7 + $0x7e0] sm:$0xff]
    %v5482 = vld [vmem:[%s7 + $0x7e8] sm:$0xff]
    %v5483 = vld [vmem:[%s7 + $0x7f0] sm:$0xff]
    %v5484 = vld [vmem:[%s7 + $0x7f8] sm:$0xff]
    %v5485 = vld [vmem:[%s5] sm:$0x3]
    %v5486 = vld [vmem:[%s8] sm:$0xf]
    %vm5487 = vcmask 31744
    %v5489 = vsel %vm5487, %v5485, 0
    %vm5491 = vcmask 1043456
    %v5493 = vsel %vm5491, %v5486, 0
    %5495 = vmatprep.subr.mxu0 0.0
    %5496 = vmatpush1.msra.mxu0 %v5493
    %5497 = vmatprep.subr.mxu0 0.0
    %5498 = vmatpush1.msra.mxu0 0.0
    %5499 = vmatprep.subr.mxu0 0.0
    %5500 = vmatpush1.msra.mxu0 0.0
    %5501 = vmatprep.subr.mxu0 0.0
    %5502 = vmatpush1.msra.mxu0 0.0
    %5503 = vmatprep.subr.mxu0 0.0
    %5504 = vmatpush1.msra.mxu0 0.0
    %5505 = vmatprep.subr.mxu0 0.0
    %5506 = vmatpush1.msra.mxu0 0.0
    %5507 = vmatprep.subr.mxu0 0.0
    %5508 = vmatpush1.msra.mxu0 0.0
    %5509 = vmatprep.subr.mxu0 0.0
    %5510 = vmatpush1.msra.mxu0 0.0
    %5511 = vmatprep.subr.mxu0 0.0
    %5512 = vmatpush1.msra.mxu0 0.0
    %5513 = vmatprep.subr.mxu0 0.0
    %5514 = vmatpush1.msra.mxu0 0.0
    %5515 = vmatprep.subr.mxu0 0.0
    %5516 = vmatpush1.msra.mxu0 0.0
    %5517 = vmatprep.subr.mxu0 0.0
    %5518 = vmatpush1.msra.mxu0 0.0
    %5519 = vmatprep.subr.mxu0 0.0
    %5520 = vmatpush1.msra.mxu0 0.0
    %5521 = vmatprep.subr.mxu0 0.0
    %5522 = vmatpush1.msra.mxu0 0.0
    %5523 = vmatprep.subr.mxu0 0.0
    %5524 = vmatpush1.msra.mxu0 0.0
    %5525 = vmatprep.subr.mxu0 0.0
    %5526 = vmatpush1.msra.mxu0 0.0
    %5527 = vmatprep.subr.mxu0 0.0
    %5528 = vmatpush1.msra.mxu0 0.0
    %5529 = vmatprep.subr.mxu0 0.0
    %5530 = vmatpush1.msra.mxu0 0.0
    %5531 = vmatprep.subr.mxu0 0.0
    %5532 = vmatpush1.msra.mxu0 0.0
    %5533 = vmatprep.subr.mxu0 0.0
    %5534 = vmatpush1.msra.mxu0 0.0
    %5535 = vmatprep.subr.mxu0 0.0
    %5536 = vmatpush1.msra.mxu0 0.0
    %5537 = vmatprep.subr.mxu0 0.0
    %5538 = vmatpush1.msra.mxu0 0.0
    %5539 = vmatprep.subr.mxu0 0.0
    %5540 = vmatpush1.msra.mxu0 0.0
    %5541 = vmatprep.subr.mxu0 0.0
    %5542 = vmatpush1.msra.mxu0 0.0
    %5543 = vmatprep.subr.mxu0 0.0
    %5544 = vmatpush1.msra.mxu0 0.0
    %5545 = vmatprep.subr.mxu0 0.0
    %5546 = vmatpush1.msra.mxu0 0.0
    %5547 = vmatprep.subr.mxu0 0.0
    %5548 = vmatpush1.msra.mxu0 0.0
    %5549 = vmatprep.subr.mxu0 0.0
    %5550 = vmatpush1.msra.mxu0 0.0
    %5551 = vmatprep.subr.mxu0 0.0
    %5552 = vmatpush1.msra.mxu0 0.0
    %5553 = vmatprep.subr.mxu0 0.0
    %5554 = vmatpush1.msra.mxu0 0.0
    %5555 = vmatprep.subr.mxu0 0.0
    %5556 = vmatpush1.msra.mxu0 0.0
    %5557 = vmatprep.subr.mxu0 0.0
    %5558 = vmatpush1.msra.mxu0 0.0
    %5559 = vmatprep.mubr.f32.mxu0 0.0
    %5560 = vmatmul.mubr.f32.gmra.mrb[0].mxu0 %v5489
    %v5561 = vpop.f32.mrb[0].mxu0
    %v5562 = vadd.f32 0.0, %v5561
    %v5563 = vpop.f32.mrb[0].mxu0
    %5564 = vdwg.mxu0
    %v5569 = vcombine.high %v5225, %v5225
    %v5571 = vunpack.c.l.s4 1983009808
    %v5572 = vunpack.c.0.s8 %v5571
    %v5573 = vlaneseq
    %v5574 = vshrl.u32 %v5573, 7
    %v5575 = vsub.s32 %v5572, %v5574
    %v5576 = vrot.slane %v5225, %v5575
    %v5578 = vunpack.c.l.s4 1983009808
    %v5579 = vunpack.c.0.s8 %v5578
    %v5580 = vlaneseq
    %v5581 = vshrl.u32 %v5580, 7
    %v5582 = vsub.s32 %v5579, %v5581
    %v5583 = vrot.slane %v5569, %v5582
    %v5584 = vcombine.high %v5576, %v5576
    %v5585 = vcombine.high %v5583, %v5583
    %v5586 = vcombine.high %v5226, %v5226
    %v5588 = vunpack.c.l.s4 1983009808
    %v5589 = vunpack.c.0.s8 %v5588
    %v5590 = vlaneseq
    %v5591 = vshrl.u32 %v5590, 7
    %v5592 = vsub.s32 %v5589, %v5591
    %v5593 = vrot.slane %v5226, %v5592
    %v5595 = vunpack.c.l.s4 1983009808
    %v5596 = vunpack.c.0.s8 %v5595
    %v5597 = vlaneseq
    %v5598 = vshrl.u32 %v5597, 7
    %v5599 = vsub.s32 %v5596, %v5598
    %v5600 = vrot.slane %v5586, %v5599
    %v5601 = vcombine.high %v5593, %v5593
    %v5602 = vcombine.high %v5600, %v5600
    %v5603 = vcombine.high %v5227, %v5227
    %v5605 = vunpack.c.l.s4 1983009808
    %v5606 = vunpack.c.0.s8 %v5605
    %v5607 = vlaneseq
    %v5608 = vshrl.u32 %v5607, 7
    %v5609 = vsub.s32 %v5606, %v5608
    %v5610 = vrot.slane %v5227, %v5609
    %v5612 = vunpack.c.l.s4 1983009808
    %v5613 = vunpack.c.0.s8 %v5612
    %v5614 = vlaneseq
    %v5615 = vshrl.u32 %v5614, 7
    %v5616 = vsub.s32 %v5613, %v5615
    %v5617 = vrot.slane %v5603, %v5616
    %v5618 = vcombine.high %v5610, %v5610
    %v5619 = vcombine.high %v5617, %v5617
    %v5620 = vcombine.high %v5228, %v5228
    %v5622 = vunpack.c.l.s4 1983009808
    %v5623 = vunpack.c.0.s8 %v5622
    %v5624 = vlaneseq
    %v5625 = vshrl.u32 %v5624, 7
    %v5626 = vsub.s32 %v5623, %v5625
    %v5627 = vrot.slane %v5228, %v5626
    %v5629 = vunpack.c.l.s4 1983009808
    %v5630 = vunpack.c.0.s8 %v5629
    %v5631 = vlaneseq
    %v5632 = vshrl.u32 %v5631, 7
    %v5633 = vsub.s32 %v5630, %v5632
    %v5634 = vrot.slane %v5620, %v5633
    %v5635 = vcombine.high %v5627, %v5627
    %v5636 = vcombine.high %v5634, %v5634
    %5653 = vmatprep.subr.mxu0 0.0
    %5654 = vmatpush1.msra.mxu0 %v5229
    %5655 = vmatprep.subr.mxu0 0.0
    %5656 = vmatpush1.msra.mxu0 %v5230
    %5657 = vmatprep.subr.mxu0 0.0
    %5658 = vmatpush1.msra.mxu0 %v5231
    %5659 = vmatprep.subr.mxu0 0.0
    %5660 = vmatpush1.msra.mxu0 %v5232
    %5661 = vmatprep.subr.mxu0 0.0
    %5662 = vmatpush1.msra.mxu0 %v5233
    %5663 = vmatprep.subr.mxu0 0.0
    %5664 = vmatpush1.msra.mxu0 %v5234
    %5665 = vmatprep.subr.mxu0 0.0
    %5666 = vmatpush1.msra.mxu0 %v5235
    %5667 = vmatprep.subr.mxu0 0.0
    %5668 = vmatpush1.msra.mxu0 %v5236
    %5669 = vmatprep.subr.mxu0 0.0
    %5670 = vmatpush1.msra.mxu0 %v5237
    %5671 = vmatprep.subr.mxu0 0.0
    %5672 = vmatpush1.msra.mxu0 %v5238
    %5673 = vmatprep.subr.mxu0 0.0
    %5674 = vmatpush1.msra.mxu0 %v5239
    %5675 = vmatprep.subr.mxu0 0.0
    %5676 = vmatpush1.msra.mxu0 %v5240
    %5677 = vmatprep.subr.mxu0 0.0
    %5678 = vmatpush1.msra.mxu0 %v5241
    %5679 = vmatprep.subr.mxu0 0.0
    %5680 = vmatpush1.msra.mxu0 %v5242
    %5681 = vmatprep.subr.mxu0 0.0
    %5682 = vmatpush1.msra.mxu0 %v5243
    %5683 = vmatprep.subr.mxu0 0.0
    %5684 = vmatpush1.msra.mxu0 %v5244
    %5685 = vmatprep.subr.mxu0 0.0
    %5686 = vmatpush1.msra.mxu0 %v5245
    %5687 = vmatprep.subr.mxu0 0.0
    %5688 = vmatpush1.msra.mxu0 %v5246
    %5689 = vmatprep.subr.mxu0 0.0
    %5690 = vmatpush1.msra.mxu0 %v5247
    %5691 = vmatprep.subr.mxu0 0.0
    %5692 = vmatpush1.msra.mxu0 %v5248
    %5693 = vmatprep.subr.mxu0 0.0
    %5694 = vmatpush1.msra.mxu0 %v5249
    %5695 = vmatprep.subr.mxu0 0.0
    %5696 = vmatpush1.msra.mxu0 %v5250
    %5697 = vmatprep.subr.mxu0 0.0
    %5698 = vmatpush1.msra.mxu0 %v5251
    %5699 = vmatprep.subr.mxu0 0.0
    %5700 = vmatpush1.msra.mxu0 %v5252
    %5701 = vmatprep.subr.mxu0 0.0
    %5702 = vmatpush1.msra.mxu0 %v5253
    %5703 = vmatprep.subr.mxu0 0.0
    %5704 = vmatpush1.msra.mxu0 %v5254
    %5705 = vmatprep.subr.mxu0 0.0
    %5706 = vmatpush1.msra.mxu0 %v5255
    %5707 = vmatprep.subr.mxu0 0.0
    %5708 = vmatpush1.msra.mxu0 %v5256
    %5709 = vmatprep.subr.mxu0 0.0
    %5710 = vmatpush1.msra.mxu0 %v5257
    %5711 = vmatprep.subr.mxu0 0.0
    %5712 = vmatpush1.msra.mxu0 %v5258
    %5713 = vmatprep.subr.mxu0 0.0
    %5714 = vmatpush1.msra.mxu0 %v5259
    %5715 = vmatprep.subr.mxu0 0.0
    %5716 = vmatpush1.msra.mxu0 %v5260
    %5717 = vmatprep.mubr.f32.mxu0 %v5584
    %5718 = vmatmul.mubr.f32.gmra.mrb[0].mxu0 %v5576
    %v5719 = vpop.f32.mrb[0].mxu0
    %v5720 = vadd.f32 %v5562, %v5719
    %v5721 = vpop.f32.mrb[0].mxu0
    %5722 = vdwg.mxu0
    %5723 = vmatprep.subr.mxu0 0.0
    %5724 = vmatpush1.msra.mxu0 %v5261
    %5725 = vmatprep.subr.mxu0 0.0
    %5726 = vmatpush1.msra.mxu0 %v5262
    %5727 = vmatprep.subr.mxu0 0.0
    %5728 = vmatpush1.msra.mxu0 %v5263
    %5729 = vmatprep.subr.mxu0 0.0
    %5730 = vmatpush1.msra.mxu0 %v5264
    %5731 = vmatprep.subr.mxu0 0.0
    %5732 = vmatpush1.msra.mxu0 %v5265
    %5733 = vmatprep.subr.mxu0 0.0
    %5734 = vmatpush1.msra.mxu0 %v5266
    %5735 = vmatprep.subr.mxu0 0.0
    %5736 = vmatpush1.msra.mxu0 %v5267
    %5737 = vmatprep.subr.mxu0 0.0
    %5738 = vmatpush1.msra.mxu0 %v5268
    %5739 = vmatprep.subr.mxu0 0.0
    %5740 = vmatpush1.msra.mxu0 %v5269
    %5741 = vmatprep.subr.mxu0 0.0
    %5742 = vmatpush1.msra.mxu0 %v5270
    %5743 = vmatprep.subr.mxu0 0.0
    %5744 = vmatpush1.msra.mxu0 %v5271
    %5745 = vmatprep.subr.mxu0 0.0
    %5746 = vmatpush1.msra.mxu0 %v5272
    %5747 = vmatprep.subr.mxu0 0.0
    %5748 = vmatpush1.msra.mxu0 %v5273
    %5749 = vmatprep.subr.mxu0 0.0
    %5750 = vmatpush1.msra.mxu0 %v5274
    %5751 = vmatprep.subr.mxu0 0.0
    %5752 = vmatpush1.msra.mxu0 %v5275
    %5753 = vmatprep.subr.mxu0 0.0
    %5754 = vmatpush1.msra.mxu0 %v5276
    %5755 = vmatprep.subr.mxu0 0.0
    %5756 = vmatpush1.msra.mxu0 %v5277
    %5757 = vmatprep.subr.mxu0 0.0
    %5758 = vmatpush1.msra.mxu0 %v5278
    %5759 = vmatprep.subr.mxu0 0.0
    %5760 = vmatpush1.msra.mxu0 %v5279
    %5761 = vmatprep.subr.mxu0 0.0
    %5762 = vmatpush1.msra.mxu0 %v5280
    %5763 = vmatprep.subr.mxu0 0.0
    %5764 = vmatpush1.msra.mxu0 %v5281
    %5765 = vmatprep.subr.mxu0 0.0
    %5766 = vmatpush1.msra.mxu0 %v5282
    %5767 = vmatprep.subr.mxu0 0.0
    %5768 = vmatpush1.msra.mxu0 %v5283
    %5769 = vmatprep.subr.mxu0 0.0
    %5770 = vmatpush1.msra.mxu0 %v5284
    %5771 = vmatprep.subr.mxu0 0.0
    %5772 = vmatpush1.msra.mxu0 %v5285
    %5773 = vmatprep.subr.mxu0 0.0
    %5774 = vmatpush1.msra.mxu0 %v5286
    %5775 = vmatprep.subr.mxu0 0.0
    %5776 = vmatpush1.msra.mxu0 %v5287
    %5777 = vmatprep.subr.mxu0 0.0
    %5778 = vmatpush1.msra.mxu0 %v5288
    %5779 = vmatprep.subr.mxu0 0.0
    %5780 = vmatpush1.msra.mxu0 %v5289
    %5781 = vmatprep.subr.mxu0 0.0
    %5782 = vmatpush1.msra.mxu0 %v5290
    %5783 = vmatprep.subr.mxu0 0.0
    %5784 = vmatpush1.msra.mxu0 %v5291
    %5785 = vmatprep.subr.mxu0 0.0
    %5786 = vmatpush1.msra.mxu0 %v5292
    %5787 = vmatprep.mubr.f32.mxu0 %v5585
    %5788 = vmatmul.mubr.f32.gmra.mrb[0].mxu0 %v5583
    %v5789 = vpop.f32.mrb[0].mxu0
    %v5790 = vadd.f32 %v5720, %v5789
    %v5791 = vpop.f32.mrb[0].mxu0
    %5792 = vdwg.mxu0
    %5793 = vmatprep.subr.mxu0 0.0
    %5794 = vmatpush1.msra.mxu0 %v5293
    %5795 = vmatprep.subr.mxu0 0.0
    %5796 = vmatpush1.msra.mxu0 %v5294
    %5797 = vmatprep.subr.mxu0 0.0
    %5798 = vmatpush1.msra.mxu0 %v5295
    %5799 = vmatprep.subr.mxu0 0.0
    %5800 = vmatpush1.msra.mxu0 %v5296
    %5801 = vmatprep.subr.mxu0 0.0
    %5802 = vmatpush1.msra.mxu0 %v5297
    %5803 = vmatprep.subr.mxu0 0.0
    %5804 = vmatpush1.msra.mxu0 %v5298
    %5805 = vmatprep.subr.mxu0 0.0
    %5806 = vmatpush1.msra.mxu0 %v5299
    %5807 = vmatprep.subr.mxu0 0.0
    %5808 = vmatpush1.msra.mxu0 %v5300
    %5809 = vmatprep.subr.mxu0 0.0
    %5810 = vmatpush1.msra.mxu0 %v5301
    %5811 = vmatprep.subr.mxu0 0.0
    %5812 = vmatpush1.msra.mxu0 %v5302
    %5813 = vmatprep.subr.mxu0 0.0
    %5814 = vmatpush1.msra.mxu0 %v5303
    %5815 = vmatprep.subr.mxu0 0.0
    %5816 = vmatpush1.msra.mxu0 %v5304
    %5817 = vmatprep.subr.mxu0 0.0
    %5818 = vmatpush1.msra.mxu0 %v5305
    %5819 = vmatprep.subr.mxu0 0.0
    %5820 = vmatpush1.msra.mxu0 %v5306
    %5821 = vmatprep.subr.mxu0 0.0
    %5822 = vmatpush1.msra.mxu0 %v5307
    %5823 = vmatprep.subr.mxu0 0.0
    %5824 = vmatpush1.msra.mxu0 %v5308
    %5825 = vmatprep.subr.mxu0 0.0
    %5826 = vmatpush1.msra.mxu0 %v5309
    %5827 = vmatprep.subr.mxu0 0.0
    %5828 = vmatpush1.msra.mxu0 %v5310
    %5829 = vmatprep.subr.mxu0 0.0
    %5830 = vmatpush1.msra.mxu0 %v5311
    %5831 = vmatprep.subr.mxu0 0.0
    %5832 = vmatpush1.msra.mxu0 %v5312
    %5833 = vmatprep.subr.mxu0 0.0
    %5834 = vmatpush1.msra.mxu0 %v5313
    %5835 = vmatprep.subr.mxu0 0.0
    %5836 = vmatpush1.msra.mxu0 %v5314
    %5837 = vmatprep.subr.mxu0 0.0
    %5838 = vmatpush1.msra.mxu0 %v5315
    %5839 = vmatprep.subr.mxu0 0.0
    %5840 = vmatpush1.msra.mxu0 %v5316
    %5841 = vmatprep.subr.mxu0 0.0
    %5842 = vmatpush1.msra.mxu0 %v5317
    %5843 = vmatprep.subr.mxu0 0.0
    %5844 = vmatpush1.msra.mxu0 %v5318
    %5845 = vmatprep.subr.mxu0 0.0
    %5846 = vmatpush1.msra.mxu0 %v5319
    %5847 = vmatprep.subr.mxu0 0.0
    %5848 = vmatpush1.msra.mxu0 %v5320
    %5849 = vmatprep.subr.mxu0 0.0
    %5850 = vmatpush1.msra.mxu0 %v5321
    %5851 = vmatprep.subr.mxu0 0.0
    %5852 = vmatpush1.msra.mxu0 %v5322
    %5853 = vmatprep.subr.mxu0 0.0
    %5854 = vmatpush1.msra.mxu0 %v5323
    %5855 = vmatprep.subr.mxu0 0.0
    %5856 = vmatpush1.msra.mxu0 %v5324
    %5857 = vmatprep.mubr.f32.mxu0 %v5601
    %5858 = vmatmul.mubr.f32.gmra.mrb[0].mxu0 %v5593
    %v5859 = vpop.f32.mrb[0].mxu0
    %v5860 = vadd.f32 %v5790, %v5859
    %v5861 = vpop.f32.mrb[0].mxu0
    %5862 = vdwg.mxu0
    %5863 = vmatprep.subr.mxu0 0.0
    %5864 = vmatpush1.msra.mxu0 %v5325
    %5865 = vmatprep.subr.mxu0 0.0
    %5866 = vmatpush1.msra.mxu0 %v5326
    %5867 = vmatprep.subr.mxu0 0.0
    %5868 = vmatpush1.msra.mxu0 %v5327
    %5869 = vmatprep.subr.mxu0 0.0
    %5870 = vmatpush1.msra.mxu0 %v5328
    %5871 = vmatprep.subr.mxu0 0.0
    %5872 = vmatpush1.msra.mxu0 %v5329
    %5873 = vmatprep.subr.mxu0 0.0
    %5874 = vmatpush1.msra.mxu0 %v5330
    %5875 = vmatprep.subr.mxu0 0.0
    %5876 = vmatpush1.msra.mxu0 %v5331
    %5877 = vmatprep.subr.mxu0 0.0
    %5878 = vmatpush1.msra.mxu0 %v5332
    %5879 = vmatprep.subr.mxu0 0.0
    %5880 = vmatpush1.msra.mxu0 %v5333
    %5881 = vmatprep.subr.mxu0 0.0
    %5882 = vmatpush1.msra.mxu0 %v5334
    %5883 = vmatprep.subr.mxu0 0.0
    %5884 = vmatpush1.msra.mxu0 %v5335
    %5885 = vmatprep.subr.mxu0 0.0
    %5886 = vmatpush1.msra.mxu0 %v5336
    %5887 = vmatprep.subr.mxu0 0.0
    %5888 = vmatpush1.msra.mxu0 %v5337
    %5889 = vmatprep.subr.mxu0 0.0
    %5890 = vmatpush1.msra.mxu0 %v5338
    %5891 = vmatprep.subr.mxu0 0.0
    %5892 = vmatpush1.msra.mxu0 %v5339
    %5893 = vmatprep.subr.mxu0 0.0
    %5894 = vmatpush1.msra.mxu0 %v5340
    %5895 = vmatprep.subr.mxu0 0.0
    %5896 = vmatpush1.msra.mxu0 %v5341
    %5897 = vmatprep.subr.mxu0 0.0
    %5898 = vmatpush1.msra.mxu0 %v5342
    %5899 = vmatprep.subr.mxu0 0.0
    %5900 = vmatpush1.msra.mxu0 %v5343
    %5901 = vmatprep.subr.mxu0 0.0
    %5902 = vmatpush1.msra.mxu0 %v5344
    %5903 = vmatprep.subr.mxu0 0.0
    %5904 = vmatpush1.msra.mxu0 %v5345
    %5905 = vmatprep.subr.mxu0 0.0
    %5906 = vmatpush1.msra.mxu0 %v5346
    %5907 = vmatprep.subr.mxu0 0.0
    %5908 = vmatpush1.msra.mxu0 %v5347
    %5909 = vmatprep.subr.mxu0 0.0
    %5910 = vmatpush1.msra.mxu0 %v5348
    %5911 = vmatprep.subr.mxu0 0.0
    %5912 = vmatpush1.msra.mxu0 %v5349
    %5913 = vmatprep.subr.mxu0 0.0
    %5914 = vmatpush1.msra.mxu0 %v5350
    %5915 = vmatprep.subr.mxu0 0.0
    %5916 = vmatpush1.msra.mxu0 %v5351
    %5917 = vmatprep.subr.mxu0 0.0
    %5918 = vmatpush1.msra.mxu0 %v5352
    %5919 = vmatprep.subr.mxu0 0.0
    %5920 = vmatpush1.msra.mxu0 %v5353
    %5921 = vmatprep.subr.mxu0 0.0
    %5922 = vmatpush1.msra.mxu0 %v5354
    %5923 = vmatprep.subr.mxu0 0.0
    %5924 = vmatpush1.msra.mxu0 %v5355
    %5925 = vmatprep.subr.mxu0 0.0
    %5926 = vmatpush1.msra.mxu0 %v5356
    %5927 = vmatprep.mubr.f32.mxu0 %v5602
    %5928 = vmatmul.mubr.f32.gmra.mrb[0].mxu0 %v5600
    %v5929 = vpop.f32.mrb[0].mxu0
    %v5930 = vadd.f32 %v5860, %v5929
    %v5931 = vpop.f32.mrb[0].mxu0
    %5932 = vdwg.mxu0
    %5933 = vmatprep.subr.mxu0 0.0
    %5934 = vmatpush1.msra.mxu0 %v5357
    %5935 = vmatprep.subr.mxu0 0.0
    %5936 = vmatpush1.msra.mxu0 %v5358
    %5937 = vmatprep.subr.mxu0 0.0
    %5938 = vmatpush1.msra.mxu0 %v5359
    %5939 = vmatprep.subr.mxu0 0.0
    %5940 = vmatpush1.msra.mxu0 %v5360
    %5941 = vmatprep.subr.mxu0 0.0
    %5942 = vmatpush1.msra.mxu0 %v5361
    %5943 = vmatprep.subr.mxu0 0.0
    %5944 = vmatpush1.msra.mxu0 %v5362
    %5945 = vmatprep.subr.mxu0 0.0
    %5946 = vmatpush1.msra.mxu0 %v5363
    %5947 = vmatprep.subr.mxu0 0.0
    %5948 = vmatpush1.msra.mxu0 %v5364
    %5949 = vmatprep.subr.mxu0 0.0
    %5950 = vmatpush1.msra.mxu0 %v5365
    %5951 = vmatprep.subr.mxu0 0.0
    %5952 = vmatpush1.msra.mxu0 %v5366
    %5953 = vmatprep.subr.mxu0 0.0
    %5954 = vmatpush1.msra.mxu0 %v5367
    %5955 = vmatprep.subr.mxu0 0.0
    %5956 = vmatpush1.msra.mxu0 %v5368
    %5957 = vmatprep.subr.mxu0 0.0
    %5958 = vmatpush1.msra.mxu0 %v5369
    %5959 = vmatprep.subr.mxu0 0.0
    %5960 = vmatpush1.msra.mxu0 %v5370
    %5961 = vmatprep.subr.mxu0 0.0
    %5962 = vmatpush1.msra.mxu0 %v5371
    %5963 = vmatprep.subr.mxu0 0.0
    %5964 = vmatpush1.msra.mxu0 %v5372
    %5965 = vmatprep.subr.mxu0 0.0
    %5966 = vmatpush1.msra.mxu0 %v5373
    %5967 = vmatprep.subr.mxu0 0.0
    %5968 = vmatpush1.msra.mxu0 %v5374
    %5969 = vmatprep.subr.mxu0 0.0
    %5970 = vmatpush1.msra.mxu0 %v5375
    %5971 = vmatprep.subr.mxu0 0.0
    %5972 = vmatpush1.msra.mxu0 %v5376
    %5973 = vmatprep.subr.mxu0 0.0
    %5974 = vmatpush1.msra.mxu0 %v5377
    %5975 = vmatprep.subr.mxu0 0.0
    %5976 = vmatpush1.msra.mxu0 %v5378
    %5977 = vmatprep.subr.mxu0 0.0
    %5978 = vmatpush1.msra.mxu0 %v5379
    %5979 = vmatprep.subr.mxu0 0.0
    %5980 = vmatpush1.msra.mxu0 %v5380
    %5981 = vmatprep.subr.mxu0 0.0
    %5982 = vmatpush1.msra.mxu0 %v5381
    %5983 = vmatprep.subr.mxu0 0.0
    %5984 = vmatpush1.msra.mxu0 %v5382
    %5985 = vmatprep.subr.mxu0 0.0
    %5986 = vmatpush1.msra.mxu0 %v5383
    %5987 = vmatprep.subr.mxu0 0.0
    %5988 = vmatpush1.msra.mxu0 %v5384
    %5989 = vmatprep.subr.mxu0 0.0
    %5990 = vmatpush1.msra.mxu0 %v5385
    %5991 = vmatprep.subr.mxu0 0.0
    %5992 = vmatpush1.msra.mxu0 %v5386
    %5993 = vmatprep.subr.mxu0 0.0
    %5994 = vmatpush1.msra.mxu0 %v5387
    %5995 = vmatprep.subr.mxu0 0.0
    %5996 = vmatpush1.msra.mxu0 %v5388
    %5997 = vmatprep.mubr.f32.mxu0 %v5618
    %5998 = vmatmul.mubr.f32.gmra.mrb[0].mxu0 %v5610
    %v5999 = vpop.f32.mrb[0].mxu0
    %v6000 = vadd.f32 %v5930, %v5999
    %v6001 = vpop.f32.mrb[0].mxu0
    %6002 = vdwg.mxu0
    %6003 = vmatprep.subr.mxu0 0.0
    %6004 = vmatpush1.msra.mxu0 %v5389
    %6005 = vmatprep.subr.mxu0 0.0
    %6006 = vmatpush1.msra.mxu0 %v5390
    %6007 = vmatprep.subr.mxu0 0.0
    %6008 = vmatpush1.msra.mxu0 %v5391
    %6009 = vmatprep.subr.mxu0 0.0
    %6010 = vmatpush1.msra.mxu0 %v5392
    %6011 = vmatprep.subr.mxu0 0.0
    %6012 = vmatpush1.msra.mxu0 %v5393
    %6013 = vmatprep.subr.mxu0 0.0
    %6014 = vmatpush1.msra.mxu0 %v5394
    %6015 = vmatprep.subr.mxu0 0.0
    %6016 = vmatpush1.msra.mxu0 %v5395
    %6017 = vmatprep.subr.mxu0 0.0
    %6018 = vmatpush1.msra.mxu0 %v5396
    %6019 = vmatprep.subr.mxu0 0.0
    %6020 = vmatpush1.msra.mxu0 %v5397
    %6021 = vmatprep.subr.mxu0 0.0
    %6022 = vmatpush1.msra.mxu0 %v5398
    %6023 = vmatprep.subr.mxu0 0.0
    %6024 = vmatpush1.msra.mxu0 %v5399
    %6025 = vmatprep.subr.mxu0 0.0
    %6026 = vmatpush1.msra.mxu0 %v5400
    %6027 = vmatprep.subr.mxu0 0.0
    %6028 = vmatpush1.msra.mxu0 %v5401
    %6029 = vmatprep.subr.mxu0 0.0
    %6030 = vmatpush1.msra.mxu0 %v5402
    %6031 = vmatprep.subr.mxu0 0.0
    %6032 = vmatpush1.msra.mxu0 %v5403
    %6033 = vmatprep.subr.mxu0 0.0
    %6034 = vmatpush1.msra.mxu0 %v5404
    %6035 = vmatprep.subr.mxu0 0.0
    %6036 = vmatpush1.msra.mxu0 %v5405
    %6037 = vmatprep.subr.mxu0 0.0
    %6038 = vmatpush1.msra.mxu0 %v5406
    %6039 = vmatprep.subr.mxu0 0.0
    %6040 = vmatpush1.msra.mxu0 %v5407
    %6041 = vmatprep.subr.mxu0 0.0
    %6042 = vmatpush1.msra.mxu0 %v5408
    %6043 = vmatprep.subr.mxu0 0.0
    %6044 = vmatpush1.msra.mxu0 %v5409
    %6045 = vmatprep.subr.mxu0 0.0
    %6046 = vmatpush1.msra.mxu0 %v5410
    %6047 = vmatprep.subr.mxu0 0.0
    %6048 = vmatpush1.msra.mxu0 %v5411
    %6049 = vmatprep.subr.mxu0 0.0
    %6050 = vmatpush1.msra.mxu0 %v5412
    %6051 = vmatprep.subr.mxu0 0.0
    %6052 = vmatpush1.msra.mxu0 %v5413
    %6053 = vmatprep.subr.mxu0 0.0
    %6054 = vmatpush1.msra.mxu0 %v5414
    %6055 = vmatprep.subr.mxu0 0.0
    %6056 = vmatpush1.msra.mxu0 %v5415
    %6057 = vmatprep.subr.mxu0 0.0
    %6058 = vmatpush1.msra.mxu0 %v5416
    %6059 = vmatprep.subr.mxu0 0.0
    %6060 = vmatpush1.msra.mxu0 %v5417
    %6061 = vmatprep.subr.mxu0 0.0
    %6062 = vmatpush1.msra.mxu0 %v5418
    %6063 = vmatprep.subr.mxu0 0.0
    %6064 = vmatpush1.msra.mxu0 %v5419
    %6065 = vmatprep.subr.mxu0 0.0
    %6066 = vmatpush1.msra.mxu0 %v5420
    %6067 = vmatprep.mubr.f32.mxu0 %v5619
    %6068 = vmatmul.mubr.f32.gmra.mrb[0].mxu0 %v5617
    %v6069 = vpop.f32.mrb[0].mxu0
    %v6070 = vadd.f32 %v6000, %v6069
    %v6071 = vpop.f32.mrb[0].mxu0
    %6072 = vdwg.mxu0
    %6073 = vmatprep.subr.mxu0 0.0
    %6074 = vmatpush1.msra.mxu0 %v5421
    %6075 = vmatprep.subr.mxu0 0.0
    %6076 = vmatpush1.msra.mxu0 %v5422
    %6077 = vmatprep.subr.mxu0 0.0
    %6078 = vmatpush1.msra.mxu0 %v5423
    %6079 = vmatprep.subr.mxu0 0.0
    %6080 = vmatpush1.msra.mxu0 %v5424
    %6081 = vmatprep.subr.mxu0 0.0
    %6082 = vmatpush1.msra.mxu0 %v5425
    %6083 = vmatprep.subr.mxu0 0.0
    %6084 = vmatpush1.msra.mxu0 %v5426
    %6085 = vmatprep.subr.mxu0 0.0
    %6086 = vmatpush1.msra.mxu0 %v5427
    %6087 = vmatprep.subr.mxu0 0.0
    %6088 = vmatpush1.msra.mxu0 %v5428
    %6089 = vmatprep.subr.mxu0 0.0
    %6090 = vmatpush1.msra.mxu0 %v5429
    %6091 = vmatprep.subr.mxu0 0.0
    %6092 = vmatpush1.msra.mxu0 %v5430
    %6093 = vmatprep.subr.mxu0 0.0
    %6094 = vmatpush1.msra.mxu0 %v5431
    %6095 = vmatprep.subr.mxu0 0.0
    %6096 = vmatpush1.msra.mxu0 %v5432
    %6097 = vmatprep.subr.mxu0 0.0
    %6098 = vmatpush1.msra.mxu0 %v5433
    %6099 = vmatprep.subr.mxu0 0.0
    %6100 = vmatpush1.msra.mxu0 %v5434
    %6101 = vmatprep.subr.mxu0 0.0
    %6102 = vmatpush1.msra.mxu0 %v5435
    %6103 = vmatprep.subr.mxu0 0.0
    %6104 = vmatpush1.msra.mxu0 %v5436
    %6105 = vmatprep.subr.mxu0 0.0
    %6106 = vmatpush1.msra.mxu0 %v5437
    %6107 = vmatprep.subr.mxu0 0.0
    %6108 = vmatpush1.msra.mxu0 %v5438
    %6109 = vmatprep.subr.mxu0 0.0
    %6110 = vmatpush1.msra.mxu0 %v5439
    %6111 = vmatprep.subr.mxu0 0.0
    %6112 = vmatpush1.msra.mxu0 %v5440
    %6113 = vmatprep.subr.mxu0 0.0
    %6114 = vmatpush1.msra.mxu0 %v5441
    %6115 = vmatprep.subr.mxu0 0.0
    %6116 = vmatpush1.msra.mxu0 %v5442
    %6117 = vmatprep.subr.mxu0 0.0
    %6118 = vmatpush1.msra.mxu0 %v5443
    %6119 = vmatprep.subr.mxu0 0.0
    %6120 = vmatpush1.msra.mxu0 %v5444
    %6121 = vmatprep.subr.mxu0 0.0
    %6122 = vmatpush1.msra.mxu0 %v5445
    %6123 = vmatprep.subr.mxu0 0.0
    %6124 = vmatpush1.msra.mxu0 %v5446
    %6125 = vmatprep.subr.mxu0 0.0
    %6126 = vmatpush1.msra.mxu0 %v5447
    %6127 = vmatprep.subr.mxu0 0.0
    %6128 = vmatpush1.msra.mxu0 %v5448
    %6129 = vmatprep.subr.mxu0 0.0
    %6130 = vmatpush1.msra.mxu0 %v5449
    %6131 = vmatprep.subr.mxu0 0.0
    %6132 = vmatpush1.msra.mxu0 %v5450
    %6133 = vmatprep.subr.mxu0 0.0
    %6134 = vmatpush1.msra.mxu0 %v5451
    %6135 = vmatprep.subr.mxu0 0.0
    %6136 = vmatpush1.msra.mxu0 %v5452
    %6137 = vmatprep.mubr.f32.mxu0 %v5635
    %6138 = vmatmul.mubr.f32.gmra.mrb[0].mxu0 %v5627
    %v6139 = vpop.f32.mrb[0].mxu0
    %v6140 = vadd.f32 %v6070, %v6139
    %v6141 = vpop.f32.mrb[0].mxu0
    %6142 = vdwg.mxu0
    %6143 = vmatprep.subr.mxu0 0.0
    %6144 = vmatpush1.msra.mxu0 %v5453
    %6145 = vmatprep.subr.mxu0 0.0
    %6146 = vmatpush1.msra.mxu0 %v5454
    %6147 = vmatprep.subr.mxu0 0.0
    %6148 = vmatpush1.msra.mxu0 %v5455
    %6149 = vmatprep.subr.mxu0 0.0
    %6150 = vmatpush1.msra.mxu0 %v5456
    %6151 = vmatprep.subr.mxu0 0.0
    %6152 = vmatpush1.msra.mxu0 %v5457
    %6153 = vmatprep.subr.mxu0 0.0
    %6154 = vmatpush1.msra.mxu0 %v5458
    %6155 = vmatprep.subr.mxu0 0.0
    %6156 = vmatpush1.msra.mxu0 %v5459
    %6157 = vmatprep.subr.mxu0 0.0
    %6158 = vmatpush1.msra.mxu0 %v5460
    %6159 = vmatprep.subr.mxu0 0.0
    %6160 = vmatpush1.msra.mxu0 %v5461
    %6161 = vmatprep.subr.mxu0 0.0
    %6162 = vmatpush1.msra.mxu0 %v5462
    %6163 = vmatprep.subr.mxu0 0.0
    %6164 = vmatpush1.msra.mxu0 %v5463
    %6165 = vmatprep.subr.mxu0 0.0
    %6166 = vmatpush1.msra.mxu0 %v5464
    %6167 = vmatprep.subr.mxu0 0.0
    %6168 = vmatpush1.msra.mxu0 %v5465
    %6169 = vmatprep.subr.mxu0 0.0
    %6170 = vmatpush1.msra.mxu0 %v5466
    %6171 = vmatprep.subr.mxu0 0.0
    %6172 = vmatpush1.msra.mxu0 %v5467
    %6173 = vmatprep.subr.mxu0 0.0
    %6174 = vmatpush1.msra.mxu0 %v5468
    %6175 = vmatprep.subr.mxu0 0.0
    %6176 = vmatpush1.msra.mxu0 %v5469
    %6177 = vmatprep.subr.mxu0 0.0
    %6178 = vmatpush1.msra.mxu0 %v5470
    %6179 = vmatprep.subr.mxu0 0.0
    %6180 = vmatpush1.msra.mxu0 %v5471
    %6181 = vmatprep.subr.mxu0 0.0
    %6182 = vmatpush1.msra.mxu0 %v5472
    %6183 = vmatprep.subr.mxu0 0.0
    %6184 = vmatpush1.msra.mxu0 %v5473
    %6185 = vmatprep.subr.mxu0 0.0
    %6186 = vmatpush1.msra.mxu0 %v5474
    %6187 = vmatprep.subr.mxu0 0.0
    %6188 = vmatpush1.msra.mxu0 %v5475
    %6189 = vmatprep.subr.mxu0 0.0
    %6190 = vmatpush1.msra.mxu0 %v5476
    %6191 = vmatprep.subr.mxu0 0.0
    %6192 = vmatpush1.msra.mxu0 %v5477
    %6193 = vmatprep.subr.mxu0 0.0
    %6194 = vmatpush1.msra.mxu0 %v5478
    %6195 = vmatprep.subr.mxu0 0.0
    %6196 = vmatpush1.msra.mxu0 %v5479
    %6197 = vmatprep.subr.mxu0 0.0
    %6198 = vmatpush1.msra.mxu0 %v5480
    %6199 = vmatprep.subr.mxu0 0.0
    %6200 = vmatpush1.msra.mxu0 %v5481
    %6201 = vmatprep.subr.mxu0 0.0
    %6202 = vmatpush1.msra.mxu0 %v5482
    %6203 = vmatprep.subr.mxu0 0.0
    %6204 = vmatpush1.msra.mxu0 %v5483
    %6205 = vmatprep.subr.mxu0 0.0
    %6206 = vmatpush1.msra.mxu0 %v5484
    %6207 = vmatprep.mubr.f32.mxu0 %v5636
    %6208 = vmatmul.mubr.f32.gmra.mrb[0].mxu0 %v5634
    %v6209 = vpop.f32.mrb[0].mxu0
    %v6210 = vadd.f32 %v6140, %v6209
    %v6211 = vpop.f32.mrb[0].mxu0
    %6212 = vdwg.mxu0
    %v6213 = vld [vmem:[%s6] sm:$0x3]
    %v6214 = vld [vmem:[%s9] sm:$0x3]
    %vm6215 = vcmask 15360
    %v6217 = vsel %vm6215, %v6213, 0
    %vm6219 = vcmask 1041408
    %v6221 = vsel %vm6219, %v6214, 0
    %6223 = vmatprep.subr.mxu0 0.0
    %6224 = vmatpush1.msra.mxu0 %v6221
    %6225 = vmatprep.subr.mxu0 0.0
    %6226 = vmatpush1.msra.mxu0 0.0
    %6227 = vmatprep.subr.mxu0 0.0
    %6228 = vmatpush1.msra.mxu0 0.0
    %6229 = vmatprep.subr.mxu0 0.0
    %6230 = vmatpush1.msra.mxu0 0.0
    %6231 = vmatprep.subr.mxu0 0.0
    %6232 = vmatpush1.msra.mxu0 0.0
    %6233 = vmatprep.subr.mxu0 0.0
    %6234 = vmatpush1.msra.mxu0 0.0
    %6235 = vmatprep.subr.mxu0 0.0
    %6236 = vmatpush1.msra.mxu0 0.0
    %6237 = vmatprep.subr.mxu0 0.0
    %6238 = vmatpush1.msra.mxu0 0.0
    %6239 = vmatprep.subr.mxu0 0.0
    %6240 = vmatpush1.msra.mxu0 0.0
    %6241 = vmatprep.subr.mxu0 0.0
    %6242 = vmatpush1.msra.mxu0 0.0
    %6243 = vmatprep.subr.mxu0 0.0
    %6244 = vmatpush1.msra.mxu0 0.0
    %6245 = vmatprep.subr.mxu0 0.0
    %6246 = vmatpush1.msra.mxu0 0.0
    %6247 = vmatprep.subr.mxu0 0.0
    %6248 = vmatpush1.msra.mxu0 0.0
    %6249 = vmatprep.subr.mxu0 0.0
    %6250 = vmatpush1.msra.mxu0 0.0
    %6251 = vmatprep.subr.mxu0 0.0
    %6252 = vmatpush1.msra.mxu0 0.0
    %6253 = vmatprep.subr.mxu0 0.0
    %6254 = vmatpush1.msra.mxu0 0.0
    %6255 = vmatprep.subr.mxu0 0.0
    %6256 = vmatpush1.msra.mxu0 0.0
    %6257 = vmatprep.subr.mxu0 0.0
    %6258 = vmatpush1.msra.mxu0 0.0
    %6259 = vmatprep.subr.mxu0 0.0
    %6260 = vmatpush1.msra.mxu0 0.0
    %6261 = vmatprep.subr.mxu0 0.0
    %6262 = vmatpush1.msra.mxu0 0.0
    %6263 = vmatprep.subr.mxu0 0.0
    %6264 = vmatpush1.msra.mxu0 0.0
    %6265 = vmatprep.subr.mxu0 0.0
    %6266 = vmatpush1.msra.mxu0 0.0
    %6267 = vmatprep.subr.mxu0 0.0
    %6268 = vmatpush1.msra.mxu0 0.0
    %6269 = vmatprep.subr.mxu0 0.0
    %6270 = vmatpush1.msra.mxu0 0.0
    %6271 = vmatprep.subr.mxu0 0.0
    %6272 = vmatpush1.msra.mxu0 0.0
    %6273 = vmatprep.subr.mxu0 0.0
    %6274 = vmatpush1.msra.mxu0 0.0
    %6275 = vmatprep.subr.mxu0 0.0
    %6276 = vmatpush1.msra.mxu0 0.0
    %6277 = vmatprep.subr.mxu0 0.0
    %6278 = vmatpush1.msra.mxu0 0.0
    %6279 = vmatprep.subr.mxu0 0.0
    %6280 = vmatpush1.msra.mxu0 0.0
    %6281 = vmatprep.subr.mxu0 0.0
    %6282 = vmatpush1.msra.mxu0 0.0
    %6283 = vmatprep.subr.mxu0 0.0
    %6284 = vmatpush1.msra.mxu0 0.0
    %6285 = vmatprep.subr.mxu0 0.0
    %6286 = vmatpush1.msra.mxu0 0.0
    %6287 = vmatprep.mubr.f32.mxu0 0.0
    %6288 = vmatmul.mubr.f32.gmra.mrb[0].mxu0 %v6217
    %v6289 = vpop.f32.mrb[0].mxu0
    %v6290 = vadd.f32 0.0, %v6289
    %v6291 = vpop.f32.mrb[0].mxu0
    %6292 = vdwg.mxu0
    %v6293 = vadd.f32 %v6210, %v6290
    %v6294 = vld [vmem:[%s10] sm:$0x1]
    %v6296 = vlaneseq
    %v6297 = vshrl.u32 %v6296, 7
    %v6298 = vsub.s32 0, %v6297
    %v6299 = vrot.slane %v6294, %v6298
    %v6301 = vadd.f32 %v6293, %v6299
    %v6302 = vmul.f32 %v6301, 0.01
    %v6303 = vmax.f32 %v6301, %v6302
    %v6304 = vld [vmem:[%s11] sm:$0xff]
    %v6305 = vld [vmem:[%s11 + $0x8] sm:$0xff]
    %v6306 = vld [vmem:[%s11 + $0x10] sm:$0xff]
    %v6307 = vld [vmem:[%s11 + $0x18] sm:$0xff]
    %v6308 = vld [vmem:[%s12] sm:$0x1]
    %v6310 = vlaneseq
    %v6311 = vshrl.u32 %v6310, 7
    %v6312 = vsub.s32 0, %v6311
    %v6313 = vrot.slane %v6308, %v6312
    %vm6315 = vcmask 261120
    %v6317 = vsel %vm6315, %v6303, 0
    %6319 = vmatprep.subr.mxu0 0.0
    %6320 = vmatpush1.msra.mxu0 %v6304
    %6321 = vmatprep.subr.mxu0 0.0
    %6322 = vmatpush1.msra.mxu0 %v6305
    %6323 = vmatprep.subr.mxu0 0.0
    %6324 = vmatpush1.msra.mxu0 %v6306
    %6325 = vmatprep.subr.mxu0 0.0
    %6326 = vmatpush1.msra.mxu0 %v6307
    %6327 = vmatprep.subr.mxu0 0.0
    %6328 = vmatpush1.msra.mxu0 0.0
    %6329 = vmatprep.subr.mxu0 0.0
    %6330 = vmatpush1.msra.mxu0 0.0
    %6331 = vmatprep.subr.mxu0 0.0
    %6332 = vmatpush1.msra.mxu0 0.0
    %6333 = vmatprep.subr.mxu0 0.0
    %6334 = vmatpush1.msra.mxu0 0.0
    %6335 = vmatprep.subr.mxu0 0.0
    %6336 = vmatpush1.msra.mxu0 0.0
    %6337 = vmatprep.subr.mxu0 0.0
    %6338 = vmatpush1.msra.mxu0 0.0
    %6339 = vmatprep.subr.mxu0 0.0
    %6340 = vmatpush1.msra.mxu0 0.0
    %6341 = vmatprep.subr.mxu0 0.0
    %6342 = vmatpush1.msra.mxu0 0.0
    %6343 = vmatprep.subr.mxu0 0.0
    %6344 = vmatpush1.msra.mxu0 0.0
    %6345 = vmatprep.subr.mxu0 0.0
    %6346 = vmatpush1.msra.mxu0 0.0
    %6347 = vmatprep.subr.mxu0 0.0
    %6348 = vmatpush1.msra.mxu0 0.0
    %6349 = vmatprep.subr.mxu0 0.0
    %6350 = vmatpush1.msra.mxu0 0.0
    %6351 = vmatprep.subr.mxu0 0.0
    %6352 = vmatpush1.msra.mxu0 0.0
    %6353 = vmatprep.subr.mxu0 0.0
    %6354 = vmatpush1.msra.mxu0 0.0
    %6355 = vmatprep.subr.mxu0 0.0
    %6356 = vmatpush1.msra.mxu0 0.0
    %6357 = vmatprep.subr.mxu0 0.0
    %6358 = vmatpush1.msra.mxu0 0.0
    %6359 = vmatprep.subr.mxu0 0.0
    %6360 = vmatpush1.msra.mxu0 0.0
    %6361 = vmatprep.subr.mxu0 0.0
    %6362 = vmatpush1.msra.mxu0 0.0
    %6363 = vmatprep.subr.mxu0 0.0
    %6364 = vmatpush1.msra.mxu0 0.0
    %6365 = vmatprep.subr.mxu0 0.0
    %6366 = vmatpush1.msra.mxu0 0.0
    %6367 = vmatprep.subr.mxu0 0.0
    %6368 = vmatpush1.msra.mxu0 0.0
    %6369 = vmatprep.subr.mxu0 0.0
    %6370 = vmatpush1.msra.mxu0 0.0
    %6371 = vmatprep.subr.mxu0 0.0
    %6372 = vmatpush1.msra.mxu0 0.0
    %6373 = vmatprep.subr.mxu0 0.0
    %6374 = vmatpush1.msra.mxu0 0.0
    %6375 = vmatprep.subr.mxu0 0.0
    %6376 = vmatpush1.msra.mxu0 0.0
    %6377 = vmatprep.subr.mxu0 0.0
    %6378 = vmatpush1.msra.mxu0 0.0
    %6379 = vmatprep.subr.mxu0 0.0
    %6380 = vmatpush1.msra.mxu0 0.0
    %6381 = vmatprep.subr.mxu0 0.0
    %6382 = vmatpush1.msra.mxu0 0.0
    %6383 = vmatprep.mubr.f32.mxu0 0.0
    %6384 = vmatmul.mubr.f32.gmra.mrb[0].mxu0 %v6317
    %v6385 = vpop.f32.mrb[0].mxu0
    %v6386 = vadd.f32 %v6313, %v6385
    %v6387 = vpop.f32.mrb[0].mxu0
    %6388 = vdwg.mxu0
    %v6389 = vmul.f32 %v6386, 0.01
    %v6390 = vmax.f32 %v6386, %v6389
    %v6391 = vld [vmem:[%s13] sm:$0xff]
    %v6392 = vld [vmem:[%s13 + $0x8] sm:$0xff]
    %v6393 = vld [vmem:[%s13 + $0x10] sm:$0xff]
    %v6394 = vld [vmem:[%s13 + $0x18] sm:$0xff]
    %v6395 = vld [vmem:[%s14] sm:$0x1]
    %v6397 = vlaneseq
    %v6398 = vshrl.u32 %v6397, 7
    %v6399 = vsub.s32 0, %v6398
    %v6400 = vrot.slane %v6395, %v6399
    %v6403 = vsel %vm6315, %v6390, 0
    %6405 = vmatprep.subr.mxu0 0.0
    %6406 = vmatpush1.msra.mxu0 %v6391
    %6407 = vmatprep.subr.mxu0 0.0
    %6408 = vmatpush1.msra.mxu0 %v6392
    %6409 = vmatprep.subr.mxu0 0.0
    %6410 = vmatpush1.msra.mxu0 %v6393
    %6411 = vmatprep.subr.mxu0 0.0
    %6412 = vmatpush1.msra.mxu0 %v6394
    %6413 = vmatprep.subr.mxu0 0.0
    %6414 = vmatpush1.msra.mxu0 0.0
    %6415 = vmatprep.subr.mxu0 0.0
    %6416 = vmatpush1.msra.mxu0 0.0
    %6417 = vmatprep.subr.mxu0 0.0
    %6418 = vmatpush1.msra.mxu0 0.0
    %6419 = vmatprep.subr.mxu0 0.0
    %6420 = vmatpush1.msra.mxu0 0.0
    %6421 = vmatprep.subr.mxu0 0.0
    %6422 = vmatpush1.msra.mxu0 0.0
    %6423 = vmatprep.subr.mxu0 0.0
    %6424 = vmatpush1.msra.mxu0 0.0
    %6425 = vmatprep.subr.mxu0 0.0
    %6426 = vmatpush1.msra.mxu0 0.0
    %6427 = vmatprep.subr.mxu0 0.0
    %6428 = vmatpush1.msra.mxu0 0.0
    %6429 = vmatprep.subr.mxu0 0.0
    %6430 = vmatpush1.msra.mxu0 0.0
    %6431 = vmatprep.subr.mxu0 0.0
    %6432 = vmatpush1.msra.mxu0 0.0
    %6433 = vmatprep.subr.mxu0 0.0
    %6434 = vmatpush1.msra.mxu0 0.0
    %6435 = vmatprep.subr.mxu0 0.0
    %6436 = vmatpush1.msra.mxu0 0.0
    %6437 = vmatprep.subr.mxu0 0.0
    %6438 = vmatpush1.msra.mxu0 0.0
    %6439 = vmatprep.subr.mxu0 0.0
    %6440 = vmatpush1.msra.mxu0 0.0
    %6441 = vmatprep.subr.mxu0 0.0
    %6442 = vmatpush1.msra.mxu0 0.0
    %6443 = vmatprep.subr.mxu0 0.0
    %6444 = vmatpush1.msra.mxu0 0.0
    %6445 = vmatprep.subr.mxu0 0.0
    %6446 = vmatpush1.msra.mxu0 0.0
    %6447 = vmatprep.subr.mxu0 0.0
    %6448 = vmatpush1.msra.mxu0 0.0
    %6449 = vmatprep.subr.mxu0 0.0
    %6450 = vmatpush1.msra.mxu0 0.0
    %6451 = vmatprep.subr.mxu0 0.0
    %6452 = vmatpush1.msra.mxu0 0.0
    %6453 = vmatprep.subr.mxu0 0.0
    %6454 = vmatpush1.msra.mxu0 0.0
    %6455 = vmatprep.subr.mxu0 0.0
    %6456 = vmatpush1.msra.mxu0 0.0
    %6457 = vmatprep.subr.mxu0 0.0
    %6458 = vmatpush1.msra.mxu0 0.0
    %6459 = vmatprep.subr.mxu0 0.0
    %6460 = vmatpush1.msra.mxu0 0.0
    %6461 = vmatprep.subr.mxu0 0.0
    %6462 = vmatpush1.msra.mxu0 0.0
    %6463 = vmatprep.subr.mxu0 0.0
    %6464 = vmatpush1.msra.mxu0 0.0
    %6465 = vmatprep.subr.mxu0 0.0
    %6466 = vmatpush1.msra.mxu0 0.0
    %6467 = vmatprep.subr.mxu0 0.0
    %6468 = vmatpush1.msra.mxu0 0.0
    %6469 = vmatprep.mubr.f32.mxu0 0.0
    %6470 = vmatmul.mubr.f32.gmra.mrb[0].mxu0 %v6403
    %v6471 = vpop.f32.mrb[0].mxu0
    %v6472 = vadd.f32 %v6400, %v6471
    %v6473 = vpop.f32.mrb[0].mxu0
    %6474 = vdwg.mxu0
    %vm6475 = vcmask 25600
    %6476 = vst.msk [vmem:[#allocation11] sm:$0x3] %vm6475, %v6472
    // Predicated region
    $region78: #{forward.1} parent=1 // pred_check
      _
    $region79: #{forward.1} parent=1 // pred_check_branch
      %6478 = sbr.rel (0) target = $region81
    $region80: #{forward.1} parent=1 // pred_region
      %s6480 = ssub.s32 32, 32
      %6481 = vsyncadd [#allocation4], %s6480
      %s6483 = sshll.u32 [#allocation11], 4
      %s6484 = int_to_ptr.vmem [resolvable:$true] %s6483
      %6486 = dma.vmem_to_hbm [thread:$0]  %s6484, 32, %s15, [#allocation4]
    $region81: #{forward.1} parent=1 // pred_fallthru
      _
    // Predicated region
    $region82: #{forward.1} parent=1 // pred_check
      _
    $region83: #{forward.1} parent=1 // pred_check_branch
      %6488 = sbr.rel (0) target = $region85
    $region84: #{forward.1} parent=1 // pred_region
      %6489 = dma.done [#allocation4], 32
    $region85: #{forward.1} parent=1 // pred_fallthru
      _
    %6490 = vsyncpa [#allocation4], 1
    %6491 = vsyncpa [#allocation5], 1
    %6492 = vsyncpa [#allocation7], 1
    %6493 = vsyncpa [#allocation10], 1

</llo_original>
